<compile_context>
chip_gen: v6e
topology: v6e:2x2x1
jax: 0.10.0
libtpu: 0.0.40
codegen_flags: <defaults>
</compile_context>

<pallas_src>
import functools

import jax
import jax.numpy as jnp
from jax import lax
from jax.experimental import pallas as pl
from jax.experimental.pallas import tpu as pltpu

LEAKY_SLOPE = 0.01  # PyTorch nn.LeakyReLU default negative_slope
FC_OUT = 512


def _leaky(v):
    return jnp.where(v > 0, v, LEAKY_SLOPE * v)


# ----------------------- fused forward kernel -----------------------
def _icm_fused_kernel(x_ref, w_conv_ref, w1x1_ref, wfc0_ref, wfc1_ref, sel_ref,
                      b_ref, o_ref, xp_ref, patch_ref, *, num_res_block, H, W):
    # x_ref     : (N, H, W, F)       input, channels zero-padded up to F
    # w_conv_ref: (1+2R, 9F, F)      stacked 3x3 conv weights (im2col row order)
    # w1x1_ref  : (F, 2)             1x1 conv weight
    # wfc0/1_ref: (N*H*W, 512)       FC rows of 1x1-channel 0 / 1, batch-tiled
    # sel_ref   : (N, N*H*W)         0/1 per-sample row-sum selector
    # b_ref     : (1, 512)           FC bias
    # o_ref     : (N, 512)           features (lane-dense output)
    # xp_ref    : (N, H+2, W+2, F)   zero-halo VMEM scratch
    # patch_ref : (N*H*W, 9F)        im2col VMEM scratch
    N, _, _, F = x_ref.shape
    M = N * H * W

    # Zero the halo scratch once; only the interior is rewritten per layer,
    # so the 1-pixel border (and any padded input channels) stay zero.
    xp_ref[...] = jnp.zeros_like(xp_ref)

    def conv3x3(act_mf, w_flat):
        # (M, F) activation -> halo scratch -> im2col patches -> one MXU matmul
        xp_ref[:, 1:H + 1, 1:W + 1, :] = act_mf.reshape(N, H, W, F)
        xp = xp_ref[...]
        for kh in range(3):
            for kw in range(3):
                tap = kh * 3 + kw
                patch_ref[:, tap * F:(tap + 1) * F] = (
                    xp[:, kh:kh + H, kw:kw + W, :].reshape(M, F))
        return jnp.dot(patch_ref[...], w_flat,
                       preferred_element_type=jnp.float32)          # (M, F)

    act = x_ref[...].reshape(M, F)

    # conv_block: Conv3x3(no bias) + ReLU
    act = jnp.maximum(conv3x3(act, w_conv_ref[0]), 0.0)

    # res_blocks: [Conv3x3 + LeakyReLU] -> Conv3x3 -> +residual -> LeakyReLU
    # (weights stay resident in VMEM; static unroll over the block count)
    for r in range(num_res_block):
        residual = act
        h1 = _leaky(conv3x3(act, w_conv_ref[1 + 2 * r]))
        act = _leaky(conv3x3(h1, w_conv_ref[2 + 2 * r]) + residual)

    # conv_feature_block: Conv1x1(no bias) + ReLU + Flatten(NCHW) + Linear(.,512)
    # out[n] = sum_hw y[n,hw,0]*Wfc[hw] + y[n,hw,1]*Wfc[HW+hw] + b, computed as a
    # per-row weighting + a selector matmul (no reshape/transpose, lane-dense).
    y = jnp.maximum(jnp.dot(act, w1x1_ref[...],
                            preferred_element_type=jnp.float32), 0.0)   # (M, 2)
    contrib = y[:, 0:1] * wfc0_ref[...] + y[:, 1:2] * wfc1_ref[...]      # (M, 512)
    o_ref[...] = jnp.dot(sel_ref[...], contrib,
                         preferred_element_type=jnp.float32) + b_ref[...]


# ----------------------- wrapper (ICM.forward == get_feature) -----------------------
def icm_forward(kparams, x_nchw):
    N, cin, H, W = x_nchw.shape
    F = kparams["w1x1"].shape[0]
    num_res_block = (kparams["w_conv"].shape[0] - 1) // 2
    M = N * H * W

    # one-time glue on the tiny input: NCHW (PyTorch) -> NHWC, pad channels to F
    x = jnp.transpose(x_nchw, (0, 2, 3, 1)).astype(jnp.float32)
    if cin < F:
        x = jnp.pad(x, ((0, 0), (0, 0), (0, 0), (0, F - cin)))

    kernel = functools.partial(_icm_fused_kernel,
                               num_res_block=num_res_block, H=H, W=W)
    vmem = pl.BlockSpec(memory_space=pltpu.MemorySpace.VMEM)
    return pl.pallas_call(
        kernel,
        out_shape=jax.ShapeDtypeStruct((N, FC_OUT), jnp.float32),
        in_specs=[vmem] * 7,
        out_specs=vmem,
        scratch_shapes=[pltpu.VMEM((N, H + 2, W + 2, F), jnp.float32),
                        pltpu.VMEM((M, 9 * F), jnp.float32)],
    )(x, kparams["w_conv"], kparams["w1x1"], kparams["wfc0"], kparams["wfc1"],
      kparams["sel"], kparams["b_fc"])


# ----------------------- parameters -----------------------
def init_icm_params(key, input_shape, num_res_block, num_filters):
    """Synthetic parameters in a PyTorch-like layout (HWIO convs, (in,out) FC)."""
    c, h, w = input_shape
    keys = jax.random.split(key, 3 + 2 * num_res_block)

    def conv_w(k, cin, cout, ksz):
        scale = 1.0 / jnp.sqrt(jnp.float32(ksz * ksz * cin))
        return scale * jax.random.normal(k, (ksz, ksz, cin, cout), jnp.float32)

    params = {"stem": conv_w(keys[0], c, num_filters, 3), "res": []}
    for i in range(num_res_block):
        w1 = conv_w(keys[1 + 2 * i], num_filters, num_filters, 3)
        w2 = conv_w(keys[2 + 2 * i], num_filters, num_filters, 3)
        params["res"].append((w1, w2))
    k1x1, kfc = jax.random.split(keys[-1])
    params["w1x1"] = (1.0 / jnp.sqrt(jnp.float32(num_filters))) * \
        jax.random.normal(k1x1, (num_filters, 2), jnp.float32)
    fc_in = 2 * h * w
    kw_fc, kb_fc = jax.random.split(kfc)
    params["w_fc"] = (1.0 / jnp.sqrt(jnp.float32(fc_in))) * \
        jax.random.normal(kw_fc, (fc_in, FC_OUT), jnp.float32)
    params["b_fc"] = (1.0 / jnp.sqrt(jnp.float32(fc_in))) * \
        jax.random.normal(kb_fc, (FC_OUT,), jnp.float32)
    return params


def prepare_icm_params(params, input_shape, num_filters, batch):
    """One-time re-layout of the parameters into the fused-kernel format."""
    c, h, w = input_shape
    F = num_filters
    HW = h * w
    assert c <= F, "stem in-channels must not exceed num_filters"

    # stem: zero-pad cin -> F so every 3x3 conv is a uniform (9F, F) im2col matmul
    stem = jnp.pad(params["stem"], ((0, 0), (0, 0), (0, F - c), (0, 0)))
    convs = [stem.reshape(9 * F, F)]
    for (w1, w2) in params["res"]:
        convs.append(w1.reshape(9 * F, F))
        convs.append(w2.reshape(9 * F, F))
    w_conv = jnp.stack(convs, axis=0)                  # (1+2R, 9F, F)

    # Split the FC weight by 1x1-conv channel (PyTorch NCHW flatten index is
    # c*HW + hw) and batch-tile it; the kernel then computes
    #   out[n] = sum_hw y[n,hw,0]*w_fc[hw] + y[n,hw,1]*w_fc[HW+hw] + b
    # with a lane-dense selector matmul instead of a runtime transpose/flatten.
    w_fc = params["w_fc"]                              # (2*HW, 512)
    wfc0 = jnp.tile(w_fc[:HW], (batch, 1))             # (batch*HW, 512)
    wfc1 = jnp.tile(w_fc[HW:], (batch, 1))             # (batch*HW, 512)
    sel = jnp.repeat(jnp.eye(batch, dtype=jnp.float32), HW, axis=1)  # (batch, batch*HW)

    return {"w_conv": w_conv, "w1x1": params["w1x1"], "wfc0": wfc0,
            "wfc1": wfc1, "sel": sel, "b_fc": params["b_fc"].reshape(1, FC_OUT)}


# ----------------------- pure-JAX reference (validation only) -----------------------
def icm_reference(params, x_nchw):
    dn = ("NCHW", "HWIO", "NCHW")

    def conv3(x, w):
        return lax.conv_general_dilated(x, w, (1, 1), ((1, 1), (1, 1)),
                                        dimension_numbers=dn,
                                        precision=lax.Precision.HIGHEST)

    x = jnp.maximum(conv3(x_nchw, params["stem"]), 0.0)
    for (w1, w2) in params["res"]:
        residual = x
        h = _leaky(conv3(x, w1))
        x = _leaky(conv3(h, w2) + residual)
    w1x1 = params["w1x1"][None, None, :, :]            # (1,1,F,2) HWIO
    y = lax.conv_general_dilated(x, w1x1, (1, 1), ((0, 0), (0, 0)),
                                 dimension_numbers=dn,
                                 precision=lax.Precision.HIGHEST)
    y = jnp.maximum(y, 0.0)                            # (N, 2, H, W)
    flat = y.reshape(y.shape[0], -1)                   # PyTorch NCHW flatten
    return jnp.dot(flat, params["w_fc"],
                   precision=lax.Precision.HIGHEST) + params["b_fc"]


if __name__ == "__main__":
    batch, c, h, w = 2, 4, 8, 8
    num_res_block, num_filters = 2, 32   # small synthetic config (PyTorch defaults: 19, 256)

    key = jax.random.PRNGKey(0)
    kx, kp = jax.random.split(key)
    x = jax.random.normal(kx, (batch, c, h, w), jnp.float32)   # NCHW, like PyTorch
    params = init_icm_params(kp, (c, h, w), num_res_block, num_filters)
    kparams = prepare_icm_params(params, (c, h, w), num_filters, batch)

    feats = jax.jit(icm_forward)(kparams, x)
    jax.block_until_ready(feats)
    assert feats.shape == (batch, FC_OUT) and feats.dtype == jnp.float32

    # numerical sanity check vs a pure-JAX reference (loose tol: in-kernel MXU
    # f32 matmuls may use the default reduced-precision passes)
    ref = icm_reference(params, x)
    err = float(jnp.max(jnp.abs(feats - ref)))
    assert err < 5e-2, f"kernel/reference mismatch: max abs err = {err}"

    print("KERNEL_OK")
</pallas_src>

<mosaic_0001>
module attributes {stable_mosaic.version = 11 : i64} {
  func.func @_icm_fused_kernel(%arg0: memref<2x8x8x32xf32, #tpu.memory_space<vmem>>, %arg1: memref<5x288x32xf32, #tpu.memory_space<vmem>>, %arg2: memref<32x2xf32, #tpu.memory_space<vmem>>, %arg3: memref<128x512xf32, #tpu.memory_space<vmem>>, %arg4: memref<128x512xf32, #tpu.memory_space<vmem>>, %arg5: memref<2x128xf32, #tpu.memory_space<vmem>>, %arg6: memref<1x512xf32, #tpu.memory_space<vmem>>, %arg7: memref<2x512xf32, #tpu.memory_space<vmem>>, %arg8: memref<2x10x10x32xf32, #tpu.memory_space<vmem>>, %arg9: memref<128x288xf32, #tpu.memory_space<vmem>>) attributes {dimension_semantics = [], scalar_prefetch = 0 : i64, scratch_operands = 2 : i64, tpu.core_type = #tpu.core_type<tc>} {
    %cst = arith.constant 0.000000e+00 : f32
    %0 = vector.broadcast %cst : f32 to vector<2x10x10x32xf32>
    %c0 = arith.constant 0 : index
    %c0_0 = arith.constant 0 : index
    %c0_1 = arith.constant 0 : index
    %c0_2 = arith.constant 0 : index
    %1 = vector.load %arg8[%c0, %c0_0, %c0_1, %c0_2] : memref<2x10x10x32xf32, #tpu.memory_space<vmem>>, vector<2x10x10x32xf32>
    tpu.vector_store %arg8[%c0, %c0_0, %c0_1, %c0_2], %0 {strides = array<i32>} : memref<2x10x10x32xf32, #tpu.memory_space<vmem>>, vector<2x10x10x32xf32>,
    %c0_3 = arith.constant 0 : index
    %c0_4 = arith.constant 0 : index
    %c0_5 = arith.constant 0 : index
    %c0_6 = arith.constant 0 : index
    %2 = vector.load %arg0[%c0_3, %c0_4, %c0_5, %c0_6] : memref<2x8x8x32xf32, #tpu.memory_space<vmem>>, vector<2x8x8x32xf32>
    %3 = vector.shape_cast %2 : vector<2x8x8x32xf32> to vector<128x32xf32>
    %c0_7 = arith.constant 0 : index
    %c0_8 = arith.constant 0 : index
    %c0_9 = arith.constant 0 : index
    %4 = vector.load %arg1[%c0_7, %c0_8, %c0_9] : memref<5x288x32xf32, #tpu.memory_space<vmem>>, vector<1x288x32xf32>
    %5 = vector.shape_cast %4 : vector<1x288x32xf32> to vector<288x32xf32>
    %6 = vector.shape_cast %3 : vector<128x32xf32> to vector<2x8x8x32xf32>
    %c0_10 = arith.constant 0 : index
    %c1 = arith.constant 1 : index
    %c1_11 = arith.constant 1 : index
    %c0_12 = arith.constant 0 : index
    %7 = vector.load %arg8[%c0_10, %c1, %c1_11, %c0_12] : memref<2x10x10x32xf32, #tpu.memory_space<vmem>>, vector<2x8x8x32xf32>
    tpu.vector_store %arg8[%c0_10, %c1, %c1_11, %c0_12], %6 {strides = array<i32>} : memref<2x10x10x32xf32, #tpu.memory_space<vmem>>, vector<2x8x8x32xf32>,
    %c0_13 = arith.constant 0 : index
    %c0_14 = arith.constant 0 : index
    %c0_15 = arith.constant 0 : index
    %c0_16 = arith.constant 0 : index
    %8 = vector.load %arg8[%c0_13, %c0_14, %c0_15, %c0_16] : memref<2x10x10x32xf32, #tpu.memory_space<vmem>>, vector<2x10x10x32xf32>
    %9 = vector.extract_strided_slice %8 {offsets = [0, 0, 0, 0], sizes = [2, 8, 8, 32], strides = [1, 1, 1, 1]} : vector<2x10x10x32xf32> to vector<2x8x8x32xf32>
    %10 = vector.shape_cast %9 : vector<2x8x8x32xf32> to vector<128x32xf32>
    %c0_17 = arith.constant 0 : index
    %c0_18 = arith.constant 0 : index
    %11 = vector.load %arg9[%c0_17, %c0_18] : memref<128x288xf32, #tpu.memory_space<vmem>>, vector<128x32xf32>
    tpu.vector_store %arg9[%c0_17, %c0_18], %10 {strides = array<i32>} : memref<128x288xf32, #tpu.memory_space<vmem>>, vector<128x32xf32>,
    %12 = vector.extract_strided_slice %8 {offsets = [0, 0, 1, 0], sizes = [2, 8, 8, 32], strides = [1, 1, 1, 1]} : vector<2x10x10x32xf32> to vector<2x8x8x32xf32>
    %13 = vector.shape_cast %12 : vector<2x8x8x32xf32> to vector<128x32xf32>
    %c0_19 = arith.constant 0 : index
    %c32 = arith.constant 32 : index
    %14 = vector.load %arg9[%c0_19, %c32] : memref<128x288xf32, #tpu.memory_space<vmem>>, vector<128x32xf32>
    tpu.vector_store %arg9[%c0_19, %c32], %13 {strides = array<i32>} : memref<128x288xf32, #tpu.memory_space<vmem>>, vector<128x32xf32>,
    %15 = vector.extract_strided_slice %8 {offsets = [0, 0, 2, 0], sizes = [2, 8, 8, 32], strides = [1, 1, 1, 1]} : vector<2x10x10x32xf32> to vector<2x8x8x32xf32>
    %16 = vector.shape_cast %15 : vector<2x8x8x32xf32> to vector<128x32xf32>
    %c0_20 = arith.constant 0 : index
    %c64 = arith.constant 64 : index
    %17 = vector.load %arg9[%c0_20, %c64] : memref<128x288xf32, #tpu.memory_space<vmem>>, vector<128x32xf32>
    tpu.vector_store %arg9[%c0_20, %c64], %16 {strides = array<i32>} : memref<128x288xf32, #tpu.memory_space<vmem>>, vector<128x32xf32>,
    %18 = vector.extract_strided_slice %8 {offsets = [0, 1, 0, 0], sizes = [2, 8, 8, 32], strides = [1, 1, 1, 1]} : vector<2x10x10x32xf32> to vector<2x8x8x32xf32>
    %19 = vector.shape_cast %18 : vector<2x8x8x32xf32> to vector<128x32xf32>
    %c0_21 = arith.constant 0 : index
    %c96 = arith.constant 96 : index
    %20 = vector.load %arg9[%c0_21, %c96] : memref<128x288xf32, #tpu.memory_space<vmem>>, vector<128x32xf32>
    tpu.vector_store %arg9[%c0_21, %c96], %19 {strides = array<i32>} : memref<128x288xf32, #tpu.memory_space<vmem>>, vector<128x32xf32>,
    %21 = vector.extract_strided_slice %8 {offsets = [0, 1, 1, 0], sizes = [2, 8, 8, 32], strides = [1, 1, 1, 1]} : vector<2x10x10x32xf32> to vector<2x8x8x32xf32>
    %22 = vector.shape_cast %21 : vector<2x8x8x32xf32> to vector<128x32xf32>
    %c0_22 = arith.constant 0 : index
    %c128 = arith.constant 128 : index
    %23 = vector.load %arg9[%c0_22, %c128] : memref<128x288xf32, #tpu.memory_space<vmem>>, vector<128x32xf32>
    tpu.vector_store %arg9[%c0_22, %c128], %22 {strides = array<i32>} : memref<128x288xf32, #tpu.memory_space<vmem>>, vector<128x32xf32>,
    %24 = vector.extract_strided_slice %8 {offsets = [0, 1, 2, 0], sizes = [2, 8, 8, 32], strides = [1, 1, 1, 1]} : vector<2x10x10x32xf32> to vector<2x8x8x32xf32>
    %25 = vector.shape_cast %24 : vector<2x8x8x32xf32> to vector<128x32xf32>
    %c0_23 = arith.constant 0 : index
    %c160 = arith.constant 160 : index
    %26 = vector.load %arg9[%c0_23, %c160] : memref<128x288xf32, #tpu.memory_space<vmem>>, vector<128x32xf32>
    tpu.vector_store %arg9[%c0_23, %c160], %25 {strides = array<i32>} : memref<128x288xf32, #tpu.memory_space<vmem>>, vector<128x32xf32>,
    %27 = vector.extract_strided_slice %8 {offsets = [0, 2, 0, 0], sizes = [2, 8, 8, 32], strides = [1, 1, 1, 1]} : vector<2x10x10x32xf32> to vector<2x8x8x32xf32>
    %28 = vector.shape_cast %27 : vector<2x8x8x32xf32> to vector<128x32xf32>
    %c0_24 = arith.constant 0 : index
    %c192 = arith.constant 192 : index
    %29 = vector.load %arg9[%c0_24, %c192] : memref<128x288xf32, #tpu.memory_space<vmem>>, vector<128x32xf32>
    tpu.vector_store %arg9[%c0_24, %c192], %28 {strides = array<i32>} : memref<128x288xf32, #tpu.memory_space<vmem>>, vector<128x32xf32>,
    %30 = vector.extract_strided_slice %8 {offsets = [0, 2, 1, 0], sizes = [2, 8, 8, 32], strides = [1, 1, 1, 1]} : vector<2x10x10x32xf32> to vector<2x8x8x32xf32>
    %31 = vector.shape_cast %30 : vector<2x8x8x32xf32> to vector<128x32xf32>
    %c0_25 = arith.constant 0 : index
    %c224 = arith.constant 224 : index
    %32 = vector.load %arg9[%c0_25, %c224] : memref<128x288xf32, #tpu.memory_space<vmem>>, vector<128x32xf32>
    tpu.vector_store %arg9[%c0_25, %c224], %31 {strides = array<i32>} : memref<128x288xf32, #tpu.memory_space<vmem>>, vector<128x32xf32>,
    %33 = vector.extract_strided_slice %8 {offsets = [0, 2, 2, 0], sizes = [2, 8, 8, 32], strides = [1, 1, 1, 1]} : vector<2x10x10x32xf32> to vector<2x8x8x32xf32>
    %34 = vector.shape_cast %33 : vector<2x8x8x32xf32> to vector<128x32xf32>
    %c0_26 = arith.constant 0 : index
    %c256 = arith.constant 256 : index
    %35 = vector.load %arg9[%c0_26, %c256] : memref<128x288xf32, #tpu.memory_space<vmem>>, vector<128x32xf32>
    tpu.vector_store %arg9[%c0_26, %c256], %34 {strides = array<i32>} : memref<128x288xf32, #tpu.memory_space<vmem>>, vector<128x32xf32>,
    %c0_27 = arith.constant 0 : index
    %c0_28 = arith.constant 0 : index
    %36 = vector.load %arg9[%c0_27, %c0_28] : memref<128x288xf32, #tpu.memory_space<vmem>>, vector<128x288xf32>
    %cst_29 = arith.constant dense<0.000000e+00> : vector<128x32xf32>
    %37 = tpu.matmul %36, %5, %cst_29 {dimension_numbers = #tpu.dot_dimension_numbers<[1], [0], [0], [1], [0, 0, 1, 1], [], []>} : vector<128x288xf32>, vector<288x32xf32>, vector<128x32xf32> -> vector<128x32xf32>
    %cst_30 = arith.constant 0.000000e+00 : f32
    %38 = vector.broadcast %cst_30 : f32 to vector<128x32xf32>
    %39 = arith.maximumf %37, %38 : vector<128x32xf32>
    %c1_31 = arith.constant 1 : index
    %c0_32 = arith.constant 0 : index
    %c0_33 = arith.constant 0 : index
    %40 = vector.load %arg1[%c1_31, %c0_32, %c0_33] : memref<5x288x32xf32, #tpu.memory_space<vmem>>, vector<1x288x32xf32>
    %41 = vector.shape_cast %40 : vector<1x288x32xf32> to vector<288x32xf32>
    %42 = vector.shape_cast %39 : vector<128x32xf32> to vector<2x8x8x32xf32>
    %c0_34 = arith.constant 0 : index
    %c1_35 = arith.constant 1 : index
    %c1_36 = arith.constant 1 : index
    %c0_37 = arith.constant 0 : index
    %43 = vector.load %arg8[%c0_34, %c1_35, %c1_36, %c0_37] : memref<2x10x10x32xf32, #tpu.memory_space<vmem>>, vector<2x8x8x32xf32>
    tpu.vector_store %arg8[%c0_34, %c1_35, %c1_36, %c0_37], %42 {strides = array<i32>} : memref<2x10x10x32xf32, #tpu.memory_space<vmem>>, vector<2x8x8x32xf32>,
    %c0_38 = arith.constant 0 : index
    %c0_39 = arith.constant 0 : index
    %c0_40 = arith.constant 0 : index
    %c0_41 = arith.constant 0 : index
    %44 = vector.load %arg8[%c0_38, %c0_39, %c0_40, %c0_41] : memref<2x10x10x32xf32, #tpu.memory_space<vmem>>, vector<2x10x10x32xf32>
    %45 = vector.extract_strided_slice %44 {offsets = [0, 0, 0, 0], sizes = [2, 8, 8, 32], strides = [1, 1, 1, 1]} : vector<2x10x10x32xf32> to vector<2x8x8x32xf32>
    %46 = vector.shape_cast %45 : vector<2x8x8x32xf32> to vector<128x32xf32>
    %c0_42 = arith.constant 0 : index
    %c0_43 = arith.constant 0 : index
    %47 = vector.load %arg9[%c0_42, %c0_43] : memref<128x288xf32, #tpu.memory_space<vmem>>, vector<128x32xf32>
    tpu.vector_store %arg9[%c0_42, %c0_43], %46 {strides = array<i32>} : memref<128x288xf32, #tpu.memory_space<vmem>>, vector<128x32xf32>,
    %48 = vector.extract_strided_slice %44 {offsets = [0, 0, 1, 0], sizes = [2, 8, 8, 32], strides = [1, 1, 1, 1]} : vector<2x10x10x32xf32> to vector<2x8x8x32xf32>
    %49 = vector.shape_cast %48 : vector<2x8x8x32xf32> to vector<128x32xf32>
    %c0_44 = arith.constant 0 : index
    %c32_45 = arith.constant 32 : index
    %50 = vector.load %arg9[%c0_44, %c32_45] : memref<128x288xf32, #tpu.memory_space<vmem>>, vector<128x32xf32>
    tpu.vector_store %arg9[%c0_44, %c32_45], %49 {strides = array<i32>} : memref<128x288xf32, #tpu.memory_space<vmem>>, vector<128x32xf32>,
    %51 = vector.extract_strided_slice %44 {offsets = [0, 0, 2, 0], sizes = [2, 8, 8, 32], strides = [1, 1, 1, 1]} : vector<2x10x10x32xf32> to vector<2x8x8x32xf32>
    %52 = vector.shape_cast %51 : vector<2x8x8x32xf32> to vector<128x32xf32>
    %c0_46 = arith.constant 0 : index
    %c64_47 = arith.constant 64 : index
    %53 = vector.load %arg9[%c0_46, %c64_47] : memref<128x288xf32, #tpu.memory_space<vmem>>, vector<128x32xf32>
    tpu.vector_store %arg9[%c0_46, %c64_47], %52 {strides = array<i32>} : memref<128x288xf32, #tpu.memory_space<vmem>>, vector<128x32xf32>,
    %54 = vector.extract_strided_slice %44 {offsets = [0, 1, 0, 0], sizes = [2, 8, 8, 32], strides = [1, 1, 1, 1]} : vector<2x10x10x32xf32> to vector<2x8x8x32xf32>
    %55 = vector.shape_cast %54 : vector<2x8x8x32xf32> to vector<128x32xf32>
    %c0_48 = arith.constant 0 : index
    %c96_49 = arith.constant 96 : index
    %56 = vector.load %arg9[%c0_48, %c96_49] : memref<128x288xf32, #tpu.memory_space<vmem>>, vector<128x32xf32>
    tpu.vector_store %arg9[%c0_48, %c96_49], %55 {strides = array<i32>} : memref<128x288xf32, #tpu.memory_space<vmem>>, vector<128x32xf32>,
    %57 = vector.extract_strided_slice %44 {offsets = [0, 1, 1, 0], sizes = [2, 8, 8, 32], strides = [1, 1, 1, 1]} : vector<2x10x10x32xf32> to vector<2x8x8x32xf32>
    %58 = vector.shape_cast %57 : vector<2x8x8x32xf32> to vector<128x32xf32>
    %c0_50 = arith.constant 0 : index
    %c128_51 = arith.constant 128 : index
    %59 = vector.load %arg9[%c0_50, %c128_51] : memref<128x288xf32, #tpu.memory_space<vmem>>, vector<128x32xf32>
    tpu.vector_store %arg9[%c0_50, %c128_51], %58 {strides = array<i32>} : memref<128x288xf32, #tpu.memory_space<vmem>>, vector<128x32xf32>,
    %60 = vector.extract_strided_slice %44 {offsets = [0, 1, 2, 0], sizes = [2, 8, 8, 32], strides = [1, 1, 1, 1]} : vector<2x10x10x32xf32> to vector<2x8x8x32xf32>
    %61 = vector.shape_cast %60 : vector<2x8x8x32xf32> to vector<128x32xf32>
    %c0_52 = arith.constant 0 : index
    %c160_53 = arith.constant 160 : index
    %62 = vector.load %arg9[%c0_52, %c160_53] : memref<128x288xf32, #tpu.memory_space<vmem>>, vector<128x32xf32>
    tpu.vector_store %arg9[%c0_52, %c160_53], %61 {strides = array<i32>} : memref<128x288xf32, #tpu.memory_space<vmem>>, vector<128x32xf32>,
    %63 = vector.extract_strided_slice %44 {offsets = [0, 2, 0, 0], sizes = [2, 8, 8, 32], strides = [1, 1, 1, 1]} : vector<2x10x10x32xf32> to vector<2x8x8x32xf32>
    %64 = vector.shape_cast %63 : vector<2x8x8x32xf32> to vector<128x32xf32>
    %c0_54 = arith.constant 0 : index
    %c192_55 = arith.constant 192 : index
    %65 = vector.load %arg9[%c0_54, %c192_55] : memref<128x288xf32, #tpu.memory_space<vmem>>, vector<128x32xf32>
    tpu.vector_store %arg9[%c0_54, %c192_55], %64 {strides = array<i32>} : memref<128x288xf32, #tpu.memory_space<vmem>>, vector<128x32xf32>,
    %66 = vector.extract_strided_slice %44 {offsets = [0, 2, 1, 0], sizes = [2, 8, 8, 32], strides = [1, 1, 1, 1]} : vector<2x10x10x32xf32> to vector<2x8x8x32xf32>
    %67 = vector.shape_cast %66 : vector<2x8x8x32xf32> to vector<128x32xf32>
    %c0_56 = arith.constant 0 : index
    %c224_57 = arith.constant 224 : index
    %68 = vector.load %arg9[%c0_56, %c224_57] : memref<128x288xf32, #tpu.memory_space<vmem>>, vector<128x32xf32>
    tpu.vector_store %arg9[%c0_56, %c224_57], %67 {strides = array<i32>} : memref<128x288xf32, #tpu.memory_space<vmem>>, vector<128x32xf32>,
    %69 = vector.extract_strided_slice %44 {offsets = [0, 2, 2, 0], sizes = [2, 8, 8, 32], strides = [1, 1, 1, 1]} : vector<2x10x10x32xf32> to vector<2x8x8x32xf32>
    %70 = vector.shape_cast %69 : vector<2x8x8x32xf32> to vector<128x32xf32>
    %c0_58 = arith.constant 0 : index
    %c256_59 = arith.constant 256 : index
    %71 = vector.load %arg9[%c0_58, %c256_59] : memref<128x288xf32, #tpu.memory_space<vmem>>, vector<128x32xf32>
    tpu.vector_store %arg9[%c0_58, %c256_59], %70 {strides = array<i32>} : memref<128x288xf32, #tpu.memory_space<vmem>>, vector<128x32xf32>,
    %c0_60 = arith.constant 0 : index
    %c0_61 = arith.constant 0 : index
    %72 = vector.load %arg9[%c0_60, %c0_61] : memref<128x288xf32, #tpu.memory_space<vmem>>, vector<128x288xf32>
    %cst_62 = arith.constant dense<0.000000e+00> : vector<128x32xf32>
    %73 = tpu.matmul %72, %41, %cst_62 {dimension_numbers = #tpu.dot_dimension_numbers<[1], [0], [0], [1], [0, 0, 1, 1], [], []>} : vector<128x288xf32>, vector<288x32xf32>, vector<128x32xf32> -> vector<128x32xf32>
    %cst_63 = arith.constant 0.000000e+00 : f32
    %74 = vector.broadcast %cst_63 : f32 to vector<128x32xf32>
    %75 = arith.cmpf ogt, %73, %74 : vector<128x32xf32>
    %cst_64 = arith.constant 0.00999999977 : f32
    %76 = vector.broadcast %cst_64 : f32 to vector<128x32xf32>
    %77 = arith.mulf %76, %73 : vector<128x32xf32>
    %78 = arith.select %75, %73, %77 : vector<128x32xi1>, vector<128x32xf32>
    %c2 = arith.constant 2 : index
    %c0_65 = arith.constant 0 : index
    %c0_66 = arith.constant 0 : index
    %79 = vector.load %arg1[%c2, %c0_65, %c0_66] : memref<5x288x32xf32, #tpu.memory_space<vmem>>, vector<1x288x32xf32>
    %80 = vector.shape_cast %79 : vector<1x288x32xf32> to vector<288x32xf32>
    %81 = vector.shape_cast %78 : vector<128x32xf32> to vector<2x8x8x32xf32>
    %c0_67 = arith.constant 0 : index
    %c1_68 = arith.constant 1 : index
    %c1_69 = arith.constant 1 : index
    %c0_70 = arith.constant 0 : index
    %82 = vector.load %arg8[%c0_67, %c1_68, %c1_69, %c0_70] : memref<2x10x10x32xf32, #tpu.memory_space<vmem>>, vector<2x8x8x32xf32>
    tpu.vector_store %arg8[%c0_67, %c1_68, %c1_69, %c0_70], %81 {strides = array<i32>} : memref<2x10x10x32xf32, #tpu.memory_space<vmem>>, vector<2x8x8x32xf32>,
    %c0_71 = arith.constant 0 : index
    %c0_72 = arith.constant 0 : index
    %c0_73 = arith.constant 0 : index
    %c0_74 = arith.constant 0 : index
    %83 = vector.load %arg8[%c0_71, %c0_72, %c0_73, %c0_74] : memref<2x10x10x32xf32, #tpu.memory_space<vmem>>, vector<2x10x10x32xf32>
    %84 = vector.extract_strided_slice %83 {offsets = [0, 0, 0, 0], sizes = [2, 8, 8, 32], strides = [1, 1, 1, 1]} : vector<2x10x10x32xf32> to vector<2x8x8x32xf32>
    %85 = vector.shape_cast %84 : vector<2x8x8x32xf32> to vector<128x32xf32>
    %c0_75 = arith.constant 0 : index
    %c0_76 = arith.constant 0 : index
    %86 = vector.load %arg9[%c0_75, %c0_76] : memref<128x288xf32, #tpu.memory_space<vmem>>, vector<128x32xf32>
    tpu.vector_store %arg9[%c0_75, %c0_76], %85 {strides = array<i32>} : memref<128x288xf32, #tpu.memory_space<vmem>>, vector<128x32xf32>,
    %87 = vector.extract_strided_slice %83 {offsets = [0, 0, 1, 0], sizes = [2, 8, 8, 32], strides = [1, 1, 1, 1]} : vector<2x10x10x32xf32> to vector<2x8x8x32xf32>
    %88 = vector.shape_cast %87 : vector<2x8x8x32xf32> to vector<128x32xf32>
    %c0_77 = arith.constant 0 : index
    %c32_78 = arith.constant 32 : index
    %89 = vector.load %arg9[%c0_77, %c32_78] : memref<128x288xf32, #tpu.memory_space<vmem>>, vector<128x32xf32>
    tpu.vector_store %arg9[%c0_77, %c32_78], %88 {strides = array<i32>} : memref<128x288xf32, #tpu.memory_space<vmem>>, vector<128x32xf32>,
    %90 = vector.extract_strided_slice %83 {offsets = [0, 0, 2, 0], sizes = [2, 8, 8, 32], strides = [1, 1, 1, 1]} : vector<2x10x10x32xf32> to vector<2x8x8x32xf32>
    %91 = vector.shape_cast %90 : vector<2x8x8x32xf32> to vector<128x32xf32>
    %c0_79 = arith.constant 0 : index
    %c64_80 = arith.constant 64 : index
    %92 = vector.load %arg9[%c0_79, %c64_80] : memref<128x288xf32, #tpu.memory_space<vmem>>, vector<128x32xf32>
    tpu.vector_store %arg9[%c0_79, %c64_80], %91 {strides = array<i32>} : memref<128x288xf32, #tpu.memory_space<vmem>>, vector<128x32xf32>,
    %93 = vector.extract_strided_slice %83 {offsets = [0, 1, 0, 0], sizes = [2, 8, 8, 32], strides = [1, 1, 1, 1]} : vector<2x10x10x32xf32> to vector<2x8x8x32xf32>
    %94 = vector.shape_cast %93 : vector<2x8x8x32xf32> to vector<128x32xf32>
    %c0_81 = arith.constant 0 : index
    %c96_82 = arith.constant 96 : index
    %95 = vector.load %arg9[%c0_81, %c96_82] : memref<128x288xf32, #tpu.memory_space<vmem>>, vector<128x32xf32>
    tpu.vector_store %arg9[%c0_81, %c96_82], %94 {strides = array<i32>} : memref<128x288xf32, #tpu.memory_space<vmem>>, vector<128x32xf32>,
    %96 = vector.extract_strided_slice %83 {offsets = [0, 1, 1, 0], sizes = [2, 8, 8, 32], strides = [1, 1, 1, 1]} : vector<2x10x10x32xf32> to vector<2x8x8x32xf32>
    %97 = vector.shape_cast %96 : vector<2x8x8x32xf32> to vector<128x32xf32>
    %c0_83 = arith.constant 0 : index
    %c128_84 = arith.constant 128 : index
    %98 = vector.load %arg9[%c0_83, %c128_84] : memref<128x288xf32, #tpu.memory_space<vmem>>, vector<128x32xf32>
    tpu.vector_store %arg9[%c0_83, %c128_84], %97 {strides = array<i32>} : memref<128x288xf32, #tpu.memory_space<vmem>>, vector<128x32xf32>,
    %99 = vector.extract_strided_slice %83 {offsets = [0, 1, 2, 0], sizes = [2, 8, 8, 32], strides = [1, 1, 1, 1]} : vector<2x10x10x32xf32> to vector<2x8x8x32xf32>
    %100 = vector.shape_cast %99 : vector<2x8x8x32xf32> to vector<128x32xf32>
    %c0_85 = arith.constant 0 : index
    %c160_86 = arith.constant 160 : index
    %101 = vector.load %arg9[%c0_85, %c160_86] : memref<128x288xf32, #tpu.memory_space<vmem>>, vector<128x32xf32>
    tpu.vector_store %arg9[%c0_85, %c160_86], %100 {strides = array<i32>} : memref<128x288xf32, #tpu.memory_space<vmem>>, vector<128x32xf32>,
    %102 = vector.extract_strided_slice %83 {offsets = [0, 2, 0, 0], sizes = [2, 8, 8, 32], strides = [1, 1, 1, 1]} : vector<2x10x10x32xf32> to vector<2x8x8x32xf32>
    %103 = vector.shape_cast %102 : vector<2x8x8x32xf32> to vector<128x32xf32>
    %c0_87 = arith.constant 0 : index
    %c192_88 = arith.constant 192 : index
    %104 = vector.load %arg9[%c0_87, %c192_88] : memref<128x288xf32, #tpu.memory_space<vmem>>, vector<128x32xf32>
    tpu.vector_store %arg9[%c0_87, %c192_88], %103 {strides = array<i32>} : memref<128x288xf32, #tpu.memory_space<vmem>>, vector<128x32xf32>,
    %105 = vector.extract_strided_slice %83 {offsets = [0, 2, 1, 0], sizes = [2, 8, 8, 32], strides = [1, 1, 1, 1]} : vector<2x10x10x32xf32> to vector<2x8x8x32xf32>
    %106 = vector.shape_cast %105 : vector<2x8x8x32xf32> to vector<128x32xf32>
    %c0_89 = arith.constant 0 : index
    %c224_90 = arith.constant 224 : index
    %107 = vector.load %arg9[%c0_89, %c224_90] : memref<128x288xf32, #tpu.memory_space<vmem>>, vector<128x32xf32>
    tpu.vector_store %arg9[%c0_89, %c224_90], %106 {strides = array<i32>} : memref<128x288xf32, #tpu.memory_space<vmem>>, vector<128x32xf32>,
    %108 = vector.extract_strided_slice %83 {offsets = [0, 2, 2, 0], sizes = [2, 8, 8, 32], strides = [1, 1, 1, 1]} : vector<2x10x10x32xf32> to vector<2x8x8x32xf32>
    %109 = vector.shape_cast %108 : vector<2x8x8x32xf32> to vector<128x32xf32>
    %c0_91 = arith.constant 0 : index
    %c256_92 = arith.constant 256 : index
    %110 = vector.load %arg9[%c0_91, %c256_92] : memref<128x288xf32, #tpu.memory_space<vmem>>, vector<128x32xf32>
    tpu.vector_store %arg9[%c0_91, %c256_92], %109 {strides = array<i32>} : memref<128x288xf32, #tpu.memory_space<vmem>>, vector<128x32xf32>,
    %c0_93 = arith.constant 0 : index
    %c0_94 = arith.constant 0 : index
    %111 = vector.load %arg9[%c0_93, %c0_94] : memref<128x288xf32, #tpu.memory_space<vmem>>, vector<128x288xf32>
    %cst_95 = arith.constant dense<0.000000e+00> : vector<128x32xf32>
    %112 = tpu.matmul %111, %80, %cst_95 {dimension_numbers = #tpu.dot_dimension_numbers<[1], [0], [0], [1], [0, 0, 1, 1], [], []>} : vector<128x288xf32>, vector<288x32xf32>, vector<128x32xf32> -> vector<128x32xf32>
    %113 = arith.addf %112, %39 : vector<128x32xf32>
    %cst_96 = arith.constant 0.000000e+00 : f32
    %114 = vector.broadcast %cst_96 : f32 to vector<128x32xf32>
    %115 = arith.cmpf ogt, %113, %114 : vector<128x32xf32>
    %cst_97 = arith.constant 0.00999999977 : f32
    %116 = vector.broadcast %cst_97 : f32 to vector<128x32xf32>
    %117 = arith.mulf %116, %113 : vector<128x32xf32>
    %118 = arith.select %115, %113, %117 : vector<128x32xi1>, vector<128x32xf32>
    %c3 = arith.constant 3 : index
    %c0_98 = arith.constant 0 : index
    %c0_99 = arith.constant 0 : index
    %119 = vector.load %arg1[%c3, %c0_98, %c0_99] : memref<5x288x32xf32, #tpu.memory_space<vmem>>, vector<1x288x32xf32>
    %120 = vector.shape_cast %119 : vector<1x288x32xf32> to vector<288x32xf32>
    %121 = vector.shape_cast %118 : vector<128x32xf32> to vector<2x8x8x32xf32>
    %c0_100 = arith.constant 0 : index
    %c1_101 = arith.constant 1 : index
    %c1_102 = arith.constant 1 : index
    %c0_103 = arith.constant 0 : index
    %122 = vector.load %arg8[%c0_100, %c1_101, %c1_102, %c0_103] : memref<2x10x10x32xf32, #tpu.memory_space<vmem>>, vector<2x8x8x32xf32>
    tpu.vector_store %arg8[%c0_100, %c1_101, %c1_102, %c0_103], %121 {strides = array<i32>} : memref<2x10x10x32xf32, #tpu.memory_space<vmem>>, vector<2x8x8x32xf32>,
    %c0_104 = arith.constant 0 : index
    %c0_105 = arith.constant 0 : index
    %c0_106 = arith.constant 0 : index
    %c0_107 = arith.constant 0 : index
    %123 = vector.load %arg8[%c0_104, %c0_105, %c0_106, %c0_107] : memref<2x10x10x32xf32, #tpu.memory_space<vmem>>, vector<2x10x10x32xf32>
    %124 = vector.extract_strided_slice %123 {offsets = [0, 0, 0, 0], sizes = [2, 8, 8, 32], strides = [1, 1, 1, 1]} : vector<2x10x10x32xf32> to vector<2x8x8x32xf32>
    %125 = vector.shape_cast %124 : vector<2x8x8x32xf32> to vector<128x32xf32>
    %c0_108 = arith.constant 0 : index
    %c0_109 = arith.constant 0 : index
    %126 = vector.load %arg9[%c0_108, %c0_109] : memref<128x288xf32, #tpu.memory_space<vmem>>, vector<128x32xf32>
    tpu.vector_store %arg9[%c0_108, %c0_109], %125 {strides = array<i32>} : memref<128x288xf32, #tpu.memory_space<vmem>>, vector<128x32xf32>,
    %127 = vector.extract_strided_slice %123 {offsets = [0, 0, 1, 0], sizes = [2, 8, 8, 32], strides = [1, 1, 1, 1]} : vector<2x10x10x32xf32> to vector<2x8x8x32xf32>
    %128 = vector.shape_cast %127 : vector<2x8x8x32xf32> to vector<128x32xf32>
    %c0_110 = arith.constant 0 : index
    %c32_111 = arith.constant 32 : index
    %129 = vector.load %arg9[%c0_110, %c32_111] : memref<128x288xf32, #tpu.memory_space<vmem>>, vector<128x32xf32>
    tpu.vector_store %arg9[%c0_110, %c32_111], %128 {strides = array<i32>} : memref<128x288xf32, #tpu.memory_space<vmem>>, vector<128x32xf32>,
    %130 = vector.extract_strided_slice %123 {offsets = [0, 0, 2, 0], sizes = [2, 8, 8, 32], strides = [1, 1, 1, 1]} : vector<2x10x10x32xf32> to vector<2x8x8x32xf32>
    %131 = vector.shape_cast %130 : vector<2x8x8x32xf32> to vector<128x32xf32>
    %c0_112 = arith.constant 0 : index
    %c64_113 = arith.constant 64 : index
    %132 = vector.load %arg9[%c0_112, %c64_113] : memref<128x288xf32, #tpu.memory_space<vmem>>, vector<128x32xf32>
    tpu.vector_store %arg9[%c0_112, %c64_113], %131 {strides = array<i32>} : memref<128x288xf32, #tpu.memory_space<vmem>>, vector<128x32xf32>,
    %133 = vector.extract_strided_slice %123 {offsets = [0, 1, 0, 0], sizes = [2, 8, 8, 32], strides = [1, 1, 1, 1]} : vector<2x10x10x32xf32> to vector<2x8x8x32xf32>
    %134 = vector.shape_cast %133 : vector<2x8x8x32xf32> to vector<128x32xf32>
    %c0_114 = arith.constant 0 : index
    %c96_115 = arith.constant 96 : index
    %135 = vector.load %arg9[%c0_114, %c96_115] : memref<128x288xf32, #tpu.memory_space<vmem>>, vector<128x32xf32>
    tpu.vector_store %arg9[%c0_114, %c96_115], %134 {strides = array<i32>} : memref<128x288xf32, #tpu.memory_space<vmem>>, vector<128x32xf32>,
    %136 = vector.extract_strided_slice %123 {offsets = [0, 1, 1, 0], sizes = [2, 8, 8, 32], strides = [1, 1, 1, 1]} : vector<2x10x10x32xf32> to vector<2x8x8x32xf32>
    %137 = vector.shape_cast %136 : vector<2x8x8x32xf32> to vector<128x32xf32>
    %c0_116 = arith.constant 0 : index
    %c128_117 = arith.constant 128 : index
    %138 = vector.load %arg9[%c0_116, %c128_117] : memref<128x288xf32, #tpu.memory_space<vmem>>, vector<128x32xf32>
    tpu.vector_store %arg9[%c0_116, %c128_117], %137 {strides = array<i32>} : memref<128x288xf32, #tpu.memory_space<vmem>>, vector<128x32xf32>,
    %139 = vector.extract_strided_slice %123 {offsets = [0, 1, 2, 0], sizes = [2, 8, 8, 32], strides = [1, 1, 1, 1]} : vector<2x10x10x32xf32> to vector<2x8x8x32xf32>
    %140 = vector.shape_cast %139 : vector<2x8x8x32xf32> to vector<128x32xf32>
    %c0_118 = arith.constant 0 : index
    %c160_119 = arith.constant 160 : index
    %141 = vector.load %arg9[%c0_118, %c160_119] : memref<128x288xf32, #tpu.memory_space<vmem>>, vector<128x32xf32>
    tpu.vector_store %arg9[%c0_118, %c160_119], %140 {strides = array<i32>} : memref<128x288xf32, #tpu.memory_space<vmem>>, vector<128x32xf32>,
    %142 = vector.extract_strided_slice %123 {offsets = [0, 2, 0, 0], sizes = [2, 8, 8, 32], strides = [1, 1, 1, 1]} : vector<2x10x10x32xf32> to vector<2x8x8x32xf32>
    %143 = vector.shape_cast %142 : vector<2x8x8x32xf32> to vector<128x32xf32>
    %c0_120 = arith.constant 0 : index
    %c192_121 = arith.constant 192 : index
    %144 = vector.load %arg9[%c0_120, %c192_121] : memref<128x288xf32, #tpu.memory_space<vmem>>, vector<128x32xf32>
    tpu.vector_store %arg9[%c0_120, %c192_121], %143 {strides = array<i32>} : memref<128x288xf32, #tpu.memory_space<vmem>>, vector<128x32xf32>,
    %145 = vector.extract_strided_slice %123 {offsets = [0, 2, 1, 0], sizes = [2, 8, 8, 32], strides = [1, 1, 1, 1]} : vector<2x10x10x32xf32> to vector<2x8x8x32xf32>
    %146 = vector.shape_cast %145 : vector<2x8x8x32xf32> to vector<128x32xf32>
    %c0_122 = arith.constant 0 : index
    %c224_123 = arith.constant 224 : index
    %147 = vector.load %arg9[%c0_122, %c224_123] : memref<128x288xf32, #tpu.memory_space<vmem>>, vector<128x32xf32>
    tpu.vector_store %arg9[%c0_122, %c224_123], %146 {strides = array<i32>} : memref<128x288xf32, #tpu.memory_space<vmem>>, vector<128x32xf32>,
    %148 = vector.extract_strided_slice %123 {offsets = [0, 2, 2, 0], sizes = [2, 8, 8, 32], strides = [1, 1, 1, 1]} : vector<2x10x10x32xf32> to vector<2x8x8x32xf32>
    %149 = vector.shape_cast %148 : vector<2x8x8x32xf32> to vector<128x32xf32>
    %c0_124 = arith.constant 0 : index
    %c256_125 = arith.constant 256 : index
    %150 = vector.load %arg9[%c0_124, %c256_125] : memref<128x288xf32, #tpu.memory_space<vmem>>, vector<128x32xf32>
    tpu.vector_store %arg9[%c0_124, %c256_125], %149 {strides = array<i32>} : memref<128x288xf32, #tpu.memory_space<vmem>>, vector<128x32xf32>,
    %c0_126 = arith.constant 0 : index
    %c0_127 = arith.constant 0 : index
    %151 = vector.load %arg9[%c0_126, %c0_127] : memref<128x288xf32, #tpu.memory_space<vmem>>, vector<128x288xf32>
    %cst_128 = arith.constant dense<0.000000e+00> : vector<128x32xf32>
    %152 = tpu.matmul %151, %120, %cst_128 {dimension_numbers = #tpu.dot_dimension_numbers<[1], [0], [0], [1], [0, 0, 1, 1], [], []>} : vector<128x288xf32>, vector<288x32xf32>, vector<128x32xf32> -> vector<128x32xf32>
    %cst_129 = arith.constant 0.000000e+00 : f32
    %153 = vector.broadcast %cst_129 : f32 to vector<128x32xf32>
    %154 = arith.cmpf ogt, %152, %153 : vector<128x32xf32>
    %cst_130 = arith.constant 0.00999999977 : f32
    %155 = vector.broadcast %cst_130 : f32 to vector<128x32xf32>
    %156 = arith.mulf %155, %152 : vector<128x32xf32>
    %157 = arith.select %154, %152, %156 : vector<128x32xi1>, vector<128x32xf32>
    %c4 = arith.constant 4 : index
    %c0_131 = arith.constant 0 : index
    %c0_132 = arith.constant 0 : index
    %158 = vector.load %arg1[%c4, %c0_131, %c0_132] : memref<5x288x32xf32, #tpu.memory_space<vmem>>, vector<1x288x32xf32>
    %159 = vector.shape_cast %158 : vector<1x288x32xf32> to vector<288x32xf32>
    %160 = vector.shape_cast %157 : vector<128x32xf32> to vector<2x8x8x32xf32>
    %c0_133 = arith.constant 0 : index
    %c1_134 = arith.constant 1 : index
    %c1_135 = arith.constant 1 : index
    %c0_136 = arith.constant 0 : index
    %161 = vector.load %arg8[%c0_133, %c1_134, %c1_135, %c0_136] : memref<2x10x10x32xf32, #tpu.memory_space<vmem>>, vector<2x8x8x32xf32>
    tpu.vector_store %arg8[%c0_133, %c1_134, %c1_135, %c0_136], %160 {strides = array<i32>} : memref<2x10x10x32xf32, #tpu.memory_space<vmem>>, vector<2x8x8x32xf32>,
    %c0_137 = arith.constant 0 : index
    %c0_138 = arith.constant 0 : index
    %c0_139 = arith.constant 0 : index
    %c0_140 = arith.constant 0 : index
    %162 = vector.load %arg8[%c0_137, %c0_138, %c0_139, %c0_140] : memref<2x10x10x32xf32, #tpu.memory_space<vmem>>, vector<2x10x10x32xf32>
    %163 = vector.extract_strided_slice %162 {offsets = [0, 0, 0, 0], sizes = [2, 8, 8, 32], strides = [1, 1, 1, 1]} : vector<2x10x10x32xf32> to vector<2x8x8x32xf32>
    %164 = vector.shape_cast %163 : vector<2x8x8x32xf32> to vector<128x32xf32>
    %c0_141 = arith.constant 0 : index
    %c0_142 = arith.constant 0 : index
    %165 = vector.load %arg9[%c0_141, %c0_142] : memref<128x288xf32, #tpu.memory_space<vmem>>, vector<128x32xf32>
    tpu.vector_store %arg9[%c0_141, %c0_142], %164 {strides = array<i32>} : memref<128x288xf32, #tpu.memory_space<vmem>>, vector<128x32xf32>,
    %166 = vector.extract_strided_slice %162 {offsets = [0, 0, 1, 0], sizes = [2, 8, 8, 32], strides = [1, 1, 1, 1]} : vector<2x10x10x32xf32> to vector<2x8x8x32xf32>
    %167 = vector.shape_cast %166 : vector<2x8x8x32xf32> to vector<128x32xf32>
    %c0_143 = arith.constant 0 : index
    %c32_144 = arith.constant 32 : index
    %168 = vector.load %arg9[%c0_143, %c32_144] : memref<128x288xf32, #tpu.memory_space<vmem>>, vector<128x32xf32>
    tpu.vector_store %arg9[%c0_143, %c32_144], %167 {strides = array<i32>} : memref<128x288xf32, #tpu.memory_space<vmem>>, vector<128x32xf32>,
    %169 = vector.extract_strided_slice %162 {offsets = [0, 0, 2, 0], sizes = [2, 8, 8, 32], strides = [1, 1, 1, 1]} : vector<2x10x10x32xf32> to vector<2x8x8x32xf32>
    %170 = vector.shape_cast %169 : vector<2x8x8x32xf32> to vector<128x32xf32>
    %c0_145 = arith.constant 0 : index
    %c64_146 = arith.constant 64 : index
    %171 = vector.load %arg9[%c0_145, %c64_146] : memref<128x288xf32, #tpu.memory_space<vmem>>, vector<128x32xf32>
    tpu.vector_store %arg9[%c0_145, %c64_146], %170 {strides = array<i32>} : memref<128x288xf32, #tpu.memory_space<vmem>>, vector<128x32xf32>,
    %172 = vector.extract_strided_slice %162 {offsets = [0, 1, 0, 0], sizes = [2, 8, 8, 32], strides = [1, 1, 1, 1]} : vector<2x10x10x32xf32> to vector<2x8x8x32xf32>
    %173 = vector.shape_cast %172 : vector<2x8x8x32xf32> to vector<128x32xf32>
    %c0_147 = arith.constant 0 : index
    %c96_148 = arith.constant 96 : index
    %174 = vector.load %arg9[%c0_147, %c96_148] : memref<128x288xf32, #tpu.memory_space<vmem>>, vector<128x32xf32>
    tpu.vector_store %arg9[%c0_147, %c96_148], %173 {strides = array<i32>} : memref<128x288xf32, #tpu.memory_space<vmem>>, vector<128x32xf32>,
    %175 = vector.extract_strided_slice %162 {offsets = [0, 1, 1, 0], sizes = [2, 8, 8, 32], strides = [1, 1, 1, 1]} : vector<2x10x10x32xf32> to vector<2x8x8x32xf32>
    %176 = vector.shape_cast %175 : vector<2x8x8x32xf32> to vector<128x32xf32>
    %c0_149 = arith.constant 0 : index
    %c128_150 = arith.constant 128 : index
    %177 = vector.load %arg9[%c0_149, %c128_150] : memref<128x288xf32, #tpu.memory_space<vmem>>, vector<128x32xf32>
    tpu.vector_store %arg9[%c0_149, %c128_150], %176 {strides = array<i32>} : memref<128x288xf32, #tpu.memory_space<vmem>>, vector<128x32xf32>,
    %178 = vector.extract_strided_slice %162 {offsets = [0, 1, 2, 0], sizes = [2, 8, 8, 32], strides = [1, 1, 1, 1]} : vector<2x10x10x32xf32> to vector<2x8x8x32xf32>
    %179 = vector.shape_cast %178 : vector<2x8x8x32xf32> to vector<128x32xf32>
    %c0_151 = arith.constant 0 : index
    %c160_152 = arith.constant 160 : index
    %180 = vector.load %arg9[%c0_151, %c160_152] : memref<128x288xf32, #tpu.memory_space<vmem>>, vector<128x32xf32>
    tpu.vector_store %arg9[%c0_151, %c160_152], %179 {strides = array<i32>} : memref<128x288xf32, #tpu.memory_space<vmem>>, vector<128x32xf32>,
    %181 = vector.extract_strided_slice %162 {offsets = [0, 2, 0, 0], sizes = [2, 8, 8, 32], strides = [1, 1, 1, 1]} : vector<2x10x10x32xf32> to vector<2x8x8x32xf32>
    %182 = vector.shape_cast %181 : vector<2x8x8x32xf32> to vector<128x32xf32>
    %c0_153 = arith.constant 0 : index
    %c192_154 = arith.constant 192 : index
    %183 = vector.load %arg9[%c0_153, %c192_154] : memref<128x288xf32, #tpu.memory_space<vmem>>, vector<128x32xf32>
    tpu.vector_store %arg9[%c0_153, %c192_154], %182 {strides = array<i32>} : memref<128x288xf32, #tpu.memory_space<vmem>>, vector<128x32xf32>,
    %184 = vector.extract_strided_slice %162 {offsets = [0, 2, 1, 0], sizes = [2, 8, 8, 32], strides = [1, 1, 1, 1]} : vector<2x10x10x32xf32> to vector<2x8x8x32xf32>
    %185 = vector.shape_cast %184 : vector<2x8x8x32xf32> to vector<128x32xf32>
    %c0_155 = arith.constant 0 : index
    %c224_156 = arith.constant 224 : index
    %186 = vector.load %arg9[%c0_155, %c224_156] : memref<128x288xf32, #tpu.memory_space<vmem>>, vector<128x32xf32>
    tpu.vector_store %arg9[%c0_155, %c224_156], %185 {strides = array<i32>} : memref<128x288xf32, #tpu.memory_space<vmem>>, vector<128x32xf32>,
    %187 = vector.extract_strided_slice %162 {offsets = [0, 2, 2, 0], sizes = [2, 8, 8, 32], strides = [1, 1, 1, 1]} : vector<2x10x10x32xf32> to vector<2x8x8x32xf32>
    %188 = vector.shape_cast %187 : vector<2x8x8x32xf32> to vector<128x32xf32>
    %c0_157 = arith.constant 0 : index
    %c256_158 = arith.constant 256 : index
    %189 = vector.load %arg9[%c0_157, %c256_158] : memref<128x288xf32, #tpu.memory_space<vmem>>, vector<128x32xf32>
    tpu.vector_store %arg9[%c0_157, %c256_158], %188 {strides = array<i32>} : memref<128x288xf32, #tpu.memory_space<vmem>>, vector<128x32xf32>,
    %c0_159 = arith.constant 0 : index
    %c0_160 = arith.constant 0 : index
    %190 = vector.load %arg9[%c0_159, %c0_160] : memref<128x288xf32, #tpu.memory_space<vmem>>, vector<128x288xf32>
    %cst_161 = arith.constant dense<0.000000e+00> : vector<128x32xf32>
    %191 = tpu.matmul %190, %159, %cst_161 {dimension_numbers = #tpu.dot_dimension_numbers<[1], [0], [0], [1], [0, 0, 1, 1], [], []>} : vector<128x288xf32>, vector<288x32xf32>, vector<128x32xf32> -> vector<128x32xf32>
    %192 = arith.addf %191, %118 : vector<128x32xf32>
    %cst_162 = arith.constant 0.000000e+00 : f32
    %193 = vector.broadcast %cst_162 : f32 to vector<128x32xf32>
    %194 = arith.cmpf ogt, %192, %193 : vector<128x32xf32>
    %cst_163 = arith.constant 0.00999999977 : f32
    %195 = vector.broadcast %cst_163 : f32 to vector<128x32xf32>
    %196 = arith.mulf %195, %192 : vector<128x32xf32>
    %197 = arith.select %194, %192, %196 : vector<128x32xi1>, vector<128x32xf32>
    %c0_164 = arith.constant 0 : index
    %c0_165 = arith.constant 0 : index
    %198 = vector.load %arg2[%c0_164, %c0_165] : memref<32x2xf32, #tpu.memory_space<vmem>>, vector<32x2xf32>
    %cst_166 = arith.constant dense<0.000000e+00> : vector<128x2xf32>
    %199 = tpu.matmul %197, %198, %cst_166 {dimension_numbers = #tpu.dot_dimension_numbers<[1], [0], [0], [1], [0, 0, 1, 1], [], []>} : vector<128x32xf32>, vector<32x2xf32>, vector<128x2xf32> -> vector<128x2xf32>
    %cst_167 = arith.constant 0.000000e+00 : f32
    %200 = vector.broadcast %cst_167 : f32 to vector<128x2xf32>
    %201 = arith.maximumf %199, %200 : vector<128x2xf32>
    %202 = vector.extract_strided_slice %201 {offsets = [0, 0], sizes = [128, 1], strides = [1, 1]} : vector<128x2xf32> to vector<128x1xf32>
    %c0_168 = arith.constant 0 : index
    %c0_169 = arith.constant 0 : index
    %203 = vector.load %arg3[%c0_168, %c0_169] : memref<128x512xf32, #tpu.memory_space<vmem>>, vector<128x512xf32>
    %204 = vector.broadcast %202 : vector<128x1xf32> to vector<128x512xf32>
    %205 = arith.mulf %204, %203 : vector<128x512xf32>
    %206 = vector.extract_strided_slice %201 {offsets = [0, 1], sizes = [128, 1], strides = [1, 1]} : vector<128x2xf32> to vector<128x1xf32>
    %c0_170 = arith.constant 0 : index
    %c0_171 = arith.constant 0 : index
    %207 = vector.load %arg4[%c0_170, %c0_171] : memref<128x512xf32, #tpu.memory_space<vmem>>, vector<128x512xf32>
    %208 = vector.broadcast %206 : vector<128x1xf32> to vector<128x512xf32>
    %209 = arith.mulf %208, %207 : vector<128x512xf32>
    %210 = arith.addf %205, %209 : vector<128x512xf32>
    %c0_172 = arith.constant 0 : index
    %c0_173 = arith.constant 0 : index
    %211 = vector.load %arg5[%c0_172, %c0_173] : memref<2x128xf32, #tpu.memory_space<vmem>>, vector<2x128xf32>
    %cst_174 = arith.constant dense<0.000000e+00> : vector<2x512xf32>
    %212 = tpu.matmul %211, %210, %cst_174 {dimension_numbers = #tpu.dot_dimension_numbers<[1], [0], [0], [1], [0, 0, 1, 1], [], []>} : vector<2x128xf32>, vector<128x512xf32>, vector<2x512xf32> -> vector<2x512xf32>
    %c0_175 = arith.constant 0 : index
    %c0_176 = arith.constant 0 : index
    %213 = vector.load %arg6[%c0_175, %c0_176] : memref<1x512xf32, #tpu.memory_space<vmem>>, vector<1x512xf32>
    %214 = vector.broadcast %213 : vector<1x512xf32> to vector<2x512xf32>
    %215 = arith.addf %212, %214 : vector<2x512xf32>
    %c0_177 = arith.constant 0 : index
    %c0_178 = arith.constant 0 : index
    %216 = vector.load %arg7[%c0_177, %c0_178] : memref<2x512xf32, #tpu.memory_space<vmem>>, vector<2x512xf32>
    tpu.vector_store %arg7[%c0_177, %c0_178], %215 {strides = array<i32>} : memref<2x512xf32, #tpu.memory_space<vmem>>, vector<2x512xf32>,
    return
  }
}

</mosaic_0001>

<llo_original>
// kernel: icm_forward.1
$region0: #{icm_forward.1}
  #allocation0 [shape = 'u32[]', space=smem, size = 0x4, offset = 0x4, fixed_abs, tag = 'smem constant byte address 0x4 - core index']
  #allocation1 [shape = 'u32[144,128]{1,0:T(1,128)}', space=vmem, size = 0x12000, scoped, tag = 'internal scratch']
  #allocation2 [shape = 'f32[2,10,10,32]{3,2,1,0:T(8,128)}', space=vmem, size = 0x28000, scoped, tag = 'scratch operand']
  #allocation3 [shape = 'f32[128,288]{1,0:T(8,128)}', space=vmem, size = 0x30000, scoped, tag = 'scratch operand']
  %s0 = inlined_call_operand.vmem [shape: f32[2,8,8,32], index: 0, kind: input, shape index: {}]
  %s1 = inlined_call_operand.vmem [shape: f32[5,288,32], index: 1, kind: input, shape index: {}]
  %s2 = inlined_call_operand.vmem [shape: f32[32,2], index: 2, kind: input, shape index: {}]
  %s3 = inlined_call_operand.vmem [shape: f32[128,512], index: 3, kind: input, shape index: {}]
  %s4 = inlined_call_operand.vmem [shape: f32[128,512], index: 4, kind: input, shape index: {}]
  %s5 = inlined_call_operand.vmem [shape: f32[2,128], index: 5, kind: input, shape index: {}]
  %s6 = inlined_call_operand.vmem [shape: f32[1,512], index: 6, kind: input, shape index: {}]
  %s7 = inlined_call_operand.hbm [shape: f32[2,512], index: 7, kind: output, shape index: {}]
  %s8 = sld [smem:[#allocation0]]
  $region38: #{icm_forward.1} parent=0
    _
  %s10 = ssub.s32 1, %s8
  %s11 = scalar_select 0, %s10, %s8
  $region1: #{icm_forward.1} parent=0
    #allocation4 [shape = 'u8[4096]{0}', space=vmem, size = 0x1000, scoped, tag = 'output window, operand 0, single buffered']
    #allocation5 [shape = 's32[1]{0}', space=sflag, size = 0x4, scoped, tag = 'scoped memory for icm_forward.1']
    %12 = vsyncpa [#allocation5], 0
    // Predicated region
    $region2: #{icm_forward.1} parent=1 // pred_check
      _
    $region3: #{icm_forward.1} parent=1 // pred_check_branch
      %14 = sbr.rel (0) target = $region5
    $region4: #{icm_forward.1} parent=1 // pred_region
      _
    $region5: #{icm_forward.1} parent=1 // pred_fallthru
      _
    // Predicated region
    $region6: #{icm_forward.1} parent=1 // pred_check
      _
    $region7: #{icm_forward.1} parent=1 // pred_check_branch
      %16 = sbr.rel (0) target = $region9
    $region8: #{icm_forward.1} parent=1 // pred_region
      _
    $region9: #{icm_forward.1} parent=1 // pred_fallthru
      _
    // Predicated region
    $region10: #{icm_forward.1} parent=1 // pred_check
      _
    $region11: #{icm_forward.1} parent=1 // pred_check_branch
      %18 = sbr.rel (0) target = $region13
    $region12: #{icm_forward.1} parent=1 // pred_region
      _
    $region13: #{icm_forward.1} parent=1 // pred_fallthru
      _
    // Predicated region
    $region14: #{icm_forward.1} parent=1 // pred_check
      _
    $region15: #{icm_forward.1} parent=1 // pred_check_branch
      %20 = sbr.rel (0) target = $region17
    $region16: #{icm_forward.1} parent=1 // pred_region
      _
    $region17: #{icm_forward.1} parent=1 // pred_fallthru
      _
    // Predicated region
    $region18: #{icm_forward.1} parent=1 // pred_check
      _
    $region19: #{icm_forward.1} parent=1 // pred_check_branch
      %22 = sbr.rel (0) target = $region21
    $region20: #{icm_forward.1} parent=1 // pred_region
      _
    $region21: #{icm_forward.1} parent=1 // pred_fallthru
      _
    // Predicated region
    $region22: #{icm_forward.1} parent=1 // pred_check
      _
    $region23: #{icm_forward.1} parent=1 // pred_check_branch
      %24 = sbr.rel (0) target = $region25
    $region24: #{icm_forward.1} parent=1 // pred_region
      _
    $region25: #{icm_forward.1} parent=1 // pred_fallthru
      _
    // Predicated region
    $region26: #{icm_forward.1} parent=1 // pred_check
      _
    $region27: #{icm_forward.1} parent=1 // pred_check_branch
      %26 = sbr.rel (0) target = $region29
    $region28: #{icm_forward.1} parent=1 // pred_region
      _
    $region29: #{icm_forward.1} parent=1 // pred_fallthru
      _
    %vm27 = vcmask 261120
    %28 = vst.msk [vmem:[#allocation2] sm:$0xff] %vm27, 0.0
    %vm29 = vcmask 254976
    %30 = vst.msk [vmem:[#allocation2 + $0x8] sm:$0x3] %vm29, 0.0
    %31 = vst.msk [vmem:[#allocation2 + $0x10] sm:$0xff] %vm27, 0.0
    %32 = vst.msk [vmem:[#allocation2 + $0x18] sm:$0x3] %vm29, 0.0
    %33 = vst.msk [vmem:[#allocation2 + $0x20] sm:$0xff] %vm27, 0.0
    %34 = vst.msk [vmem:[#allocation2 + $0x28] sm:$0x3] %vm29, 0.0
    %35 = vst.msk [vmem:[#allocation2 + $0x30] sm:$0xff] %vm27, 0.0
    %36 = vst.msk [vmem:[#allocation2 + $0x38] sm:$0x3] %vm29, 0.0
    %37 = vst.msk [vmem:[#allocation2 + $0x40] sm:$0xff] %vm27, 0.0
    %38 = vst.msk [vmem:[#allocation2 + $0x48] sm:$0x3] %vm29, 0.0
    %39 = vst.msk [vmem:[#allocation2 + $0x50] sm:$0xff] %vm27, 0.0
    %40 = vst.msk [vmem:[#allocation2 + $0x58] sm:$0x3] %vm29, 0.0
    %41 = vst.msk [vmem:[#allocation2 + $0x60] sm:$0xff] %vm27, 0.0
    %42 = vst.msk [vmem:[#allocation2 + $0x68] sm:$0x3] %vm29, 0.0
    %43 = vst.msk [vmem:[#allocation2 + $0x70] sm:$0xff] %vm27, 0.0
    %44 = vst.msk [vmem:[#allocation2 + $0x78] sm:$0x3] %vm29, 0.0
    %45 = vst.msk [vmem:[#allocation2 + $0x80] sm:$0xff] %vm27, 0.0
    %46 = vst.msk [vmem:[#allocation2 + $0x88] sm:$0x3] %vm29, 0.0
    %47 = vst.msk [vmem:[#allocation2 + $0x90] sm:$0xff] %vm27, 0.0
    %48 = vst.msk [vmem:[#allocation2 + $0x98] sm:$0x3] %vm29, 0.0
    %49 = vst.msk [vmem:[#allocation2 + $0xa0] sm:$0xff] %vm27, 0.0
    %50 = vst.msk [vmem:[#allocation2 + $0xa8] sm:$0x3] %vm29, 0.0
    %51 = vst.msk [vmem:[#allocation2 + $0xb0] sm:$0xff] %vm27, 0.0
    %52 = vst.msk [vmem:[#allocation2 + $0xb8] sm:$0x3] %vm29, 0.0
    %53 = vst.msk [vmem:[#allocation2 + $0xc0] sm:$0xff] %vm27, 0.0
    %54 = vst.msk [vmem:[#allocation2 + $0xc8] sm:$0x3] %vm29, 0.0
    %55 = vst.msk [vmem:[#allocation2 + $0xd0] sm:$0xff] %vm27, 0.0
    %56 = vst.msk [vmem:[#allocation2 + $0xd8] sm:$0x3] %vm29, 0.0
    %57 = vst.msk [vmem:[#allocation2 + $0xe0] sm:$0xff] %vm27, 0.0
    %58 = vst.msk [vmem:[#allocation2 + $0xe8] sm:$0x3] %vm29, 0.0
    %59 = vst.msk [vmem:[#allocation2 + $0xf0] sm:$0xff] %vm27, 0.0
    %60 = vst.msk [vmem:[#allocation2 + $0xf8] sm:$0x3] %vm29, 0.0
    %61 = vst.msk [vmem:[#allocation2 + $0x100] sm:$0xff] %vm27, 0.0
    %62 = vst.msk [vmem:[#allocation2 + $0x108] sm:$0x3] %vm29, 0.0
    %63 = vst.msk [vmem:[#allocation2 + $0x110] sm:$0xff] %vm27, 0.0
    %64 = vst.msk [vmem:[#allocation2 + $0x118] sm:$0x3] %vm29, 0.0
    %65 = vst.msk [vmem:[#allocation2 + $0x120] sm:$0xff] %vm27, 0.0
    %66 = vst.msk [vmem:[#allocation2 + $0x128] sm:$0x3] %vm29, 0.0
    %67 = vst.msk [vmem:[#allocation2 + $0x130] sm:$0xff] %vm27, 0.0
    %68 = vst.msk [vmem:[#allocation2 + $0x138] sm:$0x3] %vm29, 0.0
    %v69 = vld [vmem:[%s0] sm:$0xff]
    %v70 = vld [vmem:[%s0 + $0x8] sm:$0xff]
    %v71 = vld [vmem:[%s0 + $0x10] sm:$0xff]
    %v72 = vld [vmem:[%s0 + $0x18] sm:$0xff]
    %v73 = vld [vmem:[%s0 + $0x20] sm:$0xff]
    %v74 = vld [vmem:[%s0 + $0x28] sm:$0xff]
    %v75 = vld [vmem:[%s0 + $0x30] sm:$0xff]
    %v76 = vld [vmem:[%s0 + $0x38] sm:$0xff]
    %v77 = vld [vmem:[%s0 + $0x40] sm:$0xff]
    %v78 = vld [vmem:[%s0 + $0x48] sm:$0xff]
    %v79 = vld [vmem:[%s0 + $0x50] sm:$0xff]
    %v80 = vld [vmem:[%s0 + $0x58] sm:$0xff]
    %v81 = vld [vmem:[%s0 + $0x60] sm:$0xff]
    %v82 = vld [vmem:[%s0 + $0x68] sm:$0xff]
    %v83 = vld [vmem:[%s0 + $0x70] sm:$0xff]
    %v84 = vld [vmem:[%s0 + $0x78] sm:$0xff]
    %v85 = vld [vmem:[%s1] sm:$0xff]
    %v86 = vld [vmem:[%s1 + $0x8] sm:$0xff]
    %v87 = vld [vmem:[%s1 + $0x10] sm:$0xff]
    %v88 = vld [vmem:[%s1 + $0x18] sm:$0xff]
    %v89 = vld [vmem:[%s1 + $0x20] sm:$0xff]
    %v90 = vld [vmem:[%s1 + $0x28] sm:$0xff]
    %v91 = vld [vmem:[%s1 + $0x30] sm:$0xff]
    %v92 = vld [vmem:[%s1 + $0x38] sm:$0xff]
    %v93 = vld [vmem:[%s1 + $0x40] sm:$0xff]
    %v94 = vld [vmem:[%s1 + $0x48] sm:$0xff]
    %v95 = vld [vmem:[%s1 + $0x50] sm:$0xff]
    %v96 = vld [vmem:[%s1 + $0x58] sm:$0xff]
    %v97 = vld [vmem:[%s1 + $0x60] sm:$0xff]
    %v98 = vld [vmem:[%s1 + $0x68] sm:$0xff]
    %v99 = vld [vmem:[%s1 + $0x70] sm:$0xff]
    %v100 = vld [vmem:[%s1 + $0x78] sm:$0xff]
    %v101 = vld [vmem:[%s1 + $0x80] sm:$0xff]
    %v102 = vld [vmem:[%s1 + $0x88] sm:$0xff]
    %v103 = vld [vmem:[%s1 + $0x90] sm:$0xff]
    %v104 = vld [vmem:[%s1 + $0x98] sm:$0xff]
    %v105 = vld [vmem:[%s1 + $0xa0] sm:$0xff]
    %v106 = vld [vmem:[%s1 + $0xa8] sm:$0xff]
    %v107 = vld [vmem:[%s1 + $0xb0] sm:$0xff]
    %v108 = vld [vmem:[%s1 + $0xb8] sm:$0xff]
    %v109 = vld [vmem:[%s1 + $0xc0] sm:$0xff]
    %v110 = vld [vmem:[%s1 + $0xc8] sm:$0xff]
    %v111 = vld [vmem:[%s1 + $0xd0] sm:$0xff]
    %v112 = vld [vmem:[%s1 + $0xd8] sm:$0xff]
    %v113 = vld [vmem:[%s1 + $0xe0] sm:$0xff]
    %v114 = vld [vmem:[%s1 + $0xe8] sm:$0xff]
    %v115 = vld [vmem:[%s1 + $0xf0] sm:$0xff]
    %v116 = vld [vmem:[%s1 + $0xf8] sm:$0xff]
    %v117 = vld [vmem:[%s1 + $0x100] sm:$0xff]
    %v118 = vld [vmem:[%s1 + $0x108] sm:$0xff]
    %v119 = vld [vmem:[%s1 + $0x110] sm:$0xff]
    %v120 = vld [vmem:[%s1 + $0x118] sm:$0xff]
    %s121 = scalar_lea.vmem [#allocation2], 16
    %122 = vst.msk [vmem:[%s121 + $0x1] sm:$0xff] %vm27, %v69
    %123 = vst.msk [vmem:[%s121 + $0x11] sm:$0xff] %vm27, %v70
    %124 = vst.msk [vmem:[%s121 + $0x21] sm:$0xff] %vm27, %v71
    %125 = vst.msk [vmem:[%s121 + $0x31] sm:$0xff] %vm27, %v72
    %126 = vst.msk [vmem:[%s121 + $0x41] sm:$0xff] %vm27, %v73
    %127 = vst.msk [vmem:[%s121 + $0x51] sm:$0xff] %vm27, %v74
    %128 = vst.msk [vmem:[%s121 + $0x61] sm:$0xff] %vm27, %v75
    %129 = vst.msk [vmem:[%s121 + $0x71] sm:$0xff] %vm27, %v76
    %130 = vst.msk [vmem:[%s121 + $0xa1] sm:$0xff] %vm27, %v77
    %131 = vst.msk [vmem:[%s121 + $0xb1] sm:$0xff] %vm27, %v78
    %132 = vst.msk [vmem:[%s121 + $0xc1] sm:$0xff] %vm27, %v79
    %133 = vst.msk [vmem:[%s121 + $0xd1] sm:$0xff] %vm27, %v80
    %134 = vst.msk [vmem:[%s121 + $0xe1] sm:$0xff] %vm27, %v81
    %135 = vst.msk [vmem:[%s121 + $0xf1] sm:$0xff] %vm27, %v82
    %136 = vst.msk [vmem:[%s121 + $0x101] sm:$0xff] %vm27, %v83
    %137 = vst.msk [vmem:[%s121 + $0x111] sm:$0xff] %vm27, %v84
    %v138 = vld [vmem:[#allocation2] sm:$0xff]
    %v139 = vld [vmem:[#allocation2 + $0x8] sm:$0x3]
    %v140 = vld [vmem:[#allocation2 + $0x10] sm:$0xff]
    %v141 = vld [vmem:[#allocation2 + $0x18] sm:$0x3]
    %v142 = vld [vmem:[#allocation2 + $0x20] sm:$0xff]
    %v143 = vld [vmem:[#allocation2 + $0x28] sm:$0x3]
    %v144 = vld [vmem:[#allocation2 + $0x30] sm:$0xff]
    %v145 = vld [vmem:[#allocation2 + $0x38] sm:$0x3]
    %v146 = vld [vmem:[#allocation2 + $0x40] sm:$0xff]
    %v147 = vld [vmem:[#allocation2 + $0x48] sm:$0x3]
    %v148 = vld [vmem:[#allocation2 + $0x50] sm:$0xff]
    %v149 = vld [vmem:[#allocation2 + $0x58] sm:$0x3]
    %v150 = vld [vmem:[#allocation2 + $0x60] sm:$0xff]
    %v151 = vld [vmem:[#allocation2 + $0x68] sm:$0x3]
    %v152 = vld [vmem:[#allocation2 + $0x70] sm:$0xff]
    %v153 = vld [vmem:[#allocation2 + $0x78] sm:$0x3]
    %v154 = vld [vmem:[#allocation2 + $0x80] sm:$0xff]
    %v155 = vld [vmem:[#allocation2 + $0x88] sm:$0x3]
    %v156 = vld [vmem:[#allocation2 + $0x90] sm:$0xff]
    %v157 = vld [vmem:[#allocation2 + $0x98] sm:$0x3]
    %v158 = vld [vmem:[#allocation2 + $0xa0] sm:$0xff]
    %v159 = vld [vmem:[#allocation2 + $0xa8] sm:$0x3]
    %v160 = vld [vmem:[#allocation2 + $0xb0] sm:$0xff]
    %v161 = vld [vmem:[#allocation2 + $0xb8] sm:$0x3]
    %v162 = vld [vmem:[#allocation2 + $0xc0] sm:$0xff]
    %v163 = vld [vmem:[#allocation2 + $0xc8] sm:$0x3]
    %v164 = vld [vmem:[#allocation2 + $0xd0] sm:$0xff]
    %v165 = vld [vmem:[#allocation2 + $0xd8] sm:$0x3]
    %v166 = vld [vmem:[#allocation2 + $0xe0] sm:$0xff]
    %v167 = vld [vmem:[#allocation2 + $0xe8] sm:$0x3]
    %v168 = vld [vmem:[#allocation2 + $0xf0] sm:$0xff]
    %v169 = vld [vmem:[#allocation2 + $0xf8] sm:$0x3]
    %v170 = vld [vmem:[#allocation2 + $0x100] sm:$0xff]
    %v171 = vld [vmem:[#allocation2 + $0x108] sm:$0x3]
    %v172 = vld [vmem:[#allocation2 + $0x110] sm:$0xff]
    %v173 = vld [vmem:[#allocation2 + $0x118] sm:$0x3]
    %v174 = vld [vmem:[#allocation2 + $0x120] sm:$0xff]
    %v175 = vld [vmem:[#allocation2 + $0x128] sm:$0x3]
    %v176 = vld [vmem:[#allocation2 + $0x130] sm:$0xff]
    %v177 = vld [vmem:[#allocation2 + $0x138] sm:$0x3]
    %178 = vst.msk [vmem:[#allocation3] sm:$0xff] %vm27, %v138
    %179 = vst.msk [vmem:[#allocation3 + $0x18] sm:$0xff] %vm27, %v140
    %180 = vst.msk [vmem:[#allocation3 + $0x30] sm:$0xff] %vm27, %v142
    %181 = vst.msk [vmem:[#allocation3 + $0x48] sm:$0xff] %vm27, %v144
    %182 = vst.msk [vmem:[#allocation3 + $0x60] sm:$0xff] %vm27, %v146
    %183 = vst.msk [vmem:[#allocation3 + $0x78] sm:$0xff] %vm27, %v148
    %184 = vst.msk [vmem:[#allocation3 + $0x90] sm:$0xff] %vm27, %v150
    %185 = vst.msk [vmem:[#allocation3 + $0xa8] sm:$0xff] %vm27, %v152
    %186 = vst.msk [vmem:[#allocation3 + $0xc0] sm:$0xff] %vm27, %v158
    %187 = vst.msk [vmem:[#allocation3 + $0xd8] sm:$0xff] %vm27, %v160
    %188 = vst.msk [vmem:[#allocation3 + $0xf0] sm:$0xff] %vm27, %v162
    %189 = vst.msk [vmem:[#allocation3 + $0x108] sm:$0xff] %vm27, %v164
    %190 = vst.msk [vmem:[#allocation3 + $0x120] sm:$0xff] %vm27, %v166
    %191 = vst.msk [vmem:[#allocation3 + $0x138] sm:$0xff] %vm27, %v168
    %192 = vst.msk [vmem:[#allocation3 + $0x150] sm:$0xff] %vm27, %v170
    %193 = vst.msk [vmem:[#allocation3 + $0x168] sm:$0xff] %vm27, %v172
    %vm226 = vcmask 1046528
    %v227 = vrot.slane %v138, 1
    %v228 = vrot.slane %v139, 1
    %v229 = vsel %vm226, %v227, %v228
    %v230 = vrot.slane %v140, 1
    %v231 = vrot.slane %v141, 1
    %v232 = vsel %vm226, %v230, %v231
    %v233 = vrot.slane %v142, 1
    %v234 = vrot.slane %v143, 1
    %v235 = vsel %vm226, %v233, %v234
    %v236 = vrot.slane %v144, 1
    %v237 = vrot.slane %v145, 1
    %v238 = vsel %vm226, %v236, %v237
    %v239 = vrot.slane %v146, 1
    %v240 = vrot.slane %v147, 1
    %v241 = vsel %vm226, %v239, %v240
    %v242 = vrot.slane %v148, 1
    %v243 = vrot.slane %v149, 1
    %v244 = vsel %vm226, %v242, %v243
    %v245 = vrot.slane %v150, 1
    %v246 = vrot.slane %v151, 1
    %v247 = vsel %vm226, %v245, %v246
    %v248 = vrot.slane %v152, 1
    %v249 = vrot.slane %v153, 1
    %v250 = vsel %vm226, %v248, %v249
    %v251 = vrot.slane %v158, 1
    %v252 = vrot.slane %v159, 1
    %v253 = vsel %vm226, %v251, %v252
    %v254 = vrot.slane %v160, 1
    %v255 = vrot.slane %v161, 1
    %v256 = vsel %vm226, %v254, %v255
    %v257 = vrot.slane %v162, 1
    %v258 = vrot.slane %v163, 1
    %v259 = vsel %vm226, %v257, %v258
    %v260 = vrot.slane %v164, 1
    %v261 = vrot.slane %v165, 1
    %v262 = vsel %vm226, %v260, %v261
    %v263 = vrot.slane %v166, 1
    %v264 = vrot.slane %v167, 1
    %v265 = vsel %vm226, %v263, %v264
    %v266 = vrot.slane %v168, 1
    %v267 = vrot.slane %v169, 1
    %v268 = vsel %vm226, %v266, %v267
    %v269 = vrot.slane %v170, 1
    %v270 = vrot.slane %v171, 1
    %v271 = vsel %vm226, %v269, %v270
    %v272 = vrot.slane %v172, 1
    %v273 = vrot.slane %v173, 1
    %v274 = vsel %vm226, %v272, %v273
    %275 = vrot.lane.b32.xlu0 %v229, 32
    %v276 = vpop.permute.xlu0 %275
    %277 = vrot.lane.b32.xlu0 %v232, 32
    %v278 = vpop.permute.xlu0 %277
    %279 = vrot.lane.b32.xlu0 %v235, 32
    %v280 = vpop.permute.xlu0 %279
    %281 = vrot.lane.b32.xlu0 %v238, 32
    %v282 = vpop.permute.xlu0 %281
    %283 = vrot.lane.b32.xlu0 %v241, 32
    %v284 = vpop.permute.xlu0 %283
    %285 = vrot.lane.b32.xlu0 %v244, 32
    %v286 = vpop.permute.xlu0 %285
    %287 = vrot.lane.b32.xlu0 %v247, 32
    %v288 = vpop.permute.xlu0 %287
    %289 = vrot.lane.b32.xlu0 %v250, 32
    %v290 = vpop.permute.xlu0 %289
    %291 = vrot.lane.b32.xlu0 %v253, 32
    %v292 = vpop.permute.xlu0 %291
    %293 = vrot.lane.b32.xlu0 %v256, 32
    %v294 = vpop.permute.xlu0 %293
    %295 = vrot.lane.b32.xlu0 %v259, 32
    %v296 = vpop.permute.xlu0 %295
    %297 = vrot.lane.b32.xlu0 %v262, 32
    %v298 = vpop.permute.xlu0 %297
    %299 = vrot.lane.b32.xlu0 %v265, 32
    %v300 = vpop.permute.xlu0 %299
    %301 = vrot.lane.b32.xlu0 %v268, 32
    %v302 = vpop.permute.xlu0 %301
    %303 = vrot.lane.b32.xlu0 %v271, 32
    %v304 = vpop.permute.xlu0 %303
    %305 = vrot.lane.b32.xlu0 %v274, 32
    %v306 = vpop.permute.xlu0 %305
    %vm323 = vcmask 523520
    %324 = vst.msk [vmem:[#allocation3] sm:$0xff] %vm323, %v276
    %325 = vst.msk [vmem:[#allocation3 + $0x18] sm:$0xff] %vm323, %v278
    %326 = vst.msk [vmem:[#allocation3 + $0x30] sm:$0xff] %vm323, %v280
    %327 = vst.msk [vmem:[#allocation3 + $0x48] sm:$0xff] %vm323, %v282
    %328 = vst.msk [vmem:[#allocation3 + $0x60] sm:$0xff] %vm323, %v284
    %329 = vst.msk [vmem:[#allocation3 + $0x78] sm:$0xff] %vm323, %v286
    %330 = vst.msk [vmem:[#allocation3 + $0x90] sm:$0xff] %vm323, %v288
    %331 = vst.msk [vmem:[#allocation3 + $0xa8] sm:$0xff] %vm323, %v290
    %332 = vst.msk [vmem:[#allocation3 + $0xc0] sm:$0xff] %vm323, %v292
    %333 = vst.msk [vmem:[#allocation3 + $0xd8] sm:$0xff] %vm323, %v294
    %334 = vst.msk [vmem:[#allocation3 + $0xf0] sm:$0xff] %vm323, %v296
    %335 = vst.msk [vmem:[#allocation3 + $0x108] sm:$0xff] %vm323, %v298
    %336 = vst.msk [vmem:[#allocation3 + $0x120] sm:$0xff] %vm323, %v300
    %337 = vst.msk [vmem:[#allocation3 + $0x138] sm:$0xff] %vm323, %v302
    %338 = vst.msk [vmem:[#allocation3 + $0x150] sm:$0xff] %vm323, %v304
    %339 = vst.msk [vmem:[#allocation3 + $0x168] sm:$0xff] %vm323, %v306
    %vm340 = vcmask 1045504
    %v341 = vrot.slane %v138, 2
    %v342 = vrot.slane %v139, 2
    %v343 = vsel %vm340, %v341, %v342
    %v344 = vrot.slane %v140, 2
    %v345 = vrot.slane %v141, 2
    %v346 = vsel %vm340, %v344, %v345
    %v347 = vrot.slane %v142, 2
    %v348 = vrot.slane %v143, 2
    %v349 = vsel %vm340, %v347, %v348
    %v350 = vrot.slane %v144, 2
    %v351 = vrot.slane %v145, 2
    %v352 = vsel %vm340, %v350, %v351
    %v353 = vrot.slane %v146, 2
    %v354 = vrot.slane %v147, 2
    %v355 = vsel %vm340, %v353, %v354
    %v356 = vrot.slane %v148, 2
    %v357 = vrot.slane %v149, 2
    %v358 = vsel %vm340, %v356, %v357
    %v359 = vrot.slane %v150, 2
    %v360 = vrot.slane %v151, 2
    %v361 = vsel %vm340, %v359, %v360
    %v362 = vrot.slane %v152, 2
    %v363 = vrot.slane %v153, 2
    %v364 = vsel %vm340, %v362, %v363
    %v365 = vrot.slane %v158, 2
    %v366 = vrot.slane %v159, 2
    %v367 = vsel %vm340, %v365, %v366
    %v368 = vrot.slane %v160, 2
    %v369 = vrot.slane %v161, 2
    %v370 = vsel %vm340, %v368, %v369
    %v371 = vrot.slane %v162, 2
    %v372 = vrot.slane %v163, 2
    %v373 = vsel %vm340, %v371, %v372
    %v374 = vrot.slane %v164, 2
    %v375 = vrot.slane %v165, 2
    %v376 = vsel %vm340, %v374, %v375
    %v377 = vrot.slane %v166, 2
    %v378 = vrot.slane %v167, 2
    %v379 = vsel %vm340, %v377, %v378
    %v380 = vrot.slane %v168, 2
    %v381 = vrot.slane %v169, 2
    %v382 = vsel %vm340, %v380, %v381
    %v383 = vrot.slane %v170, 2
    %v384 = vrot.slane %v171, 2
    %v385 = vsel %vm340, %v383, %v384
    %v386 = vrot.slane %v172, 2
    %v387 = vrot.slane %v173, 2
    %v388 = vsel %vm340, %v386, %v387
    %389 = vrot.lane.b32.xlu0 %v343, 64
    %v390 = vpop.permute.xlu0 %389
    %391 = vrot.lane.b32.xlu0 %v346, 64
    %v392 = vpop.permute.xlu0 %391
    %393 = vrot.lane.b32.xlu0 %v349, 64
    %v394 = vpop.permute.xlu0 %393
    %395 = vrot.lane.b32.xlu0 %v352, 64
    %v396 = vpop.permute.xlu0 %395
    %397 = vrot.lane.b32.xlu0 %v355, 64
    %v398 = vpop.permute.xlu0 %397
    %399 = vrot.lane.b32.xlu0 %v358, 64
    %v400 = vpop.permute.xlu0 %399
    %401 = vrot.lane.b32.xlu0 %v361, 64
    %v402 = vpop.permute.xlu0 %401
    %403 = vrot.lane.b32.xlu0 %v364, 64
    %v404 = vpop.permute.xlu0 %403
    %405 = vrot.lane.b32.xlu0 %v367, 64
    %v406 = vpop.permute.xlu0 %405
    %407 = vrot.lane.b32.xlu0 %v370, 64
    %v408 = vpop.permute.xlu0 %407
    %409 = vrot.lane.b32.xlu0 %v373, 64
    %v410 = vpop.permute.xlu0 %409
    %411 = vrot.lane.b32.xlu0 %v376, 64
    %v412 = vpop.permute.xlu0 %411
    %413 = vrot.lane.b32.xlu0 %v379, 64
    %v414 = vpop.permute.xlu0 %413
    %415 = vrot.lane.b32.xlu0 %v382, 64
    %v416 = vpop.permute.xlu0 %415
    %417 = vrot.lane.b32.xlu0 %v385, 64
    %v418 = vpop.permute.xlu0 %417
    %419 = vrot.lane.b32.xlu0 %v388, 64
    %v420 = vpop.permute.xlu0 %419
    %vm437 = vcmask 785920
    %438 = vst.msk [vmem:[#allocation3] sm:$0xff] %vm437, %v390
    %439 = vst.msk [vmem:[#allocation3 + $0x18] sm:$0xff] %vm437, %v392
    %440 = vst.msk [vmem:[#allocation3 + $0x30] sm:$0xff] %vm437, %v394
    %441 = vst.msk [vmem:[#allocation3 + $0x48] sm:$0xff] %vm437, %v396
    %442 = vst.msk [vmem:[#allocation3 + $0x60] sm:$0xff] %vm437, %v398
    %443 = vst.msk [vmem:[#allocation3 + $0x78] sm:$0xff] %vm437, %v400
    %444 = vst.msk [vmem:[#allocation3 + $0x90] sm:$0xff] %vm437, %v402
    %445 = vst.msk [vmem:[#allocation3 + $0xa8] sm:$0xff] %vm437, %v404
    %446 = vst.msk [vmem:[#allocation3 + $0xc0] sm:$0xff] %vm437, %v406
    %447 = vst.msk [vmem:[#allocation3 + $0xd8] sm:$0xff] %vm437, %v408
    %448 = vst.msk [vmem:[#allocation3 + $0xf0] sm:$0xff] %vm437, %v410
    %449 = vst.msk [vmem:[#allocation3 + $0x108] sm:$0xff] %vm437, %v412
    %450 = vst.msk [vmem:[#allocation3 + $0x120] sm:$0xff] %vm437, %v414
    %451 = vst.msk [vmem:[#allocation3 + $0x138] sm:$0xff] %vm437, %v416
    %452 = vst.msk [vmem:[#allocation3 + $0x150] sm:$0xff] %vm437, %v418
    %453 = vst.msk [vmem:[#allocation3 + $0x168] sm:$0xff] %vm437, %v420
    %456 = vrot.lane.b32.xlu0 %v140, 96
    %v457 = vpop.permute.xlu0 %456
    %458 = vrot.lane.b32.xlu0 %v142, 96
    %v459 = vpop.permute.xlu0 %458
    %460 = vrot.lane.b32.xlu0 %v144, 96
    %v461 = vpop.permute.xlu0 %460
    %462 = vrot.lane.b32.xlu0 %v146, 96
    %v463 = vpop.permute.xlu0 %462
    %464 = vrot.lane.b32.xlu0 %v148, 96
    %v465 = vpop.permute.xlu0 %464
    %466 = vrot.lane.b32.xlu0 %v150, 96
    %v467 = vpop.permute.xlu0 %466
    %468 = vrot.lane.b32.xlu0 %v152, 96
    %v469 = vpop.permute.xlu0 %468
    %470 = vrot.lane.b32.xlu0 %v154, 96
    %v471 = vpop.permute.xlu0 %470
    %472 = vrot.lane.b32.xlu0 %v160, 96
    %v473 = vpop.permute.xlu0 %472
    %474 = vrot.lane.b32.xlu0 %v162, 96
    %v475 = vpop.permute.xlu0 %474
    %476 = vrot.lane.b32.xlu0 %v164, 96
    %v477 = vpop.permute.xlu0 %476
    %478 = vrot.lane.b32.xlu0 %v166, 96
    %v479 = vpop.permute.xlu0 %478
    %480 = vrot.lane.b32.xlu0 %v168, 96
    %v481 = vpop.permute.xlu0 %480
    %482 = vrot.lane.b32.xlu0 %v170, 96
    %v483 = vpop.permute.xlu0 %482
    %484 = vrot.lane.b32.xlu0 %v172, 96
    %v485 = vpop.permute.xlu0 %484
    %486 = vrot.lane.b32.xlu0 %v174, 96
    %v487 = vpop.permute.xlu0 %486
    %vm504 = vcmask 1048320
    %505 = vst.msk [vmem:[#allocation3] sm:$0xff] %vm504, %v457
    %506 = vst.msk [vmem:[#allocation3 + $0x18] sm:$0xff] %vm504, %v459
    %507 = vst.msk [vmem:[#allocation3 + $0x30] sm:$0xff] %vm504, %v461
    %508 = vst.msk [vmem:[#allocation3 + $0x48] sm:$0xff] %vm504, %v463
    %509 = vst.msk [vmem:[#allocation3 + $0x60] sm:$0xff] %vm504, %v465
    %510 = vst.msk [vmem:[#allocation3 + $0x78] sm:$0xff] %vm504, %v467
    %511 = vst.msk [vmem:[#allocation3 + $0x90] sm:$0xff] %vm504, %v469
    %512 = vst.msk [vmem:[#allocation3 + $0xa8] sm:$0xff] %vm504, %v471
    %513 = vst.msk [vmem:[#allocation3 + $0xc0] sm:$0xff] %vm504, %v473
    %514 = vst.msk [vmem:[#allocation3 + $0xd8] sm:$0xff] %vm504, %v475
    %515 = vst.msk [vmem:[#allocation3 + $0xf0] sm:$0xff] %vm504, %v477
    %516 = vst.msk [vmem:[#allocation3 + $0x108] sm:$0xff] %vm504, %v479
    %517 = vst.msk [vmem:[#allocation3 + $0x120] sm:$0xff] %vm504, %v481
    %518 = vst.msk [vmem:[#allocation3 + $0x138] sm:$0xff] %vm504, %v483
    %519 = vst.msk [vmem:[#allocation3 + $0x150] sm:$0xff] %vm504, %v485
    %520 = vst.msk [vmem:[#allocation3 + $0x168] sm:$0xff] %vm504, %v487
    %v523 = vrot.slane %v154, 1
    %v524 = vrot.slane %v155, 1
    %v525 = vsel %vm226, %v523, %v524
    %v526 = vrot.slane %v174, 1
    %v527 = vrot.slane %v175, 1
    %v528 = vsel %vm226, %v526, %v527
    %545 = vst.msk [vmem:[#allocation3 + $0x8] sm:$0xff] %vm27, %v232
    %546 = vst.msk [vmem:[#allocation3 + $0x20] sm:$0xff] %vm27, %v235
    %547 = vst.msk [vmem:[#allocation3 + $0x38] sm:$0xff] %vm27, %v238
    %548 = vst.msk [vmem:[#allocation3 + $0x50] sm:$0xff] %vm27, %v241
    %549 = vst.msk [vmem:[#allocation3 + $0x68] sm:$0xff] %vm27, %v244
    %550 = vst.msk [vmem:[#allocation3 + $0x80] sm:$0xff] %vm27, %v247
    %551 = vst.msk [vmem:[#allocation3 + $0x98] sm:$0xff] %vm27, %v250
    %552 = vst.msk [vmem:[#allocation3 + $0xb0] sm:$0xff] %vm27, %v525
    %553 = vst.msk [vmem:[#allocation3 + $0xc8] sm:$0xff] %vm27, %v256
    %554 = vst.msk [vmem:[#allocation3 + $0xe0] sm:$0xff] %vm27, %v259
    %555 = vst.msk [vmem:[#allocation3 + $0xf8] sm:$0xff] %vm27, %v262
    %556 = vst.msk [vmem:[#allocation3 + $0x110] sm:$0xff] %vm27, %v265
    %557 = vst.msk [vmem:[#allocation3 + $0x128] sm:$0xff] %vm27, %v268
    %558 = vst.msk [vmem:[#allocation3 + $0x140] sm:$0xff] %vm27, %v271
    %559 = vst.msk [vmem:[#allocation3 + $0x158] sm:$0xff] %vm27, %v274
    %560 = vst.msk [vmem:[#allocation3 + $0x170] sm:$0xff] %vm27, %v528
    %v561 = vrot.slane %v154, 2
    %v562 = vrot.slane %v155, 2
    %v563 = vsel %vm340, %v561, %v562
    %v564 = vrot.slane %v174, 2
    %v565 = vrot.slane %v175, 2
    %v566 = vsel %vm340, %v564, %v565
    %567 = vrot.lane.b32.xlu0 %v346, 32
    %v568 = vpop.permute.xlu0 %567
    %569 = vrot.lane.b32.xlu0 %v349, 32
    %v570 = vpop.permute.xlu0 %569
    %571 = vrot.lane.b32.xlu0 %v352, 32
    %v572 = vpop.permute.xlu0 %571
    %573 = vrot.lane.b32.xlu0 %v355, 32
    %v574 = vpop.permute.xlu0 %573
    %575 = vrot.lane.b32.xlu0 %v358, 32
    %v576 = vpop.permute.xlu0 %575
    %577 = vrot.lane.b32.xlu0 %v361, 32
    %v578 = vpop.permute.xlu0 %577
    %579 = vrot.lane.b32.xlu0 %v364, 32
    %v580 = vpop.permute.xlu0 %579
    %581 = vrot.lane.b32.xlu0 %v563, 32
    %v582 = vpop.permute.xlu0 %581
    %583 = vrot.lane.b32.xlu0 %v370, 32
    %v584 = vpop.permute.xlu0 %583
    %585 = vrot.lane.b32.xlu0 %v373, 32
    %v586 = vpop.permute.xlu0 %585
    %587 = vrot.lane.b32.xlu0 %v376, 32
    %v588 = vpop.permute.xlu0 %587
    %589 = vrot.lane.b32.xlu0 %v379, 32
    %v590 = vpop.permute.xlu0 %589
    %591 = vrot.lane.b32.xlu0 %v382, 32
    %v592 = vpop.permute.xlu0 %591
    %593 = vrot.lane.b32.xlu0 %v385, 32
    %v594 = vpop.permute.xlu0 %593
    %595 = vrot.lane.b32.xlu0 %v388, 32
    %v596 = vpop.permute.xlu0 %595
    %597 = vrot.lane.b32.xlu0 %v566, 32
    %v598 = vpop.permute.xlu0 %597
    %615 = vst.msk [vmem:[#allocation3 + $0x8] sm:$0xff] %vm323, %v568
    %616 = vst.msk [vmem:[#allocation3 + $0x20] sm:$0xff] %vm323, %v570
    %617 = vst.msk [vmem:[#allocation3 + $0x38] sm:$0xff] %vm323, %v572
    %618 = vst.msk [vmem:[#allocation3 + $0x50] sm:$0xff] %vm323, %v574
    %619 = vst.msk [vmem:[#allocation3 + $0x68] sm:$0xff] %vm323, %v576
    %620 = vst.msk [vmem:[#allocation3 + $0x80] sm:$0xff] %vm323, %v578
    %621 = vst.msk [vmem:[#allocation3 + $0x98] sm:$0xff] %vm323, %v580
    %622 = vst.msk [vmem:[#allocation3 + $0xb0] sm:$0xff] %vm323, %v582
    %623 = vst.msk [vmem:[#allocation3 + $0xc8] sm:$0xff] %vm323, %v584
    %624 = vst.msk [vmem:[#allocation3 + $0xe0] sm:$0xff] %vm323, %v586
    %625 = vst.msk [vmem:[#allocation3 + $0xf8] sm:$0xff] %vm323, %v588
    %626 = vst.msk [vmem:[#allocation3 + $0x110] sm:$0xff] %vm323, %v590
    %627 = vst.msk [vmem:[#allocation3 + $0x128] sm:$0xff] %vm323, %v592
    %628 = vst.msk [vmem:[#allocation3 + $0x140] sm:$0xff] %vm323, %v594
    %629 = vst.msk [vmem:[#allocation3 + $0x158] sm:$0xff] %vm323, %v596
    %630 = vst.msk [vmem:[#allocation3 + $0x170] sm:$0xff] %vm323, %v598
    %633 = vrot.lane.b32.xlu0 %v142, 64
    %v634 = vpop.permute.xlu0 %633
    %635 = vrot.lane.b32.xlu0 %v144, 64
    %v636 = vpop.permute.xlu0 %635
    %637 = vrot.lane.b32.xlu0 %v146, 64
    %v638 = vpop.permute.xlu0 %637
    %639 = vrot.lane.b32.xlu0 %v148, 64
    %v640 = vpop.permute.xlu0 %639
    %641 = vrot.lane.b32.xlu0 %v150, 64
    %v642 = vpop.permute.xlu0 %641
    %643 = vrot.lane.b32.xlu0 %v152, 64
    %v644 = vpop.permute.xlu0 %643
    %645 = vrot.lane.b32.xlu0 %v154, 64
    %v646 = vpop.permute.xlu0 %645
    %647 = vrot.lane.b32.xlu0 %v156, 64
    %v648 = vpop.permute.xlu0 %647
    %649 = vrot.lane.b32.xlu0 %v162, 64
    %v650 = vpop.permute.xlu0 %649
    %651 = vrot.lane.b32.xlu0 %v164, 64
    %v652 = vpop.permute.xlu0 %651
    %653 = vrot.lane.b32.xlu0 %v166, 64
    %v654 = vpop.permute.xlu0 %653
    %655 = vrot.lane.b32.xlu0 %v168, 64
    %v656 = vpop.permute.xlu0 %655
    %657 = vrot.lane.b32.xlu0 %v170, 64
    %v658 = vpop.permute.xlu0 %657
    %659 = vrot.lane.b32.xlu0 %v172, 64
    %v660 = vpop.permute.xlu0 %659
    %661 = vrot.lane.b32.xlu0 %v174, 64
    %v662 = vpop.permute.xlu0 %661
    %663 = vrot.lane.b32.xlu0 %v176, 64
    %v664 = vpop.permute.xlu0 %663
    %681 = vst.msk [vmem:[#allocation3 + $0x8] sm:$0xff] %vm437, %v634
    %682 = vst.msk [vmem:[#allocation3 + $0x20] sm:$0xff] %vm437, %v636
    %683 = vst.msk [vmem:[#allocation3 + $0x38] sm:$0xff] %vm437, %v638
    %684 = vst.msk [vmem:[#allocation3 + $0x50] sm:$0xff] %vm437, %v640
    %685 = vst.msk [vmem:[#allocation3 + $0x68] sm:$0xff] %vm437, %v642
    %686 = vst.msk [vmem:[#allocation3 + $0x80] sm:$0xff] %vm437, %v644
    %687 = vst.msk [vmem:[#allocation3 + $0x98] sm:$0xff] %vm437, %v646
    %688 = vst.msk [vmem:[#allocation3 + $0xb0] sm:$0xff] %vm437, %v648
    %689 = vst.msk [vmem:[#allocation3 + $0xc8] sm:$0xff] %vm437, %v650
    %690 = vst.msk [vmem:[#allocation3 + $0xe0] sm:$0xff] %vm437, %v652
    %691 = vst.msk [vmem:[#allocation3 + $0xf8] sm:$0xff] %vm437, %v654
    %692 = vst.msk [vmem:[#allocation3 + $0x110] sm:$0xff] %vm437, %v656
    %693 = vst.msk [vmem:[#allocation3 + $0x128] sm:$0xff] %vm437, %v658
    %694 = vst.msk [vmem:[#allocation3 + $0x140] sm:$0xff] %vm437, %v660
    %695 = vst.msk [vmem:[#allocation3 + $0x158] sm:$0xff] %vm437, %v662
    %696 = vst.msk [vmem:[#allocation3 + $0x170] sm:$0xff] %vm437, %v664
    %v699 = vrot.slane %v156, 1
    %v700 = vrot.slane %v157, 1
    %v701 = vsel %vm226, %v699, %v700
    %v702 = vrot.slane %v176, 1
    %v703 = vrot.slane %v177, 1
    %v704 = vsel %vm226, %v702, %v703
    %705 = vrot.lane.b32.xlu0 %v235, 96
    %v706 = vpop.permute.xlu0 %705
    %707 = vrot.lane.b32.xlu0 %v238, 96
    %v708 = vpop.permute.xlu0 %707
    %709 = vrot.lane.b32.xlu0 %v241, 96
    %v710 = vpop.permute.xlu0 %709
    %711 = vrot.lane.b32.xlu0 %v244, 96
    %v712 = vpop.permute.xlu0 %711
    %713 = vrot.lane.b32.xlu0 %v247, 96
    %v714 = vpop.permute.xlu0 %713
    %715 = vrot.lane.b32.xlu0 %v250, 96
    %v716 = vpop.permute.xlu0 %715
    %717 = vrot.lane.b32.xlu0 %v525, 96
    %v718 = vpop.permute.xlu0 %717
    %719 = vrot.lane.b32.xlu0 %v701, 96
    %v720 = vpop.permute.xlu0 %719
    %721 = vrot.lane.b32.xlu0 %v259, 96
    %v722 = vpop.permute.xlu0 %721
    %723 = vrot.lane.b32.xlu0 %v262, 96
    %v724 = vpop.permute.xlu0 %723
    %725 = vrot.lane.b32.xlu0 %v265, 96
    %v726 = vpop.permute.xlu0 %725
    %727 = vrot.lane.b32.xlu0 %v268, 96
    %v728 = vpop.permute.xlu0 %727
    %729 = vrot.lane.b32.xlu0 %v271, 96
    %v730 = vpop.permute.xlu0 %729
    %731 = vrot.lane.b32.xlu0 %v274, 96
    %v732 = vpop.permute.xlu0 %731
    %733 = vrot.lane.b32.xlu0 %v528, 96
    %v734 = vpop.permute.xlu0 %733
    %735 = vrot.lane.b32.xlu0 %v704, 96
    %v736 = vpop.permute.xlu0 %735
    %753 = vst.msk [vmem:[#allocation3 + $0x8] sm:$0xff] %vm504, %v706
    %754 = vst.msk [vmem:[#allocation3 + $0x20] sm:$0xff] %vm504, %v708
    %755 = vst.msk [vmem:[#allocation3 + $0x38] sm:$0xff] %vm504, %v710
    %756 = vst.msk [vmem:[#allocation3 + $0x50] sm:$0xff] %vm504, %v712
    %757 = vst.msk [vmem:[#allocation3 + $0x68] sm:$0xff] %vm504, %v714
    %758 = vst.msk [vmem:[#allocation3 + $0x80] sm:$0xff] %vm504, %v716
    %759 = vst.msk [vmem:[#allocation3 + $0x98] sm:$0xff] %vm504, %v718
    %760 = vst.msk [vmem:[#allocation3 + $0xb0] sm:$0xff] %vm504, %v720
    %761 = vst.msk [vmem:[#allocation3 + $0xc8] sm:$0xff] %vm504, %v722
    %762 = vst.msk [vmem:[#allocation3 + $0xe0] sm:$0xff] %vm504, %v724
    %763 = vst.msk [vmem:[#allocation3 + $0xf8] sm:$0xff] %vm504, %v726
    %764 = vst.msk [vmem:[#allocation3 + $0x110] sm:$0xff] %vm504, %v728
    %765 = vst.msk [vmem:[#allocation3 + $0x128] sm:$0xff] %vm504, %v730
    %766 = vst.msk [vmem:[#allocation3 + $0x140] sm:$0xff] %vm504, %v732
    %767 = vst.msk [vmem:[#allocation3 + $0x158] sm:$0xff] %vm504, %v734
    %768 = vst.msk [vmem:[#allocation3 + $0x170] sm:$0xff] %vm504, %v736
    %v769 = vrot.slane %v156, 2
    %v770 = vrot.slane %v157, 2
    %v771 = vsel %vm340, %v769, %v770
    %v772 = vrot.slane %v176, 2
    %v773 = vrot.slane %v177, 2
    %v774 = vsel %vm340, %v772, %v773
    %791 = vst.msk [vmem:[#allocation3 + $0x10] sm:$0xff] %vm27, %v349
    %792 = vst.msk [vmem:[#allocation3 + $0x28] sm:$0xff] %vm27, %v352
    %793 = vst.msk [vmem:[#allocation3 + $0x40] sm:$0xff] %vm27, %v355
    %794 = vst.msk [vmem:[#allocation3 + $0x58] sm:$0xff] %vm27, %v358
    %795 = vst.msk [vmem:[#allocation3 + $0x70] sm:$0xff] %vm27, %v361
    %796 = vst.msk [vmem:[#allocation3 + $0x88] sm:$0xff] %vm27, %v364
    %797 = vst.msk [vmem:[#allocation3 + $0xa0] sm:$0xff] %vm27, %v563
    %798 = vst.msk [vmem:[#allocation3 + $0xb8] sm:$0xff] %vm27, %v771
    %799 = vst.msk [vmem:[#allocation3 + $0xd0] sm:$0xff] %vm27, %v373
    %800 = vst.msk [vmem:[#allocation3 + $0xe8] sm:$0xff] %vm27, %v376
    %801 = vst.msk [vmem:[#allocation3 + $0x100] sm:$0xff] %vm27, %v379
    %802 = vst.msk [vmem:[#allocation3 + $0x118] sm:$0xff] %vm27, %v382
    %803 = vst.msk [vmem:[#allocation3 + $0x130] sm:$0xff] %vm27, %v385
    %804 = vst.msk [vmem:[#allocation3 + $0x148] sm:$0xff] %vm27, %v388
    %805 = vst.msk [vmem:[#allocation3 + $0x160] sm:$0xff] %vm27, %v566
    %806 = vst.msk [vmem:[#allocation3 + $0x178] sm:$0xff] %vm27, %v774
    %v807 = vld [vmem:[#allocation3] sm:$0xff]
    %v808 = vld [vmem:[#allocation3 + $0x8] sm:$0xff]
    %v809 = vld [vmem:[#allocation3 + $0x10] sm:$0xff]
    %v810 = vld [vmem:[#allocation3 + $0x18] sm:$0xff]
    %v811 = vld [vmem:[#allocation3 + $0x20] sm:$0xff]
    %v812 = vld [vmem:[#allocation3 + $0x28] sm:$0xff]
    %v813 = vld [vmem:[#allocation3 + $0x30] sm:$0xff]
    %v814 = vld [vmem:[#allocation3 + $0x38] sm:$0xff]
    %v815 = vld [vmem:[#allocation3 + $0x40] sm:$0xff]
    %v816 = vld [vmem:[#allocation3 + $0x48] sm:$0xff]
    %v817 = vld [vmem:[#allocation3 + $0x50] sm:$0xff]
    %v818 = vld [vmem:[#allocation3 + $0x58] sm:$0xff]
    %v819 = vld [vmem:[#allocation3 + $0x60] sm:$0xff]
    %v820 = vld [vmem:[#allocation3 + $0x68] sm:$0xff]
    %v821 = vld [vmem:[#allocation3 + $0x70] sm:$0xff]
    %v822 = vld [vmem:[#allocation3 + $0x78] sm:$0xff]
    %v823 = vld [vmem:[#allocation3 + $0x80] sm:$0xff]
    %v824 = vld [vmem:[#allocation3 + $0x88] sm:$0xff]
    %v825 = vld [vmem:[#allocation3 + $0x90] sm:$0xff]
    %v826 = vld [vmem:[#allocation3 + $0x98] sm:$0xff]
    %v827 = vld [vmem:[#allocation3 + $0xa0] sm:$0xff]
    %v828 = vld [vmem:[#allocation3 + $0xa8] sm:$0xff]
    %v829 = vld [vmem:[#allocation3 + $0xb0] sm:$0xff]
    %v830 = vld [vmem:[#allocation3 + $0xb8] sm:$0xff]
    %v831 = vld [vmem:[#allocation3 + $0xc0] sm:$0xff]
    %v832 = vld [vmem:[#allocation3 + $0xc8] sm:$0xff]
    %v833 = vld [vmem:[#allocation3 + $0xd0] sm:$0xff]
    %v834 = vld [vmem:[#allocation3 + $0xd8] sm:$0xff]
    %v835 = vld [vmem:[#allocation3 + $0xe0] sm:$0xff]
    %v836 = vld [vmem:[#allocation3 + $0xe8] sm:$0xff]
    %v837 = vld [vmem:[#allocation3 + $0xf0] sm:$0xff]
    %v838 = vld [vmem:[#allocation3 + $0xf8] sm:$0xff]
    %v839 = vld [vmem:[#allocation3 + $0x100] sm:$0xff]
    %v840 = vld [vmem:[#allocation3 + $0x108] sm:$0xff]
    %v841 = vld [vmem:[#allocation3 + $0x110] sm:$0xff]
    %v842 = vld [vmem:[#allocation3 + $0x118] sm:$0xff]
    %v843 = vld [vmem:[#allocation3 + $0x120] sm:$0xff]
    %v844 = vld [vmem:[#allocation3 + $0x128] sm:$0xff]
    %v845 = vld [vmem:[#allocation3 + $0x130] sm:$0xff]
    %v846 = vld [vmem:[#allocation3 + $0x138] sm:$0xff]
    %v847 = vld [vmem:[#allocation3 + $0x140] sm:$0xff]
    %v848 = vld [vmem:[#allocation3 + $0x148] sm:$0xff]
    %v849 = vld [vmem:[#allocation3 + $0x150] sm:$0xff]
    %v850 = vld [vmem:[#allocation3 + $0x158] sm:$0xff]
    %v851 = vld [vmem:[#allocation3 + $0x160] sm:$0xff]
    %v852 = vld [vmem:[#allocation3 + $0x168] sm:$0xff]
    %v853 = vld [vmem:[#allocation3 + $0x170] sm:$0xff]
    %v854 = vld [vmem:[#allocation3 + $0x178] sm:$0xff]
    %v856 = vsel %vm27, %v809, 0
    %v859 = vsel %vm27, %v812, 0
    %v862 = vsel %vm27, %v815, 0
    %v865 = vsel %vm27, %v818, 0
    %v868 = vsel %vm27, %v821, 0
    %v871 = vsel %vm27, %v824, 0
    %v874 = vsel %vm27, %v827, 0
    %v877 = vsel %vm27, %v830, 0
    %v880 = vsel %vm27, %v833, 0
    %v883 = vsel %vm27, %v836, 0
    %v886 = vsel %vm27, %v839, 0
    %v889 = vsel %vm27, %v842, 0
    %v892 = vsel %vm27, %v845, 0
    %v895 = vsel %vm27, %v848, 0
    %v898 = vsel %vm27, %v851, 0
    %v901 = vsel %vm27, %v854, 0
    %903 = vmatprep.subr.mxu0 0.0
    %904 = vmatpush1.msra.mxu0 %v100
    %905 = vmatprep.subr.mxu0 0.0
    %906 = vmatpush1.msra.mxu0 %v99
    %907 = vmatprep.subr.mxu0 0.0
    %908 = vmatpush1.msra.mxu0 %v98
    %909 = vmatprep.subr.mxu0 0.0
    %910 = vmatpush1.msra.mxu0 %v97
    %911 = vmatprep.subr.mxu0 0.0
    %912 = vmatpush1.msra.mxu0 %v96
    %913 = vmatprep.subr.mxu0 0.0
    %914 = vmatpush1.msra.mxu0 %v95
    %915 = vmatprep.subr.mxu0 0.0
    %916 = vmatpush1.msra.mxu0 %v94
    %917 = vmatprep.subr.mxu0 0.0
    %918 = vmatpush1.msra.mxu0 %v93
    %919 = vmatprep.subr.mxu0 0.0
    %920 = vmatpush1.msra.mxu0 %v92
    %921 = vmatprep.subr.mxu0 0.0
    %922 = vmatpush1.msra.mxu0 %v91
    %923 = vmatprep.subr.mxu0 0.0
    %924 = vmatpush1.msra.mxu0 %v90
    %925 = vmatprep.subr.mxu0 0.0
    %926 = vmatpush1.msra.mxu0 %v89
    %927 = vmatprep.subr.mxu0 0.0
    %928 = vmatpush1.msra.mxu0 %v88
    %929 = vmatprep.subr.mxu0 0.0
    %930 = vmatpush1.msra.mxu0 %v87
    %931 = vmatprep.subr.mxu0 0.0
    %932 = vmatpush1.msra.mxu0 %v86
    %933 = vmatprep.subr.mxu0 0.0
    %934 = vmatpush1.msra.mxu0 %v85
    %935 = vmatprep.subr.mxu0 0.0
    %936 = vmatpush2.msra.mxu0 %v116
    %937 = vmatprep.subr.mxu0 0.0
    %938 = vmatpush2.msra.mxu0 %v115
    %939 = vmatprep.subr.mxu0 0.0
    %940 = vmatpush2.msra.mxu0 %v114
    %941 = vmatprep.subr.mxu0 0.0
    %942 = vmatpush2.msra.mxu0 %v113
    %943 = vmatprep.subr.mxu0 0.0
    %944 = vmatpush2.msra.mxu0 %v112
    %945 = vmatprep.subr.mxu0 0.0
    %946 = vmatpush2.msra.mxu0 %v111
    %947 = vmatprep.subr.mxu0 0.0
    %948 = vmatpush2.msra.mxu0 %v110
    %949 = vmatprep.subr.mxu0 0.0
    %950 = vmatpush2.msra.mxu0 %v109
    %951 = vmatprep.subr.mxu0 0.0
    %952 = vmatpush2.msra.mxu0 %v108
    %953 = vmatprep.subr.mxu0 0.0
    %954 = vmatpush2.msra.mxu0 %v107
    %955 = vmatprep.subr.mxu0 0.0
    %956 = vmatpush2.msra.mxu0 %v106
    %957 = vmatprep.subr.mxu0 0.0
    %958 = vmatpush2.msra.mxu0 %v105
    %959 = vmatprep.subr.mxu0 0.0
    %960 = vmatpush2.msra.mxu0 %v104
    %961 = vmatprep.subr.mxu0 0.0
    %962 = vmatpush2.msra.mxu0 %v103
    %963 = vmatprep.subr.mxu0 0.0
    %964 = vmatpush2.msra.mxu0 %v102
    %965 = vmatprep.subr.mxu0 0.0
    %966 = vmatpush2.msra.mxu0 %v101
    %967 = vmatprep.mubr.f32.mxu0 %v808
    %968 = vmatmul.mubr.f32.gmra.mxu0 %v807
    %v969 = vpop.f32.mrf.mxu0
    %v970 = vadd.f32 0.0, %v969
    %v971 = vpop.f32.mrf.mxu0
    %972 = vmatprep.mubr.f32.mxu0 %v811
    %973 = vmatmul.mubr.f32.gmra.mxu0 %v810
    %v974 = vpop.f32.mrf.mxu0
    %v975 = vadd.f32 0.0, %v974
    %v976 = vpop.f32.mrf.mxu0
    %977 = vmatprep.mubr.f32.mxu0 %v814
    %978 = vmatmul.mubr.f32.gmra.mxu0 %v813
    %v979 = vpop.f32.mrf.mxu0
    %v980 = vadd.f32 0.0, %v979
    %v981 = vpop.f32.mrf.mxu0
    %982 = vmatprep.mubr.f32.mxu0 %v817
    %983 = vmatmul.mubr.f32.gmra.mxu0 %v816
    %v984 = vpop.f32.mrf.mxu0
    %v985 = vadd.f32 0.0, %v984
    %v986 = vpop.f32.mrf.mxu0
    %987 = vmatprep.mubr.f32.mxu0 %v820
    %988 = vmatmul.mubr.f32.gmra.mxu0 %v819
    %v989 = vpop.f32.mrf.mxu0
    %v990 = vadd.f32 0.0, %v989
    %v991 = vpop.f32.mrf.mxu0
    %992 = vmatprep.mubr.f32.mxu0 %v823
    %993 = vmatmul.mubr.f32.gmra.mxu0 %v822
    %v994 = vpop.f32.mrf.mxu0
    %v995 = vadd.f32 0.0, %v994
    %v996 = vpop.f32.mrf.mxu0
    %997 = vmatprep.mubr.f32.mxu0 %v826
    %998 = vmatmul.mubr.f32.gmra.mxu0 %v825
    %v999 = vpop.f32.mrf.mxu0
    %v1000 = vadd.f32 0.0, %v999
    %v1001 = vpop.f32.mrf.mxu0
    %1002 = vmatprep.mubr.f32.mxu0 %v829
    %1003 = vmatmul.mubr.f32.gmra.mxu0 %v828
    %v1004 = vpop.f32.mrf.mxu0
    %v1005 = vadd.f32 0.0, %v1004
    %v1006 = vpop.f32.mrf.mxu0
    %1007 = vmatprep.mubr.f32.mxu0 %v832
    %1008 = vmatmul.mubr.f32.gmra.mxu0 %v831
    %v1009 = vpop.f32.mrf.mxu0
    %v1010 = vadd.f32 0.0, %v1009
    %v1011 = vpop.f32.mrf.mxu0
    %1012 = vmatprep.mubr.f32.mxu0 %v835
    %1013 = vmatmul.mubr.f32.gmra.mxu0 %v834
    %v1014 = vpop.f32.mrf.mxu0
    %v1015 = vadd.f32 0.0, %v1014
    %v1016 = vpop.f32.mrf.mxu0
    %1017 = vmatprep.mubr.f32.mxu0 %v838
    %1018 = vmatmul.mubr.f32.gmra.mxu0 %v837
    %v1019 = vpop.f32.mrf.mxu0
    %v1020 = vadd.f32 0.0, %v1019
    %v1021 = vpop.f32.mrf.mxu0
    %1022 = vmatprep.mubr.f32.mxu0 %v841
    %1023 = vmatmul.mubr.f32.gmra.mxu0 %v840
    %v1024 = vpop.f32.mrf.mxu0
    %v1025 = vadd.f32 0.0, %v1024
    %v1026 = vpop.f32.mrf.mxu0
    %1027 = vmatprep.mubr.f32.mxu0 %v844
    %1028 = vmatmul.mubr.f32.gmra.mxu0 %v843
    %v1029 = vpop.f32.mrf.mxu0
    %v1030 = vadd.f32 0.0, %v1029
    %v1031 = vpop.f32.mrf.mxu0
    %1032 = vmatprep.mubr.f32.mxu0 %v847
    %1033 = vmatmul.mubr.f32.gmra.mxu0 %v846
    %v1034 = vpop.f32.mrf.mxu0
    %v1035 = vadd.f32 0.0, %v1034
    %v1036 = vpop.f32.mrf.mxu0
    %1037 = vmatprep.mubr.f32.mxu0 %v850
    %1038 = vmatmul.mubr.f32.gmra.mxu0 %v849
    %v1039 = vpop.f32.mrf.mxu0
    %v1040 = vadd.f32 0.0, %v1039
    %v1041 = vpop.f32.mrf.mxu0
    %1042 = vmatprep.mubr.f32.mxu0 %v853
    %1043 = vmatmul.mubr.f32.gmra.mxu0 %v852
    %v1044 = vpop.f32.mrf.mxu0
    %v1045 = vadd.f32 0.0, %v1044
    %v1046 = vpop.f32.mrf.mxu0
    %1047 = vdwg.mxu0
    %1048 = vmatprep.subr.mxu0 0.0
    %1049 = vmatpush1.msra.mxu0 0.0
    %1050 = vmatprep.subr.mxu0 0.0
    %1051 = vmatpush1.msra.mxu0 0.0
    %1052 = vmatprep.subr.mxu0 0.0
    %1053 = vmatpush1.msra.mxu0 0.0
    %1054 = vmatprep.subr.mxu0 0.0
    %1055 = vmatpush1.msra.mxu0 0.0
    %1056 = vmatprep.subr.mxu0 0.0
    %1057 = vmatpush1.msra.mxu0 0.0
    %1058 = vmatprep.subr.mxu0 0.0
    %1059 = vmatpush1.msra.mxu0 0.0
    %1060 = vmatprep.subr.mxu0 0.0
    %1061 = vmatpush1.msra.mxu0 0.0
    %1062 = vmatprep.subr.mxu0 0.0
    %1063 = vmatpush1.msra.mxu0 0.0
    %1064 = vmatprep.subr.mxu0 0.0
    %1065 = vmatpush1.msra.mxu0 0.0
    %1066 = vmatprep.subr.mxu0 0.0
    %1067 = vmatpush1.msra.mxu0 0.0
    %1068 = vmatprep.subr.mxu0 0.0
    %1069 = vmatpush1.msra.mxu0 0.0
    %1070 = vmatprep.subr.mxu0 0.0
    %1071 = vmatpush1.msra.mxu0 0.0
    %1072 = vmatprep.subr.mxu0 0.0
    %1073 = vmatpush1.msra.mxu0 %v120
    %1074 = vmatprep.subr.mxu0 0.0
    %1075 = vmatpush1.msra.mxu0 %v119
    %1076 = vmatprep.subr.mxu0 0.0
    %1077 = vmatpush1.msra.mxu0 %v118
    %1078 = vmatprep.subr.mxu0 0.0
    %1079 = vmatpush1.msra.mxu0 %v117
    %1080 = vmatprep.subr.mxu0 0.0
    %1081 = vmatpush2.msra.mxu0 0.0
    %1082 = vmatprep.subr.mxu0 0.0
    %1083 = vmatpush2.msra.mxu0 0.0
    %1084 = vmatprep.subr.mxu0 0.0
    %1085 = vmatpush2.msra.mxu0 0.0
    %1086 = vmatprep.subr.mxu0 0.0
    %1087 = vmatpush2.msra.mxu0 0.0
    %1088 = vmatprep.subr.mxu0 0.0
    %1089 = vmatpush2.msra.mxu0 0.0
    %1090 = vmatprep.subr.mxu0 0.0
    %1091 = vmatpush2.msra.mxu0 0.0
    %1092 = vmatprep.subr.mxu0 0.0
    %1093 = vmatpush2.msra.mxu0 0.0
    %1094 = vmatprep.subr.mxu0 0.0
    %1095 = vmatpush2.msra.mxu0 0.0
    %1096 = vmatprep.subr.mxu0 0.0
    %1097 = vmatpush2.msra.mxu0 0.0
    %1098 = vmatprep.subr.mxu0 0.0
    %1099 = vmatpush2.msra.mxu0 0.0
    %1100 = vmatprep.subr.mxu0 0.0
    %1101 = vmatpush2.msra.mxu0 0.0
    %1102 = vmatprep.subr.mxu0 0.0
    %1103 = vmatpush2.msra.mxu0 0.0
    %1104 = vmatprep.subr.mxu0 0.0
    %1105 = vmatpush2.msra.mxu0 0.0
    %1106 = vmatprep.subr.mxu0 0.0
    %1107 = vmatpush2.msra.mxu0 0.0
    %1108 = vmatprep.subr.mxu0 0.0
    %1109 = vmatpush2.msra.mxu0 0.0
    %1110 = vmatprep.subr.mxu0 0.0
    %1111 = vmatpush2.msra.mxu0 0.0
    %1112 = vmatprep.mubr.f32.mxu0 0.0
    %1113 = vmatmul.mubr.f32.gmra.mxu0 %v856
    %v1114 = vpop.f32.mrf.mxu0
    %v1115 = vadd.f32 %v970, %v1114
    %v1116 = vpop.f32.mrf.mxu0
    %1117 = vmatprep.mubr.f32.mxu0 0.0
    %1118 = vmatmul.mubr.f32.gmra.mxu0 %v859
    %v1119 = vpop.f32.mrf.mxu0
    %v1120 = vadd.f32 %v975, %v1119
    %v1121 = vpop.f32.mrf.mxu0
    %1122 = vmatprep.mubr.f32.mxu0 0.0
    %1123 = vmatmul.mubr.f32.gmra.mxu0 %v862
    %v1124 = vpop.f32.mrf.mxu0
    %v1125 = vadd.f32 %v980, %v1124
    %v1126 = vpop.f32.mrf.mxu0
    %1127 = vmatprep.mubr.f32.mxu0 0.0
    %1128 = vmatmul.mubr.f32.gmra.mxu0 %v865
    %v1129 = vpop.f32.mrf.mxu0
    %v1130 = vadd.f32 %v985, %v1129
    %v1131 = vpop.f32.mrf.mxu0
    %1132 = vmatprep.mubr.f32.mxu0 0.0
    %1133 = vmatmul.mubr.f32.gmra.mxu0 %v868
    %v1134 = vpop.f32.mrf.mxu0
    %v1135 = vadd.f32 %v990, %v1134
    %v1136 = vpop.f32.mrf.mxu0
    %1137 = vmatprep.mubr.f32.mxu0 0.0
    %1138 = vmatmul.mubr.f32.gmra.mxu0 %v871
    %v1139 = vpop.f32.mrf.mxu0
    %v1140 = vadd.f32 %v995, %v1139
    %v1141 = vpop.f32.mrf.mxu0
    %1142 = vmatprep.mubr.f32.mxu0 0.0
    %1143 = vmatmul.mubr.f32.gmra.mxu0 %v874
    %v1144 = vpop.f32.mrf.mxu0
    %v1145 = vadd.f32 %v1000, %v1144
    %v1146 = vpop.f32.mrf.mxu0
    %1147 = vmatprep.mubr.f32.mxu0 0.0
    %1148 = vmatmul.mubr.f32.gmra.mxu0 %v877
    %v1149 = vpop.f32.mrf.mxu0
    %v1150 = vadd.f32 %v1005, %v1149
    %v1151 = vpop.f32.mrf.mxu0
    %1152 = vmatprep.mubr.f32.mxu0 0.0
    %1153 = vmatmul.mubr.f32.gmra.mxu0 %v880
    %v1154 = vpop.f32.mrf.mxu0
    %v1155 = vadd.f32 %v1010, %v1154
    %v1156 = vpop.f32.mrf.mxu0
    %1157 = vmatprep.mubr.f32.mxu0 0.0
    %1158 = vmatmul.mubr.f32.gmra.mxu0 %v883
    %v1159 = vpop.f32.mrf.mxu0
    %v1160 = vadd.f32 %v1015, %v1159
    %v1161 = vpop.f32.mrf.mxu0
    %1162 = vmatprep.mubr.f32.mxu0 0.0
    %1163 = vmatmul.mubr.f32.gmra.mxu0 %v886
    %v1164 = vpop.f32.mrf.mxu0
    %v1165 = vadd.f32 %v1020, %v1164
    %v1166 = vpop.f32.mrf.mxu0
    %1167 = vmatprep.mubr.f32.mxu0 0.0
    %1168 = vmatmul.mubr.f32.gmra.mxu0 %v889
    %v1169 = vpop.f32.mrf.mxu0
    %v1170 = vadd.f32 %v1025, %v1169
    %v1171 = vpop.f32.mrf.mxu0
    %1172 = vmatprep.mubr.f32.mxu0 0.0
    %1173 = vmatmul.mubr.f32.gmra.mxu0 %v892
    %v1174 = vpop.f32.mrf.mxu0
    %v1175 = vadd.f32 %v1030, %v1174
    %v1176 = vpop.f32.mrf.mxu0
    %1177 = vmatprep.mubr.f32.mxu0 0.0
    %1178 = vmatmul.mubr.f32.gmra.mxu0 %v895
    %v1179 = vpop.f32.mrf.mxu0
    %v1180 = vadd.f32 %v1035, %v1179
    %v1181 = vpop.f32.mrf.mxu0
    %1182 = vmatprep.mubr.f32.mxu0 0.0
    %1183 = vmatmul.mubr.f32.gmra.mxu0 %v898
    %v1184 = vpop.f32.mrf.mxu0
    %v1185 = vadd.f32 %v1040, %v1184
    %v1186 = vpop.f32.mrf.mxu0
    %1187 = vmatprep.mubr.f32.mxu0 0.0
    %1188 = vmatmul.mubr.f32.gmra.mxu0 %v901
    %v1189 = vpop.f32.mrf.mxu0
    %v1190 = vadd.f32 %v1045, %v1189
    %v1191 = vpop.f32.mrf.mxu0
    %1192 = vdwg.mxu0
    %v1193 = vmax.f32 %v1115, 0.0
    %v1194 = vmax.f32 %v1120, 0.0
    %v1195 = vmax.f32 %v1125, 0.0
    %v1196 = vmax.f32 %v1130, 0.0
    %v1197 = vmax.f32 %v1135, 0.0
    %v1198 = vmax.f32 %v1140, 0.0
    %v1199 = vmax.f32 %v1145, 0.0
    %v1200 = vmax.f32 %v1150, 0.0
    %v1201 = vmax.f32 %v1155, 0.0
    %v1202 = vmax.f32 %v1160, 0.0
    %v1203 = vmax.f32 %v1165, 0.0
    %v1204 = vmax.f32 %v1170, 0.0
    %v1205 = vmax.f32 %v1175, 0.0
    %v1206 = vmax.f32 %v1180, 0.0
    %v1207 = vmax.f32 %v1185, 0.0
    %v1208 = vmax.f32 %v1190, 0.0
    %s1209 = scalar_lea.vmem %s1, 288
    %v1210 = vld [vmem:[%s1209] sm:$0xff]
    %v1211 = vld [vmem:[%s1209 + $0x8] sm:$0xff]
    %v1212 = vld [vmem:[%s1209 + $0x10] sm:$0xff]
    %v1213 = vld [vmem:[%s1209 + $0x18] sm:$0xff]
    %v1214 = vld [vmem:[%s1209 + $0x20] sm:$0xff]
    %v1215 = vld [vmem:[%s1209 + $0x28] sm:$0xff]
    %v1216 = vld [vmem:[%s1209 + $0x30] sm:$0xff]
    %v1217 = vld [vmem:[%s1209 + $0x38] sm:$0xff]
    %v1218 = vld [vmem:[%s1209 + $0x40] sm:$0xff]
    %v1219 = vld [vmem:[%s1209 + $0x48] sm:$0xff]
    %v1220 = vld [vmem:[%s1209 + $0x50] sm:$0xff]
    %v1221 = vld [vmem:[%s1209 + $0x58] sm:$0xff]
    %v1222 = vld [vmem:[%s1209 + $0x60] sm:$0xff]
    %v1223 = vld [vmem:[%s1209 + $0x68] sm:$0xff]
    %v1224 = vld [vmem:[%s1209 + $0x70] sm:$0xff]
    %v1225 = vld [vmem:[%s1209 + $0x78] sm:$0xff]
    %v1226 = vld [vmem:[%s1209 + $0x80] sm:$0xff]
    %v1227 = vld [vmem:[%s1209 + $0x88] sm:$0xff]
    %v1228 = vld [vmem:[%s1209 + $0x90] sm:$0xff]
    %v1229 = vld [vmem:[%s1209 + $0x98] sm:$0xff]
    %v1230 = vld [vmem:[%s1209 + $0xa0] sm:$0xff]
    %v1231 = vld [vmem:[%s1209 + $0xa8] sm:$0xff]
    %v1232 = vld [vmem:[%s1209 + $0xb0] sm:$0xff]
    %v1233 = vld [vmem:[%s1209 + $0xb8] sm:$0xff]
    %v1234 = vld [vmem:[%s1209 + $0xc0] sm:$0xff]
    %v1235 = vld [vmem:[%s1209 + $0xc8] sm:$0xff]
    %v1236 = vld [vmem:[%s1209 + $0xd0] sm:$0xff]
    %v1237 = vld [vmem:[%s1209 + $0xd8] sm:$0xff]
    %v1238 = vld [vmem:[%s1209 + $0xe0] sm:$0xff]
    %v1239 = vld [vmem:[%s1209 + $0xe8] sm:$0xff]
    %v1240 = vld [vmem:[%s1209 + $0xf0] sm:$0xff]
    %v1241 = vld [vmem:[%s1209 + $0xf8] sm:$0xff]
    %v1242 = vld [vmem:[%s1209 + $0x100] sm:$0xff]
    %v1243 = vld [vmem:[%s1209 + $0x108] sm:$0xff]
    %v1244 = vld [vmem:[%s1209 + $0x110] sm:$0xff]
    %v1245 = vld [vmem:[%s1209 + $0x118] sm:$0xff]
    %1246 = vst.msk [vmem:[%s121 + $0x1] sm:$0xff] %vm27, %v1193
    %1247 = vst.msk [vmem:[%s121 + $0x11] sm:$0xff] %vm27, %v1194
    %1248 = vst.msk [vmem:[%s121 + $0x21] sm:$0xff] %vm27, %v1195
    %1249 = vst.msk [vmem:[%s121 + $0x31] sm:$0xff] %vm27, %v1196
    %1250 = vst.msk [vmem:[%s121 + $0x41] sm:$0xff] %vm27, %v1197
    %1251 = vst.msk [vmem:[%s121 + $0x51] sm:$0xff] %vm27, %v1198
    %1252 = vst.msk [vmem:[%s121 + $0x61] sm:$0xff] %vm27, %v1199
    %1253 = vst.msk [vmem:[%s121 + $0x71] sm:$0xff] %vm27, %v1200
    %1254 = vst.msk [vmem:[%s121 + $0xa1] sm:$0xff] %vm27, %v1201
    %1255 = vst.msk [vmem:[%s121 + $0xb1] sm:$0xff] %vm27, %v1202
    %1256 = vst.msk [vmem:[%s121 + $0xc1] sm:$0xff] %vm27, %v1203
    %1257 = vst.msk [vmem:[%s121 + $0xd1] sm:$0xff] %vm27, %v1204
    %1258 = vst.msk [vmem:[%s121 + $0xe1] sm:$0xff] %vm27, %v1205
    %1259 = vst.msk [vmem:[%s121 + $0xf1] sm:$0xff] %vm27, %v1206
    %1260 = vst.msk [vmem:[%s121 + $0x101] sm:$0xff] %vm27, %v1207
    %1261 = vst.msk [vmem:[%s121 + $0x111] sm:$0xff] %vm27, %v1208
    %v1262 = vld [vmem:[#allocation2] sm:$0xff]
    %v1263 = vld [vmem:[#allocation2 + $0x8] sm:$0x3]
    %v1264 = vld [vmem:[#allocation2 + $0x10] sm:$0xff]
    %v1265 = vld [vmem:[#allocation2 + $0x18] sm:$0x3]
    %v1266 = vld [vmem:[#allocation2 + $0x20] sm:$0xff]
    %v1267 = vld [vmem:[#allocation2 + $0x28] sm:$0x3]
    %v1268 = vld [vmem:[#allocation2 + $0x30] sm:$0xff]
    %v1269 = vld [vmem:[#allocation2 + $0x38] sm:$0x3]
    %v1270 = vld [vmem:[#allocation2 + $0x40] sm:$0xff]
    %v1271 = vld [vmem:[#allocation2 + $0x48] sm:$0x3]
    %v1272 = vld [vmem:[#allocation2 + $0x50] sm:$0xff]
    %v1273 = vld [vmem:[#allocation2 + $0x58] sm:$0x3]
    %v1274 = vld [vmem:[#allocation2 + $0x60] sm:$0xff]
    %v1275 = vld [vmem:[#allocation2 + $0x68] sm:$0x3]
    %v1276 = vld [vmem:[#allocation2 + $0x70] sm:$0xff]
    %v1277 = vld [vmem:[#allocation2 + $0x78] sm:$0x3]
    %v1278 = vld [vmem:[#allocation2 + $0x80] sm:$0xff]
    %v1279 = vld [vmem:[#allocation2 + $0x88] sm:$0x3]
    %v1280 = vld [vmem:[#allocation2 + $0x90] sm:$0xff]
    %v1281 = vld [vmem:[#allocation2 + $0x98] sm:$0x3]
    %v1282 = vld [vmem:[#allocation2 + $0xa0] sm:$0xff]
    %v1283 = vld [vmem:[#allocation2 + $0xa8] sm:$0x3]
    %v1284 = vld [vmem:[#allocation2 + $0xb0] sm:$0xff]
    %v1285 = vld [vmem:[#allocation2 + $0xb8] sm:$0x3]
    %v1286 = vld [vmem:[#allocation2 + $0xc0] sm:$0xff]
    %v1287 = vld [vmem:[#allocation2 + $0xc8] sm:$0x3]
    %v1288 = vld [vmem:[#allocation2 + $0xd0] sm:$0xff]
    %v1289 = vld [vmem:[#allocation2 + $0xd8] sm:$0x3]
    %v1290 = vld [vmem:[#allocation2 + $0xe0] sm:$0xff]
    %v1291 = vld [vmem:[#allocation2 + $0xe8] sm:$0x3]
    %v1292 = vld [vmem:[#allocation2 + $0xf0] sm:$0xff]
    %v1293 = vld [vmem:[#allocation2 + $0xf8] sm:$0x3]
    %v1294 = vld [vmem:[#allocation2 + $0x100] sm:$0xff]
    %v1295 = vld [vmem:[#allocation2 + $0x108] sm:$0x3]
    %v1296 = vld [vmem:[#allocation2 + $0x110] sm:$0xff]
    %v1297 = vld [vmem:[#allocation2 + $0x118] sm:$0x3]
    %v1298 = vld [vmem:[#allocation2 + $0x120] sm:$0xff]
    %v1299 = vld [vmem:[#allocation2 + $0x128] sm:$0x3]
    %v1300 = vld [vmem:[#allocation2 + $0x130] sm:$0xff]
    %v1301 = vld [vmem:[#allocation2 + $0x138] sm:$0x3]
    %1302 = vst.msk [vmem:[#allocation3] sm:$0xff] %vm27, %v1262
    %1303 = vst.msk [vmem:[#allocation3 + $0x18] sm:$0xff] %vm27, %v1264
    %1304 = vst.msk [vmem:[#allocation3 + $0x30] sm:$0xff] %vm27, %v1266
    %1305 = vst.msk [vmem:[#allocation3 + $0x48] sm:$0xff] %vm27, %v1268
    %1306 = vst.msk [vmem:[#allocation3 + $0x60] sm:$0xff] %vm27, %v1270
    %1307 = vst.msk [vmem:[#allocation3 + $0x78] sm:$0xff] %vm27, %v1272
    %1308 = vst.msk [vmem:[#allocation3 + $0x90] sm:$0xff] %vm27, %v1274
    %1309 = vst.msk [vmem:[#allocation3 + $0xa8] sm:$0xff] %vm27, %v1276
    %1310 = vst.msk [vmem:[#allocation3 + $0xc0] sm:$0xff] %vm27, %v1282
    %1311 = vst.msk [vmem:[#allocation3 + $0xd8] sm:$0xff] %vm27, %v1284
    %1312 = vst.msk [vmem:[#allocation3 + $0xf0] sm:$0xff] %vm27, %v1286
    %1313 = vst.msk [vmem:[#allocation3 + $0x108] sm:$0xff] %vm27, %v1288
    %1314 = vst.msk [vmem:[#allocation3 + $0x120] sm:$0xff] %vm27, %v1290
    %1315 = vst.msk [vmem:[#allocation3 + $0x138] sm:$0xff] %vm27, %v1292
    %1316 = vst.msk [vmem:[#allocation3 + $0x150] sm:$0xff] %vm27, %v1294
    %1317 = vst.msk [vmem:[#allocation3 + $0x168] sm:$0xff] %vm27, %v1296
    %v1350 = vrot.slane %v1262, 1
    %v1351 = vrot.slane %v1263, 1
    %v1352 = vsel %vm226, %v1350, %v1351
    %v1353 = vrot.slane %v1264, 1
    %v1354 = vrot.slane %v1265, 1
    %v1355 = vsel %vm226, %v1353, %v1354
    %v1356 = vrot.slane %v1266, 1
    %v1357 = vrot.slane %v1267, 1
    %v1358 = vsel %vm226, %v1356, %v1357
    %v1359 = vrot.slane %v1268, 1
    %v1360 = vrot.slane %v1269, 1
    %v1361 = vsel %vm226, %v1359, %v1360
    %v1362 = vrot.slane %v1270, 1
    %v1363 = vrot.slane %v1271, 1
    %v1364 = vsel %vm226, %v1362, %v1363
    %v1365 = vrot.slane %v1272, 1
    %v1366 = vrot.slane %v1273, 1
    %v1367 = vsel %vm226, %v1365, %v1366
    %v1368 = vrot.slane %v1274, 1
    %v1369 = vrot.slane %v1275, 1
    %v1370 = vsel %vm226, %v1368, %v1369
    %v1371 = vrot.slane %v1276, 1
    %v1372 = vrot.slane %v1277, 1
    %v1373 = vsel %vm226, %v1371, %v1372
    %v1374 = vrot.slane %v1282, 1
    %v1375 = vrot.slane %v1283, 1
    %v1376 = vsel %vm226, %v1374, %v1375
    %v1377 = vrot.slane %v1284, 1
    %v1378 = vrot.slane %v1285, 1
    %v1379 = vsel %vm226, %v1377, %v1378
    %v1380 = vrot.slane %v1286, 1
    %v1381 = vrot.slane %v1287, 1
    %v1382 = vsel %vm226, %v1380, %v1381
    %v1383 = vrot.slane %v1288, 1
    %v1384 = vrot.slane %v1289, 1
    %v1385 = vsel %vm226, %v1383, %v1384
    %v1386 = vrot.slane %v1290, 1
    %v1387 = vrot.slane %v1291, 1
    %v1388 = vsel %vm226, %v1386, %v1387
    %v1389 = vrot.slane %v1292, 1
    %v1390 = vrot.slane %v1293, 1
    %v1391 = vsel %vm226, %v1389, %v1390
    %v1392 = vrot.slane %v1294, 1
    %v1393 = vrot.slane %v1295, 1
    %v1394 = vsel %vm226, %v1392, %v1393
    %v1395 = vrot.slane %v1296, 1
    %v1396 = vrot.slane %v1297, 1
    %v1397 = vsel %vm226, %v1395, %v1396
    %1398 = vrot.lane.b32.xlu0 %v1352, 32
    %v1399 = vpop.permute.xlu0 %1398
    %1400 = vrot.lane.b32.xlu0 %v1355, 32
    %v1401 = vpop.permute.xlu0 %1400
    %1402 = vrot.lane.b32.xlu0 %v1358, 32
    %v1403 = vpop.permute.xlu0 %1402
    %1404 = vrot.lane.b32.xlu0 %v1361, 32
    %v1405 = vpop.permute.xlu0 %1404
    %1406 = vrot.lane.b32.xlu0 %v1364, 32
    %v1407 = vpop.permute.xlu0 %1406
    %1408 = vrot.lane.b32.xlu0 %v1367, 32
    %v1409 = vpop.permute.xlu0 %1408
    %1410 = vrot.lane.b32.xlu0 %v1370, 32
    %v1411 = vpop.permute.xlu0 %1410
    %1412 = vrot.lane.b32.xlu0 %v1373, 32
    %v1413 = vpop.permute.xlu0 %1412
    %1414 = vrot.lane.b32.xlu0 %v1376, 32
    %v1415 = vpop.permute.xlu0 %1414
    %1416 = vrot.lane.b32.xlu0 %v1379, 32
    %v1417 = vpop.permute.xlu0 %1416
    %1418 = vrot.lane.b32.xlu0 %v1382, 32
    %v1419 = vpop.permute.xlu0 %1418
    %1420 = vrot.lane.b32.xlu0 %v1385, 32
    %v1421 = vpop.permute.xlu0 %1420
    %1422 = vrot.lane.b32.xlu0 %v1388, 32
    %v1423 = vpop.permute.xlu0 %1422
    %1424 = vrot.lane.b32.xlu0 %v1391, 32
    %v1425 = vpop.permute.xlu0 %1424
    %1426 = vrot.lane.b32.xlu0 %v1394, 32
    %v1427 = vpop.permute.xlu0 %1426
    %1428 = vrot.lane.b32.xlu0 %v1397, 32
    %v1429 = vpop.permute.xlu0 %1428
    %1446 = vst.msk [vmem:[#allocation3] sm:$0xff] %vm323, %v1399
    %1447 = vst.msk [vmem:[#allocation3 + $0x18] sm:$0xff] %vm323, %v1401
    %1448 = vst.msk [vmem:[#allocation3 + $0x30] sm:$0xff] %vm323, %v1403
    %1449 = vst.msk [vmem:[#allocation3 + $0x48] sm:$0xff] %vm323, %v1405
    %1450 = vst.msk [vmem:[#allocation3 + $0x60] sm:$0xff] %vm323, %v1407
    %1451 = vst.msk [vmem:[#allocation3 + $0x78] sm:$0xff] %vm323, %v1409
    %1452 = vst.msk [vmem:[#allocation3 + $0x90] sm:$0xff] %vm323, %v1411
    %1453 = vst.msk [vmem:[#allocation3 + $0xa8] sm:$0xff] %vm323, %v1413
    %1454 = vst.msk [vmem:[#allocation3 + $0xc0] sm:$0xff] %vm323, %v1415
    %1455 = vst.msk [vmem:[#allocation3 + $0xd8] sm:$0xff] %vm323, %v1417
    %1456 = vst.msk [vmem:[#allocation3 + $0xf0] sm:$0xff] %vm323, %v1419
    %1457 = vst.msk [vmem:[#allocation3 + $0x108] sm:$0xff] %vm323, %v1421
    %1458 = vst.msk [vmem:[#allocation3 + $0x120] sm:$0xff] %vm323, %v1423
    %1459 = vst.msk [vmem:[#allocation3 + $0x138] sm:$0xff] %vm323, %v1425
    %1460 = vst.msk [vmem:[#allocation3 + $0x150] sm:$0xff] %vm323, %v1427
    %1461 = vst.msk [vmem:[#allocation3 + $0x168] sm:$0xff] %vm323, %v1429
    %v1462 = vrot.slane %v1262, 2
    %v1463 = vrot.slane %v1263, 2
    %v1464 = vsel %vm340, %v1462, %v1463
    %v1465 = vrot.slane %v1264, 2
    %v1466 = vrot.slane %v1265, 2
    %v1467 = vsel %vm340, %v1465, %v1466
    %v1468 = vrot.slane %v1266, 2
    %v1469 = vrot.slane %v1267, 2
    %v1470 = vsel %vm340, %v1468, %v1469
    %v1471 = vrot.slane %v1268, 2
    %v1472 = vrot.slane %v1269, 2
    %v1473 = vsel %vm340, %v1471, %v1472
    %v1474 = vrot.slane %v1270, 2
    %v1475 = vrot.slane %v1271, 2
    %v1476 = vsel %vm340, %v1474, %v1475
    %v1477 = vrot.slane %v1272, 2
    %v1478 = vrot.slane %v1273, 2
    %v1479 = vsel %vm340, %v1477, %v1478
    %v1480 = vrot.slane %v1274, 2
    %v1481 = vrot.slane %v1275, 2
    %v1482 = vsel %vm340, %v1480, %v1481
    %v1483 = vrot.slane %v1276, 2
    %v1484 = vrot.slane %v1277, 2
    %v1485 = vsel %vm340, %v1483, %v1484
    %v1486 = vrot.slane %v1282, 2
    %v1487 = vrot.slane %v1283, 2
    %v1488 = vsel %vm340, %v1486, %v1487
    %v1489 = vrot.slane %v1284, 2
    %v1490 = vrot.slane %v1285, 2
    %v1491 = vsel %vm340, %v1489, %v1490
    %v1492 = vrot.slane %v1286, 2
    %v1493 = vrot.slane %v1287, 2
    %v1494 = vsel %vm340, %v1492, %v1493
    %v1495 = vrot.slane %v1288, 2
    %v1496 = vrot.slane %v1289, 2
    %v1497 = vsel %vm340, %v1495, %v1496
    %v1498 = vrot.slane %v1290, 2
    %v1499 = vrot.slane %v1291, 2
    %v1500 = vsel %vm340, %v1498, %v1499
    %v1501 = vrot.slane %v1292, 2
    %v1502 = vrot.slane %v1293, 2
    %v1503 = vsel %vm340, %v1501, %v1502
    %v1504 = vrot.slane %v1294, 2
    %v1505 = vrot.slane %v1295, 2
    %v1506 = vsel %vm340, %v1504, %v1505
    %v1507 = vrot.slane %v1296, 2
    %v1508 = vrot.slane %v1297, 2
    %v1509 = vsel %vm340, %v1507, %v1508
    %1510 = vrot.lane.b32.xlu0 %v1464, 64
    %v1511 = vpop.permute.xlu0 %1510
    %1512 = vrot.lane.b32.xlu0 %v1467, 64
    %v1513 = vpop.permute.xlu0 %1512
    %1514 = vrot.lane.b32.xlu0 %v1470, 64
    %v1515 = vpop.permute.xlu0 %1514
    %1516 = vrot.lane.b32.xlu0 %v1473, 64
    %v1517 = vpop.permute.xlu0 %1516
    %1518 = vrot.lane.b32.xlu0 %v1476, 64
    %v1519 = vpop.permute.xlu0 %1518
    %1520 = vrot.lane.b32.xlu0 %v1479, 64
    %v1521 = vpop.permute.xlu0 %1520
    %1522 = vrot.lane.b32.xlu0 %v1482, 64
    %v1523 = vpop.permute.xlu0 %1522
    %1524 = vrot.lane.b32.xlu0 %v1485, 64
    %v1525 = vpop.permute.xlu0 %1524
    %1526 = vrot.lane.b32.xlu0 %v1488, 64
    %v1527 = vpop.permute.xlu0 %1526
    %1528 = vrot.lane.b32.xlu0 %v1491, 64
    %v1529 = vpop.permute.xlu0 %1528
    %1530 = vrot.lane.b32.xlu0 %v1494, 64
    %v1531 = vpop.permute.xlu0 %1530
    %1532 = vrot.lane.b32.xlu0 %v1497, 64
    %v1533 = vpop.permute.xlu0 %1532
    %1534 = vrot.lane.b32.xlu0 %v1500, 64
    %v1535 = vpop.permute.xlu0 %1534
    %1536 = vrot.lane.b32.xlu0 %v1503, 64
    %v1537 = vpop.permute.xlu0 %1536
    %1538 = vrot.lane.b32.xlu0 %v1506, 64
    %v1539 = vpop.permute.xlu0 %1538
    %1540 = vrot.lane.b32.xlu0 %v1509, 64
    %v1541 = vpop.permute.xlu0 %1540
    %1558 = vst.msk [vmem:[#allocation3] sm:$0xff] %vm437, %v1511
    %1559 = vst.msk [vmem:[#allocation3 + $0x18] sm:$0xff] %vm437, %v1513
    %1560 = vst.msk [vmem:[#allocation3 + $0x30] sm:$0xff] %vm437, %v1515
    %1561 = vst.msk [vmem:[#allocation3 + $0x48] sm:$0xff] %vm437, %v1517
    %1562 = vst.msk [vmem:[#allocation3 + $0x60] sm:$0xff] %vm437, %v1519
    %1563 = vst.msk [vmem:[#allocation3 + $0x78] sm:$0xff] %vm437, %v1521
    %1564 = vst.msk [vmem:[#allocation3 + $0x90] sm:$0xff] %vm437, %v1523
    %1565 = vst.msk [vmem:[#allocation3 + $0xa8] sm:$0xff] %vm437, %v1525
    %1566 = vst.msk [vmem:[#allocation3 + $0xc0] sm:$0xff] %vm437, %v1527
    %1567 = vst.msk [vmem:[#allocation3 + $0xd8] sm:$0xff] %vm437, %v1529
    %1568 = vst.msk [vmem:[#allocation3 + $0xf0] sm:$0xff] %vm437, %v1531
    %1569 = vst.msk [vmem:[#allocation3 + $0x108] sm:$0xff] %vm437, %v1533
    %1570 = vst.msk [vmem:[#allocation3 + $0x120] sm:$0xff] %vm437, %v1535
    %1571 = vst.msk [vmem:[#allocation3 + $0x138] sm:$0xff] %vm437, %v1537
    %1572 = vst.msk [vmem:[#allocation3 + $0x150] sm:$0xff] %vm437, %v1539
    %1573 = vst.msk [vmem:[#allocation3 + $0x168] sm:$0xff] %vm437, %v1541
    %1576 = vrot.lane.b32.xlu0 %v1264, 96
    %v1577 = vpop.permute.xlu0 %1576
    %1578 = vrot.lane.b32.xlu0 %v1266, 96
    %v1579 = vpop.permute.xlu0 %1578
    %1580 = vrot.lane.b32.xlu0 %v1268, 96
    %v1581 = vpop.permute.xlu0 %1580
    %1582 = vrot.lane.b32.xlu0 %v1270, 96
    %v1583 = vpop.permute.xlu0 %1582
    %1584 = vrot.lane.b32.xlu0 %v1272, 96
    %v1585 = vpop.permute.xlu0 %1584
    %1586 = vrot.lane.b32.xlu0 %v1274, 96
    %v1587 = vpop.permute.xlu0 %1586
    %1588 = vrot.lane.b32.xlu0 %v1276, 96
    %v1589 = vpop.permute.xlu0 %1588
    %1590 = vrot.lane.b32.xlu0 %v1278, 96
    %v1591 = vpop.permute.xlu0 %1590
    %1592 = vrot.lane.b32.xlu0 %v1284, 96
    %v1593 = vpop.permute.xlu0 %1592
    %1594 = vrot.lane.b32.xlu0 %v1286, 96
    %v1595 = vpop.permute.xlu0 %1594
    %1596 = vrot.lane.b32.xlu0 %v1288, 96
    %v1597 = vpop.permute.xlu0 %1596
    %1598 = vrot.lane.b32.xlu0 %v1290, 96
    %v1599 = vpop.permute.xlu0 %1598
    %1600 = vrot.lane.b32.xlu0 %v1292, 96
    %v1601 = vpop.permute.xlu0 %1600
    %1602 = vrot.lane.b32.xlu0 %v1294, 96
    %v1603 = vpop.permute.xlu0 %1602
    %1604 = vrot.lane.b32.xlu0 %v1296, 96
    %v1605 = vpop.permute.xlu0 %1604
    %1606 = vrot.lane.b32.xlu0 %v1298, 96
    %v1607 = vpop.permute.xlu0 %1606
    %1624 = vst.msk [vmem:[#allocation3] sm:$0xff] %vm504, %v1577
    %1625 = vst.msk [vmem:[#allocation3 + $0x18] sm:$0xff] %vm504, %v1579
    %1626 = vst.msk [vmem:[#allocation3 + $0x30] sm:$0xff] %vm504, %v1581
    %1627 = vst.msk [vmem:[#allocation3 + $0x48] sm:$0xff] %vm504, %v1583
    %1628 = vst.msk [vmem:[#allocation3 + $0x60] sm:$0xff] %vm504, %v1585
    %1629 = vst.msk [vmem:[#allocation3 + $0x78] sm:$0xff] %vm504, %v1587
    %1630 = vst.msk [vmem:[#allocation3 + $0x90] sm:$0xff] %vm504, %v1589
    %1631 = vst.msk [vmem:[#allocation3 + $0xa8] sm:$0xff] %vm504, %v1591
    %1632 = vst.msk [vmem:[#allocation3 + $0xc0] sm:$0xff] %vm504, %v1593
    %1633 = vst.msk [vmem:[#allocation3 + $0xd8] sm:$0xff] %vm504, %v1595
    %1634 = vst.msk [vmem:[#allocation3 + $0xf0] sm:$0xff] %vm504, %v1597
    %1635 = vst.msk [vmem:[#allocation3 + $0x108] sm:$0xff] %vm504, %v1599
    %1636 = vst.msk [vmem:[#allocation3 + $0x120] sm:$0xff] %vm504, %v1601
    %1637 = vst.msk [vmem:[#allocation3 + $0x138] sm:$0xff] %vm504, %v1603
    %1638 = vst.msk [vmem:[#allocation3 + $0x150] sm:$0xff] %vm504, %v1605
    %1639 = vst.msk [vmem:[#allocation3 + $0x168] sm:$0xff] %vm504, %v1607
    %v1642 = vrot.slane %v1278, 1
    %v1643 = vrot.slane %v1279, 1
    %v1644 = vsel %vm226, %v1642, %v1643
    %v1645 = vrot.slane %v1298, 1
    %v1646 = vrot.slane %v1299, 1
    %v1647 = vsel %vm226, %v1645, %v1646
    %1664 = vst.msk [vmem:[#allocation3 + $0x8] sm:$0xff] %vm27, %v1355
    %1665 = vst.msk [vmem:[#allocation3 + $0x20] sm:$0xff] %vm27, %v1358
    %1666 = vst.msk [vmem:[#allocation3 + $0x38] sm:$0xff] %vm27, %v1361
    %1667 = vst.msk [vmem:[#allocation3 + $0x50] sm:$0xff] %vm27, %v1364
    %1668 = vst.msk [vmem:[#allocation3 + $0x68] sm:$0xff] %vm27, %v1367
    %1669 = vst.msk [vmem:[#allocation3 + $0x80] sm:$0xff] %vm27, %v1370
    %1670 = vst.msk [vmem:[#allocation3 + $0x98] sm:$0xff] %vm27, %v1373
    %1671 = vst.msk [vmem:[#allocation3 + $0xb0] sm:$0xff] %vm27, %v1644
    %1672 = vst.msk [vmem:[#allocation3 + $0xc8] sm:$0xff] %vm27, %v1379
    %1673 = vst.msk [vmem:[#allocation3 + $0xe0] sm:$0xff] %vm27, %v1382
    %1674 = vst.msk [vmem:[#allocation3 + $0xf8] sm:$0xff] %vm27, %v1385
    %1675 = vst.msk [vmem:[#allocation3 + $0x110] sm:$0xff] %vm27, %v1388
    %1676 = vst.msk [vmem:[#allocation3 + $0x128] sm:$0xff] %vm27, %v1391
    %1677 = vst.msk [vmem:[#allocation3 + $0x140] sm:$0xff] %vm27, %v1394
    %1678 = vst.msk [vmem:[#allocation3 + $0x158] sm:$0xff] %vm27, %v1397
    %1679 = vst.msk [vmem:[#allocation3 + $0x170] sm:$0xff] %vm27, %v1647
    %v1680 = vrot.slane %v1278, 2
    %v1681 = vrot.slane %v1279, 2
    %v1682 = vsel %vm340, %v1680, %v1681
    %v1683 = vrot.slane %v1298, 2
    %v1684 = vrot.slane %v1299, 2
    %v1685 = vsel %vm340, %v1683, %v1684
    %1686 = vrot.lane.b32.xlu0 %v1467, 32
    %v1687 = vpop.permute.xlu0 %1686
    %1688 = vrot.lane.b32.xlu0 %v1470, 32
    %v1689 = vpop.permute.xlu0 %1688
    %1690 = vrot.lane.b32.xlu0 %v1473, 32
    %v1691 = vpop.permute.xlu0 %1690
    %1692 = vrot.lane.b32.xlu0 %v1476, 32
    %v1693 = vpop.permute.xlu0 %1692
    %1694 = vrot.lane.b32.xlu0 %v1479, 32
    %v1695 = vpop.permute.xlu0 %1694
    %1696 = vrot.lane.b32.xlu0 %v1482, 32
    %v1697 = vpop.permute.xlu0 %1696
    %1698 = vrot.lane.b32.xlu0 %v1485, 32
    %v1699 = vpop.permute.xlu0 %1698
    %1700 = vrot.lane.b32.xlu0 %v1682, 32
    %v1701 = vpop.permute.xlu0 %1700
    %1702 = vrot.lane.b32.xlu0 %v1491, 32
    %v1703 = vpop.permute.xlu0 %1702
    %1704 = vrot.lane.b32.xlu0 %v1494, 32
    %v1705 = vpop.permute.xlu0 %1704
    %1706 = vrot.lane.b32.xlu0 %v1497, 32
    %v1707 = vpop.permute.xlu0 %1706
    %1708 = vrot.lane.b32.xlu0 %v1500, 32
    %v1709 = vpop.permute.xlu0 %1708
    %1710 = vrot.lane.b32.xlu0 %v1503, 32
    %v1711 = vpop.permute.xlu0 %1710
    %1712 = vrot.lane.b32.xlu0 %v1506, 32
    %v1713 = vpop.permute.xlu0 %1712
    %1714 = vrot.lane.b32.xlu0 %v1509, 32
    %v1715 = vpop.permute.xlu0 %1714
    %1716 = vrot.lane.b32.xlu0 %v1685, 32
    %v1717 = vpop.permute.xlu0 %1716
    %1734 = vst.msk [vmem:[#allocation3 + $0x8] sm:$0xff] %vm323, %v1687
    %1735 = vst.msk [vmem:[#allocation3 + $0x20] sm:$0xff] %vm323, %v1689
    %1736 = vst.msk [vmem:[#allocation3 + $0x38] sm:$0xff] %vm323, %v1691
    %1737 = vst.msk [vmem:[#allocation3 + $0x50] sm:$0xff] %vm323, %v1693
    %1738 = vst.msk [vmem:[#allocation3 + $0x68] sm:$0xff] %vm323, %v1695
    %1739 = vst.msk [vmem:[#allocation3 + $0x80] sm:$0xff] %vm323, %v1697
    %1740 = vst.msk [vmem:[#allocation3 + $0x98] sm:$0xff] %vm323, %v1699
    %1741 = vst.msk [vmem:[#allocation3 + $0xb0] sm:$0xff] %vm323, %v1701
    %1742 = vst.msk [vmem:[#allocation3 + $0xc8] sm:$0xff] %vm323, %v1703
    %1743 = vst.msk [vmem:[#allocation3 + $0xe0] sm:$0xff] %vm323, %v1705
    %1744 = vst.msk [vmem:[#allocation3 + $0xf8] sm:$0xff] %vm323, %v1707
    %1745 = vst.msk [vmem:[#allocation3 + $0x110] sm:$0xff] %vm323, %v1709
    %1746 = vst.msk [vmem:[#allocation3 + $0x128] sm:$0xff] %vm323, %v1711
    %1747 = vst.msk [vmem:[#allocation3 + $0x140] sm:$0xff] %vm323, %v1713
    %1748 = vst.msk [vmem:[#allocation3 + $0x158] sm:$0xff] %vm323, %v1715
    %1749 = vst.msk [vmem:[#allocation3 + $0x170] sm:$0xff] %vm323, %v1717
    %1752 = vrot.lane.b32.xlu0 %v1266, 64
    %v1753 = vpop.permute.xlu0 %1752
    %1754 = vrot.lane.b32.xlu0 %v1268, 64
    %v1755 = vpop.permute.xlu0 %1754
    %1756 = vrot.lane.b32.xlu0 %v1270, 64
    %v1757 = vpop.permute.xlu0 %1756
    %1758 = vrot.lane.b32.xlu0 %v1272, 64
    %v1759 = vpop.permute.xlu0 %1758
    %1760 = vrot.lane.b32.xlu0 %v1274, 64
    %v1761 = vpop.permute.xlu0 %1760
    %1762 = vrot.lane.b32.xlu0 %v1276, 64
    %v1763 = vpop.permute.xlu0 %1762
    %1764 = vrot.lane.b32.xlu0 %v1278, 64
    %v1765 = vpop.permute.xlu0 %1764
    %1766 = vrot.lane.b32.xlu0 %v1280, 64
    %v1767 = vpop.permute.xlu0 %1766
    %1768 = vrot.lane.b32.xlu0 %v1286, 64
    %v1769 = vpop.permute.xlu0 %1768
    %1770 = vrot.lane.b32.xlu0 %v1288, 64
    %v1771 = vpop.permute.xlu0 %1770
    %1772 = vrot.lane.b32.xlu0 %v1290, 64
    %v1773 = vpop.permute.xlu0 %1772
    %1774 = vrot.lane.b32.xlu0 %v1292, 64
    %v1775 = vpop.permute.xlu0 %1774
    %1776 = vrot.lane.b32.xlu0 %v1294, 64
    %v1777 = vpop.permute.xlu0 %1776
    %1778 = vrot.lane.b32.xlu0 %v1296, 64
    %v1779 = vpop.permute.xlu0 %1778
    %1780 = vrot.lane.b32.xlu0 %v1298, 64
    %v1781 = vpop.permute.xlu0 %1780
    %1782 = vrot.lane.b32.xlu0 %v1300, 64
    %v1783 = vpop.permute.xlu0 %1782
    %1800 = vst.msk [vmem:[#allocation3 + $0x8] sm:$0xff] %vm437, %v1753
    %1801 = vst.msk [vmem:[#allocation3 + $0x20] sm:$0xff] %vm437, %v1755
    %1802 = vst.msk [vmem:[#allocation3 + $0x38] sm:$0xff] %vm437, %v1757
    %1803 = vst.msk [vmem:[#allocation3 + $0x50] sm:$0xff] %vm437, %v1759
    %1804 = vst.msk [vmem:[#allocation3 + $0x68] sm:$0xff] %vm437, %v1761
    %1805 = vst.msk [vmem:[#allocation3 + $0x80] sm:$0xff] %vm437, %v1763
    %1806 = vst.msk [vmem:[#allocation3 + $0x98] sm:$0xff] %vm437, %v1765
    %1807 = vst.msk [vmem:[#allocation3 + $0xb0] sm:$0xff] %vm437, %v1767
    %1808 = vst.msk [vmem:[#allocation3 + $0xc8] sm:$0xff] %vm437, %v1769
    %1809 = vst.msk [vmem:[#allocation3 + $0xe0] sm:$0xff] %vm437, %v1771
    %1810 = vst.msk [vmem:[#allocation3 + $0xf8] sm:$0xff] %vm437, %v1773
    %1811 = vst.msk [vmem:[#allocation3 + $0x110] sm:$0xff] %vm437, %v1775
    %1812 = vst.msk [vmem:[#allocation3 + $0x128] sm:$0xff] %vm437, %v1777
    %1813 = vst.msk [vmem:[#allocation3 + $0x140] sm:$0xff] %vm437, %v1779
    %1814 = vst.msk [vmem:[#allocation3 + $0x158] sm:$0xff] %vm437, %v1781
    %1815 = vst.msk [vmem:[#allocation3 + $0x170] sm:$0xff] %vm437, %v1783
    %v1818 = vrot.slane %v1280, 1
    %v1819 = vrot.slane %v1281, 1
    %v1820 = vsel %vm226, %v1818, %v1819
    %v1821 = vrot.slane %v1300, 1
    %v1822 = vrot.slane %v1301, 1
    %v1823 = vsel %vm226, %v1821, %v1822
    %1824 = vrot.lane.b32.xlu0 %v1358, 96
    %v1825 = vpop.permute.xlu0 %1824
    %1826 = vrot.lane.b32.xlu0 %v1361, 96
    %v1827 = vpop.permute.xlu0 %1826
    %1828 = vrot.lane.b32.xlu0 %v1364, 96
    %v1829 = vpop.permute.xlu0 %1828
    %1830 = vrot.lane.b32.xlu0 %v1367, 96
    %v1831 = vpop.permute.xlu0 %1830
    %1832 = vrot.lane.b32.xlu0 %v1370, 96
    %v1833 = vpop.permute.xlu0 %1832
    %1834 = vrot.lane.b32.xlu0 %v1373, 96
    %v1835 = vpop.permute.xlu0 %1834
    %1836 = vrot.lane.b32.xlu0 %v1644, 96
    %v1837 = vpop.permute.xlu0 %1836
    %1838 = vrot.lane.b32.xlu0 %v1820, 96
    %v1839 = vpop.permute.xlu0 %1838
    %1840 = vrot.lane.b32.xlu0 %v1382, 96
    %v1841 = vpop.permute.xlu0 %1840
    %1842 = vrot.lane.b32.xlu0 %v1385, 96
    %v1843 = vpop.permute.xlu0 %1842
    %1844 = vrot.lane.b32.xlu0 %v1388, 96
    %v1845 = vpop.permute.xlu0 %1844
    %1846 = vrot.lane.b32.xlu0 %v1391, 96
    %v1847 = vpop.permute.xlu0 %1846
    %1848 = vrot.lane.b32.xlu0 %v1394, 96
    %v1849 = vpop.permute.xlu0 %1848
    %1850 = vrot.lane.b32.xlu0 %v1397, 96
    %v1851 = vpop.permute.xlu0 %1850
    %1852 = vrot.lane.b32.xlu0 %v1647, 96
    %v1853 = vpop.permute.xlu0 %1852
    %1854 = vrot.lane.b32.xlu0 %v1823, 96
    %v1855 = vpop.permute.xlu0 %1854
    %1872 = vst.msk [vmem:[#allocation3 + $0x8] sm:$0xff] %vm504, %v1825
    %1873 = vst.msk [vmem:[#allocation3 + $0x20] sm:$0xff] %vm504, %v1827
    %1874 = vst.msk [vmem:[#allocation3 + $0x38] sm:$0xff] %vm504, %v1829
    %1875 = vst.msk [vmem:[#allocation3 + $0x50] sm:$0xff] %vm504, %v1831
    %1876 = vst.msk [vmem:[#allocation3 + $0x68] sm:$0xff] %vm504, %v1833
    %1877 = vst.msk [vmem:[#allocation3 + $0x80] sm:$0xff] %vm504, %v1835
    %1878 = vst.msk [vmem:[#allocation3 + $0x98] sm:$0xff] %vm504, %v1837
    %1879 = vst.msk [vmem:[#allocation3 + $0xb0] sm:$0xff] %vm504, %v1839
    %1880 = vst.msk [vmem:[#allocation3 + $0xc8] sm:$0xff] %vm504, %v1841
    %1881 = vst.msk [vmem:[#allocation3 + $0xe0] sm:$0xff] %vm504, %v1843
    %1882 = vst.msk [vmem:[#allocation3 + $0xf8] sm:$0xff] %vm504, %v1845
    %1883 = vst.msk [vmem:[#allocation3 + $0x110] sm:$0xff] %vm504, %v1847
    %1884 = vst.msk [vmem:[#allocation3 + $0x128] sm:$0xff] %vm504, %v1849
    %1885 = vst.msk [vmem:[#allocation3 + $0x140] sm:$0xff] %vm504, %v1851
    %1886 = vst.msk [vmem:[#allocation3 + $0x158] sm:$0xff] %vm504, %v1853
    %1887 = vst.msk [vmem:[#allocation3 + $0x170] sm:$0xff] %vm504, %v1855
    %v1888 = vrot.slane %v1280, 2
    %v1889 = vrot.slane %v1281, 2
    %v1890 = vsel %vm340, %v1888, %v1889
    %v1891 = vrot.slane %v1300, 2
    %v1892 = vrot.slane %v1301, 2
    %v1893 = vsel %vm340, %v1891, %v1892
    %1910 = vst.msk [vmem:[#allocation3 + $0x10] sm:$0xff] %vm27, %v1470
    %1911 = vst.msk [vmem:[#allocation3 + $0x28] sm:$0xff] %vm27, %v1473
    %1912 = vst.msk [vmem:[#allocation3 + $0x40] sm:$0xff] %vm27, %v1476
    %1913 = vst.msk [vmem:[#allocation3 + $0x58] sm:$0xff] %vm27, %v1479
    %1914 = vst.msk [vmem:[#allocation3 + $0x70] sm:$0xff] %vm27, %v1482
    %1915 = vst.msk [vmem:[#allocation3 + $0x88] sm:$0xff] %vm27, %v1485
    %1916 = vst.msk [vmem:[#allocation3 + $0xa0] sm:$0xff] %vm27, %v1682
    %1917 = vst.msk [vmem:[#allocation3 + $0xb8] sm:$0xff] %vm27, %v1890
    %1918 = vst.msk [vmem:[#allocation3 + $0xd0] sm:$0xff] %vm27, %v1494
    %1919 = vst.msk [vmem:[#allocation3 + $0xe8] sm:$0xff] %vm27, %v1497
    %1920 = vst.msk [vmem:[#allocation3 + $0x100] sm:$0xff] %vm27, %v1500
    %1921 = vst.msk [vmem:[#allocation3 + $0x118] sm:$0xff] %vm27, %v1503
    %1922 = vst.msk [vmem:[#allocation3 + $0x130] sm:$0xff] %vm27, %v1506
    %1923 = vst.msk [vmem:[#allocation3 + $0x148] sm:$0xff] %vm27, %v1509
    %1924 = vst.msk [vmem:[#allocation3 + $0x160] sm:$0xff] %vm27, %v1685
    %1925 = vst.msk [vmem:[#allocation3 + $0x178] sm:$0xff] %vm27, %v1893
    %v1926 = vld [vmem:[#allocation3] sm:$0xff]
    %v1927 = vld [vmem:[#allocation3 + $0x8] sm:$0xff]
    %v1928 = vld [vmem:[#allocation3 + $0x10] sm:$0xff]
    %v1929 = vld [vmem:[#allocation3 + $0x18] sm:$0xff]
    %v1930 = vld [vmem:[#allocation3 + $0x20] sm:$0xff]
    %v1931 = vld [vmem:[#allocation3 + $0x28] sm:$0xff]
    %v1932 = vld [vmem:[#allocation3 + $0x30] sm:$0xff]
    %v1933 = vld [vmem:[#allocation3 + $0x38] sm:$0xff]
    %v1934 = vld [vmem:[#allocation3 + $0x40] sm:$0xff]
    %v1935 = vld [vmem:[#allocation3 + $0x48] sm:$0xff]
    %v1936 = vld [vmem:[#allocation3 + $0x50] sm:$0xff]
    %v1937 = vld [vmem:[#allocation3 + $0x58] sm:$0xff]
    %v1938 = vld [vmem:[#allocation3 + $0x60] sm:$0xff]
    %v1939 = vld [vmem:[#allocation3 + $0x68] sm:$0xff]
    %v1940 = vld [vmem:[#allocation3 + $0x70] sm:$0xff]
    %v1941 = vld [vmem:[#allocation3 + $0x78] sm:$0xff]
    %v1942 = vld [vmem:[#allocation3 + $0x80] sm:$0xff]
    %v1943 = vld [vmem:[#allocation3 + $0x88] sm:$0xff]
    %v1944 = vld [vmem:[#allocation3 + $0x90] sm:$0xff]
    %v1945 = vld [vmem:[#allocation3 + $0x98] sm:$0xff]
    %v1946 = vld [vmem:[#allocation3 + $0xa0] sm:$0xff]
    %v1947 = vld [vmem:[#allocation3 + $0xa8] sm:$0xff]
    %v1948 = vld [vmem:[#allocation3 + $0xb0] sm:$0xff]
    %v1949 = vld [vmem:[#allocation3 + $0xb8] sm:$0xff]
    %v1950 = vld [vmem:[#allocation3 + $0xc0] sm:$0xff]
    %v1951 = vld [vmem:[#allocation3 + $0xc8] sm:$0xff]
    %v1952 = vld [vmem:[#allocation3 + $0xd0] sm:$0xff]
    %v1953 = vld [vmem:[#allocation3 + $0xd8] sm:$0xff]
    %v1954 = vld [vmem:[#allocation3 + $0xe0] sm:$0xff]
    %v1955 = vld [vmem:[#allocation3 + $0xe8] sm:$0xff]
    %v1956 = vld [vmem:[#allocation3 + $0xf0] sm:$0xff]
    %v1957 = vld [vmem:[#allocation3 + $0xf8] sm:$0xff]
    %v1958 = vld [vmem:[#allocation3 + $0x100] sm:$0xff]
    %v1959 = vld [vmem:[#allocation3 + $0x108] sm:$0xff]
    %v1960 = vld [vmem:[#allocation3 + $0x110] sm:$0xff]
    %v1961 = vld [vmem:[#allocation3 + $0x118] sm:$0xff]
    %v1962 = vld [vmem:[#allocation3 + $0x120] sm:$0xff]
    %v1963 = vld [vmem:[#allocation3 + $0x128] sm:$0xff]
    %v1964 = vld [vmem:[#allocation3 + $0x130] sm:$0xff]
    %v1965 = vld [vmem:[#allocation3 + $0x138] sm:$0xff]
    %v1966 = vld [vmem:[#allocation3 + $0x140] sm:$0xff]
    %v1967 = vld [vmem:[#allocation3 + $0x148] sm:$0xff]
    %v1968 = vld [vmem:[#allocation3 + $0x150] sm:$0xff]
    %v1969 = vld [vmem:[#allocation3 + $0x158] sm:$0xff]
    %v1970 = vld [vmem:[#allocation3 + $0x160] sm:$0xff]
    %v1971 = vld [vmem:[#allocation3 + $0x168] sm:$0xff]
    %v1972 = vld [vmem:[#allocation3 + $0x170] sm:$0xff]
    %v1973 = vld [vmem:[#allocation3 + $0x178] sm:$0xff]
    %v1975 = vsel %vm27, %v1928, 0
    %v1978 = vsel %vm27, %v1931, 0
    %v1981 = vsel %vm27, %v1934, 0
    %v1984 = vsel %vm27, %v1937, 0
    %v1987 = vsel %vm27, %v1940, 0
    %v1990 = vsel %vm27, %v1943, 0
    %v1993 = vsel %vm27, %v1946, 0
    %v1996 = vsel %vm27, %v1949, 0
    %v1999 = vsel %vm27, %v1952, 0
    %v2002 = vsel %vm27, %v1955, 0
    %v2005 = vsel %vm27, %v1958, 0
    %v2008 = vsel %vm27, %v1961, 0
    %v2011 = vsel %vm27, %v1964, 0
    %v2014 = vsel %vm27, %v1967, 0
    %v2017 = vsel %vm27, %v1970, 0
    %v2020 = vsel %vm27, %v1973, 0
    %2022 = vmatprep.subr.mxu0 0.0
    %2023 = vmatpush1.msra.mxu0 %v1225
    %2024 = vmatprep.subr.mxu0 0.0
    %2025 = vmatpush1.msra.mxu0 %v1224
    %2026 = vmatprep.subr.mxu0 0.0
    %2027 = vmatpush1.msra.mxu0 %v1223
    %2028 = vmatprep.subr.mxu0 0.0
    %2029 = vmatpush1.msra.mxu0 %v1222
    %2030 = vmatprep.subr.mxu0 0.0
    %2031 = vmatpush1.msra.mxu0 %v1221
    %2032 = vmatprep.subr.mxu0 0.0
    %2033 = vmatpush1.msra.mxu0 %v1220
    %2034 = vmatprep.subr.mxu0 0.0
    %2035 = vmatpush1.msra.mxu0 %v1219
    %2036 = vmatprep.subr.mxu0 0.0
    %2037 = vmatpush1.msra.mxu0 %v1218
    %2038 = vmatprep.subr.mxu0 0.0
    %2039 = vmatpush1.msra.mxu0 %v1217
    %2040 = vmatprep.subr.mxu0 0.0
    %2041 = vmatpush1.msra.mxu0 %v1216
    %2042 = vmatprep.subr.mxu0 0.0
    %2043 = vmatpush1.msra.mxu0 %v1215
    %2044 = vmatprep.subr.mxu0 0.0
    %2045 = vmatpush1.msra.mxu0 %v1214
    %2046 = vmatprep.subr.mxu0 0.0
    %2047 = vmatpush1.msra.mxu0 %v1213
    %2048 = vmatprep.subr.mxu0 0.0
    %2049 = vmatpush1.msra.mxu0 %v1212
    %2050 = vmatprep.subr.mxu0 0.0
    %2051 = vmatpush1.msra.mxu0 %v1211
    %2052 = vmatprep.subr.mxu0 0.0
    %2053 = vmatpush1.msra.mxu0 %v1210
    %2054 = vmatprep.subr.mxu0 0.0
    %2055 = vmatpush2.msra.mxu0 %v1241
    %2056 = vmatprep.subr.mxu0 0.0
    %2057 = vmatpush2.msra.mxu0 %v1240
    %2058 = vmatprep.subr.mxu0 0.0
    %2059 = vmatpush2.msra.mxu0 %v1239
    %2060 = vmatprep.subr.mxu0 0.0
    %2061 = vmatpush2.msra.mxu0 %v1238
    %2062 = vmatprep.subr.mxu0 0.0
    %2063 = vmatpush2.msra.mxu0 %v1237
    %2064 = vmatprep.subr.mxu0 0.0
    %2065 = vmatpush2.msra.mxu0 %v1236
    %2066 = vmatprep.subr.mxu0 0.0
    %2067 = vmatpush2.msra.mxu0 %v1235
    %2068 = vmatprep.subr.mxu0 0.0
    %2069 = vmatpush2.msra.mxu0 %v1234
    %2070 = vmatprep.subr.mxu0 0.0
    %2071 = vmatpush2.msra.mxu0 %v1233
    %2072 = vmatprep.subr.mxu0 0.0
    %2073 = vmatpush2.msra.mxu0 %v1232
    %2074 = vmatprep.subr.mxu0 0.0
    %2075 = vmatpush2.msra.mxu0 %v1231
    %2076 = vmatprep.subr.mxu0 0.0
    %2077 = vmatpush2.msra.mxu0 %v1230
    %2078 = vmatprep.subr.mxu0 0.0
    %2079 = vmatpush2.msra.mxu0 %v1229
    %2080 = vmatprep.subr.mxu0 0.0
    %2081 = vmatpush2.msra.mxu0 %v1228
    %2082 = vmatprep.subr.mxu0 0.0
    %2083 = vmatpush2.msra.mxu0 %v1227
    %2084 = vmatprep.subr.mxu0 0.0
    %2085 = vmatpush2.msra.mxu0 %v1226
    %2086 = vmatprep.mubr.f32.mxu0 %v1927
    %2087 = vmatmul.mubr.f32.gmra.mxu0 %v1926
    %v2088 = vpop.f32.mrf.mxu0
    %v2089 = vadd.f32 0.0, %v2088
    %v2090 = vpop.f32.mrf.mxu0
    %2091 = vmatprep.mubr.f32.mxu0 %v1930
    %2092 = vmatmul.mubr.f32.gmra.mxu0 %v1929
    %v2093 = vpop.f32.mrf.mxu0
    %v2094 = vadd.f32 0.0, %v2093
    %v2095 = vpop.f32.mrf.mxu0
    %2096 = vmatprep.mubr.f32.mxu0 %v1933
    %2097 = vmatmul.mubr.f32.gmra.mxu0 %v1932
    %v2098 = vpop.f32.mrf.mxu0
    %v2099 = vadd.f32 0.0, %v2098
    %v2100 = vpop.f32.mrf.mxu0
    %2101 = vmatprep.mubr.f32.mxu0 %v1936
    %2102 = vmatmul.mubr.f32.gmra.mxu0 %v1935
    %v2103 = vpop.f32.mrf.mxu0
    %v2104 = vadd.f32 0.0, %v2103
    %v2105 = vpop.f32.mrf.mxu0
    %2106 = vmatprep.mubr.f32.mxu0 %v1939
    %2107 = vmatmul.mubr.f32.gmra.mxu0 %v1938
    %v2108 = vpop.f32.mrf.mxu0
    %v2109 = vadd.f32 0.0, %v2108
    %v2110 = vpop.f32.mrf.mxu0
    %2111 = vmatprep.mubr.f32.mxu0 %v1942
    %2112 = vmatmul.mubr.f32.gmra.mxu0 %v1941
    %v2113 = vpop.f32.mrf.mxu0
    %v2114 = vadd.f32 0.0, %v2113
    %v2115 = vpop.f32.mrf.mxu0
    %2116 = vmatprep.mubr.f32.mxu0 %v1945
    %2117 = vmatmul.mubr.f32.gmra.mxu0 %v1944
    %v2118 = vpop.f32.mrf.mxu0
    %v2119 = vadd.f32 0.0, %v2118
    %v2120 = vpop.f32.mrf.mxu0
    %2121 = vmatprep.mubr.f32.mxu0 %v1948
    %2122 = vmatmul.mubr.f32.gmra.mxu0 %v1947
    %v2123 = vpop.f32.mrf.mxu0
    %v2124 = vadd.f32 0.0, %v2123
    %v2125 = vpop.f32.mrf.mxu0
    %2126 = vmatprep.mubr.f32.mxu0 %v1951
    %2127 = vmatmul.mubr.f32.gmra.mxu0 %v1950
    %v2128 = vpop.f32.mrf.mxu0
    %v2129 = vadd.f32 0.0, %v2128
    %v2130 = vpop.f32.mrf.mxu0
    %2131 = vmatprep.mubr.f32.mxu0 %v1954
    %2132 = vmatmul.mubr.f32.gmra.mxu0 %v1953
    %v2133 = vpop.f32.mrf.mxu0
    %v2134 = vadd.f32 0.0, %v2133
    %v2135 = vpop.f32.mrf.mxu0
    %2136 = vmatprep.mubr.f32.mxu0 %v1957
    %2137 = vmatmul.mubr.f32.gmra.mxu0 %v1956
    %v2138 = vpop.f32.mrf.mxu0
    %v2139 = vadd.f32 0.0, %v2138
    %v2140 = vpop.f32.mrf.mxu0
    %2141 = vmatprep.mubr.f32.mxu0 %v1960
    %2142 = vmatmul.mubr.f32.gmra.mxu0 %v1959
    %v2143 = vpop.f32.mrf.mxu0
    %v2144 = vadd.f32 0.0, %v2143
    %v2145 = vpop.f32.mrf.mxu0
    %2146 = vmatprep.mubr.f32.mxu0 %v1963
    %2147 = vmatmul.mubr.f32.gmra.mxu0 %v1962
    %v2148 = vpop.f32.mrf.mxu0
    %v2149 = vadd.f32 0.0, %v2148
    %v2150 = vpop.f32.mrf.mxu0
    %2151 = vmatprep.mubr.f32.mxu0 %v1966
    %2152 = vmatmul.mubr.f32.gmra.mxu0 %v1965
    %v2153 = vpop.f32.mrf.mxu0
    %v2154 = vadd.f32 0.0, %v2153
    %v2155 = vpop.f32.mrf.mxu0
    %2156 = vmatprep.mubr.f32.mxu0 %v1969
    %2157 = vmatmul.mubr.f32.gmra.mxu0 %v1968
    %v2158 = vpop.f32.mrf.mxu0
    %v2159 = vadd.f32 0.0, %v2158
    %v2160 = vpop.f32.mrf.mxu0
    %2161 = vmatprep.mubr.f32.mxu0 %v1972
    %2162 = vmatmul.mubr.f32.gmra.mxu0 %v1971
    %v2163 = vpop.f32.mrf.mxu0
    %v2164 = vadd.f32 0.0, %v2163
    %v2165 = vpop.f32.mrf.mxu0
    %2166 = vdwg.mxu0
    %2167 = vmatprep.subr.mxu0 0.0
    %2168 = vmatpush1.msra.mxu0 0.0
    %2169 = vmatprep.subr.mxu0 0.0
    %2170 = vmatpush1.msra.mxu0 0.0
    %2171 = vmatprep.subr.mxu0 0.0
    %2172 = vmatpush1.msra.mxu0 0.0
    %2173 = vmatprep.subr.mxu0 0.0
    %2174 = vmatpush1.msra.mxu0 0.0
    %2175 = vmatprep.subr.mxu0 0.0
    %2176 = vmatpush1.msra.mxu0 0.0
    %2177 = vmatprep.subr.mxu0 0.0
    %2178 = vmatpush1.msra.mxu0 0.0
    %2179 = vmatprep.subr.mxu0 0.0
    %2180 = vmatpush1.msra.mxu0 0.0
    %2181 = vmatprep.subr.mxu0 0.0
    %2182 = vmatpush1.msra.mxu0 0.0
    %2183 = vmatprep.subr.mxu0 0.0
    %2184 = vmatpush1.msra.mxu0 0.0
    %2185 = vmatprep.subr.mxu0 0.0
    %2186 = vmatpush1.msra.mxu0 0.0
    %2187 = vmatprep.subr.mxu0 0.0
    %2188 = vmatpush1.msra.mxu0 0.0
    %2189 = vmatprep.subr.mxu0 0.0
    %2190 = vmatpush1.msra.mxu0 0.0
    %2191 = vmatprep.subr.mxu0 0.0
    %2192 = vmatpush1.msra.mxu0 %v1245
    %2193 = vmatprep.subr.mxu0 0.0
    %2194 = vmatpush1.msra.mxu0 %v1244
    %2195 = vmatprep.subr.mxu0 0.0
    %2196 = vmatpush1.msra.mxu0 %v1243
    %2197 = vmatprep.subr.mxu0 0.0
    %2198 = vmatpush1.msra.mxu0 %v1242
    %2199 = vmatprep.subr.mxu0 0.0
    %2200 = vmatpush2.msra.mxu0 0.0
    %2201 = vmatprep.subr.mxu0 0.0
    %2202 = vmatpush2.msra.mxu0 0.0
    %2203 = vmatprep.subr.mxu0 0.0
    %2204 = vmatpush2.msra.mxu0 0.0
    %2205 = vmatprep.subr.mxu0 0.0
    %2206 = vmatpush2.msra.mxu0 0.0
    %2207 = vmatprep.subr.mxu0 0.0
    %2208 = vmatpush2.msra.mxu0 0.0
    %2209 = vmatprep.subr.mxu0 0.0
    %2210 = vmatpush2.msra.mxu0 0.0
    %2211 = vmatprep.subr.mxu0 0.0
    %2212 = vmatpush2.msra.mxu0 0.0
    %2213 = vmatprep.subr.mxu0 0.0
    %2214 = vmatpush2.msra.mxu0 0.0
    %2215 = vmatprep.subr.mxu0 0.0
    %2216 = vmatpush2.msra.mxu0 0.0
    %2217 = vmatprep.subr.mxu0 0.0
    %2218 = vmatpush2.msra.mxu0 0.0
    %2219 = vmatprep.subr.mxu0 0.0
    %2220 = vmatpush2.msra.mxu0 0.0
    %2221 = vmatprep.subr.mxu0 0.0
    %2222 = vmatpush2.msra.mxu0 0.0
    %2223 = vmatprep.subr.mxu0 0.0
    %2224 = vmatpush2.msra.mxu0 0.0
    %2225 = vmatprep.subr.mxu0 0.0
    %2226 = vmatpush2.msra.mxu0 0.0
    %2227 = vmatprep.subr.mxu0 0.0
    %2228 = vmatpush2.msra.mxu0 0.0
    %2229 = vmatprep.subr.mxu0 0.0
    %2230 = vmatpush2.msra.mxu0 0.0
    %2231 = vmatprep.mubr.f32.mxu0 0.0
    %2232 = vmatmul.mubr.f32.gmra.mxu0 %v1975
    %v2233 = vpop.f32.mrf.mxu0
    %v2234 = vadd.f32 %v2089, %v2233
    %v2235 = vpop.f32.mrf.mxu0
    %2236 = vmatprep.mubr.f32.mxu0 0.0
    %2237 = vmatmul.mubr.f32.gmra.mxu0 %v1978
    %v2238 = vpop.f32.mrf.mxu0
    %v2239 = vadd.f32 %v2094, %v2238
    %v2240 = vpop.f32.mrf.mxu0
    %2241 = vmatprep.mubr.f32.mxu0 0.0
    %2242 = vmatmul.mubr.f32.gmra.mxu0 %v1981
    %v2243 = vpop.f32.mrf.mxu0
    %v2244 = vadd.f32 %v2099, %v2243
    %v2245 = vpop.f32.mrf.mxu0
    %2246 = vmatprep.mubr.f32.mxu0 0.0
    %2247 = vmatmul.mubr.f32.gmra.mxu0 %v1984
    %v2248 = vpop.f32.mrf.mxu0
    %v2249 = vadd.f32 %v2104, %v2248
    %v2250 = vpop.f32.mrf.mxu0
    %2251 = vmatprep.mubr.f32.mxu0 0.0
    %2252 = vmatmul.mubr.f32.gmra.mxu0 %v1987
    %v2253 = vpop.f32.mrf.mxu0
    %v2254 = vadd.f32 %v2109, %v2253
    %v2255 = vpop.f32.mrf.mxu0
    %2256 = vmatprep.mubr.f32.mxu0 0.0
    %2257 = vmatmul.mubr.f32.gmra.mxu0 %v1990
    %v2258 = vpop.f32.mrf.mxu0
    %v2259 = vadd.f32 %v2114, %v2258
    %v2260 = vpop.f32.mrf.mxu0
    %2261 = vmatprep.mubr.f32.mxu0 0.0
    %2262 = vmatmul.mubr.f32.gmra.mxu0 %v1993
    %v2263 = vpop.f32.mrf.mxu0
    %v2264 = vadd.f32 %v2119, %v2263
    %v2265 = vpop.f32.mrf.mxu0
    %2266 = vmatprep.mubr.f32.mxu0 0.0
    %2267 = vmatmul.mubr.f32.gmra.mxu0 %v1996
    %v2268 = vpop.f32.mrf.mxu0
    %v2269 = vadd.f32 %v2124, %v2268
    %v2270 = vpop.f32.mrf.mxu0
    %2271 = vmatprep.mubr.f32.mxu0 0.0
    %2272 = vmatmul.mubr.f32.gmra.mxu0 %v1999
    %v2273 = vpop.f32.mrf.mxu0
    %v2274 = vadd.f32 %v2129, %v2273
    %v2275 = vpop.f32.mrf.mxu0
    %2276 = vmatprep.mubr.f32.mxu0 0.0
    %2277 = vmatmul.mubr.f32.gmra.mxu0 %v2002
    %v2278 = vpop.f32.mrf.mxu0
    %v2279 = vadd.f32 %v2134, %v2278
    %v2280 = vpop.f32.mrf.mxu0
    %2281 = vmatprep.mubr.f32.mxu0 0.0
    %2282 = vmatmul.mubr.f32.gmra.mxu0 %v2005
    %v2283 = vpop.f32.mrf.mxu0
    %v2284 = vadd.f32 %v2139, %v2283
    %v2285 = vpop.f32.mrf.mxu0
    %2286 = vmatprep.mubr.f32.mxu0 0.0
    %2287 = vmatmul.mubr.f32.gmra.mxu0 %v2008
    %v2288 = vpop.f32.mrf.mxu0
    %v2289 = vadd.f32 %v2144, %v2288
    %v2290 = vpop.f32.mrf.mxu0
    %2291 = vmatprep.mubr.f32.mxu0 0.0
    %2292 = vmatmul.mubr.f32.gmra.mxu0 %v2011
    %v2293 = vpop.f32.mrf.mxu0
    %v2294 = vadd.f32 %v2149, %v2293
    %v2295 = vpop.f32.mrf.mxu0
    %2296 = vmatprep.mubr.f32.mxu0 0.0
    %2297 = vmatmul.mubr.f32.gmra.mxu0 %v2014
    %v2298 = vpop.f32.mrf.mxu0
    %v2299 = vadd.f32 %v2154, %v2298
    %v2300 = vpop.f32.mrf.mxu0
    %2301 = vmatprep.mubr.f32.mxu0 0.0
    %2302 = vmatmul.mubr.f32.gmra.mxu0 %v2017
    %v2303 = vpop.f32.mrf.mxu0
    %v2304 = vadd.f32 %v2159, %v2303
    %v2305 = vpop.f32.mrf.mxu0
    %2306 = vmatprep.mubr.f32.mxu0 0.0
    %2307 = vmatmul.mubr.f32.gmra.mxu0 %v2020
    %v2308 = vpop.f32.mrf.mxu0
    %v2309 = vadd.f32 %v2164, %v2308
    %v2310 = vpop.f32.mrf.mxu0
    %2311 = vdwg.mxu0
    %vm2312 = vcmp.gt.f32.partialorder %v2234, 0.0
    %vm2313 = vcmp.gt.f32.partialorder %v2239, 0.0
    %vm2314 = vcmp.gt.f32.partialorder %v2244, 0.0
    %vm2315 = vcmp.gt.f32.partialorder %v2249, 0.0
    %vm2316 = vcmp.gt.f32.partialorder %v2254, 0.0
    %vm2317 = vcmp.gt.f32.partialorder %v2259, 0.0
    %vm2318 = vcmp.gt.f32.partialorder %v2264, 0.0
    %vm2319 = vcmp.gt.f32.partialorder %v2269, 0.0
    %vm2320 = vcmp.gt.f32.partialorder %v2274, 0.0
    %vm2321 = vcmp.gt.f32.partialorder %v2279, 0.0
    %vm2322 = vcmp.gt.f32.partialorder %v2284, 0.0
    %vm2323 = vcmp.gt.f32.partialorder %v2289, 0.0
    %vm2324 = vcmp.gt.f32.partialorder %v2294, 0.0
    %vm2325 = vcmp.gt.f32.partialorder %v2299, 0.0
    %vm2326 = vcmp.gt.f32.partialorder %v2304, 0.0
    %vm2327 = vcmp.gt.f32.partialorder %v2309, 0.0
    %v2328 = vmul.f32 %v2234, 0.01
    %v2329 = vmul.f32 %v2239, 0.01
    %v2330 = vmul.f32 %v2244, 0.01
    %v2331 = vmul.f32 %v2249, 0.01
    %v2332 = vmul.f32 %v2254, 0.01
    %v2333 = vmul.f32 %v2259, 0.01
    %v2334 = vmul.f32 %v2264, 0.01
    %v2335 = vmul.f32 %v2269, 0.01
    %v2336 = vmul.f32 %v2274, 0.01
    %v2337 = vmul.f32 %v2279, 0.01
    %v2338 = vmul.f32 %v2284, 0.01
    %v2339 = vmul.f32 %v2289, 0.01
    %v2340 = vmul.f32 %v2294, 0.01
    %v2341 = vmul.f32 %v2299, 0.01
    %v2342 = vmul.f32 %v2304, 0.01
    %v2343 = vmul.f32 %v2309, 0.01
    %v2344 = vsel %vm2312, %v2234, %v2328
    %v2345 = vsel %vm2313, %v2239, %v2329
    %v2346 = vsel %vm2314, %v2244, %v2330
    %v2347 = vsel %vm2315, %v2249, %v2331
    %v2348 = vsel %vm2316, %v2254, %v2332
    %v2349 = vsel %vm2317, %v2259, %v2333
    %v2350 = vsel %vm2318, %v2264, %v2334
    %v2351 = vsel %vm2319, %v2269, %v2335
    %v2352 = vsel %vm2320, %v2274, %v2336
    %v2353 = vsel %vm2321, %v2279, %v2337
    %v2354 = vsel %vm2322, %v2284, %v2338
    %v2355 = vsel %vm2323, %v2289, %v2339
    %v2356 = vsel %vm2324, %v2294, %v2340
    %v2357 = vsel %vm2325, %v2299, %v2341
    %v2358 = vsel %vm2326, %v2304, %v2342
    %v2359 = vsel %vm2327, %v2309, %v2343
    %s2360 = scalar_lea.vmem %s1, 576
    %v2361 = vld [vmem:[%s2360] sm:$0xff]
    %v2362 = vld [vmem:[%s2360 + $0x8] sm:$0xff]
    %v2363 = vld [vmem:[%s2360 + $0x10] sm:$0xff]
    %v2364 = vld [vmem:[%s2360 + $0x18] sm:$0xff]
    %v2365 = vld [vmem:[%s2360 + $0x20] sm:$0xff]
    %v2366 = vld [vmem:[%s2360 + $0x28] sm:$0xff]
    %v2367 = vld [vmem:[%s2360 + $0x30] sm:$0xff]
    %v2368 = vld [vmem:[%s2360 + $0x38] sm:$0xff]
    %v2369 = vld [vmem:[%s2360 + $0x40] sm:$0xff]
    %v2370 = vld [vmem:[%s2360 + $0x48] sm:$0xff]
    %v2371 = vld [vmem:[%s2360 + $0x50] sm:$0xff]
    %v2372 = vld [vmem:[%s2360 + $0x58] sm:$0xff]
    %v2373 = vld [vmem:[%s2360 + $0x60] sm:$0xff]
    %v2374 = vld [vmem:[%s2360 + $0x68] sm:$0xff]
    %v2375 = vld [vmem:[%s2360 + $0x70] sm:$0xff]
    %v2376 = vld [vmem:[%s2360 + $0x78] sm:$0xff]
    %v2377 = vld [vmem:[%s2360 + $0x80] sm:$0xff]
    %v2378 = vld [vmem:[%s2360 + $0x88] sm:$0xff]
    %v2379 = vld [vmem:[%s2360 + $0x90] sm:$0xff]
    %v2380 = vld [vmem:[%s2360 + $0x98] sm:$0xff]
    %v2381 = vld [vmem:[%s2360 + $0xa0] sm:$0xff]
    %v2382 = vld [vmem:[%s2360 + $0xa8] sm:$0xff]
    %v2383 = vld [vmem:[%s2360 + $0xb0] sm:$0xff]
    %v2384 = vld [vmem:[%s2360 + $0xb8] sm:$0xff]
    %v2385 = vld [vmem:[%s2360 + $0xc0] sm:$0xff]
    %v2386 = vld [vmem:[%s2360 + $0xc8] sm:$0xff]
    %v2387 = vld [vmem:[%s2360 + $0xd0] sm:$0xff]
    %v2388 = vld [vmem:[%s2360 + $0xd8] sm:$0xff]
    %v2389 = vld [vmem:[%s2360 + $0xe0] sm:$0xff]
    %v2390 = vld [vmem:[%s2360 + $0xe8] sm:$0xff]
    %v2391 = vld [vmem:[%s2360 + $0xf0] sm:$0xff]
    %v2392 = vld [vmem:[%s2360 + $0xf8] sm:$0xff]
    %v2393 = vld [vmem:[%s2360 + $0x100] sm:$0xff]
    %v2394 = vld [vmem:[%s2360 + $0x108] sm:$0xff]
    %v2395 = vld [vmem:[%s2360 + $0x110] sm:$0xff]
    %v2396 = vld [vmem:[%s2360 + $0x118] sm:$0xff]
    %2397 = vst.msk [vmem:[%s121 + $0x1] sm:$0xff] %vm27, %v2344
    %2398 = vst.msk [vmem:[%s121 + $0x11] sm:$0xff] %vm27, %v2345
    %2399 = vst.msk [vmem:[%s121 + $0x21] sm:$0xff] %vm27, %v2346
    %2400 = vst.msk [vmem:[%s121 + $0x31] sm:$0xff] %vm27, %v2347
    %2401 = vst.msk [vmem:[%s121 + $0x41] sm:$0xff] %vm27, %v2348
    %2402 = vst.msk [vmem:[%s121 + $0x51] sm:$0xff] %vm27, %v2349
    %2403 = vst.msk [vmem:[%s121 + $0x61] sm:$0xff] %vm27, %v2350
    %2404 = vst.msk [vmem:[%s121 + $0x71] sm:$0xff] %vm27, %v2351
    %2405 = vst.msk [vmem:[%s121 + $0xa1] sm:$0xff] %vm27, %v2352
    %2406 = vst.msk [vmem:[%s121 + $0xb1] sm:$0xff] %vm27, %v2353
    %2407 = vst.msk [vmem:[%s121 + $0xc1] sm:$0xff] %vm27, %v2354
    %2408 = vst.msk [vmem:[%s121 + $0xd1] sm:$0xff] %vm27, %v2355
    %2409 = vst.msk [vmem:[%s121 + $0xe1] sm:$0xff] %vm27, %v2356
    %2410 = vst.msk [vmem:[%s121 + $0xf1] sm:$0xff] %vm27, %v2357
    %2411 = vst.msk [vmem:[%s121 + $0x101] sm:$0xff] %vm27, %v2358
    %2412 = vst.msk [vmem:[%s121 + $0x111] sm:$0xff] %vm27, %v2359
    %v2413 = vld [vmem:[#allocation2] sm:$0xff]
    %v2414 = vld [vmem:[#allocation2 + $0x8] sm:$0x3]
    %v2415 = vld [vmem:[#allocation2 + $0x10] sm:$0xff]
    %v2416 = vld [vmem:[#allocation2 + $0x18] sm:$0x3]
    %v2417 = vld [vmem:[#allocation2 + $0x20] sm:$0xff]
    %v2418 = vld [vmem:[#allocation2 + $0x28] sm:$0x3]
    %v2419 = vld [vmem:[#allocation2 + $0x30] sm:$0xff]
    %v2420 = vld [vmem:[#allocation2 + $0x38] sm:$0x3]
    %v2421 = vld [vmem:[#allocation2 + $0x40] sm:$0xff]
    %v2422 = vld [vmem:[#allocation2 + $0x48] sm:$0x3]
    %v2423 = vld [vmem:[#allocation2 + $0x50] sm:$0xff]
    %v2424 = vld [vmem:[#allocation2 + $0x58] sm:$0x3]
    %v2425 = vld [vmem:[#allocation2 + $0x60] sm:$0xff]
    %v2426 = vld [vmem:[#allocation2 + $0x68] sm:$0x3]
    %v2427 = vld [vmem:[#allocation2 + $0x70] sm:$0xff]
    %v2428 = vld [vmem:[#allocation2 + $0x78] sm:$0x3]
    %v2429 = vld [vmem:[#allocation2 + $0x80] sm:$0xff]
    %v2430 = vld [vmem:[#allocation2 + $0x88] sm:$0x3]
    %v2431 = vld [vmem:[#allocation2 + $0x90] sm:$0xff]
    %v2432 = vld [vmem:[#allocation2 + $0x98] sm:$0x3]
    %v2433 = vld [vmem:[#allocation2 + $0xa0] sm:$0xff]
    %v2434 = vld [vmem:[#allocation2 + $0xa8] sm:$0x3]
    %v2435 = vld [vmem:[#allocation2 + $0xb0] sm:$0xff]
    %v2436 = vld [vmem:[#allocation2 + $0xb8] sm:$0x3]
    %v2437 = vld [vmem:[#allocation2 + $0xc0] sm:$0xff]
    %v2438 = vld [vmem:[#allocation2 + $0xc8] sm:$0x3]
    %v2439 = vld [vmem:[#allocation2 + $0xd0] sm:$0xff]
    %v2440 = vld [vmem:[#allocation2 + $0xd8] sm:$0x3]
    %v2441 = vld [vmem:[#allocation2 + $0xe0] sm:$0xff]
    %v2442 = vld [vmem:[#allocation2 + $0xe8] sm:$0x3]
    %v2443 = vld [vmem:[#allocation2 + $0xf0] sm:$0xff]
    %v2444 = vld [vmem:[#allocation2 + $0xf8] sm:$0x3]
    %v2445 = vld [vmem:[#allocation2 + $0x100] sm:$0xff]
    %v2446 = vld [vmem:[#allocation2 + $0x108] sm:$0x3]
    %v2447 = vld [vmem:[#allocation2 + $0x110] sm:$0xff]
    %v2448 = vld [vmem:[#allocation2 + $0x118] sm:$0x3]
    %v2449 = vld [vmem:[#allocation2 + $0x120] sm:$0xff]
    %v2450 = vld [vmem:[#allocation2 + $0x128] sm:$0x3]
    %v2451 = vld [vmem:[#allocation2 + $0x130] sm:$0xff]
    %v2452 = vld [vmem:[#allocation2 + $0x138] sm:$0x3]
    %2453 = vst.msk [vmem:[#allocation3] sm:$0xff] %vm27, %v2413
    %2454 = vst.msk [vmem:[#allocation3 + $0x18] sm:$0xff] %vm27, %v2415
    %2455 = vst.msk [vmem:[#allocation3 + $0x30] sm:$0xff] %vm27, %v2417
    %2456 = vst.msk [vmem:[#allocation3 + $0x48] sm:$0xff] %vm27, %v2419
    %2457 = vst.msk [vmem:[#allocation3 + $0x60] sm:$0xff] %vm27, %v2421
    %2458 = vst.msk [vmem:[#allocation3 + $0x78] sm:$0xff] %vm27, %v2423
    %2459 = vst.msk [vmem:[#allocation3 + $0x90] sm:$0xff] %vm27, %v2425
    %2460 = vst.msk [vmem:[#allocation3 + $0xa8] sm:$0xff] %vm27, %v2427
    %2461 = vst.msk [vmem:[#allocation3 + $0xc0] sm:$0xff] %vm27, %v2433
    %2462 = vst.msk [vmem:[#allocation3 + $0xd8] sm:$0xff] %vm27, %v2435
    %2463 = vst.msk [vmem:[#allocation3 + $0xf0] sm:$0xff] %vm27, %v2437
    %2464 = vst.msk [vmem:[#allocation3 + $0x108] sm:$0xff] %vm27, %v2439
    %2465 = vst.msk [vmem:[#allocation3 + $0x120] sm:$0xff] %vm27, %v2441
    %2466 = vst.msk [vmem:[#allocation3 + $0x138] sm:$0xff] %vm27, %v2443
    %2467 = vst.msk [vmem:[#allocation3 + $0x150] sm:$0xff] %vm27, %v2445
    %2468 = vst.msk [vmem:[#allocation3 + $0x168] sm:$0xff] %vm27, %v2447
    %v2501 = vrot.slane %v2413, 1
    %v2502 = vrot.slane %v2414, 1
    %v2503 = vsel %vm226, %v2501, %v2502
    %v2504 = vrot.slane %v2415, 1
    %v2505 = vrot.slane %v2416, 1
    %v2506 = vsel %vm226, %v2504, %v2505
    %v2507 = vrot.slane %v2417, 1
    %v2508 = vrot.slane %v2418, 1
    %v2509 = vsel %vm226, %v2507, %v2508
    %v2510 = vrot.slane %v2419, 1
    %v2511 = vrot.slane %v2420, 1
    %v2512 = vsel %vm226, %v2510, %v2511
    %v2513 = vrot.slane %v2421, 1
    %v2514 = vrot.slane %v2422, 1
    %v2515 = vsel %vm226, %v2513, %v2514
    %v2516 = vrot.slane %v2423, 1
    %v2517 = vrot.slane %v2424, 1
    %v2518 = vsel %vm226, %v2516, %v2517
    %v2519 = vrot.slane %v2425, 1
    %v2520 = vrot.slane %v2426, 1
    %v2521 = vsel %vm226, %v2519, %v2520
    %v2522 = vrot.slane %v2427, 1
    %v2523 = vrot.slane %v2428, 1
    %v2524 = vsel %vm226, %v2522, %v2523
    %v2525 = vrot.slane %v2433, 1
    %v2526 = vrot.slane %v2434, 1
    %v2527 = vsel %vm226, %v2525, %v2526
    %v2528 = vrot.slane %v2435, 1
    %v2529 = vrot.slane %v2436, 1
    %v2530 = vsel %vm226, %v2528, %v2529
    %v2531 = vrot.slane %v2437, 1
    %v2532 = vrot.slane %v2438, 1
    %v2533 = vsel %vm226, %v2531, %v2532
    %v2534 = vrot.slane %v2439, 1
    %v2535 = vrot.slane %v2440, 1
    %v2536 = vsel %vm226, %v2534, %v2535
    %v2537 = vrot.slane %v2441, 1
    %v2538 = vrot.slane %v2442, 1
    %v2539 = vsel %vm226, %v2537, %v2538
    %v2540 = vrot.slane %v2443, 1
    %v2541 = vrot.slane %v2444, 1
    %v2542 = vsel %vm226, %v2540, %v2541
    %v2543 = vrot.slane %v2445, 1
    %v2544 = vrot.slane %v2446, 1
    %v2545 = vsel %vm226, %v2543, %v2544
    %v2546 = vrot.slane %v2447, 1
    %v2547 = vrot.slane %v2448, 1
    %v2548 = vsel %vm226, %v2546, %v2547
    %2549 = vrot.lane.b32.xlu0 %v2503, 32
    %v2550 = vpop.permute.xlu0 %2549
    %2551 = vrot.lane.b32.xlu0 %v2506, 32
    %v2552 = vpop.permute.xlu0 %2551
    %2553 = vrot.lane.b32.xlu0 %v2509, 32
    %v2554 = vpop.permute.xlu0 %2553
    %2555 = vrot.lane.b32.xlu0 %v2512, 32
    %v2556 = vpop.permute.xlu0 %2555
    %2557 = vrot.lane.b32.xlu0 %v2515, 32
    %v2558 = vpop.permute.xlu0 %2557
    %2559 = vrot.lane.b32.xlu0 %v2518, 32
    %v2560 = vpop.permute.xlu0 %2559
    %2561 = vrot.lane.b32.xlu0 %v2521, 32
    %v2562 = vpop.permute.xlu0 %2561
    %2563 = vrot.lane.b32.xlu0 %v2524, 32
    %v2564 = vpop.permute.xlu0 %2563
    %2565 = vrot.lane.b32.xlu0 %v2527, 32
    %v2566 = vpop.permute.xlu0 %2565
    %2567 = vrot.lane.b32.xlu0 %v2530, 32
    %v2568 = vpop.permute.xlu0 %2567
    %2569 = vrot.lane.b32.xlu0 %v2533, 32
    %v2570 = vpop.permute.xlu0 %2569
    %2571 = vrot.lane.b32.xlu0 %v2536, 32
    %v2572 = vpop.permute.xlu0 %2571
    %2573 = vrot.lane.b32.xlu0 %v2539, 32
    %v2574 = vpop.permute.xlu0 %2573
    %2575 = vrot.lane.b32.xlu0 %v2542, 32
    %v2576 = vpop.permute.xlu0 %2575
    %2577 = vrot.lane.b32.xlu0 %v2545, 32
    %v2578 = vpop.permute.xlu0 %2577
    %2579 = vrot.lane.b32.xlu0 %v2548, 32
    %v2580 = vpop.permute.xlu0 %2579
    %2597 = vst.msk [vmem:[#allocation3] sm:$0xff] %vm323, %v2550
    %2598 = vst.msk [vmem:[#allocation3 + $0x18] sm:$0xff] %vm323, %v2552
    %2599 = vst.msk [vmem:[#allocation3 + $0x30] sm:$0xff] %vm323, %v2554
    %2600 = vst.msk [vmem:[#allocation3 + $0x48] sm:$0xff] %vm323, %v2556
    %2601 = vst.msk [vmem:[#allocation3 + $0x60] sm:$0xff] %vm323, %v2558
    %2602 = vst.msk [vmem:[#allocation3 + $0x78] sm:$0xff] %vm323, %v2560
    %2603 = vst.msk [vmem:[#allocation3 + $0x90] sm:$0xff] %vm323, %v2562
    %2604 = vst.msk [vmem:[#allocation3 + $0xa8] sm:$0xff] %vm323, %v2564
    %2605 = vst.msk [vmem:[#allocation3 + $0xc0] sm:$0xff] %vm323, %v2566
    %2606 = vst.msk [vmem:[#allocation3 + $0xd8] sm:$0xff] %vm323, %v2568
    %2607 = vst.msk [vmem:[#allocation3 + $0xf0] sm:$0xff] %vm323, %v2570
    %2608 = vst.msk [vmem:[#allocation3 + $0x108] sm:$0xff] %vm323, %v2572
    %2609 = vst.msk [vmem:[#allocation3 + $0x120] sm:$0xff] %vm323, %v2574
    %2610 = vst.msk [vmem:[#allocation3 + $0x138] sm:$0xff] %vm323, %v2576
    %2611 = vst.msk [vmem:[#allocation3 + $0x150] sm:$0xff] %vm323, %v2578
    %2612 = vst.msk [vmem:[#allocation3 + $0x168] sm:$0xff] %vm323, %v2580
    %v2613 = vrot.slane %v2413, 2
    %v2614 = vrot.slane %v2414, 2
    %v2615 = vsel %vm340, %v2613, %v2614
    %v2616 = vrot.slane %v2415, 2
    %v2617 = vrot.slane %v2416, 2
    %v2618 = vsel %vm340, %v2616, %v2617
    %v2619 = vrot.slane %v2417, 2
    %v2620 = vrot.slane %v2418, 2
    %v2621 = vsel %vm340, %v2619, %v2620
    %v2622 = vrot.slane %v2419, 2
    %v2623 = vrot.slane %v2420, 2
    %v2624 = vsel %vm340, %v2622, %v2623
    %v2625 = vrot.slane %v2421, 2
    %v2626 = vrot.slane %v2422, 2
    %v2627 = vsel %vm340, %v2625, %v2626
    %v2628 = vrot.slane %v2423, 2
    %v2629 = vrot.slane %v2424, 2
    %v2630 = vsel %vm340, %v2628, %v2629
    %v2631 = vrot.slane %v2425, 2
    %v2632 = vrot.slane %v2426, 2
    %v2633 = vsel %vm340, %v2631, %v2632
    %v2634 = vrot.slane %v2427, 2
    %v2635 = vrot.slane %v2428, 2
    %v2636 = vsel %vm340, %v2634, %v2635
    %v2637 = vrot.slane %v2433, 2
    %v2638 = vrot.slane %v2434, 2
    %v2639 = vsel %vm340, %v2637, %v2638
    %v2640 = vrot.slane %v2435, 2
    %v2641 = vrot.slane %v2436, 2
    %v2642 = vsel %vm340, %v2640, %v2641
    %v2643 = vrot.slane %v2437, 2
    %v2644 = vrot.slane %v2438, 2
    %v2645 = vsel %vm340, %v2643, %v2644
    %v2646 = vrot.slane %v2439, 2
    %v2647 = vrot.slane %v2440, 2
    %v2648 = vsel %vm340, %v2646, %v2647
    %v2649 = vrot.slane %v2441, 2
    %v2650 = vrot.slane %v2442, 2
    %v2651 = vsel %vm340, %v2649, %v2650
    %v2652 = vrot.slane %v2443, 2
    %v2653 = vrot.slane %v2444, 2
    %v2654 = vsel %vm340, %v2652, %v2653
    %v2655 = vrot.slane %v2445, 2
    %v2656 = vrot.slane %v2446, 2
    %v2657 = vsel %vm340, %v2655, %v2656
    %v2658 = vrot.slane %v2447, 2
    %v2659 = vrot.slane %v2448, 2
    %v2660 = vsel %vm340, %v2658, %v2659
    %2661 = vrot.lane.b32.xlu0 %v2615, 64
    %v2662 = vpop.permute.xlu0 %2661
    %2663 = vrot.lane.b32.xlu0 %v2618, 64
    %v2664 = vpop.permute.xlu0 %2663
    %2665 = vrot.lane.b32.xlu0 %v2621, 64
    %v2666 = vpop.permute.xlu0 %2665
    %2667 = vrot.lane.b32.xlu0 %v2624, 64
    %v2668 = vpop.permute.xlu0 %2667
    %2669 = vrot.lane.b32.xlu0 %v2627, 64
    %v2670 = vpop.permute.xlu0 %2669
    %2671 = vrot.lane.b32.xlu0 %v2630, 64
    %v2672 = vpop.permute.xlu0 %2671
    %2673 = vrot.lane.b32.xlu0 %v2633, 64
    %v2674 = vpop.permute.xlu0 %2673
    %2675 = vrot.lane.b32.xlu0 %v2636, 64
    %v2676 = vpop.permute.xlu0 %2675
    %2677 = vrot.lane.b32.xlu0 %v2639, 64
    %v2678 = vpop.permute.xlu0 %2677
    %2679 = vrot.lane.b32.xlu0 %v2642, 64
    %v2680 = vpop.permute.xlu0 %2679
    %2681 = vrot.lane.b32.xlu0 %v2645, 64
    %v2682 = vpop.permute.xlu0 %2681
    %2683 = vrot.lane.b32.xlu0 %v2648, 64
    %v2684 = vpop.permute.xlu0 %2683
    %2685 = vrot.lane.b32.xlu0 %v2651, 64
    %v2686 = vpop.permute.xlu0 %2685
    %2687 = vrot.lane.b32.xlu0 %v2654, 64
    %v2688 = vpop.permute.xlu0 %2687
    %2689 = vrot.lane.b32.xlu0 %v2657, 64
    %v2690 = vpop.permute.xlu0 %2689
    %2691 = vrot.lane.b32.xlu0 %v2660, 64
    %v2692 = vpop.permute.xlu0 %2691
    %2709 = vst.msk [vmem:[#allocation3] sm:$0xff] %vm437, %v2662
    %2710 = vst.msk [vmem:[#allocation3 + $0x18] sm:$0xff] %vm437, %v2664
    %2711 = vst.msk [vmem:[#allocation3 + $0x30] sm:$0xff] %vm437, %v2666
    %2712 = vst.msk [vmem:[#allocation3 + $0x48] sm:$0xff] %vm437, %v2668
    %2713 = vst.msk [vmem:[#allocation3 + $0x60] sm:$0xff] %vm437, %v2670
    %2714 = vst.msk [vmem:[#allocation3 + $0x78] sm:$0xff] %vm437, %v2672
    %2715 = vst.msk [vmem:[#allocation3 + $0x90] sm:$0xff] %vm437, %v2674
    %2716 = vst.msk [vmem:[#allocation3 + $0xa8] sm:$0xff] %vm437, %v2676
    %2717 = vst.msk [vmem:[#allocation3 + $0xc0] sm:$0xff] %vm437, %v2678
    %2718 = vst.msk [vmem:[#allocation3 + $0xd8] sm:$0xff] %vm437, %v2680
    %2719 = vst.msk [vmem:[#allocation3 + $0xf0] sm:$0xff] %vm437, %v2682
    %2720 = vst.msk [vmem:[#allocation3 + $0x108] sm:$0xff] %vm437, %v2684
    %2721 = vst.msk [vmem:[#allocation3 + $0x120] sm:$0xff] %vm437, %v2686
    %2722 = vst.msk [vmem:[#allocation3 + $0x138] sm:$0xff] %vm437, %v2688
    %2723 = vst.msk [vmem:[#allocation3 + $0x150] sm:$0xff] %vm437, %v2690
    %2724 = vst.msk [vmem:[#allocation3 + $0x168] sm:$0xff] %vm437, %v2692
    %2727 = vrot.lane.b32.xlu0 %v2415, 96
    %v2728 = vpop.permute.xlu0 %2727
    %2729 = vrot.lane.b32.xlu0 %v2417, 96
    %v2730 = vpop.permute.xlu0 %2729
    %2731 = vrot.lane.b32.xlu0 %v2419, 96
    %v2732 = vpop.permute.xlu0 %2731
    %2733 = vrot.lane.b32.xlu0 %v2421, 96
    %v2734 = vpop.permute.xlu0 %2733
    %2735 = vrot.lane.b32.xlu0 %v2423, 96
    %v2736 = vpop.permute.xlu0 %2735
    %2737 = vrot.lane.b32.xlu0 %v2425, 96
    %v2738 = vpop.permute.xlu0 %2737
    %2739 = vrot.lane.b32.xlu0 %v2427, 96
    %v2740 = vpop.permute.xlu0 %2739
    %2741 = vrot.lane.b32.xlu0 %v2429, 96
    %v2742 = vpop.permute.xlu0 %2741
    %2743 = vrot.lane.b32.xlu0 %v2435, 96
    %v2744 = vpop.permute.xlu0 %2743
    %2745 = vrot.lane.b32.xlu0 %v2437, 96
    %v2746 = vpop.permute.xlu0 %2745
    %2747 = vrot.lane.b32.xlu0 %v2439, 96
    %v2748 = vpop.permute.xlu0 %2747
    %2749 = vrot.lane.b32.xlu0 %v2441, 96
    %v2750 = vpop.permute.xlu0 %2749
    %2751 = vrot.lane.b32.xlu0 %v2443, 96
    %v2752 = vpop.permute.xlu0 %2751
    %2753 = vrot.lane.b32.xlu0 %v2445, 96
    %v2754 = vpop.permute.xlu0 %2753
    %2755 = vrot.lane.b32.xlu0 %v2447, 96
    %v2756 = vpop.permute.xlu0 %2755
    %2757 = vrot.lane.b32.xlu0 %v2449, 96
    %v2758 = vpop.permute.xlu0 %2757
    %2775 = vst.msk [vmem:[#allocation3] sm:$0xff] %vm504, %v2728
    %2776 = vst.msk [vmem:[#allocation3 + $0x18] sm:$0xff] %vm504, %v2730
    %2777 = vst.msk [vmem:[#allocation3 + $0x30] sm:$0xff] %vm504, %v2732
    %2778 = vst.msk [vmem:[#allocation3 + $0x48] sm:$0xff] %vm504, %v2734
    %2779 = vst.msk [vmem:[#allocation3 + $0x60] sm:$0xff] %vm504, %v2736
    %2780 = vst.msk [vmem:[#allocation3 + $0x78] sm:$0xff] %vm504, %v2738
    %2781 = vst.msk [vmem:[#allocation3 + $0x90] sm:$0xff] %vm504, %v2740
    %2782 = vst.msk [vmem:[#allocation3 + $0xa8] sm:$0xff] %vm504, %v2742
    %2783 = vst.msk [vmem:[#allocation3 + $0xc0] sm:$0xff] %vm504, %v2744
    %2784 = vst.msk [vmem:[#allocation3 + $0xd8] sm:$0xff] %vm504, %v2746
    %2785 = vst.msk [vmem:[#allocation3 + $0xf0] sm:$0xff] %vm504, %v2748
    %2786 = vst.msk [vmem:[#allocation3 + $0x108] sm:$0xff] %vm504, %v2750
    %2787 = vst.msk [vmem:[#allocation3 + $0x120] sm:$0xff] %vm504, %v2752
    %2788 = vst.msk [vmem:[#allocation3 + $0x138] sm:$0xff] %vm504, %v2754
    %2789 = vst.msk [vmem:[#allocation3 + $0x150] sm:$0xff] %vm504, %v2756
    %2790 = vst.msk [vmem:[#allocation3 + $0x168] sm:$0xff] %vm504, %v2758
    %v2793 = vrot.slane %v2429, 1
    %v2794 = vrot.slane %v2430, 1
    %v2795 = vsel %vm226, %v2793, %v2794
    %v2796 = vrot.slane %v2449, 1
    %v2797 = vrot.slane %v2450, 1
    %v2798 = vsel %vm226, %v2796, %v2797
    %2815 = vst.msk [vmem:[#allocation3 + $0x8] sm:$0xff] %vm27, %v2506
    %2816 = vst.msk [vmem:[#allocation3 + $0x20] sm:$0xff] %vm27, %v2509
    %2817 = vst.msk [vmem:[#allocation3 + $0x38] sm:$0xff] %vm27, %v2512
    %2818 = vst.msk [vmem:[#allocation3 + $0x50] sm:$0xff] %vm27, %v2515
    %2819 = vst.msk [vmem:[#allocation3 + $0x68] sm:$0xff] %vm27, %v2518
    %2820 = vst.msk [vmem:[#allocation3 + $0x80] sm:$0xff] %vm27, %v2521
    %2821 = vst.msk [vmem:[#allocation3 + $0x98] sm:$0xff] %vm27, %v2524
    %2822 = vst.msk [vmem:[#allocation3 + $0xb0] sm:$0xff] %vm27, %v2795
    %2823 = vst.msk [vmem:[#allocation3 + $0xc8] sm:$0xff] %vm27, %v2530
    %2824 = vst.msk [vmem:[#allocation3 + $0xe0] sm:$0xff] %vm27, %v2533
    %2825 = vst.msk [vmem:[#allocation3 + $0xf8] sm:$0xff] %vm27, %v2536
    %2826 = vst.msk [vmem:[#allocation3 + $0x110] sm:$0xff] %vm27, %v2539
    %2827 = vst.msk [vmem:[#allocation3 + $0x128] sm:$0xff] %vm27, %v2542
    %2828 = vst.msk [vmem:[#allocation3 + $0x140] sm:$0xff] %vm27, %v2545
    %2829 = vst.msk [vmem:[#allocation3 + $0x158] sm:$0xff] %vm27, %v2548
    %2830 = vst.msk [vmem:[#allocation3 + $0x170] sm:$0xff] %vm27, %v2798
    %v2831 = vrot.slane %v2429, 2
    %v2832 = vrot.slane %v2430, 2
    %v2833 = vsel %vm340, %v2831, %v2832
    %v2834 = vrot.slane %v2449, 2
    %v2835 = vrot.slane %v2450, 2
    %v2836 = vsel %vm340, %v2834, %v2835
    %2837 = vrot.lane.b32.xlu0 %v2618, 32
    %v2838 = vpop.permute.xlu0 %2837
    %2839 = vrot.lane.b32.xlu0 %v2621, 32
    %v2840 = vpop.permute.xlu0 %2839
    %2841 = vrot.lane.b32.xlu0 %v2624, 32
    %v2842 = vpop.permute.xlu0 %2841
    %2843 = vrot.lane.b32.xlu0 %v2627, 32
    %v2844 = vpop.permute.xlu0 %2843
    %2845 = vrot.lane.b32.xlu0 %v2630, 32
    %v2846 = vpop.permute.xlu0 %2845
    %2847 = vrot.lane.b32.xlu0 %v2633, 32
    %v2848 = vpop.permute.xlu0 %2847
    %2849 = vrot.lane.b32.xlu0 %v2636, 32
    %v2850 = vpop.permute.xlu0 %2849
    %2851 = vrot.lane.b32.xlu0 %v2833, 32
    %v2852 = vpop.permute.xlu0 %2851
    %2853 = vrot.lane.b32.xlu0 %v2642, 32
    %v2854 = vpop.permute.xlu0 %2853
    %2855 = vrot.lane.b32.xlu0 %v2645, 32
    %v2856 = vpop.permute.xlu0 %2855
    %2857 = vrot.lane.b32.xlu0 %v2648, 32
    %v2858 = vpop.permute.xlu0 %2857
    %2859 = vrot.lane.b32.xlu0 %v2651, 32
    %v2860 = vpop.permute.xlu0 %2859
    %2861 = vrot.lane.b32.xlu0 %v2654, 32
    %v2862 = vpop.permute.xlu0 %2861
    %2863 = vrot.lane.b32.xlu0 %v2657, 32
    %v2864 = vpop.permute.xlu0 %2863
    %2865 = vrot.lane.b32.xlu0 %v2660, 32
    %v2866 = vpop.permute.xlu0 %2865
    %2867 = vrot.lane.b32.xlu0 %v2836, 32
    %v2868 = vpop.permute.xlu0 %2867
    %2885 = vst.msk [vmem:[#allocation3 + $0x8] sm:$0xff] %vm323, %v2838
    %2886 = vst.msk [vmem:[#allocation3 + $0x20] sm:$0xff] %vm323, %v2840
    %2887 = vst.msk [vmem:[#allocation3 + $0x38] sm:$0xff] %vm323, %v2842
    %2888 = vst.msk [vmem:[#allocation3 + $0x50] sm:$0xff] %vm323, %v2844
    %2889 = vst.msk [vmem:[#allocation3 + $0x68] sm:$0xff] %vm323, %v2846
    %2890 = vst.msk [vmem:[#allocation3 + $0x80] sm:$0xff] %vm323, %v2848
    %2891 = vst.msk [vmem:[#allocation3 + $0x98] sm:$0xff] %vm323, %v2850
    %2892 = vst.msk [vmem:[#allocation3 + $0xb0] sm:$0xff] %vm323, %v2852
    %2893 = vst.msk [vmem:[#allocation3 + $0xc8] sm:$0xff] %vm323, %v2854
    %2894 = vst.msk [vmem:[#allocation3 + $0xe0] sm:$0xff] %vm323, %v2856
    %2895 = vst.msk [vmem:[#allocation3 + $0xf8] sm:$0xff] %vm323, %v2858
    %2896 = vst.msk [vmem:[#allocation3 + $0x110] sm:$0xff] %vm323, %v2860
    %2897 = vst.msk [vmem:[#allocation3 + $0x128] sm:$0xff] %vm323, %v2862
    %2898 = vst.msk [vmem:[#allocation3 + $0x140] sm:$0xff] %vm323, %v2864
    %2899 = vst.msk [vmem:[#allocation3 + $0x158] sm:$0xff] %vm323, %v2866
    %2900 = vst.msk [vmem:[#allocation3 + $0x170] sm:$0xff] %vm323, %v2868
    %2903 = vrot.lane.b32.xlu0 %v2417, 64
    %v2904 = vpop.permute.xlu0 %2903
    %2905 = vrot.lane.b32.xlu0 %v2419, 64
    %v2906 = vpop.permute.xlu0 %2905
    %2907 = vrot.lane.b32.xlu0 %v2421, 64
    %v2908 = vpop.permute.xlu0 %2907
    %2909 = vrot.lane.b32.xlu0 %v2423, 64
    %v2910 = vpop.permute.xlu0 %2909
    %2911 = vrot.lane.b32.xlu0 %v2425, 64
    %v2912 = vpop.permute.xlu0 %2911
    %2913 = vrot.lane.b32.xlu0 %v2427, 64
    %v2914 = vpop.permute.xlu0 %2913
    %2915 = vrot.lane.b32.xlu0 %v2429, 64
    %v2916 = vpop.permute.xlu0 %2915
    %2917 = vrot.lane.b32.xlu0 %v2431, 64
    %v2918 = vpop.permute.xlu0 %2917
    %2919 = vrot.lane.b32.xlu0 %v2437, 64
    %v2920 = vpop.permute.xlu0 %2919
    %2921 = vrot.lane.b32.xlu0 %v2439, 64
    %v2922 = vpop.permute.xlu0 %2921
    %2923 = vrot.lane.b32.xlu0 %v2441, 64
    %v2924 = vpop.permute.xlu0 %2923
    %2925 = vrot.lane.b32.xlu0 %v2443, 64
    %v2926 = vpop.permute.xlu0 %2925
    %2927 = vrot.lane.b32.xlu0 %v2445, 64
    %v2928 = vpop.permute.xlu0 %2927
    %2929 = vrot.lane.b32.xlu0 %v2447, 64
    %v2930 = vpop.permute.xlu0 %2929
    %2931 = vrot.lane.b32.xlu0 %v2449, 64
    %v2932 = vpop.permute.xlu0 %2931
    %2933 = vrot.lane.b32.xlu0 %v2451, 64
    %v2934 = vpop.permute.xlu0 %2933
    %2951 = vst.msk [vmem:[#allocation3 + $0x8] sm:$0xff] %vm437, %v2904
    %2952 = vst.msk [vmem:[#allocation3 + $0x20] sm:$0xff] %vm437, %v2906
    %2953 = vst.msk [vmem:[#allocation3 + $0x38] sm:$0xff] %vm437, %v2908
    %2954 = vst.msk [vmem:[#allocation3 + $0x50] sm:$0xff] %vm437, %v2910
    %2955 = vst.msk [vmem:[#allocation3 + $0x68] sm:$0xff] %vm437, %v2912
    %2956 = vst.msk [vmem:[#allocation3 + $0x80] sm:$0xff] %vm437, %v2914
    %2957 = vst.msk [vmem:[#allocation3 + $0x98] sm:$0xff] %vm437, %v2916
    %2958 = vst.msk [vmem:[#allocation3 + $0xb0] sm:$0xff] %vm437, %v2918
    %2959 = vst.msk [vmem:[#allocation3 + $0xc8] sm:$0xff] %vm437, %v2920
    %2960 = vst.msk [vmem:[#allocation3 + $0xe0] sm:$0xff] %vm437, %v2922
    %2961 = vst.msk [vmem:[#allocation3 + $0xf8] sm:$0xff] %vm437, %v2924
    %2962 = vst.msk [vmem:[#allocation3 + $0x110] sm:$0xff] %vm437, %v2926
    %2963 = vst.msk [vmem:[#allocation3 + $0x128] sm:$0xff] %vm437, %v2928
    %2964 = vst.msk [vmem:[#allocation3 + $0x140] sm:$0xff] %vm437, %v2930
    %2965 = vst.msk [vmem:[#allocation3 + $0x158] sm:$0xff] %vm437, %v2932
    %2966 = vst.msk [vmem:[#allocation3 + $0x170] sm:$0xff] %vm437, %v2934
    %v2969 = vrot.slane %v2431, 1
    %v2970 = vrot.slane %v2432, 1
    %v2971 = vsel %vm226, %v2969, %v2970
    %v2972 = vrot.slane %v2451, 1
    %v2973 = vrot.slane %v2452, 1
    %v2974 = vsel %vm226, %v2972, %v2973
    %2975 = vrot.lane.b32.xlu0 %v2509, 96
    %v2976 = vpop.permute.xlu0 %2975
    %2977 = vrot.lane.b32.xlu0 %v2512, 96
    %v2978 = vpop.permute.xlu0 %2977
    %2979 = vrot.lane.b32.xlu0 %v2515, 96
    %v2980 = vpop.permute.xlu0 %2979
    %2981 = vrot.lane.b32.xlu0 %v2518, 96
    %v2982 = vpop.permute.xlu0 %2981
    %2983 = vrot.lane.b32.xlu0 %v2521, 96
    %v2984 = vpop.permute.xlu0 %2983
    %2985 = vrot.lane.b32.xlu0 %v2524, 96
    %v2986 = vpop.permute.xlu0 %2985
    %2987 = vrot.lane.b32.xlu0 %v2795, 96
    %v2988 = vpop.permute.xlu0 %2987
    %2989 = vrot.lane.b32.xlu0 %v2971, 96
    %v2990 = vpop.permute.xlu0 %2989
    %2991 = vrot.lane.b32.xlu0 %v2533, 96
    %v2992 = vpop.permute.xlu0 %2991
    %2993 = vrot.lane.b32.xlu0 %v2536, 96
    %v2994 = vpop.permute.xlu0 %2993
    %2995 = vrot.lane.b32.xlu0 %v2539, 96
    %v2996 = vpop.permute.xlu0 %2995
    %2997 = vrot.lane.b32.xlu0 %v2542, 96
    %v2998 = vpop.permute.xlu0 %2997
    %2999 = vrot.lane.b32.xlu0 %v2545, 96
    %v3000 = vpop.permute.xlu0 %2999
    %3001 = vrot.lane.b32.xlu0 %v2548, 96
    %v3002 = vpop.permute.xlu0 %3001
    %3003 = vrot.lane.b32.xlu0 %v2798, 96
    %v3004 = vpop.permute.xlu0 %3003
    %3005 = vrot.lane.b32.xlu0 %v2974, 96
    %v3006 = vpop.permute.xlu0 %3005
    %3023 = vst.msk [vmem:[#allocation3 + $0x8] sm:$0xff] %vm504, %v2976
    %3024 = vst.msk [vmem:[#allocation3 + $0x20] sm:$0xff] %vm504, %v2978
    %3025 = vst.msk [vmem:[#allocation3 + $0x38] sm:$0xff] %vm504, %v2980
    %3026 = vst.msk [vmem:[#allocation3 + $0x50] sm:$0xff] %vm504, %v2982
    %3027 = vst.msk [vmem:[#allocation3 + $0x68] sm:$0xff] %vm504, %v2984
    %3028 = vst.msk [vmem:[#allocation3 + $0x80] sm:$0xff] %vm504, %v2986
    %3029 = vst.msk [vmem:[#allocation3 + $0x98] sm:$0xff] %vm504, %v2988
    %3030 = vst.msk [vmem:[#allocation3 + $0xb0] sm:$0xff] %vm504, %v2990
    %3031 = vst.msk [vmem:[#allocation3 + $0xc8] sm:$0xff] %vm504, %v2992
    %3032 = vst.msk [vmem:[#allocation3 + $0xe0] sm:$0xff] %vm504, %v2994
    %3033 = vst.msk [vmem:[#allocation3 + $0xf8] sm:$0xff] %vm504, %v2996
    %3034 = vst.msk [vmem:[#allocation3 + $0x110] sm:$0xff] %vm504, %v2998
    %3035 = vst.msk [vmem:[#allocation3 + $0x128] sm:$0xff] %vm504, %v3000
    %3036 = vst.msk [vmem:[#allocation3 + $0x140] sm:$0xff] %vm504, %v3002
    %3037 = vst.msk [vmem:[#allocation3 + $0x158] sm:$0xff] %vm504, %v3004
    %3038 = vst.msk [vmem:[#allocation3 + $0x170] sm:$0xff] %vm504, %v3006
    %v3039 = vrot.slane %v2431, 2
    %v3040 = vrot.slane %v2432, 2
    %v3041 = vsel %vm340, %v3039, %v3040
    %v3042 = vrot.slane %v2451, 2
    %v3043 = vrot.slane %v2452, 2
    %v3044 = vsel %vm340, %v3042, %v3043
    %3061 = vst.msk [vmem:[#allocation3 + $0x10] sm:$0xff] %vm27, %v2621
    %3062 = vst.msk [vmem:[#allocation3 + $0x28] sm:$0xff] %vm27, %v2624
    %3063 = vst.msk [vmem:[#allocation3 + $0x40] sm:$0xff] %vm27, %v2627
    %3064 = vst.msk [vmem:[#allocation3 + $0x58] sm:$0xff] %vm27, %v2630
    %3065 = vst.msk [vmem:[#allocation3 + $0x70] sm:$0xff] %vm27, %v2633
    %3066 = vst.msk [vmem:[#allocation3 + $0x88] sm:$0xff] %vm27, %v2636
    %3067 = vst.msk [vmem:[#allocation3 + $0xa0] sm:$0xff] %vm27, %v2833
    %3068 = vst.msk [vmem:[#allocation3 + $0xb8] sm:$0xff] %vm27, %v3041
    %3069 = vst.msk [vmem:[#allocation3 + $0xd0] sm:$0xff] %vm27, %v2645
    %3070 = vst.msk [vmem:[#allocation3 + $0xe8] sm:$0xff] %vm27, %v2648
    %3071 = vst.msk [vmem:[#allocation3 + $0x100] sm:$0xff] %vm27, %v2651
    %3072 = vst.msk [vmem:[#allocation3 + $0x118] sm:$0xff] %vm27, %v2654
    %3073 = vst.msk [vmem:[#allocation3 + $0x130] sm:$0xff] %vm27, %v2657
    %3074 = vst.msk [vmem:[#allocation3 + $0x148] sm:$0xff] %vm27, %v2660
    %3075 = vst.msk [vmem:[#allocation3 + $0x160] sm:$0xff] %vm27, %v2836
    %3076 = vst.msk [vmem:[#allocation3 + $0x178] sm:$0xff] %vm27, %v3044
    %v3077 = vld [vmem:[#allocation3] sm:$0xff]
    %v3078 = vld [vmem:[#allocation3 + $0x8] sm:$0xff]
    %v3079 = vld [vmem:[#allocation3 + $0x10] sm:$0xff]
    %v3080 = vld [vmem:[#allocation3 + $0x18] sm:$0xff]
    %v3081 = vld [vmem:[#allocation3 + $0x20] sm:$0xff]
    %v3082 = vld [vmem:[#allocation3 + $0x28] sm:$0xff]
    %v3083 = vld [vmem:[#allocation3 + $0x30] sm:$0xff]
    %v3084 = vld [vmem:[#allocation3 + $0x38] sm:$0xff]
    %v3085 = vld [vmem:[#allocation3 + $0x40] sm:$0xff]
    %v3086 = vld [vmem:[#allocation3 + $0x48] sm:$0xff]
    %v3087 = vld [vmem:[#allocation3 + $0x50] sm:$0xff]
    %v3088 = vld [vmem:[#allocation3 + $0x58] sm:$0xff]
    %v3089 = vld [vmem:[#allocation3 + $0x60] sm:$0xff]
    %v3090 = vld [vmem:[#allocation3 + $0x68] sm:$0xff]
    %v3091 = vld [vmem:[#allocation3 + $0x70] sm:$0xff]
    %v3092 = vld [vmem:[#allocation3 + $0x78] sm:$0xff]
    %v3093 = vld [vmem:[#allocation3 + $0x80] sm:$0xff]
    %v3094 = vld [vmem:[#allocation3 + $0x88] sm:$0xff]
    %v3095 = vld [vmem:[#allocation3 + $0x90] sm:$0xff]
    %v3096 = vld [vmem:[#allocation3 + $0x98] sm:$0xff]
    %v3097 = vld [vmem:[#allocation3 + $0xa0] sm:$0xff]
    %v3098 = vld [vmem:[#allocation3 + $0xa8] sm:$0xff]
    %v3099 = vld [vmem:[#allocation3 + $0xb0] sm:$0xff]
    %v3100 = vld [vmem:[#allocation3 + $0xb8] sm:$0xff]
    %v3101 = vld [vmem:[#allocation3 + $0xc0] sm:$0xff]
    %v3102 = vld [vmem:[#allocation3 + $0xc8] sm:$0xff]
    %v3103 = vld [vmem:[#allocation3 + $0xd0] sm:$0xff]
    %v3104 = vld [vmem:[#allocation3 + $0xd8] sm:$0xff]
    %v3105 = vld [vmem:[#allocation3 + $0xe0] sm:$0xff]
    %v3106 = vld [vmem:[#allocation3 + $0xe8] sm:$0xff]
    %v3107 = vld [vmem:[#allocation3 + $0xf0] sm:$0xff]
    %v3108 = vld [vmem:[#allocation3 + $0xf8] sm:$0xff]
    %v3109 = vld [vmem:[#allocation3 + $0x100] sm:$0xff]
    %v3110 = vld [vmem:[#allocation3 + $0x108] sm:$0xff]
    %v3111 = vld [vmem:[#allocation3 + $0x110] sm:$0xff]
    %v3112 = vld [vmem:[#allocation3 + $0x118] sm:$0xff]
    %v3113 = vld [vmem:[#allocation3 + $0x120] sm:$0xff]
    %v3114 = vld [vmem:[#allocation3 + $0x128] sm:$0xff]
    %v3115 = vld [vmem:[#allocation3 + $0x130] sm:$0xff]
    %v3116 = vld [vmem:[#allocation3 + $0x138] sm:$0xff]
    %v3117 = vld [vmem:[#allocation3 + $0x140] sm:$0xff]
    %v3118 = vld [vmem:[#allocation3 + $0x148] sm:$0xff]
    %v3119 = vld [vmem:[#allocation3 + $0x150] sm:$0xff]
    %v3120 = vld [vmem:[#allocation3 + $0x158] sm:$0xff]
    %v3121 = vld [vmem:[#allocation3 + $0x160] sm:$0xff]
    %v3122 = vld [vmem:[#allocation3 + $0x168] sm:$0xff]
    %v3123 = vld [vmem:[#allocation3 + $0x170] sm:$0xff]
    %v3124 = vld [vmem:[#allocation3 + $0x178] sm:$0xff]
    %v3126 = vsel %vm27, %v3079, 0
    %v3129 = vsel %vm27, %v3082, 0
    %v3132 = vsel %vm27, %v3085, 0
    %v3135 = vsel %vm27, %v3088, 0
    %v3138 = vsel %vm27, %v3091, 0
    %v3141 = vsel %vm27, %v3094, 0
    %v3144 = vsel %vm27, %v3097, 0
    %v3147 = vsel %vm27, %v3100, 0
    %v3150 = vsel %vm27, %v3103, 0
    %v3153 = vsel %vm27, %v3106, 0
    %v3156 = vsel %vm27, %v3109, 0
    %v3159 = vsel %vm27, %v3112, 0
    %v3162 = vsel %vm27, %v3115, 0
    %v3165 = vsel %vm27, %v3118, 0
    %v3168 = vsel %vm27, %v3121, 0
    %v3171 = vsel %vm27, %v3124, 0
    %3173 = vmatprep.subr.mxu0 0.0
    %3174 = vmatpush1.msra.mxu0 %v2376
    %3175 = vmatprep.subr.mxu0 0.0
    %3176 = vmatpush1.msra.mxu0 %v2375
    %3177 = vmatprep.subr.mxu0 0.0
    %3178 = vmatpush1.msra.mxu0 %v2374
    %3179 = vmatprep.subr.mxu0 0.0
    %3180 = vmatpush1.msra.mxu0 %v2373
    %3181 = vmatprep.subr.mxu0 0.0
    %3182 = vmatpush1.msra.mxu0 %v2372
    %3183 = vmatprep.subr.mxu0 0.0
    %3184 = vmatpush1.msra.mxu0 %v2371
    %3185 = vmatprep.subr.mxu0 0.0
    %3186 = vmatpush1.msra.mxu0 %v2370
    %3187 = vmatprep.subr.mxu0 0.0
    %3188 = vmatpush1.msra.mxu0 %v2369
    %3189 = vmatprep.subr.mxu0 0.0
    %3190 = vmatpush1.msra.mxu0 %v2368
    %3191 = vmatprep.subr.mxu0 0.0
    %3192 = vmatpush1.msra.mxu0 %v2367
    %3193 = vmatprep.subr.mxu0 0.0
    %3194 = vmatpush1.msra.mxu0 %v2366
    %3195 = vmatprep.subr.mxu0 0.0
    %3196 = vmatpush1.msra.mxu0 %v2365
    %3197 = vmatprep.subr.mxu0 0.0
    %3198 = vmatpush1.msra.mxu0 %v2364
    %3199 = vmatprep.subr.mxu0 0.0
    %3200 = vmatpush1.msra.mxu0 %v2363
    %3201 = vmatprep.subr.mxu0 0.0
    %3202 = vmatpush1.msra.mxu0 %v2362
    %3203 = vmatprep.subr.mxu0 0.0
    %3204 = vmatpush1.msra.mxu0 %v2361
    %3205 = vmatprep.subr.mxu0 0.0
    %3206 = vmatpush2.msra.mxu0 %v2392
    %3207 = vmatprep.subr.mxu0 0.0
    %3208 = vmatpush2.msra.mxu0 %v2391
    %3209 = vmatprep.subr.mxu0 0.0
    %3210 = vmatpush2.msra.mxu0 %v2390
    %3211 = vmatprep.subr.mxu0 0.0
    %3212 = vmatpush2.msra.mxu0 %v2389
    %3213 = vmatprep.subr.mxu0 0.0
    %3214 = vmatpush2.msra.mxu0 %v2388
    %3215 = vmatprep.subr.mxu0 0.0
    %3216 = vmatpush2.msra.mxu0 %v2387
    %3217 = vmatprep.subr.mxu0 0.0
    %3218 = vmatpush2.msra.mxu0 %v2386
    %3219 = vmatprep.subr.mxu0 0.0
    %3220 = vmatpush2.msra.mxu0 %v2385
    %3221 = vmatprep.subr.mxu0 0.0
    %3222 = vmatpush2.msra.mxu0 %v2384
    %3223 = vmatprep.subr.mxu0 0.0
    %3224 = vmatpush2.msra.mxu0 %v2383
    %3225 = vmatprep.subr.mxu0 0.0
    %3226 = vmatpush2.msra.mxu0 %v2382
    %3227 = vmatprep.subr.mxu0 0.0
    %3228 = vmatpush2.msra.mxu0 %v2381
    %3229 = vmatprep.subr.mxu0 0.0
    %3230 = vmatpush2.msra.mxu0 %v2380
    %3231 = vmatprep.subr.mxu0 0.0
    %3232 = vmatpush2.msra.mxu0 %v2379
    %3233 = vmatprep.subr.mxu0 0.0
    %3234 = vmatpush2.msra.mxu0 %v2378
    %3235 = vmatprep.subr.mxu0 0.0
    %3236 = vmatpush2.msra.mxu0 %v2377
    %3237 = vmatprep.mubr.f32.mxu0 %v3078
    %3238 = vmatmul.mubr.f32.gmra.mxu0 %v3077
    %v3239 = vpop.f32.mrf.mxu0
    %v3240 = vadd.f32 %v1193, %v3239
    %v3241 = vpop.f32.mrf.mxu0
    %3242 = vmatprep.mubr.f32.mxu0 %v3081
    %3243 = vmatmul.mubr.f32.gmra.mxu0 %v3080
    %v3244 = vpop.f32.mrf.mxu0
    %v3245 = vadd.f32 %v1194, %v3244
    %v3246 = vpop.f32.mrf.mxu0
    %3247 = vmatprep.mubr.f32.mxu0 %v3084
    %3248 = vmatmul.mubr.f32.gmra.mxu0 %v3083
    %v3249 = vpop.f32.mrf.mxu0
    %v3250 = vadd.f32 %v1195, %v3249
    %v3251 = vpop.f32.mrf.mxu0
    %3252 = vmatprep.mubr.f32.mxu0 %v3087
    %3253 = vmatmul.mubr.f32.gmra.mxu0 %v3086
    %v3254 = vpop.f32.mrf.mxu0
    %v3255 = vadd.f32 %v1196, %v3254
    %v3256 = vpop.f32.mrf.mxu0
    %3257 = vmatprep.mubr.f32.mxu0 %v3090
    %3258 = vmatmul.mubr.f32.gmra.mxu0 %v3089
    %v3259 = vpop.f32.mrf.mxu0
    %v3260 = vadd.f32 %v1197, %v3259
    %v3261 = vpop.f32.mrf.mxu0
    %3262 = vmatprep.mubr.f32.mxu0 %v3093
    %3263 = vmatmul.mubr.f32.gmra.mxu0 %v3092
    %v3264 = vpop.f32.mrf.mxu0
    %v3265 = vadd.f32 %v1198, %v3264
    %v3266 = vpop.f32.mrf.mxu0
    %3267 = vmatprep.mubr.f32.mxu0 %v3096
    %3268 = vmatmul.mubr.f32.gmra.mxu0 %v3095
    %v3269 = vpop.f32.mrf.mxu0
    %v3270 = vadd.f32 %v1199, %v3269
    %v3271 = vpop.f32.mrf.mxu0
    %3272 = vmatprep.mubr.f32.mxu0 %v3099
    %3273 = vmatmul.mubr.f32.gmra.mxu0 %v3098
    %v3274 = vpop.f32.mrf.mxu0
    %v3275 = vadd.f32 %v1200, %v3274
    %v3276 = vpop.f32.mrf.mxu0
    %3277 = vmatprep.mubr.f32.mxu0 %v3102
    %3278 = vmatmul.mubr.f32.gmra.mxu0 %v3101
    %v3279 = vpop.f32.mrf.mxu0
    %v3280 = vadd.f32 %v1201, %v3279
    %v3281 = vpop.f32.mrf.mxu0
    %3282 = vmatprep.mubr.f32.mxu0 %v3105
    %3283 = vmatmul.mubr.f32.gmra.mxu0 %v3104
    %v3284 = vpop.f32.mrf.mxu0
    %v3285 = vadd.f32 %v1202, %v3284
    %v3286 = vpop.f32.mrf.mxu0
    %3287 = vmatprep.mubr.f32.mxu0 %v3108
    %3288 = vmatmul.mubr.f32.gmra.mxu0 %v3107
    %v3289 = vpop.f32.mrf.mxu0
    %v3290 = vadd.f32 %v1203, %v3289
    %v3291 = vpop.f32.mrf.mxu0
    %3292 = vmatprep.mubr.f32.mxu0 %v3111
    %3293 = vmatmul.mubr.f32.gmra.mxu0 %v3110
    %v3294 = vpop.f32.mrf.mxu0
    %v3295 = vadd.f32 %v1204, %v3294
    %v3296 = vpop.f32.mrf.mxu0
    %3297 = vmatprep.mubr.f32.mxu0 %v3114
    %3298 = vmatmul.mubr.f32.gmra.mxu0 %v3113
    %v3299 = vpop.f32.mrf.mxu0
    %v3300 = vadd.f32 %v1205, %v3299
    %v3301 = vpop.f32.mrf.mxu0
    %3302 = vmatprep.mubr.f32.mxu0 %v3117
    %3303 = vmatmul.mubr.f32.gmra.mxu0 %v3116
    %v3304 = vpop.f32.mrf.mxu0
    %v3305 = vadd.f32 %v1206, %v3304
    %v3306 = vpop.f32.mrf.mxu0
    %3307 = vmatprep.mubr.f32.mxu0 %v3120
    %3308 = vmatmul.mubr.f32.gmra.mxu0 %v3119
    %v3309 = vpop.f32.mrf.mxu0
    %v3310 = vadd.f32 %v1207, %v3309
    %v3311 = vpop.f32.mrf.mxu0
    %3312 = vmatprep.mubr.f32.mxu0 %v3123
    %3313 = vmatmul.mubr.f32.gmra.mxu0 %v3122
    %v3314 = vpop.f32.mrf.mxu0
    %v3315 = vadd.f32 %v1208, %v3314
    %v3316 = vpop.f32.mrf.mxu0
    %3317 = vdwg.mxu0
    %3318 = vmatprep.subr.mxu0 0.0
    %3319 = vmatpush1.msra.mxu0 0.0
    %3320 = vmatprep.subr.mxu0 0.0
    %3321 = vmatpush1.msra.mxu0 0.0
    %3322 = vmatprep.subr.mxu0 0.0
    %3323 = vmatpush1.msra.mxu0 0.0
    %3324 = vmatprep.subr.mxu0 0.0
    %3325 = vmatpush1.msra.mxu0 0.0
    %3326 = vmatprep.subr.mxu0 0.0
    %3327 = vmatpush1.msra.mxu0 0.0
    %3328 = vmatprep.subr.mxu0 0.0
    %3329 = vmatpush1.msra.mxu0 0.0
    %3330 = vmatprep.subr.mxu0 0.0
    %3331 = vmatpush1.msra.mxu0 0.0
    %3332 = vmatprep.subr.mxu0 0.0
    %3333 = vmatpush1.msra.mxu0 0.0
    %3334 = vmatprep.subr.mxu0 0.0
    %3335 = vmatpush1.msra.mxu0 0.0
    %3336 = vmatprep.subr.mxu0 0.0
    %3337 = vmatpush1.msra.mxu0 0.0
    %3338 = vmatprep.subr.mxu0 0.0
    %3339 = vmatpush1.msra.mxu0 0.0
    %3340 = vmatprep.subr.mxu0 0.0
    %3341 = vmatpush1.msra.mxu0 0.0
    %3342 = vmatprep.subr.mxu0 0.0
    %3343 = vmatpush1.msra.mxu0 %v2396
    %3344 = vmatprep.subr.mxu0 0.0
    %3345 = vmatpush1.msra.mxu0 %v2395
    %3346 = vmatprep.subr.mxu0 0.0
    %3347 = vmatpush1.msra.mxu0 %v2394
    %3348 = vmatprep.subr.mxu0 0.0
    %3349 = vmatpush1.msra.mxu0 %v2393
    %3350 = vmatprep.subr.mxu0 0.0
    %3351 = vmatpush2.msra.mxu0 0.0
    %3352 = vmatprep.subr.mxu0 0.0
    %3353 = vmatpush2.msra.mxu0 0.0
    %3354 = vmatprep.subr.mxu0 0.0
    %3355 = vmatpush2.msra.mxu0 0.0
    %3356 = vmatprep.subr.mxu0 0.0
    %3357 = vmatpush2.msra.mxu0 0.0
    %3358 = vmatprep.subr.mxu0 0.0
    %3359 = vmatpush2.msra.mxu0 0.0
    %3360 = vmatprep.subr.mxu0 0.0
    %3361 = vmatpush2.msra.mxu0 0.0
    %3362 = vmatprep.subr.mxu0 0.0
    %3363 = vmatpush2.msra.mxu0 0.0
    %3364 = vmatprep.subr.mxu0 0.0
    %3365 = vmatpush2.msra.mxu0 0.0
    %3366 = vmatprep.subr.mxu0 0.0
    %3367 = vmatpush2.msra.mxu0 0.0
    %3368 = vmatprep.subr.mxu0 0.0
    %3369 = vmatpush2.msra.mxu0 0.0
    %3370 = vmatprep.subr.mxu0 0.0
    %3371 = vmatpush2.msra.mxu0 0.0
    %3372 = vmatprep.subr.mxu0 0.0
    %3373 = vmatpush2.msra.mxu0 0.0
    %3374 = vmatprep.subr.mxu0 0.0
    %3375 = vmatpush2.msra.mxu0 0.0
    %3376 = vmatprep.subr.mxu0 0.0
    %3377 = vmatpush2.msra.mxu0 0.0
    %3378 = vmatprep.subr.mxu0 0.0
    %3379 = vmatpush2.msra.mxu0 0.0
    %3380 = vmatprep.subr.mxu0 0.0
    %3381 = vmatpush2.msra.mxu0 0.0
    %3382 = vmatprep.mubr.f32.mxu0 0.0
    %3383 = vmatmul.mubr.f32.gmra.mxu0 %v3126
    %v3384 = vpop.f32.mrf.mxu0
    %v3385 = vadd.f32 %v3240, %v3384
    %v3386 = vpop.f32.mrf.mxu0
    %3387 = vmatprep.mubr.f32.mxu0 0.0
    %3388 = vmatmul.mubr.f32.gmra.mxu0 %v3129
    %v3389 = vpop.f32.mrf.mxu0
    %v3390 = vadd.f32 %v3245, %v3389
    %v3391 = vpop.f32.mrf.mxu0
    %3392 = vmatprep.mubr.f32.mxu0 0.0
    %3393 = vmatmul.mubr.f32.gmra.mxu0 %v3132
    %v3394 = vpop.f32.mrf.mxu0
    %v3395 = vadd.f32 %v3250, %v3394
    %v3396 = vpop.f32.mrf.mxu0
    %3397 = vmatprep.mubr.f32.mxu0 0.0
    %3398 = vmatmul.mubr.f32.gmra.mxu0 %v3135
    %v3399 = vpop.f32.mrf.mxu0
    %v3400 = vadd.f32 %v3255, %v3399
    %v3401 = vpop.f32.mrf.mxu0
    %3402 = vmatprep.mubr.f32.mxu0 0.0
    %3403 = vmatmul.mubr.f32.gmra.mxu0 %v3138
    %v3404 = vpop.f32.mrf.mxu0
    %v3405 = vadd.f32 %v3260, %v3404
    %v3406 = vpop.f32.mrf.mxu0
    %3407 = vmatprep.mubr.f32.mxu0 0.0
    %3408 = vmatmul.mubr.f32.gmra.mxu0 %v3141
    %v3409 = vpop.f32.mrf.mxu0
    %v3410 = vadd.f32 %v3265, %v3409
    %v3411 = vpop.f32.mrf.mxu0
    %3412 = vmatprep.mubr.f32.mxu0 0.0
    %3413 = vmatmul.mubr.f32.gmra.mxu0 %v3144
    %v3414 = vpop.f32.mrf.mxu0
    %v3415 = vadd.f32 %v3270, %v3414
    %v3416 = vpop.f32.mrf.mxu0
    %3417 = vmatprep.mubr.f32.mxu0 0.0
    %3418 = vmatmul.mubr.f32.gmra.mxu0 %v3147
    %v3419 = vpop.f32.mrf.mxu0
    %v3420 = vadd.f32 %v3275, %v3419
    %v3421 = vpop.f32.mrf.mxu0
    %3422 = vmatprep.mubr.f32.mxu0 0.0
    %3423 = vmatmul.mubr.f32.gmra.mxu0 %v3150
    %v3424 = vpop.f32.mrf.mxu0
    %v3425 = vadd.f32 %v3280, %v3424
    %v3426 = vpop.f32.mrf.mxu0
    %3427 = vmatprep.mubr.f32.mxu0 0.0
    %3428 = vmatmul.mubr.f32.gmra.mxu0 %v3153
    %v3429 = vpop.f32.mrf.mxu0
    %v3430 = vadd.f32 %v3285, %v3429
    %v3431 = vpop.f32.mrf.mxu0
    %3432 = vmatprep.mubr.f32.mxu0 0.0
    %3433 = vmatmul.mubr.f32.gmra.mxu0 %v3156
    %v3434 = vpop.f32.mrf.mxu0
    %v3435 = vadd.f32 %v3290, %v3434
    %v3436 = vpop.f32.mrf.mxu0
    %3437 = vmatprep.mubr.f32.mxu0 0.0
    %3438 = vmatmul.mubr.f32.gmra.mxu0 %v3159
    %v3439 = vpop.f32.mrf.mxu0
    %v3440 = vadd.f32 %v3295, %v3439
    %v3441 = vpop.f32.mrf.mxu0
    %3442 = vmatprep.mubr.f32.mxu0 0.0
    %3443 = vmatmul.mubr.f32.gmra.mxu0 %v3162
    %v3444 = vpop.f32.mrf.mxu0
    %v3445 = vadd.f32 %v3300, %v3444
    %v3446 = vpop.f32.mrf.mxu0
    %3447 = vmatprep.mubr.f32.mxu0 0.0
    %3448 = vmatmul.mubr.f32.gmra.mxu0 %v3165
    %v3449 = vpop.f32.mrf.mxu0
    %v3450 = vadd.f32 %v3305, %v3449
    %v3451 = vpop.f32.mrf.mxu0
    %3452 = vmatprep.mubr.f32.mxu0 0.0
    %3453 = vmatmul.mubr.f32.gmra.mxu0 %v3168
    %v3454 = vpop.f32.mrf.mxu0
    %v3455 = vadd.f32 %v3310, %v3454
    %v3456 = vpop.f32.mrf.mxu0
    %3457 = vmatprep.mubr.f32.mxu0 0.0
    %3458 = vmatmul.mubr.f32.gmra.mxu0 %v3171
    %v3459 = vpop.f32.mrf.mxu0
    %v3460 = vadd.f32 %v3315, %v3459
    %v3461 = vpop.f32.mrf.mxu0
    %3462 = vdwg.mxu0
    %vm3463 = vcmp.gt.f32.partialorder %v3385, 0.0
    %vm3464 = vcmp.gt.f32.partialorder %v3390, 0.0
    %vm3465 = vcmp.gt.f32.partialorder %v3395, 0.0
    %vm3466 = vcmp.gt.f32.partialorder %v3400, 0.0
    %vm3467 = vcmp.gt.f32.partialorder %v3405, 0.0
    %vm3468 = vcmp.gt.f32.partialorder %v3410, 0.0
    %vm3469 = vcmp.gt.f32.partialorder %v3415, 0.0
    %vm3470 = vcmp.gt.f32.partialorder %v3420, 0.0
    %vm3471 = vcmp.gt.f32.partialorder %v3425, 0.0
    %vm3472 = vcmp.gt.f32.partialorder %v3430, 0.0
    %vm3473 = vcmp.gt.f32.partialorder %v3435, 0.0
    %vm3474 = vcmp.gt.f32.partialorder %v3440, 0.0
    %vm3475 = vcmp.gt.f32.partialorder %v3445, 0.0
    %vm3476 = vcmp.gt.f32.partialorder %v3450, 0.0
    %vm3477 = vcmp.gt.f32.partialorder %v3455, 0.0
    %vm3478 = vcmp.gt.f32.partialorder %v3460, 0.0
    %v3479 = vmul.f32 %v3385, 0.01
    %v3480 = vmul.f32 %v3390, 0.01
    %v3481 = vmul.f32 %v3395, 0.01
    %v3482 = vmul.f32 %v3400, 0.01
    %v3483 = vmul.f32 %v3405, 0.01
    %v3484 = vmul.f32 %v3410, 0.01
    %v3485 = vmul.f32 %v3415, 0.01
    %v3486 = vmul.f32 %v3420, 0.01
    %v3487 = vmul.f32 %v3425, 0.01
    %v3488 = vmul.f32 %v3430, 0.01
    %v3489 = vmul.f32 %v3435, 0.01
    %v3490 = vmul.f32 %v3440, 0.01
    %v3491 = vmul.f32 %v3445, 0.01
    %v3492 = vmul.f32 %v3450, 0.01
    %v3493 = vmul.f32 %v3455, 0.01
    %v3494 = vmul.f32 %v3460, 0.01
    %v3495 = vsel %vm3463, %v3385, %v3479
    %v3496 = vsel %vm3464, %v3390, %v3480
    %v3497 = vsel %vm3465, %v3395, %v3481
    %v3498 = vsel %vm3466, %v3400, %v3482
    %v3499 = vsel %vm3467, %v3405, %v3483
    %v3500 = vsel %vm3468, %v3410, %v3484
    %v3501 = vsel %vm3469, %v3415, %v3485
    %v3502 = vsel %vm3470, %v3420, %v3486
    %v3503 = vsel %vm3471, %v3425, %v3487
    %v3504 = vsel %vm3472, %v3430, %v3488
    %v3505 = vsel %vm3473, %v3435, %v3489
    %v3506 = vsel %vm3474, %v3440, %v3490
    %v3507 = vsel %vm3475, %v3445, %v3491
    %v3508 = vsel %vm3476, %v3450, %v3492
    %v3509 = vsel %vm3477, %v3455, %v3493
    %v3510 = vsel %vm3478, %v3460, %v3494
    %s3511 = scalar_lea.vmem %s1, 864
    %v3512 = vld [vmem:[%s3511] sm:$0xff]
    %v3513 = vld [vmem:[%s3511 + $0x8] sm:$0xff]
    %v3514 = vld [vmem:[%s3511 + $0x10] sm:$0xff]
    %v3515 = vld [vmem:[%s3511 + $0x18] sm:$0xff]
    %v3516 = vld [vmem:[%s3511 + $0x20] sm:$0xff]
    %v3517 = vld [vmem:[%s3511 + $0x28] sm:$0xff]
    %v3518 = vld [vmem:[%s3511 + $0x30] sm:$0xff]
    %v3519 = vld [vmem:[%s3511 + $0x38] sm:$0xff]
    %v3520 = vld [vmem:[%s3511 + $0x40] sm:$0xff]
    %v3521 = vld [vmem:[%s3511 + $0x48] sm:$0xff]
    %v3522 = vld [vmem:[%s3511 + $0x50] sm:$0xff]
    %v3523 = vld [vmem:[%s3511 + $0x58] sm:$0xff]
    %v3524 = vld [vmem:[%s3511 + $0x60] sm:$0xff]
    %v3525 = vld [vmem:[%s3511 + $0x68] sm:$0xff]
    %v3526 = vld [vmem:[%s3511 + $0x70] sm:$0xff]
    %v3527 = vld [vmem:[%s3511 + $0x78] sm:$0xff]
    %v3528 = vld [vmem:[%s3511 + $0x80] sm:$0xff]
    %v3529 = vld [vmem:[%s3511 + $0x88] sm:$0xff]
    %v3530 = vld [vmem:[%s3511 + $0x90] sm:$0xff]
    %v3531 = vld [vmem:[%s3511 + $0x98] sm:$0xff]
    %v3532 = vld [vmem:[%s3511 + $0xa0] sm:$0xff]
    %v3533 = vld [vmem:[%s3511 + $0xa8] sm:$0xff]
    %v3534 = vld [vmem:[%s3511 + $0xb0] sm:$0xff]
    %v3535 = vld [vmem:[%s3511 + $0xb8] sm:$0xff]
    %v3536 = vld [vmem:[%s3511 + $0xc0] sm:$0xff]
    %v3537 = vld [vmem:[%s3511 + $0xc8] sm:$0xff]
    %v3538 = vld [vmem:[%s3511 + $0xd0] sm:$0xff]
    %v3539 = vld [vmem:[%s3511 + $0xd8] sm:$0xff]
    %v3540 = vld [vmem:[%s3511 + $0xe0] sm:$0xff]
    %v3541 = vld [vmem:[%s3511 + $0xe8] sm:$0xff]
    %v3542 = vld [vmem:[%s3511 + $0xf0] sm:$0xff]
    %v3543 = vld [vmem:[%s3511 + $0xf8] sm:$0xff]
    %v3544 = vld [vmem:[%s3511 + $0x100] sm:$0xff]
    %v3545 = vld [vmem:[%s3511 + $0x108] sm:$0xff]
    %v3546 = vld [vmem:[%s3511 + $0x110] sm:$0xff]
    %v3547 = vld [vmem:[%s3511 + $0x118] sm:$0xff]
    %3548 = vst.msk [vmem:[%s121 + $0x1] sm:$0xff] %vm27, %v3495
    %3549 = vst.msk [vmem:[%s121 + $0x11] sm:$0xff] %vm27, %v3496
    %3550 = vst.msk [vmem:[%s121 + $0x21] sm:$0xff] %vm27, %v3497
    %3551 = vst.msk [vmem:[%s121 + $0x31] sm:$0xff] %vm27, %v3498
    %3552 = vst.msk [vmem:[%s121 + $0x41] sm:$0xff] %vm27, %v3499
    %3553 = vst.msk [vmem:[%s121 + $0x51] sm:$0xff] %vm27, %v3500
    %3554 = vst.msk [vmem:[%s121 + $0x61] sm:$0xff] %vm27, %v3501
    %3555 = vst.msk [vmem:[%s121 + $0x71] sm:$0xff] %vm27, %v3502
    %3556 = vst.msk [vmem:[%s121 + $0xa1] sm:$0xff] %vm27, %v3503
    %3557 = vst.msk [vmem:[%s121 + $0xb1] sm:$0xff] %vm27, %v3504
    %3558 = vst.msk [vmem:[%s121 + $0xc1] sm:$0xff] %vm27, %v3505
    %3559 = vst.msk [vmem:[%s121 + $0xd1] sm:$0xff] %vm27, %v3506
    %3560 = vst.msk [vmem:[%s121 + $0xe1] sm:$0xff] %vm27, %v3507
    %3561 = vst.msk [vmem:[%s121 + $0xf1] sm:$0xff] %vm27, %v3508
    %3562 = vst.msk [vmem:[%s121 + $0x101] sm:$0xff] %vm27, %v3509
    %3563 = vst.msk [vmem:[%s121 + $0x111] sm:$0xff] %vm27, %v3510
    %v3564 = vld [vmem:[#allocation2] sm:$0xff]
    %v3565 = vld [vmem:[#allocation2 + $0x8] sm:$0x3]
    %v3566 = vld [vmem:[#allocation2 + $0x10] sm:$0xff]
    %v3567 = vld [vmem:[#allocation2 + $0x18] sm:$0x3]
    %v3568 = vld [vmem:[#allocation2 + $0x20] sm:$0xff]
    %v3569 = vld [vmem:[#allocation2 + $0x28] sm:$0x3]
    %v3570 = vld [vmem:[#allocation2 + $0x30] sm:$0xff]
    %v3571 = vld [vmem:[#allocation2 + $0x38] sm:$0x3]
    %v3572 = vld [vmem:[#allocation2 + $0x40] sm:$0xff]
    %v3573 = vld [vmem:[#allocation2 + $0x48] sm:$0x3]
    %v3574 = vld [vmem:[#allocation2 + $0x50] sm:$0xff]
    %v3575 = vld [vmem:[#allocation2 + $0x58] sm:$0x3]
    %v3576 = vld [vmem:[#allocation2 + $0x60] sm:$0xff]
    %v3577 = vld [vmem:[#allocation2 + $0x68] sm:$0x3]
    %v3578 = vld [vmem:[#allocation2 + $0x70] sm:$0xff]
    %v3579 = vld [vmem:[#allocation2 + $0x78] sm:$0x3]
    %v3580 = vld [vmem:[#allocation2 + $0x80] sm:$0xff]
    %v3581 = vld [vmem:[#allocation2 + $0x88] sm:$0x3]
    %v3582 = vld [vmem:[#allocation2 + $0x90] sm:$0xff]
    %v3583 = vld [vmem:[#allocation2 + $0x98] sm:$0x3]
    %v3584 = vld [vmem:[#allocation2 + $0xa0] sm:$0xff]
    %v3585 = vld [vmem:[#allocation2 + $0xa8] sm:$0x3]
    %v3586 = vld [vmem:[#allocation2 + $0xb0] sm:$0xff]
    %v3587 = vld [vmem:[#allocation2 + $0xb8] sm:$0x3]
    %v3588 = vld [vmem:[#allocation2 + $0xc0] sm:$0xff]
    %v3589 = vld [vmem:[#allocation2 + $0xc8] sm:$0x3]
    %v3590 = vld [vmem:[#allocation2 + $0xd0] sm:$0xff]
    %v3591 = vld [vmem:[#allocation2 + $0xd8] sm:$0x3]
    %v3592 = vld [vmem:[#allocation2 + $0xe0] sm:$0xff]
    %v3593 = vld [vmem:[#allocation2 + $0xe8] sm:$0x3]
    %v3594 = vld [vmem:[#allocation2 + $0xf0] sm:$0xff]
    %v3595 = vld [vmem:[#allocation2 + $0xf8] sm:$0x3]
    %v3596 = vld [vmem:[#allocation2 + $0x100] sm:$0xff]
    %v3597 = vld [vmem:[#allocation2 + $0x108] sm:$0x3]
    %v3598 = vld [vmem:[#allocation2 + $0x110] sm:$0xff]
    %v3599 = vld [vmem:[#allocation2 + $0x118] sm:$0x3]
    %v3600 = vld [vmem:[#allocation2 + $0x120] sm:$0xff]
    %v3601 = vld [vmem:[#allocation2 + $0x128] sm:$0x3]
    %v3602 = vld [vmem:[#allocation2 + $0x130] sm:$0xff]
    %v3603 = vld [vmem:[#allocation2 + $0x138] sm:$0x3]
    %3604 = vst.msk [vmem:[#allocation3] sm:$0xff] %vm27, %v3564
    %3605 = vst.msk [vmem:[#allocation3 + $0x18] sm:$0xff] %vm27, %v3566
    %3606 = vst.msk [vmem:[#allocation3 + $0x30] sm:$0xff] %vm27, %v3568
    %3607 = vst.msk [vmem:[#allocation3 + $0x48] sm:$0xff] %vm27, %v3570
    %3608 = vst.msk [vmem:[#allocation3 + $0x60] sm:$0xff] %vm27, %v3572
    %3609 = vst.msk [vmem:[#allocation3 + $0x78] sm:$0xff] %vm27, %v3574
    %3610 = vst.msk [vmem:[#allocation3 + $0x90] sm:$0xff] %vm27, %v3576
    %3611 = vst.msk [vmem:[#allocation3 + $0xa8] sm:$0xff] %vm27, %v3578
    %3612 = vst.msk [vmem:[#allocation3 + $0xc0] sm:$0xff] %vm27, %v3584
    %3613 = vst.msk [vmem:[#allocation3 + $0xd8] sm:$0xff] %vm27, %v3586
    %3614 = vst.msk [vmem:[#allocation3 + $0xf0] sm:$0xff] %vm27, %v3588
    %3615 = vst.msk [vmem:[#allocation3 + $0x108] sm:$0xff] %vm27, %v3590
    %3616 = vst.msk [vmem:[#allocation3 + $0x120] sm:$0xff] %vm27, %v3592
    %3617 = vst.msk [vmem:[#allocation3 + $0x138] sm:$0xff] %vm27, %v3594
    %3618 = vst.msk [vmem:[#allocation3 + $0x150] sm:$0xff] %vm27, %v3596
    %3619 = vst.msk [vmem:[#allocation3 + $0x168] sm:$0xff] %vm27, %v3598
    %v3652 = vrot.slane %v3564, 1
    %v3653 = vrot.slane %v3565, 1
    %v3654 = vsel %vm226, %v3652, %v3653
    %v3655 = vrot.slane %v3566, 1
    %v3656 = vrot.slane %v3567, 1
    %v3657 = vsel %vm226, %v3655, %v3656
    %v3658 = vrot.slane %v3568, 1
    %v3659 = vrot.slane %v3569, 1
    %v3660 = vsel %vm226, %v3658, %v3659
    %v3661 = vrot.slane %v3570, 1
    %v3662 = vrot.slane %v3571, 1
    %v3663 = vsel %vm226, %v3661, %v3662
    %v3664 = vrot.slane %v3572, 1
    %v3665 = vrot.slane %v3573, 1
    %v3666 = vsel %vm226, %v3664, %v3665
    %v3667 = vrot.slane %v3574, 1
    %v3668 = vrot.slane %v3575, 1
    %v3669 = vsel %vm226, %v3667, %v3668
    %v3670 = vrot.slane %v3576, 1
    %v3671 = vrot.slane %v3577, 1
    %v3672 = vsel %vm226, %v3670, %v3671
    %v3673 = vrot.slane %v3578, 1
    %v3674 = vrot.slane %v3579, 1
    %v3675 = vsel %vm226, %v3673, %v3674
    %v3676 = vrot.slane %v3584, 1
    %v3677 = vrot.slane %v3585, 1
    %v3678 = vsel %vm226, %v3676, %v3677
    %v3679 = vrot.slane %v3586, 1
    %v3680 = vrot.slane %v3587, 1
    %v3681 = vsel %vm226, %v3679, %v3680
    %v3682 = vrot.slane %v3588, 1
    %v3683 = vrot.slane %v3589, 1
    %v3684 = vsel %vm226, %v3682, %v3683
    %v3685 = vrot.slane %v3590, 1
    %v3686 = vrot.slane %v3591, 1
    %v3687 = vsel %vm226, %v3685, %v3686
    %v3688 = vrot.slane %v3592, 1
    %v3689 = vrot.slane %v3593, 1
    %v3690 = vsel %vm226, %v3688, %v3689
    %v3691 = vrot.slane %v3594, 1
    %v3692 = vrot.slane %v3595, 1
    %v3693 = vsel %vm226, %v3691, %v3692
    %v3694 = vrot.slane %v3596, 1
    %v3695 = vrot.slane %v3597, 1
    %v3696 = vsel %vm226, %v3694, %v3695
    %v3697 = vrot.slane %v3598, 1
    %v3698 = vrot.slane %v3599, 1
    %v3699 = vsel %vm226, %v3697, %v3698
    %3700 = vrot.lane.b32.xlu0 %v3654, 32
    %v3701 = vpop.permute.xlu0 %3700
    %3702 = vrot.lane.b32.xlu0 %v3657, 32
    %v3703 = vpop.permute.xlu0 %3702
    %3704 = vrot.lane.b32.xlu0 %v3660, 32
    %v3705 = vpop.permute.xlu0 %3704
    %3706 = vrot.lane.b32.xlu0 %v3663, 32
    %v3707 = vpop.permute.xlu0 %3706
    %3708 = vrot.lane.b32.xlu0 %v3666, 32
    %v3709 = vpop.permute.xlu0 %3708
    %3710 = vrot.lane.b32.xlu0 %v3669, 32
    %v3711 = vpop.permute.xlu0 %3710
    %3712 = vrot.lane.b32.xlu0 %v3672, 32
    %v3713 = vpop.permute.xlu0 %3712
    %3714 = vrot.lane.b32.xlu0 %v3675, 32
    %v3715 = vpop.permute.xlu0 %3714
    %3716 = vrot.lane.b32.xlu0 %v3678, 32
    %v3717 = vpop.permute.xlu0 %3716
    %3718 = vrot.lane.b32.xlu0 %v3681, 32
    %v3719 = vpop.permute.xlu0 %3718
    %3720 = vrot.lane.b32.xlu0 %v3684, 32
    %v3721 = vpop.permute.xlu0 %3720
    %3722 = vrot.lane.b32.xlu0 %v3687, 32
    %v3723 = vpop.permute.xlu0 %3722
    %3724 = vrot.lane.b32.xlu0 %v3690, 32
    %v3725 = vpop.permute.xlu0 %3724
    %3726 = vrot.lane.b32.xlu0 %v3693, 32
    %v3727 = vpop.permute.xlu0 %3726
    %3728 = vrot.lane.b32.xlu0 %v3696, 32
    %v3729 = vpop.permute.xlu0 %3728
    %3730 = vrot.lane.b32.xlu0 %v3699, 32
    %v3731 = vpop.permute.xlu0 %3730
    %3748 = vst.msk [vmem:[#allocation3] sm:$0xff] %vm323, %v3701
    %3749 = vst.msk [vmem:[#allocation3 + $0x18] sm:$0xff] %vm323, %v3703
    %3750 = vst.msk [vmem:[#allocation3 + $0x30] sm:$0xff] %vm323, %v3705
    %3751 = vst.msk [vmem:[#allocation3 + $0x48] sm:$0xff] %vm323, %v3707
    %3752 = vst.msk [vmem:[#allocation3 + $0x60] sm:$0xff] %vm323, %v3709
    %3753 = vst.msk [vmem:[#allocation3 + $0x78] sm:$0xff] %vm323, %v3711
    %3754 = vst.msk [vmem:[#allocation3 + $0x90] sm:$0xff] %vm323, %v3713
    %3755 = vst.msk [vmem:[#allocation3 + $0xa8] sm:$0xff] %vm323, %v3715
    %3756 = vst.msk [vmem:[#allocation3 + $0xc0] sm:$0xff] %vm323, %v3717
    %3757 = vst.msk [vmem:[#allocation3 + $0xd8] sm:$0xff] %vm323, %v3719
    %3758 = vst.msk [vmem:[#allocation3 + $0xf0] sm:$0xff] %vm323, %v3721
    %3759 = vst.msk [vmem:[#allocation3 + $0x108] sm:$0xff] %vm323, %v3723
    %3760 = vst.msk [vmem:[#allocation3 + $0x120] sm:$0xff] %vm323, %v3725
    %3761 = vst.msk [vmem:[#allocation3 + $0x138] sm:$0xff] %vm323, %v3727
    %3762 = vst.msk [vmem:[#allocation3 + $0x150] sm:$0xff] %vm323, %v3729
    %3763 = vst.msk [vmem:[#allocation3 + $0x168] sm:$0xff] %vm323, %v3731
    %v3764 = vrot.slane %v3564, 2
    %v3765 = vrot.slane %v3565, 2
    %v3766 = vsel %vm340, %v3764, %v3765
    %v3767 = vrot.slane %v3566, 2
    %v3768 = vrot.slane %v3567, 2
    %v3769 = vsel %vm340, %v3767, %v3768
    %v3770 = vrot.slane %v3568, 2
    %v3771 = vrot.slane %v3569, 2
    %v3772 = vsel %vm340, %v3770, %v3771
    %v3773 = vrot.slane %v3570, 2
    %v3774 = vrot.slane %v3571, 2
    %v3775 = vsel %vm340, %v3773, %v3774
    %v3776 = vrot.slane %v3572, 2
    %v3777 = vrot.slane %v3573, 2
    %v3778 = vsel %vm340, %v3776, %v3777
    %v3779 = vrot.slane %v3574, 2
    %v3780 = vrot.slane %v3575, 2
    %v3781 = vsel %vm340, %v3779, %v3780
    %v3782 = vrot.slane %v3576, 2
    %v3783 = vrot.slane %v3577, 2
    %v3784 = vsel %vm340, %v3782, %v3783
    %v3785 = vrot.slane %v3578, 2
    %v3786 = vrot.slane %v3579, 2
    %v3787 = vsel %vm340, %v3785, %v3786
    %v3788 = vrot.slane %v3584, 2
    %v3789 = vrot.slane %v3585, 2
    %v3790 = vsel %vm340, %v3788, %v3789
    %v3791 = vrot.slane %v3586, 2
    %v3792 = vrot.slane %v3587, 2
    %v3793 = vsel %vm340, %v3791, %v3792
    %v3794 = vrot.slane %v3588, 2
    %v3795 = vrot.slane %v3589, 2
    %v3796 = vsel %vm340, %v3794, %v3795
    %v3797 = vrot.slane %v3590, 2
    %v3798 = vrot.slane %v3591, 2
    %v3799 = vsel %vm340, %v3797, %v3798
    %v3800 = vrot.slane %v3592, 2
    %v3801 = vrot.slane %v3593, 2
    %v3802 = vsel %vm340, %v3800, %v3801
    %v3803 = vrot.slane %v3594, 2
    %v3804 = vrot.slane %v3595, 2
    %v3805 = vsel %vm340, %v3803, %v3804
    %v3806 = vrot.slane %v3596, 2
    %v3807 = vrot.slane %v3597, 2
    %v3808 = vsel %vm340, %v3806, %v3807
    %v3809 = vrot.slane %v3598, 2
    %v3810 = vrot.slane %v3599, 2
    %v3811 = vsel %vm340, %v3809, %v3810
    %3812 = vrot.lane.b32.xlu0 %v3766, 64
    %v3813 = vpop.permute.xlu0 %3812
    %3814 = vrot.lane.b32.xlu0 %v3769, 64
    %v3815 = vpop.permute.xlu0 %3814
    %3816 = vrot.lane.b32.xlu0 %v3772, 64
    %v3817 = vpop.permute.xlu0 %3816
    %3818 = vrot.lane.b32.xlu0 %v3775, 64
    %v3819 = vpop.permute.xlu0 %3818
    %3820 = vrot.lane.b32.xlu0 %v3778, 64
    %v3821 = vpop.permute.xlu0 %3820
    %3822 = vrot.lane.b32.xlu0 %v3781, 64
    %v3823 = vpop.permute.xlu0 %3822
    %3824 = vrot.lane.b32.xlu0 %v3784, 64
    %v3825 = vpop.permute.xlu0 %3824
    %3826 = vrot.lane.b32.xlu0 %v3787, 64
    %v3827 = vpop.permute.xlu0 %3826
    %3828 = vrot.lane.b32.xlu0 %v3790, 64
    %v3829 = vpop.permute.xlu0 %3828
    %3830 = vrot.lane.b32.xlu0 %v3793, 64
    %v3831 = vpop.permute.xlu0 %3830
    %3832 = vrot.lane.b32.xlu0 %v3796, 64
    %v3833 = vpop.permute.xlu0 %3832
    %3834 = vrot.lane.b32.xlu0 %v3799, 64
    %v3835 = vpop.permute.xlu0 %3834
    %3836 = vrot.lane.b32.xlu0 %v3802, 64
    %v3837 = vpop.permute.xlu0 %3836
    %3838 = vrot.lane.b32.xlu0 %v3805, 64
    %v3839 = vpop.permute.xlu0 %3838
    %3840 = vrot.lane.b32.xlu0 %v3808, 64
    %v3841 = vpop.permute.xlu0 %3840
    %3842 = vrot.lane.b32.xlu0 %v3811, 64
    %v3843 = vpop.permute.xlu0 %3842
    %3860 = vst.msk [vmem:[#allocation3] sm:$0xff] %vm437, %v3813
    %3861 = vst.msk [vmem:[#allocation3 + $0x18] sm:$0xff] %vm437, %v3815
    %3862 = vst.msk [vmem:[#allocation3 + $0x30] sm:$0xff] %vm437, %v3817
    %3863 = vst.msk [vmem:[#allocation3 + $0x48] sm:$0xff] %vm437, %v3819
    %3864 = vst.msk [vmem:[#allocation3 + $0x60] sm:$0xff] %vm437, %v3821
    %3865 = vst.msk [vmem:[#allocation3 + $0x78] sm:$0xff] %vm437, %v3823
    %3866 = vst.msk [vmem:[#allocation3 + $0x90] sm:$0xff] %vm437, %v3825
    %3867 = vst.msk [vmem:[#allocation3 + $0xa8] sm:$0xff] %vm437, %v3827
    %3868 = vst.msk [vmem:[#allocation3 + $0xc0] sm:$0xff] %vm437, %v3829
    %3869 = vst.msk [vmem:[#allocation3 + $0xd8] sm:$0xff] %vm437, %v3831
    %3870 = vst.msk [vmem:[#allocation3 + $0xf0] sm:$0xff] %vm437, %v3833
    %3871 = vst.msk [vmem:[#allocation3 + $0x108] sm:$0xff] %vm437, %v3835
    %3872 = vst.msk [vmem:[#allocation3 + $0x120] sm:$0xff] %vm437, %v3837
    %3873 = vst.msk [vmem:[#allocation3 + $0x138] sm:$0xff] %vm437, %v3839
    %3874 = vst.msk [vmem:[#allocation3 + $0x150] sm:$0xff] %vm437, %v3841
    %3875 = vst.msk [vmem:[#allocation3 + $0x168] sm:$0xff] %vm437, %v3843
    %3878 = vrot.lane.b32.xlu0 %v3566, 96
    %v3879 = vpop.permute.xlu0 %3878
    %3880 = vrot.lane.b32.xlu0 %v3568, 96
    %v3881 = vpop.permute.xlu0 %3880
    %3882 = vrot.lane.b32.xlu0 %v3570, 96
    %v3883 = vpop.permute.xlu0 %3882
    %3884 = vrot.lane.b32.xlu0 %v3572, 96
    %v3885 = vpop.permute.xlu0 %3884
    %3886 = vrot.lane.b32.xlu0 %v3574, 96
    %v3887 = vpop.permute.xlu0 %3886
    %3888 = vrot.lane.b32.xlu0 %v3576, 96
    %v3889 = vpop.permute.xlu0 %3888
    %3890 = vrot.lane.b32.xlu0 %v3578, 96
    %v3891 = vpop.permute.xlu0 %3890
    %3892 = vrot.lane.b32.xlu0 %v3580, 96
    %v3893 = vpop.permute.xlu0 %3892
    %3894 = vrot.lane.b32.xlu0 %v3586, 96
    %v3895 = vpop.permute.xlu0 %3894
    %3896 = vrot.lane.b32.xlu0 %v3588, 96
    %v3897 = vpop.permute.xlu0 %3896
    %3898 = vrot.lane.b32.xlu0 %v3590, 96
    %v3899 = vpop.permute.xlu0 %3898
    %3900 = vrot.lane.b32.xlu0 %v3592, 96
    %v3901 = vpop.permute.xlu0 %3900
    %3902 = vrot.lane.b32.xlu0 %v3594, 96
    %v3903 = vpop.permute.xlu0 %3902
    %3904 = vrot.lane.b32.xlu0 %v3596, 96
    %v3905 = vpop.permute.xlu0 %3904
    %3906 = vrot.lane.b32.xlu0 %v3598, 96
    %v3907 = vpop.permute.xlu0 %3906
    %3908 = vrot.lane.b32.xlu0 %v3600, 96
    %v3909 = vpop.permute.xlu0 %3908
    %3926 = vst.msk [vmem:[#allocation3] sm:$0xff] %vm504, %v3879
    %3927 = vst.msk [vmem:[#allocation3 + $0x18] sm:$0xff] %vm504, %v3881
    %3928 = vst.msk [vmem:[#allocation3 + $0x30] sm:$0xff] %vm504, %v3883
    %3929 = vst.msk [vmem:[#allocation3 + $0x48] sm:$0xff] %vm504, %v3885
    %3930 = vst.msk [vmem:[#allocation3 + $0x60] sm:$0xff] %vm504, %v3887
    %3931 = vst.msk [vmem:[#allocation3 + $0x78] sm:$0xff] %vm504, %v3889
    %3932 = vst.msk [vmem:[#allocation3 + $0x90] sm:$0xff] %vm504, %v3891
    %3933 = vst.msk [vmem:[#allocation3 + $0xa8] sm:$0xff] %vm504, %v3893
    %3934 = vst.msk [vmem:[#allocation3 + $0xc0] sm:$0xff] %vm504, %v3895
    %3935 = vst.msk [vmem:[#allocation3 + $0xd8] sm:$0xff] %vm504, %v3897
    %3936 = vst.msk [vmem:[#allocation3 + $0xf0] sm:$0xff] %vm504, %v3899
    %3937 = vst.msk [vmem:[#allocation3 + $0x108] sm:$0xff] %vm504, %v3901
    %3938 = vst.msk [vmem:[#allocation3 + $0x120] sm:$0xff] %vm504, %v3903
    %3939 = vst.msk [vmem:[#allocation3 + $0x138] sm:$0xff] %vm504, %v3905
    %3940 = vst.msk [vmem:[#allocation3 + $0x150] sm:$0xff] %vm504, %v3907
    %3941 = vst.msk [vmem:[#allocation3 + $0x168] sm:$0xff] %vm504, %v3909
    %v3944 = vrot.slane %v3580, 1
    %v3945 = vrot.slane %v3581, 1
    %v3946 = vsel %vm226, %v3944, %v3945
    %v3947 = vrot.slane %v3600, 1
    %v3948 = vrot.slane %v3601, 1
    %v3949 = vsel %vm226, %v3947, %v3948
    %3966 = vst.msk [vmem:[#allocation3 + $0x8] sm:$0xff] %vm27, %v3657
    %3967 = vst.msk [vmem:[#allocation3 + $0x20] sm:$0xff] %vm27, %v3660
    %3968 = vst.msk [vmem:[#allocation3 + $0x38] sm:$0xff] %vm27, %v3663
    %3969 = vst.msk [vmem:[#allocation3 + $0x50] sm:$0xff] %vm27, %v3666
    %3970 = vst.msk [vmem:[#allocation3 + $0x68] sm:$0xff] %vm27, %v3669
    %3971 = vst.msk [vmem:[#allocation3 + $0x80] sm:$0xff] %vm27, %v3672
    %3972 = vst.msk [vmem:[#allocation3 + $0x98] sm:$0xff] %vm27, %v3675
    %3973 = vst.msk [vmem:[#allocation3 + $0xb0] sm:$0xff] %vm27, %v3946
    %3974 = vst.msk [vmem:[#allocation3 + $0xc8] sm:$0xff] %vm27, %v3681
    %3975 = vst.msk [vmem:[#allocation3 + $0xe0] sm:$0xff] %vm27, %v3684
    %3976 = vst.msk [vmem:[#allocation3 + $0xf8] sm:$0xff] %vm27, %v3687
    %3977 = vst.msk [vmem:[#allocation3 + $0x110] sm:$0xff] %vm27, %v3690
    %3978 = vst.msk [vmem:[#allocation3 + $0x128] sm:$0xff] %vm27, %v3693
    %3979 = vst.msk [vmem:[#allocation3 + $0x140] sm:$0xff] %vm27, %v3696
    %3980 = vst.msk [vmem:[#allocation3 + $0x158] sm:$0xff] %vm27, %v3699
    %3981 = vst.msk [vmem:[#allocation3 + $0x170] sm:$0xff] %vm27, %v3949
    %v3982 = vrot.slane %v3580, 2
    %v3983 = vrot.slane %v3581, 2
    %v3984 = vsel %vm340, %v3982, %v3983
    %v3985 = vrot.slane %v3600, 2
    %v3986 = vrot.slane %v3601, 2
    %v3987 = vsel %vm340, %v3985, %v3986
    %3988 = vrot.lane.b32.xlu0 %v3769, 32
    %v3989 = vpop.permute.xlu0 %3988
    %3990 = vrot.lane.b32.xlu0 %v3772, 32
    %v3991 = vpop.permute.xlu0 %3990
    %3992 = vrot.lane.b32.xlu0 %v3775, 32
    %v3993 = vpop.permute.xlu0 %3992
    %3994 = vrot.lane.b32.xlu0 %v3778, 32
    %v3995 = vpop.permute.xlu0 %3994
    %3996 = vrot.lane.b32.xlu0 %v3781, 32
    %v3997 = vpop.permute.xlu0 %3996
    %3998 = vrot.lane.b32.xlu0 %v3784, 32
    %v3999 = vpop.permute.xlu0 %3998
    %4000 = vrot.lane.b32.xlu0 %v3787, 32
    %v4001 = vpop.permute.xlu0 %4000
    %4002 = vrot.lane.b32.xlu0 %v3984, 32
    %v4003 = vpop.permute.xlu0 %4002
    %4004 = vrot.lane.b32.xlu0 %v3793, 32
    %v4005 = vpop.permute.xlu0 %4004
    %4006 = vrot.lane.b32.xlu0 %v3796, 32
    %v4007 = vpop.permute.xlu0 %4006
    %4008 = vrot.lane.b32.xlu0 %v3799, 32
    %v4009 = vpop.permute.xlu0 %4008
    %4010 = vrot.lane.b32.xlu0 %v3802, 32
    %v4011 = vpop.permute.xlu0 %4010
    %4012 = vrot.lane.b32.xlu0 %v3805, 32
    %v4013 = vpop.permute.xlu0 %4012
    %4014 = vrot.lane.b32.xlu0 %v3808, 32
    %v4015 = vpop.permute.xlu0 %4014
    %4016 = vrot.lane.b32.xlu0 %v3811, 32
    %v4017 = vpop.permute.xlu0 %4016
    %4018 = vrot.lane.b32.xlu0 %v3987, 32
    %v4019 = vpop.permute.xlu0 %4018
    %4036 = vst.msk [vmem:[#allocation3 + $0x8] sm:$0xff] %vm323, %v3989
    %4037 = vst.msk [vmem:[#allocation3 + $0x20] sm:$0xff] %vm323, %v3991
    %4038 = vst.msk [vmem:[#allocation3 + $0x38] sm:$0xff] %vm323, %v3993
    %4039 = vst.msk [vmem:[#allocation3 + $0x50] sm:$0xff] %vm323, %v3995
    %4040 = vst.msk [vmem:[#allocation3 + $0x68] sm:$0xff] %vm323, %v3997
    %4041 = vst.msk [vmem:[#allocation3 + $0x80] sm:$0xff] %vm323, %v3999
    %4042 = vst.msk [vmem:[#allocation3 + $0x98] sm:$0xff] %vm323, %v4001
    %4043 = vst.msk [vmem:[#allocation3 + $0xb0] sm:$0xff] %vm323, %v4003
    %4044 = vst.msk [vmem:[#allocation3 + $0xc8] sm:$0xff] %vm323, %v4005
    %4045 = vst.msk [vmem:[#allocation3 + $0xe0] sm:$0xff] %vm323, %v4007
    %4046 = vst.msk [vmem:[#allocation3 + $0xf8] sm:$0xff] %vm323, %v4009
    %4047 = vst.msk [vmem:[#allocation3 + $0x110] sm:$0xff] %vm323, %v4011
    %4048 = vst.msk [vmem:[#allocation3 + $0x128] sm:$0xff] %vm323, %v4013
    %4049 = vst.msk [vmem:[#allocation3 + $0x140] sm:$0xff] %vm323, %v4015
    %4050 = vst.msk [vmem:[#allocation3 + $0x158] sm:$0xff] %vm323, %v4017
    %4051 = vst.msk [vmem:[#allocation3 + $0x170] sm:$0xff] %vm323, %v4019
    %4054 = vrot.lane.b32.xlu0 %v3568, 64
    %v4055 = vpop.permute.xlu0 %4054
    %4056 = vrot.lane.b32.xlu0 %v3570, 64
    %v4057 = vpop.permute.xlu0 %4056
    %4058 = vrot.lane.b32.xlu0 %v3572, 64
    %v4059 = vpop.permute.xlu0 %4058
    %4060 = vrot.lane.b32.xlu0 %v3574, 64
    %v4061 = vpop.permute.xlu0 %4060
    %4062 = vrot.lane.b32.xlu0 %v3576, 64
    %v4063 = vpop.permute.xlu0 %4062
    %4064 = vrot.lane.b32.xlu0 %v3578, 64
    %v4065 = vpop.permute.xlu0 %4064
    %4066 = vrot.lane.b32.xlu0 %v3580, 64
    %v4067 = vpop.permute.xlu0 %4066
    %4068 = vrot.lane.b32.xlu0 %v3582, 64
    %v4069 = vpop.permute.xlu0 %4068
    %4070 = vrot.lane.b32.xlu0 %v3588, 64
    %v4071 = vpop.permute.xlu0 %4070
    %4072 = vrot.lane.b32.xlu0 %v3590, 64
    %v4073 = vpop.permute.xlu0 %4072
    %4074 = vrot.lane.b32.xlu0 %v3592, 64
    %v4075 = vpop.permute.xlu0 %4074
    %4076 = vrot.lane.b32.xlu0 %v3594, 64
    %v4077 = vpop.permute.xlu0 %4076
    %4078 = vrot.lane.b32.xlu0 %v3596, 64
    %v4079 = vpop.permute.xlu0 %4078
    %4080 = vrot.lane.b32.xlu0 %v3598, 64
    %v4081 = vpop.permute.xlu0 %4080
    %4082 = vrot.lane.b32.xlu0 %v3600, 64
    %v4083 = vpop.permute.xlu0 %4082
    %4084 = vrot.lane.b32.xlu0 %v3602, 64
    %v4085 = vpop.permute.xlu0 %4084
    %4102 = vst.msk [vmem:[#allocation3 + $0x8] sm:$0xff] %vm437, %v4055
    %4103 = vst.msk [vmem:[#allocation3 + $0x20] sm:$0xff] %vm437, %v4057
    %4104 = vst.msk [vmem:[#allocation3 + $0x38] sm:$0xff] %vm437, %v4059
    %4105 = vst.msk [vmem:[#allocation3 + $0x50] sm:$0xff] %vm437, %v4061
    %4106 = vst.msk [vmem:[#allocation3 + $0x68] sm:$0xff] %vm437, %v4063
    %4107 = vst.msk [vmem:[#allocation3 + $0x80] sm:$0xff] %vm437, %v4065
    %4108 = vst.msk [vmem:[#allocation3 + $0x98] sm:$0xff] %vm437, %v4067
    %4109 = vst.msk [vmem:[#allocation3 + $0xb0] sm:$0xff] %vm437, %v4069
    %4110 = vst.msk [vmem:[#allocation3 + $0xc8] sm:$0xff] %vm437, %v4071
    %4111 = vst.msk [vmem:[#allocation3 + $0xe0] sm:$0xff] %vm437, %v4073
    %4112 = vst.msk [vmem:[#allocation3 + $0xf8] sm:$0xff] %vm437, %v4075
    %4113 = vst.msk [vmem:[#allocation3 + $0x110] sm:$0xff] %vm437, %v4077
    %4114 = vst.msk [vmem:[#allocation3 + $0x128] sm:$0xff] %vm437, %v4079
    %4115 = vst.msk [vmem:[#allocation3 + $0x140] sm:$0xff] %vm437, %v4081
    %4116 = vst.msk [vmem:[#allocation3 + $0x158] sm:$0xff] %vm437, %v4083
    %4117 = vst.msk [vmem:[#allocation3 + $0x170] sm:$0xff] %vm437, %v4085
    %v4120 = vrot.slane %v3582, 1
    %v4121 = vrot.slane %v3583, 1
    %v4122 = vsel %vm226, %v4120, %v4121
    %v4123 = vrot.slane %v3602, 1
    %v4124 = vrot.slane %v3603, 1
    %v4125 = vsel %vm226, %v4123, %v4124
    %4126 = vrot.lane.b32.xlu0 %v3660, 96
    %v4127 = vpop.permute.xlu0 %4126
    %4128 = vrot.lane.b32.xlu0 %v3663, 96
    %v4129 = vpop.permute.xlu0 %4128
    %4130 = vrot.lane.b32.xlu0 %v3666, 96
    %v4131 = vpop.permute.xlu0 %4130
    %4132 = vrot.lane.b32.xlu0 %v3669, 96
    %v4133 = vpop.permute.xlu0 %4132
    %4134 = vrot.lane.b32.xlu0 %v3672, 96
    %v4135 = vpop.permute.xlu0 %4134
    %4136 = vrot.lane.b32.xlu0 %v3675, 96
    %v4137 = vpop.permute.xlu0 %4136
    %4138 = vrot.lane.b32.xlu0 %v3946, 96
    %v4139 = vpop.permute.xlu0 %4138
    %4140 = vrot.lane.b32.xlu0 %v4122, 96
    %v4141 = vpop.permute.xlu0 %4140
    %4142 = vrot.lane.b32.xlu0 %v3684, 96
    %v4143 = vpop.permute.xlu0 %4142
    %4144 = vrot.lane.b32.xlu0 %v3687, 96
    %v4145 = vpop.permute.xlu0 %4144
    %4146 = vrot.lane.b32.xlu0 %v3690, 96
    %v4147 = vpop.permute.xlu0 %4146
    %4148 = vrot.lane.b32.xlu0 %v3693, 96
    %v4149 = vpop.permute.xlu0 %4148
    %4150 = vrot.lane.b32.xlu0 %v3696, 96
    %v4151 = vpop.permute.xlu0 %4150
    %4152 = vrot.lane.b32.xlu0 %v3699, 96
    %v4153 = vpop.permute.xlu0 %4152
    %4154 = vrot.lane.b32.xlu0 %v3949, 96
    %v4155 = vpop.permute.xlu0 %4154
    %4156 = vrot.lane.b32.xlu0 %v4125, 96
    %v4157 = vpop.permute.xlu0 %4156
    %4174 = vst.msk [vmem:[#allocation3 + $0x8] sm:$0xff] %vm504, %v4127
    %4175 = vst.msk [vmem:[#allocation3 + $0x20] sm:$0xff] %vm504, %v4129
    %4176 = vst.msk [vmem:[#allocation3 + $0x38] sm:$0xff] %vm504, %v4131
    %4177 = vst.msk [vmem:[#allocation3 + $0x50] sm:$0xff] %vm504, %v4133
    %4178 = vst.msk [vmem:[#allocation3 + $0x68] sm:$0xff] %vm504, %v4135
    %4179 = vst.msk [vmem:[#allocation3 + $0x80] sm:$0xff] %vm504, %v4137
    %4180 = vst.msk [vmem:[#allocation3 + $0x98] sm:$0xff] %vm504, %v4139
    %4181 = vst.msk [vmem:[#allocation3 + $0xb0] sm:$0xff] %vm504, %v4141
    %4182 = vst.msk [vmem:[#allocation3 + $0xc8] sm:$0xff] %vm504, %v4143
    %4183 = vst.msk [vmem:[#allocation3 + $0xe0] sm:$0xff] %vm504, %v4145
    %4184 = vst.msk [vmem:[#allocation3 + $0xf8] sm:$0xff] %vm504, %v4147
    %4185 = vst.msk [vmem:[#allocation3 + $0x110] sm:$0xff] %vm504, %v4149
    %4186 = vst.msk [vmem:[#allocation3 + $0x128] sm:$0xff] %vm504, %v4151
    %4187 = vst.msk [vmem:[#allocation3 + $0x140] sm:$0xff] %vm504, %v4153
    %4188 = vst.msk [vmem:[#allocation3 + $0x158] sm:$0xff] %vm504, %v4155
    %4189 = vst.msk [vmem:[#allocation3 + $0x170] sm:$0xff] %vm504, %v4157
    %v4190 = vrot.slane %v3582, 2
    %v4191 = vrot.slane %v3583, 2
    %v4192 = vsel %vm340, %v4190, %v4191
    %v4193 = vrot.slane %v3602, 2
    %v4194 = vrot.slane %v3603, 2
    %v4195 = vsel %vm340, %v4193, %v4194
    %4212 = vst.msk [vmem:[#allocation3 + $0x10] sm:$0xff] %vm27, %v3772
    %4213 = vst.msk [vmem:[#allocation3 + $0x28] sm:$0xff] %vm27, %v3775
    %4214 = vst.msk [vmem:[#allocation3 + $0x40] sm:$0xff] %vm27, %v3778
    %4215 = vst.msk [vmem:[#allocation3 + $0x58] sm:$0xff] %vm27, %v3781
    %4216 = vst.msk [vmem:[#allocation3 + $0x70] sm:$0xff] %vm27, %v3784
    %4217 = vst.msk [vmem:[#allocation3 + $0x88] sm:$0xff] %vm27, %v3787
    %4218 = vst.msk [vmem:[#allocation3 + $0xa0] sm:$0xff] %vm27, %v3984
    %4219 = vst.msk [vmem:[#allocation3 + $0xb8] sm:$0xff] %vm27, %v4192
    %4220 = vst.msk [vmem:[#allocation3 + $0xd0] sm:$0xff] %vm27, %v3796
    %4221 = vst.msk [vmem:[#allocation3 + $0xe8] sm:$0xff] %vm27, %v3799
    %4222 = vst.msk [vmem:[#allocation3 + $0x100] sm:$0xff] %vm27, %v3802
    %4223 = vst.msk [vmem:[#allocation3 + $0x118] sm:$0xff] %vm27, %v3805
    %4224 = vst.msk [vmem:[#allocation3 + $0x130] sm:$0xff] %vm27, %v3808
    %4225 = vst.msk [vmem:[#allocation3 + $0x148] sm:$0xff] %vm27, %v3811
    %4226 = vst.msk [vmem:[#allocation3 + $0x160] sm:$0xff] %vm27, %v3987
    %4227 = vst.msk [vmem:[#allocation3 + $0x178] sm:$0xff] %vm27, %v4195
    %v4228 = vld [vmem:[#allocation3] sm:$0xff]
    %v4229 = vld [vmem:[#allocation3 + $0x8] sm:$0xff]
    %v4230 = vld [vmem:[#allocation3 + $0x10] sm:$0xff]
    %v4231 = vld [vmem:[#allocation3 + $0x18] sm:$0xff]
    %v4232 = vld [vmem:[#allocation3 + $0x20] sm:$0xff]
    %v4233 = vld [vmem:[#allocation3 + $0x28] sm:$0xff]
    %v4234 = vld [vmem:[#allocation3 + $0x30] sm:$0xff]
    %v4235 = vld [vmem:[#allocation3 + $0x38] sm:$0xff]
    %v4236 = vld [vmem:[#allocation3 + $0x40] sm:$0xff]
    %v4237 = vld [vmem:[#allocation3 + $0x48] sm:$0xff]
    %v4238 = vld [vmem:[#allocation3 + $0x50] sm:$0xff]
    %v4239 = vld [vmem:[#allocation3 + $0x58] sm:$0xff]
    %v4240 = vld [vmem:[#allocation3 + $0x60] sm:$0xff]
    %v4241 = vld [vmem:[#allocation3 + $0x68] sm:$0xff]
    %v4242 = vld [vmem:[#allocation3 + $0x70] sm:$0xff]
    %v4243 = vld [vmem:[#allocation3 + $0x78] sm:$0xff]
    %v4244 = vld [vmem:[#allocation3 + $0x80] sm:$0xff]
    %v4245 = vld [vmem:[#allocation3 + $0x88] sm:$0xff]
    %v4246 = vld [vmem:[#allocation3 + $0x90] sm:$0xff]
    %v4247 = vld [vmem:[#allocation3 + $0x98] sm:$0xff]
    %v4248 = vld [vmem:[#allocation3 + $0xa0] sm:$0xff]
    %v4249 = vld [vmem:[#allocation3 + $0xa8] sm:$0xff]
    %v4250 = vld [vmem:[#allocation3 + $0xb0] sm:$0xff]
    %v4251 = vld [vmem:[#allocation3 + $0xb8] sm:$0xff]
    %v4252 = vld [vmem:[#allocation3 + $0xc0] sm:$0xff]
    %v4253 = vld [vmem:[#allocation3 + $0xc8] sm:$0xff]
    %v4254 = vld [vmem:[#allocation3 + $0xd0] sm:$0xff]
    %v4255 = vld [vmem:[#allocation3 + $0xd8] sm:$0xff]
    %v4256 = vld [vmem:[#allocation3 + $0xe0] sm:$0xff]
    %v4257 = vld [vmem:[#allocation3 + $0xe8] sm:$0xff]
    %v4258 = vld [vmem:[#allocation3 + $0xf0] sm:$0xff]
    %v4259 = vld [vmem:[#allocation3 + $0xf8] sm:$0xff]
    %v4260 = vld [vmem:[#allocation3 + $0x100] sm:$0xff]
    %v4261 = vld [vmem:[#allocation3 + $0x108] sm:$0xff]
    %v4262 = vld [vmem:[#allocation3 + $0x110] sm:$0xff]
    %v4263 = vld [vmem:[#allocation3 + $0x118] sm:$0xff]
    %v4264 = vld [vmem:[#allocation3 + $0x120] sm:$0xff]
    %v4265 = vld [vmem:[#allocation3 + $0x128] sm:$0xff]
    %v4266 = vld [vmem:[#allocation3 + $0x130] sm:$0xff]
    %v4267 = vld [vmem:[#allocation3 + $0x138] sm:$0xff]
    %v4268 = vld [vmem:[#allocation3 + $0x140] sm:$0xff]
    %v4269 = vld [vmem:[#allocation3 + $0x148] sm:$0xff]
    %v4270 = vld [vmem:[#allocation3 + $0x150] sm:$0xff]
    %v4271 = vld [vmem:[#allocation3 + $0x158] sm:$0xff]
    %v4272 = vld [vmem:[#allocation3 + $0x160] sm:$0xff]
    %v4273 = vld [vmem:[#allocation3 + $0x168] sm:$0xff]
    %v4274 = vld [vmem:[#allocation3 + $0x170] sm:$0xff]
    %v4275 = vld [vmem:[#allocation3 + $0x178] sm:$0xff]
    %v4277 = vsel %vm27, %v4230, 0
    %v4280 = vsel %vm27, %v4233, 0
    %v4283 = vsel %vm27, %v4236, 0
    %v4286 = vsel %vm27, %v4239, 0
    %v4289 = vsel %vm27, %v4242, 0
    %v4292 = vsel %vm27, %v4245, 0
    %v4295 = vsel %vm27, %v4248, 0
    %v4298 = vsel %vm27, %v4251, 0
    %v4301 = vsel %vm27, %v4254, 0
    %v4304 = vsel %vm27, %v4257, 0
    %v4307 = vsel %vm27, %v4260, 0
    %v4310 = vsel %vm27, %v4263, 0
    %v4313 = vsel %vm27, %v4266, 0
    %v4316 = vsel %vm27, %v4269, 0
    %v4319 = vsel %vm27, %v4272, 0
    %v4322 = vsel %vm27, %v4275, 0
    %4324 = vmatprep.subr.mxu0 0.0
    %4325 = vmatpush1.msra.mxu0 %v3527
    %4326 = vmatprep.subr.mxu0 0.0
    %4327 = vmatpush1.msra.mxu0 %v3526
    %4328 = vmatprep.subr.mxu0 0.0
    %4329 = vmatpush1.msra.mxu0 %v3525
    %4330 = vmatprep.subr.mxu0 0.0
    %4331 = vmatpush1.msra.mxu0 %v3524
    %4332 = vmatprep.subr.mxu0 0.0
    %4333 = vmatpush1.msra.mxu0 %v3523
    %4334 = vmatprep.subr.mxu0 0.0
    %4335 = vmatpush1.msra.mxu0 %v3522
    %4336 = vmatprep.subr.mxu0 0.0
    %4337 = vmatpush1.msra.mxu0 %v3521
    %4338 = vmatprep.subr.mxu0 0.0
    %4339 = vmatpush1.msra.mxu0 %v3520
    %4340 = vmatprep.subr.mxu0 0.0
    %4341 = vmatpush1.msra.mxu0 %v3519
    %4342 = vmatprep.subr.mxu0 0.0
    %4343 = vmatpush1.msra.mxu0 %v3518
    %4344 = vmatprep.subr.mxu0 0.0
    %4345 = vmatpush1.msra.mxu0 %v3517
    %4346 = vmatprep.subr.mxu0 0.0
    %4347 = vmatpush1.msra.mxu0 %v3516
    %4348 = vmatprep.subr.mxu0 0.0
    %4349 = vmatpush1.msra.mxu0 %v3515
    %4350 = vmatprep.subr.mxu0 0.0
    %4351 = vmatpush1.msra.mxu0 %v3514
    %4352 = vmatprep.subr.mxu0 0.0
    %4353 = vmatpush1.msra.mxu0 %v3513
    %4354 = vmatprep.subr.mxu0 0.0
    %4355 = vmatpush1.msra.mxu0 %v3512
    %4356 = vmatprep.subr.mxu0 0.0
    %4357 = vmatpush2.msra.mxu0 %v3543
    %4358 = vmatprep.subr.mxu0 0.0
    %4359 = vmatpush2.msra.mxu0 %v3542
    %4360 = vmatprep.subr.mxu0 0.0
    %4361 = vmatpush2.msra.mxu0 %v3541
    %4362 = vmatprep.subr.mxu0 0.0
    %4363 = vmatpush2.msra.mxu0 %v3540
    %4364 = vmatprep.subr.mxu0 0.0
    %4365 = vmatpush2.msra.mxu0 %v3539
    %4366 = vmatprep.subr.mxu0 0.0
    %4367 = vmatpush2.msra.mxu0 %v3538
    %4368 = vmatprep.subr.mxu0 0.0
    %4369 = vmatpush2.msra.mxu0 %v3537
    %4370 = vmatprep.subr.mxu0 0.0
    %4371 = vmatpush2.msra.mxu0 %v3536
    %4372 = vmatprep.subr.mxu0 0.0
    %4373 = vmatpush2.msra.mxu0 %v3535
    %4374 = vmatprep.subr.mxu0 0.0
    %4375 = vmatpush2.msra.mxu0 %v3534
    %4376 = vmatprep.subr.mxu0 0.0
    %4377 = vmatpush2.msra.mxu0 %v3533
    %4378 = vmatprep.subr.mxu0 0.0
    %4379 = vmatpush2.msra.mxu0 %v3532
    %4380 = vmatprep.subr.mxu0 0.0
    %4381 = vmatpush2.msra.mxu0 %v3531
    %4382 = vmatprep.subr.mxu0 0.0
    %4383 = vmatpush2.msra.mxu0 %v3530
    %4384 = vmatprep.subr.mxu0 0.0
    %4385 = vmatpush2.msra.mxu0 %v3529
    %4386 = vmatprep.subr.mxu0 0.0
    %4387 = vmatpush2.msra.mxu0 %v3528
    %4388 = vmatprep.mubr.f32.mxu0 %v4229
    %4389 = vmatmul.mubr.f32.gmra.mxu0 %v4228
    %v4390 = vpop.f32.mrf.mxu0
    %v4391 = vadd.f32 0.0, %v4390
    %v4392 = vpop.f32.mrf.mxu0
    %4393 = vmatprep.mubr.f32.mxu0 %v4232
    %4394 = vmatmul.mubr.f32.gmra.mxu0 %v4231
    %v4395 = vpop.f32.mrf.mxu0
    %v4396 = vadd.f32 0.0, %v4395
    %v4397 = vpop.f32.mrf.mxu0
    %4398 = vmatprep.mubr.f32.mxu0 %v4235
    %4399 = vmatmul.mubr.f32.gmra.mxu0 %v4234
    %v4400 = vpop.f32.mrf.mxu0
    %v4401 = vadd.f32 0.0, %v4400
    %v4402 = vpop.f32.mrf.mxu0
    %4403 = vmatprep.mubr.f32.mxu0 %v4238
    %4404 = vmatmul.mubr.f32.gmra.mxu0 %v4237
    %v4405 = vpop.f32.mrf.mxu0
    %v4406 = vadd.f32 0.0, %v4405
    %v4407 = vpop.f32.mrf.mxu0
    %4408 = vmatprep.mubr.f32.mxu0 %v4241
    %4409 = vmatmul.mubr.f32.gmra.mxu0 %v4240
    %v4410 = vpop.f32.mrf.mxu0
    %v4411 = vadd.f32 0.0, %v4410
    %v4412 = vpop.f32.mrf.mxu0
    %4413 = vmatprep.mubr.f32.mxu0 %v4244
    %4414 = vmatmul.mubr.f32.gmra.mxu0 %v4243
    %v4415 = vpop.f32.mrf.mxu0
    %v4416 = vadd.f32 0.0, %v4415
    %v4417 = vpop.f32.mrf.mxu0
    %4418 = vmatprep.mubr.f32.mxu0 %v4247
    %4419 = vmatmul.mubr.f32.gmra.mxu0 %v4246
    %v4420 = vpop.f32.mrf.mxu0
    %v4421 = vadd.f32 0.0, %v4420
    %v4422 = vpop.f32.mrf.mxu0
    %4423 = vmatprep.mubr.f32.mxu0 %v4250
    %4424 = vmatmul.mubr.f32.gmra.mxu0 %v4249
    %v4425 = vpop.f32.mrf.mxu0
    %v4426 = vadd.f32 0.0, %v4425
    %v4427 = vpop.f32.mrf.mxu0
    %4428 = vmatprep.mubr.f32.mxu0 %v4253
    %4429 = vmatmul.mubr.f32.gmra.mxu0 %v4252
    %v4430 = vpop.f32.mrf.mxu0
    %v4431 = vadd.f32 0.0, %v4430
    %v4432 = vpop.f32.mrf.mxu0
    %4433 = vmatprep.mubr.f32.mxu0 %v4256
    %4434 = vmatmul.mubr.f32.gmra.mxu0 %v4255
    %v4435 = vpop.f32.mrf.mxu0
    %v4436 = vadd.f32 0.0, %v4435
    %v4437 = vpop.f32.mrf.mxu0
    %4438 = vmatprep.mubr.f32.mxu0 %v4259
    %4439 = vmatmul.mubr.f32.gmra.mxu0 %v4258
    %v4440 = vpop.f32.mrf.mxu0
    %v4441 = vadd.f32 0.0, %v4440
    %v4442 = vpop.f32.mrf.mxu0
    %4443 = vmatprep.mubr.f32.mxu0 %v4262
    %4444 = vmatmul.mubr.f32.gmra.mxu0 %v4261
    %v4445 = vpop.f32.mrf.mxu0
    %v4446 = vadd.f32 0.0, %v4445
    %v4447 = vpop.f32.mrf.mxu0
    %4448 = vmatprep.mubr.f32.mxu0 %v4265
    %4449 = vmatmul.mubr.f32.gmra.mxu0 %v4264
    %v4450 = vpop.f32.mrf.mxu0
    %v4451 = vadd.f32 0.0, %v4450
    %v4452 = vpop.f32.mrf.mxu0
    %4453 = vmatprep.mubr.f32.mxu0 %v4268
    %4454 = vmatmul.mubr.f32.gmra.mxu0 %v4267
    %v4455 = vpop.f32.mrf.mxu0
    %v4456 = vadd.f32 0.0, %v4455
    %v4457 = vpop.f32.mrf.mxu0
    %4458 = vmatprep.mubr.f32.mxu0 %v4271
    %4459 = vmatmul.mubr.f32.gmra.mxu0 %v4270
    %v4460 = vpop.f32.mrf.mxu0
    %v4461 = vadd.f32 0.0, %v4460
    %v4462 = vpop.f32.mrf.mxu0
    %4463 = vmatprep.mubr.f32.mxu0 %v4274
    %4464 = vmatmul.mubr.f32.gmra.mxu0 %v4273
    %v4465 = vpop.f32.mrf.mxu0
    %v4466 = vadd.f32 0.0, %v4465
    %v4467 = vpop.f32.mrf.mxu0
    %4468 = vdwg.mxu0
    %4469 = vmatprep.subr.mxu0 0.0
    %4470 = vmatpush1.msra.mxu0 0.0
    %4471 = vmatprep.subr.mxu0 0.0
    %4472 = vmatpush1.msra.mxu0 0.0
    %4473 = vmatprep.subr.mxu0 0.0
    %4474 = vmatpush1.msra.mxu0 0.0
    %4475 = vmatprep.subr.mxu0 0.0
    %4476 = vmatpush1.msra.mxu0 0.0
    %4477 = vmatprep.subr.mxu0 0.0
    %4478 = vmatpush1.msra.mxu0 0.0
    %4479 = vmatprep.subr.mxu0 0.0
    %4480 = vmatpush1.msra.mxu0 0.0
    %4481 = vmatprep.subr.mxu0 0.0
    %4482 = vmatpush1.msra.mxu0 0.0
    %4483 = vmatprep.subr.mxu0 0.0
    %4484 = vmatpush1.msra.mxu0 0.0
    %4485 = vmatprep.subr.mxu0 0.0
    %4486 = vmatpush1.msra.mxu0 0.0
    %4487 = vmatprep.subr.mxu0 0.0
    %4488 = vmatpush1.msra.mxu0 0.0
    %4489 = vmatprep.subr.mxu0 0.0
    %4490 = vmatpush1.msra.mxu0 0.0
    %4491 = vmatprep.subr.mxu0 0.0
    %4492 = vmatpush1.msra.mxu0 0.0
    %4493 = vmatprep.subr.mxu0 0.0
    %4494 = vmatpush1.msra.mxu0 %v3547
    %4495 = vmatprep.subr.mxu0 0.0
    %4496 = vmatpush1.msra.mxu0 %v3546
    %4497 = vmatprep.subr.mxu0 0.0
    %4498 = vmatpush1.msra.mxu0 %v3545
    %4499 = vmatprep.subr.mxu0 0.0
    %4500 = vmatpush1.msra.mxu0 %v3544
    %4501 = vmatprep.subr.mxu0 0.0
    %4502 = vmatpush2.msra.mxu0 0.0
    %4503 = vmatprep.subr.mxu0 0.0
    %4504 = vmatpush2.msra.mxu0 0.0
    %4505 = vmatprep.subr.mxu0 0.0
    %4506 = vmatpush2.msra.mxu0 0.0
    %4507 = vmatprep.subr.mxu0 0.0
    %4508 = vmatpush2.msra.mxu0 0.0
    %4509 = vmatprep.subr.mxu0 0.0
    %4510 = vmatpush2.msra.mxu0 0.0
    %4511 = vmatprep.subr.mxu0 0.0
    %4512 = vmatpush2.msra.mxu0 0.0
    %4513 = vmatprep.subr.mxu0 0.0
    %4514 = vmatpush2.msra.mxu0 0.0
    %4515 = vmatprep.subr.mxu0 0.0
    %4516 = vmatpush2.msra.mxu0 0.0
    %4517 = vmatprep.subr.mxu0 0.0
    %4518 = vmatpush2.msra.mxu0 0.0
    %4519 = vmatprep.subr.mxu0 0.0
    %4520 = vmatpush2.msra.mxu0 0.0
    %4521 = vmatprep.subr.mxu0 0.0
    %4522 = vmatpush2.msra.mxu0 0.0
    %4523 = vmatprep.subr.mxu0 0.0
    %4524 = vmatpush2.msra.mxu0 0.0
    %4525 = vmatprep.subr.mxu0 0.0
    %4526 = vmatpush2.msra.mxu0 0.0
    %4527 = vmatprep.subr.mxu0 0.0
    %4528 = vmatpush2.msra.mxu0 0.0
    %4529 = vmatprep.subr.mxu0 0.0
    %4530 = vmatpush2.msra.mxu0 0.0
    %4531 = vmatprep.subr.mxu0 0.0
    %4532 = vmatpush2.msra.mxu0 0.0
    %4533 = vmatprep.mubr.f32.mxu0 0.0
    %4534 = vmatmul.mubr.f32.gmra.mxu0 %v4277
    %v4535 = vpop.f32.mrf.mxu0
    %v4536 = vadd.f32 %v4391, %v4535
    %v4537 = vpop.f32.mrf.mxu0
    %4538 = vmatprep.mubr.f32.mxu0 0.0
    %4539 = vmatmul.mubr.f32.gmra.mxu0 %v4280
    %v4540 = vpop.f32.mrf.mxu0
    %v4541 = vadd.f32 %v4396, %v4540
    %v4542 = vpop.f32.mrf.mxu0
    %4543 = vmatprep.mubr.f32.mxu0 0.0
    %4544 = vmatmul.mubr.f32.gmra.mxu0 %v4283
    %v4545 = vpop.f32.mrf.mxu0
    %v4546 = vadd.f32 %v4401, %v4545
    %v4547 = vpop.f32.mrf.mxu0
    %4548 = vmatprep.mubr.f32.mxu0 0.0
    %4549 = vmatmul.mubr.f32.gmra.mxu0 %v4286
    %v4550 = vpop.f32.mrf.mxu0
    %v4551 = vadd.f32 %v4406, %v4550
    %v4552 = vpop.f32.mrf.mxu0
    %4553 = vmatprep.mubr.f32.mxu0 0.0
    %4554 = vmatmul.mubr.f32.gmra.mxu0 %v4289
    %v4555 = vpop.f32.mrf.mxu0
    %v4556 = vadd.f32 %v4411, %v4555
    %v4557 = vpop.f32.mrf.mxu0
    %4558 = vmatprep.mubr.f32.mxu0 0.0
    %4559 = vmatmul.mubr.f32.gmra.mxu0 %v4292
    %v4560 = vpop.f32.mrf.mxu0
    %v4561 = vadd.f32 %v4416, %v4560
    %v4562 = vpop.f32.mrf.mxu0
    %4563 = vmatprep.mubr.f32.mxu0 0.0
    %4564 = vmatmul.mubr.f32.gmra.mxu0 %v4295
    %v4565 = vpop.f32.mrf.mxu0
    %v4566 = vadd.f32 %v4421, %v4565
    %v4567 = vpop.f32.mrf.mxu0
    %4568 = vmatprep.mubr.f32.mxu0 0.0
    %4569 = vmatmul.mubr.f32.gmra.mxu0 %v4298
    %v4570 = vpop.f32.mrf.mxu0
    %v4571 = vadd.f32 %v4426, %v4570
    %v4572 = vpop.f32.mrf.mxu0
    %4573 = vmatprep.mubr.f32.mxu0 0.0
    %4574 = vmatmul.mubr.f32.gmra.mxu0 %v4301
    %v4575 = vpop.f32.mrf.mxu0
    %v4576 = vadd.f32 %v4431, %v4575
    %v4577 = vpop.f32.mrf.mxu0
    %4578 = vmatprep.mubr.f32.mxu0 0.0
    %4579 = vmatmul.mubr.f32.gmra.mxu0 %v4304
    %v4580 = vpop.f32.mrf.mxu0
    %v4581 = vadd.f32 %v4436, %v4580
    %v4582 = vpop.f32.mrf.mxu0
    %4583 = vmatprep.mubr.f32.mxu0 0.0
    %4584 = vmatmul.mubr.f32.gmra.mxu0 %v4307
    %v4585 = vpop.f32.mrf.mxu0
    %v4586 = vadd.f32 %v4441, %v4585
    %v4587 = vpop.f32.mrf.mxu0
    %4588 = vmatprep.mubr.f32.mxu0 0.0
    %4589 = vmatmul.mubr.f32.gmra.mxu0 %v4310
    %v4590 = vpop.f32.mrf.mxu0
    %v4591 = vadd.f32 %v4446, %v4590
    %v4592 = vpop.f32.mrf.mxu0
    %4593 = vmatprep.mubr.f32.mxu0 0.0
    %4594 = vmatmul.mubr.f32.gmra.mxu0 %v4313
    %v4595 = vpop.f32.mrf.mxu0
    %v4596 = vadd.f32 %v4451, %v4595
    %v4597 = vpop.f32.mrf.mxu0
    %4598 = vmatprep.mubr.f32.mxu0 0.0
    %4599 = vmatmul.mubr.f32.gmra.mxu0 %v4316
    %v4600 = vpop.f32.mrf.mxu0
    %v4601 = vadd.f32 %v4456, %v4600
    %v4602 = vpop.f32.mrf.mxu0
    %4603 = vmatprep.mubr.f32.mxu0 0.0
    %4604 = vmatmul.mubr.f32.gmra.mxu0 %v4319
    %v4605 = vpop.f32.mrf.mxu0
    %v4606 = vadd.f32 %v4461, %v4605
    %v4607 = vpop.f32.mrf.mxu0
    %4608 = vmatprep.mubr.f32.mxu0 0.0
    %4609 = vmatmul.mubr.f32.gmra.mxu0 %v4322
    %v4610 = vpop.f32.mrf.mxu0
    %v4611 = vadd.f32 %v4466, %v4610
    %v4612 = vpop.f32.mrf.mxu0
    %4613 = vdwg.mxu0
    %vm4614 = vcmp.gt.f32.partialorder %v4536, 0.0
    %vm4615 = vcmp.gt.f32.partialorder %v4541, 0.0
    %vm4616 = vcmp.gt.f32.partialorder %v4546, 0.0
    %vm4617 = vcmp.gt.f32.partialorder %v4551, 0.0
    %vm4618 = vcmp.gt.f32.partialorder %v4556, 0.0
    %vm4619 = vcmp.gt.f32.partialorder %v4561, 0.0
    %vm4620 = vcmp.gt.f32.partialorder %v4566, 0.0
    %vm4621 = vcmp.gt.f32.partialorder %v4571, 0.0
    %vm4622 = vcmp.gt.f32.partialorder %v4576, 0.0
    %vm4623 = vcmp.gt.f32.partialorder %v4581, 0.0
    %vm4624 = vcmp.gt.f32.partialorder %v4586, 0.0
    %vm4625 = vcmp.gt.f32.partialorder %v4591, 0.0
    %vm4626 = vcmp.gt.f32.partialorder %v4596, 0.0
    %vm4627 = vcmp.gt.f32.partialorder %v4601, 0.0
    %vm4628 = vcmp.gt.f32.partialorder %v4606, 0.0
    %vm4629 = vcmp.gt.f32.partialorder %v4611, 0.0
    %v4630 = vmul.f32 %v4536, 0.01
    %v4631 = vmul.f32 %v4541, 0.01
    %v4632 = vmul.f32 %v4546, 0.01
    %v4633 = vmul.f32 %v4551, 0.01
    %v4634 = vmul.f32 %v4556, 0.01
    %v4635 = vmul.f32 %v4561, 0.01
    %v4636 = vmul.f32 %v4566, 0.01
    %v4637 = vmul.f32 %v4571, 0.01
    %v4638 = vmul.f32 %v4576, 0.01
    %v4639 = vmul.f32 %v4581, 0.01
    %v4640 = vmul.f32 %v4586, 0.01
    %v4641 = vmul.f32 %v4591, 0.01
    %v4642 = vmul.f32 %v4596, 0.01
    %v4643 = vmul.f32 %v4601, 0.01
    %v4644 = vmul.f32 %v4606, 0.01
    %v4645 = vmul.f32 %v4611, 0.01
    %v4646 = vsel %vm4614, %v4536, %v4630
    %v4647 = vsel %vm4615, %v4541, %v4631
    %v4648 = vsel %vm4616, %v4546, %v4632
    %v4649 = vsel %vm4617, %v4551, %v4633
    %v4650 = vsel %vm4618, %v4556, %v4634
    %v4651 = vsel %vm4619, %v4561, %v4635
    %v4652 = vsel %vm4620, %v4566, %v4636
    %v4653 = vsel %vm4621, %v4571, %v4637
    %v4654 = vsel %vm4622, %v4576, %v4638
    %v4655 = vsel %vm4623, %v4581, %v4639
    %v4656 = vsel %vm4624, %v4586, %v4640
    %v4657 = vsel %vm4625, %v4591, %v4641
    %v4658 = vsel %vm4626, %v4596, %v4642
    %v4659 = vsel %vm4627, %v4601, %v4643
    %v4660 = vsel %vm4628, %v4606, %v4644
    %v4661 = vsel %vm4629, %v4611, %v4645
    %s4662 = scalar_lea.vmem %s1, 1152
    %v4663 = vld [vmem:[%s4662] sm:$0xff]
    %v4664 = vld [vmem:[%s4662 + $0x8] sm:$0xff]
    %v4665 = vld [vmem:[%s4662 + $0x10] sm:$0xff]
    %v4666 = vld [vmem:[%s4662 + $0x18] sm:$0xff]
    %v4667 = vld [vmem:[%s4662 + $0x20] sm:$0xff]
    %v4668 = vld [vmem:[%s4662 + $0x28] sm:$0xff]
    %v4669 = vld [vmem:[%s4662 + $0x30] sm:$0xff]
    %v4670 = vld [vmem:[%s4662 + $0x38] sm:$0xff]
    %v4671 = vld [vmem:[%s4662 + $0x40] sm:$0xff]
    %v4672 = vld [vmem:[%s4662 + $0x48] sm:$0xff]
    %v4673 = vld [vmem:[%s4662 + $0x50] sm:$0xff]
    %v4674 = vld [vmem:[%s4662 + $0x58] sm:$0xff]
    %v4675 = vld [vmem:[%s4662 + $0x60] sm:$0xff]
    %v4676 = vld [vmem:[%s4662 + $0x68] sm:$0xff]
    %v4677 = vld [vmem:[%s4662 + $0x70] sm:$0xff]
    %v4678 = vld [vmem:[%s4662 + $0x78] sm:$0xff]
    %v4679 = vld [vmem:[%s4662 + $0x80] sm:$0xff]
    %v4680 = vld [vmem:[%s4662 + $0x88] sm:$0xff]
    %v4681 = vld [vmem:[%s4662 + $0x90] sm:$0xff]
    %v4682 = vld [vmem:[%s4662 + $0x98] sm:$0xff]
    %v4683 = vld [vmem:[%s4662 + $0xa0] sm:$0xff]
    %v4684 = vld [vmem:[%s4662 + $0xa8] sm:$0xff]
    %v4685 = vld [vmem:[%s4662 + $0xb0] sm:$0xff]
    %v4686 = vld [vmem:[%s4662 + $0xb8] sm:$0xff]
    %v4687 = vld [vmem:[%s4662 + $0xc0] sm:$0xff]
    %v4688 = vld [vmem:[%s4662 + $0xc8] sm:$0xff]
    %v4689 = vld [vmem:[%s4662 + $0xd0] sm:$0xff]
    %v4690 = vld [vmem:[%s4662 + $0xd8] sm:$0xff]
    %v4691 = vld [vmem:[%s4662 + $0xe0] sm:$0xff]
    %v4692 = vld [vmem:[%s4662 + $0xe8] sm:$0xff]
    %v4693 = vld [vmem:[%s4662 + $0xf0] sm:$0xff]
    %v4694 = vld [vmem:[%s4662 + $0xf8] sm:$0xff]
    %v4695 = vld [vmem:[%s4662 + $0x100] sm:$0xff]
    %v4696 = vld [vmem:[%s4662 + $0x108] sm:$0xff]
    %v4697 = vld [vmem:[%s4662 + $0x110] sm:$0xff]
    %v4698 = vld [vmem:[%s4662 + $0x118] sm:$0xff]
    %4699 = vst.msk [vmem:[%s121 + $0x1] sm:$0xff] %vm27, %v4646
    %4700 = vst.msk [vmem:[%s121 + $0x11] sm:$0xff] %vm27, %v4647
    %4701 = vst.msk [vmem:[%s121 + $0x21] sm:$0xff] %vm27, %v4648
    %4702 = vst.msk [vmem:[%s121 + $0x31] sm:$0xff] %vm27, %v4649
    %4703 = vst.msk [vmem:[%s121 + $0x41] sm:$0xff] %vm27, %v4650
    %4704 = vst.msk [vmem:[%s121 + $0x51] sm:$0xff] %vm27, %v4651
    %4705 = vst.msk [vmem:[%s121 + $0x61] sm:$0xff] %vm27, %v4652
    %4706 = vst.msk [vmem:[%s121 + $0x71] sm:$0xff] %vm27, %v4653
    %4707 = vst.msk [vmem:[%s121 + $0xa1] sm:$0xff] %vm27, %v4654
    %4708 = vst.msk [vmem:[%s121 + $0xb1] sm:$0xff] %vm27, %v4655
    %4709 = vst.msk [vmem:[%s121 + $0xc1] sm:$0xff] %vm27, %v4656
    %4710 = vst.msk [vmem:[%s121 + $0xd1] sm:$0xff] %vm27, %v4657
    %4711 = vst.msk [vmem:[%s121 + $0xe1] sm:$0xff] %vm27, %v4658
    %4712 = vst.msk [vmem:[%s121 + $0xf1] sm:$0xff] %vm27, %v4659
    %4713 = vst.msk [vmem:[%s121 + $0x101] sm:$0xff] %vm27, %v4660
    %4714 = vst.msk [vmem:[%s121 + $0x111] sm:$0xff] %vm27, %v4661
    %v4715 = vld [vmem:[#allocation2] sm:$0xff]
    %v4716 = vld [vmem:[#allocation2 + $0x8] sm:$0x3]
    %v4717 = vld [vmem:[#allocation2 + $0x10] sm:$0xff]
    %v4718 = vld [vmem:[#allocation2 + $0x18] sm:$0x3]
    %v4719 = vld [vmem:[#allocation2 + $0x20] sm:$0xff]
    %v4720 = vld [vmem:[#allocation2 + $0x28] sm:$0x3]
    %v4721 = vld [vmem:[#allocation2 + $0x30] sm:$0xff]
    %v4722 = vld [vmem:[#allocation2 + $0x38] sm:$0x3]
    %v4723 = vld [vmem:[#allocation2 + $0x40] sm:$0xff]
    %v4724 = vld [vmem:[#allocation2 + $0x48] sm:$0x3]
    %v4725 = vld [vmem:[#allocation2 + $0x50] sm:$0xff]
    %v4726 = vld [vmem:[#allocation2 + $0x58] sm:$0x3]
    %v4727 = vld [vmem:[#allocation2 + $0x60] sm:$0xff]
    %v4728 = vld [vmem:[#allocation2 + $0x68] sm:$0x3]
    %v4729 = vld [vmem:[#allocation2 + $0x70] sm:$0xff]
    %v4730 = vld [vmem:[#allocation2 + $0x78] sm:$0x3]
    %v4731 = vld [vmem:[#allocation2 + $0x80] sm:$0xff]
    %v4732 = vld [vmem:[#allocation2 + $0x88] sm:$0x3]
    %v4733 = vld [vmem:[#allocation2 + $0x90] sm:$0xff]
    %v4734 = vld [vmem:[#allocation2 + $0x98] sm:$0x3]
    %v4735 = vld [vmem:[#allocation2 + $0xa0] sm:$0xff]
    %v4736 = vld [vmem:[#allocation2 + $0xa8] sm:$0x3]
    %v4737 = vld [vmem:[#allocation2 + $0xb0] sm:$0xff]
    %v4738 = vld [vmem:[#allocation2 + $0xb8] sm:$0x3]
    %v4739 = vld [vmem:[#allocation2 + $0xc0] sm:$0xff]
    %v4740 = vld [vmem:[#allocation2 + $0xc8] sm:$0x3]
    %v4741 = vld [vmem:[#allocation2 + $0xd0] sm:$0xff]
    %v4742 = vld [vmem:[#allocation2 + $0xd8] sm:$0x3]
    %v4743 = vld [vmem:[#allocation2 + $0xe0] sm:$0xff]
    %v4744 = vld [vmem:[#allocation2 + $0xe8] sm:$0x3]
    %v4745 = vld [vmem:[#allocation2 + $0xf0] sm:$0xff]
    %v4746 = vld [vmem:[#allocation2 + $0xf8] sm:$0x3]
    %v4747 = vld [vmem:[#allocation2 + $0x100] sm:$0xff]
    %v4748 = vld [vmem:[#allocation2 + $0x108] sm:$0x3]
    %v4749 = vld [vmem:[#allocation2 + $0x110] sm:$0xff]
    %v4750 = vld [vmem:[#allocation2 + $0x118] sm:$0x3]
    %v4751 = vld [vmem:[#allocation2 + $0x120] sm:$0xff]
    %v4752 = vld [vmem:[#allocation2 + $0x128] sm:$0x3]
    %v4753 = vld [vmem:[#allocation2 + $0x130] sm:$0xff]
    %v4754 = vld [vmem:[#allocation2 + $0x138] sm:$0x3]
    %4755 = vst.msk [vmem:[#allocation3] sm:$0xff] %vm27, %v4715
    %4756 = vst.msk [vmem:[#allocation3 + $0x18] sm:$0xff] %vm27, %v4717
    %4757 = vst.msk [vmem:[#allocation3 + $0x30] sm:$0xff] %vm27, %v4719
    %4758 = vst.msk [vmem:[#allocation3 + $0x48] sm:$0xff] %vm27, %v4721
    %4759 = vst.msk [vmem:[#allocation3 + $0x60] sm:$0xff] %vm27, %v4723
    %4760 = vst.msk [vmem:[#allocation3 + $0x78] sm:$0xff] %vm27, %v4725
    %4761 = vst.msk [vmem:[#allocation3 + $0x90] sm:$0xff] %vm27, %v4727
    %4762 = vst.msk [vmem:[#allocation3 + $0xa8] sm:$0xff] %vm27, %v4729
    %4763 = vst.msk [vmem:[#allocation3 + $0xc0] sm:$0xff] %vm27, %v4735
    %4764 = vst.msk [vmem:[#allocation3 + $0xd8] sm:$0xff] %vm27, %v4737
    %4765 = vst.msk [vmem:[#allocation3 + $0xf0] sm:$0xff] %vm27, %v4739
    %4766 = vst.msk [vmem:[#allocation3 + $0x108] sm:$0xff] %vm27, %v4741
    %4767 = vst.msk [vmem:[#allocation3 + $0x120] sm:$0xff] %vm27, %v4743
    %4768 = vst.msk [vmem:[#allocation3 + $0x138] sm:$0xff] %vm27, %v4745
    %4769 = vst.msk [vmem:[#allocation3 + $0x150] sm:$0xff] %vm27, %v4747
    %4770 = vst.msk [vmem:[#allocation3 + $0x168] sm:$0xff] %vm27, %v4749
    %v4803 = vrot.slane %v4715, 1
    %v4804 = vrot.slane %v4716, 1
    %v4805 = vsel %vm226, %v4803, %v4804
    %v4806 = vrot.slane %v4717, 1
    %v4807 = vrot.slane %v4718, 1
    %v4808 = vsel %vm226, %v4806, %v4807
    %v4809 = vrot.slane %v4719, 1
    %v4810 = vrot.slane %v4720, 1
    %v4811 = vsel %vm226, %v4809, %v4810
    %v4812 = vrot.slane %v4721, 1
    %v4813 = vrot.slane %v4722, 1
    %v4814 = vsel %vm226, %v4812, %v4813
    %v4815 = vrot.slane %v4723, 1
    %v4816 = vrot.slane %v4724, 1
    %v4817 = vsel %vm226, %v4815, %v4816
    %v4818 = vrot.slane %v4725, 1
    %v4819 = vrot.slane %v4726, 1
    %v4820 = vsel %vm226, %v4818, %v4819
    %v4821 = vrot.slane %v4727, 1
    %v4822 = vrot.slane %v4728, 1
    %v4823 = vsel %vm226, %v4821, %v4822
    %v4824 = vrot.slane %v4729, 1
    %v4825 = vrot.slane %v4730, 1
    %v4826 = vsel %vm226, %v4824, %v4825
    %v4827 = vrot.slane %v4735, 1
    %v4828 = vrot.slane %v4736, 1
    %v4829 = vsel %vm226, %v4827, %v4828
    %v4830 = vrot.slane %v4737, 1
    %v4831 = vrot.slane %v4738, 1
    %v4832 = vsel %vm226, %v4830, %v4831
    %v4833 = vrot.slane %v4739, 1
    %v4834 = vrot.slane %v4740, 1
    %v4835 = vsel %vm226, %v4833, %v4834
    %v4836 = vrot.slane %v4741, 1
    %v4837 = vrot.slane %v4742, 1
    %v4838 = vsel %vm226, %v4836, %v4837
    %v4839 = vrot.slane %v4743, 1
    %v4840 = vrot.slane %v4744, 1
    %v4841 = vsel %vm226, %v4839, %v4840
    %v4842 = vrot.slane %v4745, 1
    %v4843 = vrot.slane %v4746, 1
    %v4844 = vsel %vm226, %v4842, %v4843
    %v4845 = vrot.slane %v4747, 1
    %v4846 = vrot.slane %v4748, 1
    %v4847 = vsel %vm226, %v4845, %v4846
    %v4848 = vrot.slane %v4749, 1
    %v4849 = vrot.slane %v4750, 1
    %v4850 = vsel %vm226, %v4848, %v4849
    %4851 = vrot.lane.b32.xlu0 %v4805, 32
    %v4852 = vpop.permute.xlu0 %4851
    %4853 = vrot.lane.b32.xlu0 %v4808, 32
    %v4854 = vpop.permute.xlu0 %4853
    %4855 = vrot.lane.b32.xlu0 %v4811, 32
    %v4856 = vpop.permute.xlu0 %4855
    %4857 = vrot.lane.b32.xlu0 %v4814, 32
    %v4858 = vpop.permute.xlu0 %4857
    %4859 = vrot.lane.b32.xlu0 %v4817, 32
    %v4860 = vpop.permute.xlu0 %4859
    %4861 = vrot.lane.b32.xlu0 %v4820, 32
    %v4862 = vpop.permute.xlu0 %4861
    %4863 = vrot.lane.b32.xlu0 %v4823, 32
    %v4864 = vpop.permute.xlu0 %4863
    %4865 = vrot.lane.b32.xlu0 %v4826, 32
    %v4866 = vpop.permute.xlu0 %4865
    %4867 = vrot.lane.b32.xlu0 %v4829, 32
    %v4868 = vpop.permute.xlu0 %4867
    %4869 = vrot.lane.b32.xlu0 %v4832, 32
    %v4870 = vpop.permute.xlu0 %4869
    %4871 = vrot.lane.b32.xlu0 %v4835, 32
    %v4872 = vpop.permute.xlu0 %4871
    %4873 = vrot.lane.b32.xlu0 %v4838, 32
    %v4874 = vpop.permute.xlu0 %4873
    %4875 = vrot.lane.b32.xlu0 %v4841, 32
    %v4876 = vpop.permute.xlu0 %4875
    %4877 = vrot.lane.b32.xlu0 %v4844, 32
    %v4878 = vpop.permute.xlu0 %4877
    %4879 = vrot.lane.b32.xlu0 %v4847, 32
    %v4880 = vpop.permute.xlu0 %4879
    %4881 = vrot.lane.b32.xlu0 %v4850, 32
    %v4882 = vpop.permute.xlu0 %4881
    %4899 = vst.msk [vmem:[#allocation3] sm:$0xff] %vm323, %v4852
    %4900 = vst.msk [vmem:[#allocation3 + $0x18] sm:$0xff] %vm323, %v4854
    %4901 = vst.msk [vmem:[#allocation3 + $0x30] sm:$0xff] %vm323, %v4856
    %4902 = vst.msk [vmem:[#allocation3 + $0x48] sm:$0xff] %vm323, %v4858
    %4903 = vst.msk [vmem:[#allocation3 + $0x60] sm:$0xff] %vm323, %v4860
    %4904 = vst.msk [vmem:[#allocation3 + $0x78] sm:$0xff] %vm323, %v4862
    %4905 = vst.msk [vmem:[#allocation3 + $0x90] sm:$0xff] %vm323, %v4864
    %4906 = vst.msk [vmem:[#allocation3 + $0xa8] sm:$0xff] %vm323, %v4866
    %4907 = vst.msk [vmem:[#allocation3 + $0xc0] sm:$0xff] %vm323, %v4868
    %4908 = vst.msk [vmem:[#allocation3 + $0xd8] sm:$0xff] %vm323, %v4870
    %4909 = vst.msk [vmem:[#allocation3 + $0xf0] sm:$0xff] %vm323, %v4872
    %4910 = vst.msk [vmem:[#allocation3 + $0x108] sm:$0xff] %vm323, %v4874
    %4911 = vst.msk [vmem:[#allocation3 + $0x120] sm:$0xff] %vm323, %v4876
    %4912 = vst.msk [vmem:[#allocation3 + $0x138] sm:$0xff] %vm323, %v4878
    %4913 = vst.msk [vmem:[#allocation3 + $0x150] sm:$0xff] %vm323, %v4880
    %4914 = vst.msk [vmem:[#allocation3 + $0x168] sm:$0xff] %vm323, %v4882
    %v4915 = vrot.slane %v4715, 2
    %v4916 = vrot.slane %v4716, 2
    %v4917 = vsel %vm340, %v4915, %v4916
    %v4918 = vrot.slane %v4717, 2
    %v4919 = vrot.slane %v4718, 2
    %v4920 = vsel %vm340, %v4918, %v4919
    %v4921 = vrot.slane %v4719, 2
    %v4922 = vrot.slane %v4720, 2
    %v4923 = vsel %vm340, %v4921, %v4922
    %v4924 = vrot.slane %v4721, 2
    %v4925 = vrot.slane %v4722, 2
    %v4926 = vsel %vm340, %v4924, %v4925
    %v4927 = vrot.slane %v4723, 2
    %v4928 = vrot.slane %v4724, 2
    %v4929 = vsel %vm340, %v4927, %v4928
    %v4930 = vrot.slane %v4725, 2
    %v4931 = vrot.slane %v4726, 2
    %v4932 = vsel %vm340, %v4930, %v4931
    %v4933 = vrot.slane %v4727, 2
    %v4934 = vrot.slane %v4728, 2
    %v4935 = vsel %vm340, %v4933, %v4934
    %v4936 = vrot.slane %v4729, 2
    %v4937 = vrot.slane %v4730, 2
    %v4938 = vsel %vm340, %v4936, %v4937
    %v4939 = vrot.slane %v4735, 2
    %v4940 = vrot.slane %v4736, 2
    %v4941 = vsel %vm340, %v4939, %v4940
    %v4942 = vrot.slane %v4737, 2
    %v4943 = vrot.slane %v4738, 2
    %v4944 = vsel %vm340, %v4942, %v4943
    %v4945 = vrot.slane %v4739, 2
    %v4946 = vrot.slane %v4740, 2
    %v4947 = vsel %vm340, %v4945, %v4946
    %v4948 = vrot.slane %v4741, 2
    %v4949 = vrot.slane %v4742, 2
    %v4950 = vsel %vm340, %v4948, %v4949
    %v4951 = vrot.slane %v4743, 2
    %v4952 = vrot.slane %v4744, 2
    %v4953 = vsel %vm340, %v4951, %v4952
    %v4954 = vrot.slane %v4745, 2
    %v4955 = vrot.slane %v4746, 2
    %v4956 = vsel %vm340, %v4954, %v4955
    %v4957 = vrot.slane %v4747, 2
    %v4958 = vrot.slane %v4748, 2
    %v4959 = vsel %vm340, %v4957, %v4958
    %v4960 = vrot.slane %v4749, 2
    %v4961 = vrot.slane %v4750, 2
    %v4962 = vsel %vm340, %v4960, %v4961
    %4963 = vrot.lane.b32.xlu0 %v4917, 64
    %v4964 = vpop.permute.xlu0 %4963
    %4965 = vrot.lane.b32.xlu0 %v4920, 64
    %v4966 = vpop.permute.xlu0 %4965
    %4967 = vrot.lane.b32.xlu0 %v4923, 64
    %v4968 = vpop.permute.xlu0 %4967
    %4969 = vrot.lane.b32.xlu0 %v4926, 64
    %v4970 = vpop.permute.xlu0 %4969
    %4971 = vrot.lane.b32.xlu0 %v4929, 64
    %v4972 = vpop.permute.xlu0 %4971
    %4973 = vrot.lane.b32.xlu0 %v4932, 64
    %v4974 = vpop.permute.xlu0 %4973
    %4975 = vrot.lane.b32.xlu0 %v4935, 64
    %v4976 = vpop.permute.xlu0 %4975
    %4977 = vrot.lane.b32.xlu0 %v4938, 64
    %v4978 = vpop.permute.xlu0 %4977
    %4979 = vrot.lane.b32.xlu0 %v4941, 64
    %v4980 = vpop.permute.xlu0 %4979
    %4981 = vrot.lane.b32.xlu0 %v4944, 64
    %v4982 = vpop.permute.xlu0 %4981
    %4983 = vrot.lane.b32.xlu0 %v4947, 64
    %v4984 = vpop.permute.xlu0 %4983
    %4985 = vrot.lane.b32.xlu0 %v4950, 64
    %v4986 = vpop.permute.xlu0 %4985
    %4987 = vrot.lane.b32.xlu0 %v4953, 64
    %v4988 = vpop.permute.xlu0 %4987
    %4989 = vrot.lane.b32.xlu0 %v4956, 64
    %v4990 = vpop.permute.xlu0 %4989
    %4991 = vrot.lane.b32.xlu0 %v4959, 64
    %v4992 = vpop.permute.xlu0 %4991
    %4993 = vrot.lane.b32.xlu0 %v4962, 64
    %v4994 = vpop.permute.xlu0 %4993
    %5011 = vst.msk [vmem:[#allocation3] sm:$0xff] %vm437, %v4964
    %5012 = vst.msk [vmem:[#allocation3 + $0x18] sm:$0xff] %vm437, %v4966
    %5013 = vst.msk [vmem:[#allocation3 + $0x30] sm:$0xff] %vm437, %v4968
    %5014 = vst.msk [vmem:[#allocation3 + $0x48] sm:$0xff] %vm437, %v4970
    %5015 = vst.msk [vmem:[#allocation3 + $0x60] sm:$0xff] %vm437, %v4972
    %5016 = vst.msk [vmem:[#allocation3 + $0x78] sm:$0xff] %vm437, %v4974
    %5017 = vst.msk [vmem:[#allocation3 + $0x90] sm:$0xff] %vm437, %v4976
    %5018 = vst.msk [vmem:[#allocation3 + $0xa8] sm:$0xff] %vm437, %v4978
    %5019 = vst.msk [vmem:[#allocation3 + $0xc0] sm:$0xff] %vm437, %v4980
    %5020 = vst.msk [vmem:[#allocation3 + $0xd8] sm:$0xff] %vm437, %v4982
    %5021 = vst.msk [vmem:[#allocation3 + $0xf0] sm:$0xff] %vm437, %v4984
    %5022 = vst.msk [vmem:[#allocation3 + $0x108] sm:$0xff] %vm437, %v4986
    %5023 = vst.msk [vmem:[#allocation3 + $0x120] sm:$0xff] %vm437, %v4988
    %5024 = vst.msk [vmem:[#allocation3 + $0x138] sm:$0xff] %vm437, %v4990
    %5025 = vst.msk [vmem:[#allocation3 + $0x150] sm:$0xff] %vm437, %v4992
    %5026 = vst.msk [vmem:[#allocation3 + $0x168] sm:$0xff] %vm437, %v4994
    %5029 = vrot.lane.b32.xlu0 %v4717, 96
    %v5030 = vpop.permute.xlu0 %5029
    %5031 = vrot.lane.b32.xlu0 %v4719, 96
    %v5032 = vpop.permute.xlu0 %5031
    %5033 = vrot.lane.b32.xlu0 %v4721, 96
    %v5034 = vpop.permute.xlu0 %5033
    %5035 = vrot.lane.b32.xlu0 %v4723, 96
    %v5036 = vpop.permute.xlu0 %5035
    %5037 = vrot.lane.b32.xlu0 %v4725, 96
    %v5038 = vpop.permute.xlu0 %5037
    %5039 = vrot.lane.b32.xlu0 %v4727, 96
    %v5040 = vpop.permute.xlu0 %5039
    %5041 = vrot.lane.b32.xlu0 %v4729, 96
    %v5042 = vpop.permute.xlu0 %5041
    %5043 = vrot.lane.b32.xlu0 %v4731, 96
    %v5044 = vpop.permute.xlu0 %5043
    %5045 = vrot.lane.b32.xlu0 %v4737, 96
    %v5046 = vpop.permute.xlu0 %5045
    %5047 = vrot.lane.b32.xlu0 %v4739, 96
    %v5048 = vpop.permute.xlu0 %5047
    %5049 = vrot.lane.b32.xlu0 %v4741, 96
    %v5050 = vpop.permute.xlu0 %5049
    %5051 = vrot.lane.b32.xlu0 %v4743, 96
    %v5052 = vpop.permute.xlu0 %5051
    %5053 = vrot.lane.b32.xlu0 %v4745, 96
    %v5054 = vpop.permute.xlu0 %5053
    %5055 = vrot.lane.b32.xlu0 %v4747, 96
    %v5056 = vpop.permute.xlu0 %5055
    %5057 = vrot.lane.b32.xlu0 %v4749, 96
    %v5058 = vpop.permute.xlu0 %5057
    %5059 = vrot.lane.b32.xlu0 %v4751, 96
    %v5060 = vpop.permute.xlu0 %5059
    %5077 = vst.msk [vmem:[#allocation3] sm:$0xff] %vm504, %v5030
    %5078 = vst.msk [vmem:[#allocation3 + $0x18] sm:$0xff] %vm504, %v5032
    %5079 = vst.msk [vmem:[#allocation3 + $0x30] sm:$0xff] %vm504, %v5034
    %5080 = vst.msk [vmem:[#allocation3 + $0x48] sm:$0xff] %vm504, %v5036
    %5081 = vst.msk [vmem:[#allocation3 + $0x60] sm:$0xff] %vm504, %v5038
    %5082 = vst.msk [vmem:[#allocation3 + $0x78] sm:$0xff] %vm504, %v5040
    %5083 = vst.msk [vmem:[#allocation3 + $0x90] sm:$0xff] %vm504, %v5042
    %5084 = vst.msk [vmem:[#allocation3 + $0xa8] sm:$0xff] %vm504, %v5044
    %5085 = vst.msk [vmem:[#allocation3 + $0xc0] sm:$0xff] %vm504, %v5046
    %5086 = vst.msk [vmem:[#allocation3 + $0xd8] sm:$0xff] %vm504, %v5048
    %5087 = vst.msk [vmem:[#allocation3 + $0xf0] sm:$0xff] %vm504, %v5050
    %5088 = vst.msk [vmem:[#allocation3 + $0x108] sm:$0xff] %vm504, %v5052
    %5089 = vst.msk [vmem:[#allocation3 + $0x120] sm:$0xff] %vm504, %v5054
    %5090 = vst.msk [vmem:[#allocation3 + $0x138] sm:$0xff] %vm504, %v5056
    %5091 = vst.msk [vmem:[#allocation3 + $0x150] sm:$0xff] %vm504, %v5058
    %5092 = vst.msk [vmem:[#allocation3 + $0x168] sm:$0xff] %vm504, %v5060
    %v5095 = vrot.slane %v4731, 1
    %v5096 = vrot.slane %v4732, 1
    %v5097 = vsel %vm226, %v5095, %v5096
    %v5098 = vrot.slane %v4751, 1
    %v5099 = vrot.slane %v4752, 1
    %v5100 = vsel %vm226, %v5098, %v5099
    %5117 = vst.msk [vmem:[#allocation3 + $0x8] sm:$0xff] %vm27, %v4808
    %5118 = vst.msk [vmem:[#allocation3 + $0x20] sm:$0xff] %vm27, %v4811
    %5119 = vst.msk [vmem:[#allocation3 + $0x38] sm:$0xff] %vm27, %v4814
    %5120 = vst.msk [vmem:[#allocation3 + $0x50] sm:$0xff] %vm27, %v4817
    %5121 = vst.msk [vmem:[#allocation3 + $0x68] sm:$0xff] %vm27, %v4820
    %5122 = vst.msk [vmem:[#allocation3 + $0x80] sm:$0xff] %vm27, %v4823
    %5123 = vst.msk [vmem:[#allocation3 + $0x98] sm:$0xff] %vm27, %v4826
    %5124 = vst.msk [vmem:[#allocation3 + $0xb0] sm:$0xff] %vm27, %v5097
    %5125 = vst.msk [vmem:[#allocation3 + $0xc8] sm:$0xff] %vm27, %v4832
    %5126 = vst.msk [vmem:[#allocation3 + $0xe0] sm:$0xff] %vm27, %v4835
    %5127 = vst.msk [vmem:[#allocation3 + $0xf8] sm:$0xff] %vm27, %v4838
    %5128 = vst.msk [vmem:[#allocation3 + $0x110] sm:$0xff] %vm27, %v4841
    %5129 = vst.msk [vmem:[#allocation3 + $0x128] sm:$0xff] %vm27, %v4844
    %5130 = vst.msk [vmem:[#allocation3 + $0x140] sm:$0xff] %vm27, %v4847
    %5131 = vst.msk [vmem:[#allocation3 + $0x158] sm:$0xff] %vm27, %v4850
    %5132 = vst.msk [vmem:[#allocation3 + $0x170] sm:$0xff] %vm27, %v5100
    %v5133 = vrot.slane %v4731, 2
    %v5134 = vrot.slane %v4732, 2
    %v5135 = vsel %vm340, %v5133, %v5134
    %v5136 = vrot.slane %v4751, 2
    %v5137 = vrot.slane %v4752, 2
    %v5138 = vsel %vm340, %v5136, %v5137
    %5139 = vrot.lane.b32.xlu0 %v4920, 32
    %v5140 = vpop.permute.xlu0 %5139
    %5141 = vrot.lane.b32.xlu0 %v4923, 32
    %v5142 = vpop.permute.xlu0 %5141
    %5143 = vrot.lane.b32.xlu0 %v4926, 32
    %v5144 = vpop.permute.xlu0 %5143
    %5145 = vrot.lane.b32.xlu0 %v4929, 32
    %v5146 = vpop.permute.xlu0 %5145
    %5147 = vrot.lane.b32.xlu0 %v4932, 32
    %v5148 = vpop.permute.xlu0 %5147
    %5149 = vrot.lane.b32.xlu0 %v4935, 32
    %v5150 = vpop.permute.xlu0 %5149
    %5151 = vrot.lane.b32.xlu0 %v4938, 32
    %v5152 = vpop.permute.xlu0 %5151
    %5153 = vrot.lane.b32.xlu0 %v5135, 32
    %v5154 = vpop.permute.xlu0 %5153
    %5155 = vrot.lane.b32.xlu0 %v4944, 32
    %v5156 = vpop.permute.xlu0 %5155
    %5157 = vrot.lane.b32.xlu0 %v4947, 32
    %v5158 = vpop.permute.xlu0 %5157
    %5159 = vrot.lane.b32.xlu0 %v4950, 32
    %v5160 = vpop.permute.xlu0 %5159
    %5161 = vrot.lane.b32.xlu0 %v4953, 32
    %v5162 = vpop.permute.xlu0 %5161
    %5163 = vrot.lane.b32.xlu0 %v4956, 32
    %v5164 = vpop.permute.xlu0 %5163
    %5165 = vrot.lane.b32.xlu0 %v4959, 32
    %v5166 = vpop.permute.xlu0 %5165
    %5167 = vrot.lane.b32.xlu0 %v4962, 32
    %v5168 = vpop.permute.xlu0 %5167
    %5169 = vrot.lane.b32.xlu0 %v5138, 32
    %v5170 = vpop.permute.xlu0 %5169
    %5187 = vst.msk [vmem:[#allocation3 + $0x8] sm:$0xff] %vm323, %v5140
    %5188 = vst.msk [vmem:[#allocation3 + $0x20] sm:$0xff] %vm323, %v5142
    %5189 = vst.msk [vmem:[#allocation3 + $0x38] sm:$0xff] %vm323, %v5144
    %5190 = vst.msk [vmem:[#allocation3 + $0x50] sm:$0xff] %vm323, %v5146
    %5191 = vst.msk [vmem:[#allocation3 + $0x68] sm:$0xff] %vm323, %v5148
    %5192 = vst.msk [vmem:[#allocation3 + $0x80] sm:$0xff] %vm323, %v5150
    %5193 = vst.msk [vmem:[#allocation3 + $0x98] sm:$0xff] %vm323, %v5152
    %5194 = vst.msk [vmem:[#allocation3 + $0xb0] sm:$0xff] %vm323, %v5154
    %5195 = vst.msk [vmem:[#allocation3 + $0xc8] sm:$0xff] %vm323, %v5156
    %5196 = vst.msk [vmem:[#allocation3 + $0xe0] sm:$0xff] %vm323, %v5158
    %5197 = vst.msk [vmem:[#allocation3 + $0xf8] sm:$0xff] %vm323, %v5160
    %5198 = vst.msk [vmem:[#allocation3 + $0x110] sm:$0xff] %vm323, %v5162
    %5199 = vst.msk [vmem:[#allocation3 + $0x128] sm:$0xff] %vm323, %v5164
    %5200 = vst.msk [vmem:[#allocation3 + $0x140] sm:$0xff] %vm323, %v5166
    %5201 = vst.msk [vmem:[#allocation3 + $0x158] sm:$0xff] %vm323, %v5168
    %5202 = vst.msk [vmem:[#allocation3 + $0x170] sm:$0xff] %vm323, %v5170
    %5205 = vrot.lane.b32.xlu0 %v4719, 64
    %v5206 = vpop.permute.xlu0 %5205
    %5207 = vrot.lane.b32.xlu0 %v4721, 64
    %v5208 = vpop.permute.xlu0 %5207
    %5209 = vrot.lane.b32.xlu0 %v4723, 64
    %v5210 = vpop.permute.xlu0 %5209
    %5211 = vrot.lane.b32.xlu0 %v4725, 64
    %v5212 = vpop.permute.xlu0 %5211
    %5213 = vrot.lane.b32.xlu0 %v4727, 64
    %v5214 = vpop.permute.xlu0 %5213
    %5215 = vrot.lane.b32.xlu0 %v4729, 64
    %v5216 = vpop.permute.xlu0 %5215
    %5217 = vrot.lane.b32.xlu0 %v4731, 64
    %v5218 = vpop.permute.xlu0 %5217
    %5219 = vrot.lane.b32.xlu0 %v4733, 64
    %v5220 = vpop.permute.xlu0 %5219
    %5221 = vrot.lane.b32.xlu0 %v4739, 64
    %v5222 = vpop.permute.xlu0 %5221
    %5223 = vrot.lane.b32.xlu0 %v4741, 64
    %v5224 = vpop.permute.xlu0 %5223
    %5225 = vrot.lane.b32.xlu0 %v4743, 64
    %v5226 = vpop.permute.xlu0 %5225
    %5227 = vrot.lane.b32.xlu0 %v4745, 64
    %v5228 = vpop.permute.xlu0 %5227
    %5229 = vrot.lane.b32.xlu0 %v4747, 64
    %v5230 = vpop.permute.xlu0 %5229
    %5231 = vrot.lane.b32.xlu0 %v4749, 64
    %v5232 = vpop.permute.xlu0 %5231
    %5233 = vrot.lane.b32.xlu0 %v4751, 64
    %v5234 = vpop.permute.xlu0 %5233
    %5235 = vrot.lane.b32.xlu0 %v4753, 64
    %v5236 = vpop.permute.xlu0 %5235
    %5253 = vst.msk [vmem:[#allocation3 + $0x8] sm:$0xff] %vm437, %v5206
    %5254 = vst.msk [vmem:[#allocation3 + $0x20] sm:$0xff] %vm437, %v5208
    %5255 = vst.msk [vmem:[#allocation3 + $0x38] sm:$0xff] %vm437, %v5210
    %5256 = vst.msk [vmem:[#allocation3 + $0x50] sm:$0xff] %vm437, %v5212
    %5257 = vst.msk [vmem:[#allocation3 + $0x68] sm:$0xff] %vm437, %v5214
    %5258 = vst.msk [vmem:[#allocation3 + $0x80] sm:$0xff] %vm437, %v5216
    %5259 = vst.msk [vmem:[#allocation3 + $0x98] sm:$0xff] %vm437, %v5218
    %5260 = vst.msk [vmem:[#allocation3 + $0xb0] sm:$0xff] %vm437, %v5220
    %5261 = vst.msk [vmem:[#allocation3 + $0xc8] sm:$0xff] %vm437, %v5222
    %5262 = vst.msk [vmem:[#allocation3 + $0xe0] sm:$0xff] %vm437, %v5224
    %5263 = vst.msk [vmem:[#allocation3 + $0xf8] sm:$0xff] %vm437, %v5226
    %5264 = vst.msk [vmem:[#allocation3 + $0x110] sm:$0xff] %vm437, %v5228
    %5265 = vst.msk [vmem:[#allocation3 + $0x128] sm:$0xff] %vm437, %v5230
    %5266 = vst.msk [vmem:[#allocation3 + $0x140] sm:$0xff] %vm437, %v5232
    %5267 = vst.msk [vmem:[#allocation3 + $0x158] sm:$0xff] %vm437, %v5234
    %5268 = vst.msk [vmem:[#allocation3 + $0x170] sm:$0xff] %vm437, %v5236
    %v5271 = vrot.slane %v4733, 1
    %v5272 = vrot.slane %v4734, 1
    %v5273 = vsel %vm226, %v5271, %v5272
    %v5274 = vrot.slane %v4753, 1
    %v5275 = vrot.slane %v4754, 1
    %v5276 = vsel %vm226, %v5274, %v5275
    %5277 = vrot.lane.b32.xlu0 %v4811, 96
    %v5278 = vpop.permute.xlu0 %5277
    %5279 = vrot.lane.b32.xlu0 %v4814, 96
    %v5280 = vpop.permute.xlu0 %5279
    %5281 = vrot.lane.b32.xlu0 %v4817, 96
    %v5282 = vpop.permute.xlu0 %5281
    %5283 = vrot.lane.b32.xlu0 %v4820, 96
    %v5284 = vpop.permute.xlu0 %5283
    %5285 = vrot.lane.b32.xlu0 %v4823, 96
    %v5286 = vpop.permute.xlu0 %5285
    %5287 = vrot.lane.b32.xlu0 %v4826, 96
    %v5288 = vpop.permute.xlu0 %5287
    %5289 = vrot.lane.b32.xlu0 %v5097, 96
    %v5290 = vpop.permute.xlu0 %5289
    %5291 = vrot.lane.b32.xlu0 %v5273, 96
    %v5292 = vpop.permute.xlu0 %5291
    %5293 = vrot.lane.b32.xlu0 %v4835, 96
    %v5294 = vpop.permute.xlu0 %5293
    %5295 = vrot.lane.b32.xlu0 %v4838, 96
    %v5296 = vpop.permute.xlu0 %5295
    %5297 = vrot.lane.b32.xlu0 %v4841, 96
    %v5298 = vpop.permute.xlu0 %5297
    %5299 = vrot.lane.b32.xlu0 %v4844, 96
    %v5300 = vpop.permute.xlu0 %5299
    %5301 = vrot.lane.b32.xlu0 %v4847, 96
    %v5302 = vpop.permute.xlu0 %5301
    %5303 = vrot.lane.b32.xlu0 %v4850, 96
    %v5304 = vpop.permute.xlu0 %5303
    %5305 = vrot.lane.b32.xlu0 %v5100, 96
    %v5306 = vpop.permute.xlu0 %5305
    %5307 = vrot.lane.b32.xlu0 %v5276, 96
    %v5308 = vpop.permute.xlu0 %5307
    %5325 = vst.msk [vmem:[#allocation3 + $0x8] sm:$0xff] %vm504, %v5278
    %5326 = vst.msk [vmem:[#allocation3 + $0x20] sm:$0xff] %vm504, %v5280
    %5327 = vst.msk [vmem:[#allocation3 + $0x38] sm:$0xff] %vm504, %v5282
    %5328 = vst.msk [vmem:[#allocation3 + $0x50] sm:$0xff] %vm504, %v5284
    %5329 = vst.msk [vmem:[#allocation3 + $0x68] sm:$0xff] %vm504, %v5286
    %5330 = vst.msk [vmem:[#allocation3 + $0x80] sm:$0xff] %vm504, %v5288
    %5331 = vst.msk [vmem:[#allocation3 + $0x98] sm:$0xff] %vm504, %v5290
    %5332 = vst.msk [vmem:[#allocation3 + $0xb0] sm:$0xff] %vm504, %v5292
    %5333 = vst.msk [vmem:[#allocation3 + $0xc8] sm:$0xff] %vm504, %v5294
    %5334 = vst.msk [vmem:[#allocation3 + $0xe0] sm:$0xff] %vm504, %v5296
    %5335 = vst.msk [vmem:[#allocation3 + $0xf8] sm:$0xff] %vm504, %v5298
    %5336 = vst.msk [vmem:[#allocation3 + $0x110] sm:$0xff] %vm504, %v5300
    %5337 = vst.msk [vmem:[#allocation3 + $0x128] sm:$0xff] %vm504, %v5302
    %5338 = vst.msk [vmem:[#allocation3 + $0x140] sm:$0xff] %vm504, %v5304
    %5339 = vst.msk [vmem:[#allocation3 + $0x158] sm:$0xff] %vm504, %v5306
    %5340 = vst.msk [vmem:[#allocation3 + $0x170] sm:$0xff] %vm504, %v5308
    %v5341 = vrot.slane %v4733, 2
    %v5342 = vrot.slane %v4734, 2
    %v5343 = vsel %vm340, %v5341, %v5342
    %v5344 = vrot.slane %v4753, 2
    %v5345 = vrot.slane %v4754, 2
    %v5346 = vsel %vm340, %v5344, %v5345
    %5363 = vst.msk [vmem:[#allocation3 + $0x10] sm:$0xff] %vm27, %v4923
    %5364 = vst.msk [vmem:[#allocation3 + $0x28] sm:$0xff] %vm27, %v4926
    %5365 = vst.msk [vmem:[#allocation3 + $0x40] sm:$0xff] %vm27, %v4929
    %5366 = vst.msk [vmem:[#allocation3 + $0x58] sm:$0xff] %vm27, %v4932
    %5367 = vst.msk [vmem:[#allocation3 + $0x70] sm:$0xff] %vm27, %v4935
    %5368 = vst.msk [vmem:[#allocation3 + $0x88] sm:$0xff] %vm27, %v4938
    %5369 = vst.msk [vmem:[#allocation3 + $0xa0] sm:$0xff] %vm27, %v5135
    %5370 = vst.msk [vmem:[#allocation3 + $0xb8] sm:$0xff] %vm27, %v5343
    %5371 = vst.msk [vmem:[#allocation3 + $0xd0] sm:$0xff] %vm27, %v4947
    %5372 = vst.msk [vmem:[#allocation3 + $0xe8] sm:$0xff] %vm27, %v4950
    %5373 = vst.msk [vmem:[#allocation3 + $0x100] sm:$0xff] %vm27, %v4953
    %5374 = vst.msk [vmem:[#allocation3 + $0x118] sm:$0xff] %vm27, %v4956
    %5375 = vst.msk [vmem:[#allocation3 + $0x130] sm:$0xff] %vm27, %v4959
    %5376 = vst.msk [vmem:[#allocation3 + $0x148] sm:$0xff] %vm27, %v4962
    %5377 = vst.msk [vmem:[#allocation3 + $0x160] sm:$0xff] %vm27, %v5138
    %5378 = vst.msk [vmem:[#allocation3 + $0x178] sm:$0xff] %vm27, %v5346
    %v5379 = vld [vmem:[#allocation3] sm:$0xff]
    %v5380 = vld [vmem:[#allocation3 + $0x8] sm:$0xff]
    %v5381 = vld [vmem:[#allocation3 + $0x10] sm:$0xff]
    %v5382 = vld [vmem:[#allocation3 + $0x18] sm:$0xff]
    %v5383 = vld [vmem:[#allocation3 + $0x20] sm:$0xff]
    %v5384 = vld [vmem:[#allocation3 + $0x28] sm:$0xff]
    %v5385 = vld [vmem:[#allocation3 + $0x30] sm:$0xff]
    %v5386 = vld [vmem:[#allocation3 + $0x38] sm:$0xff]
    %v5387 = vld [vmem:[#allocation3 + $0x40] sm:$0xff]
    %v5388 = vld [vmem:[#allocation3 + $0x48] sm:$0xff]
    %v5389 = vld [vmem:[#allocation3 + $0x50] sm:$0xff]
    %v5390 = vld [vmem:[#allocation3 + $0x58] sm:$0xff]
    %v5391 = vld [vmem:[#allocation3 + $0x60] sm:$0xff]
    %v5392 = vld [vmem:[#allocation3 + $0x68] sm:$0xff]
    %v5393 = vld [vmem:[#allocation3 + $0x70] sm:$0xff]
    %v5394 = vld [vmem:[#allocation3 + $0x78] sm:$0xff]
    %v5395 = vld [vmem:[#allocation3 + $0x80] sm:$0xff]
    %v5396 = vld [vmem:[#allocation3 + $0x88] sm:$0xff]
    %v5397 = vld [vmem:[#allocation3 + $0x90] sm:$0xff]
    %v5398 = vld [vmem:[#allocation3 + $0x98] sm:$0xff]
    %v5399 = vld [vmem:[#allocation3 + $0xa0] sm:$0xff]
    %v5400 = vld [vmem:[#allocation3 + $0xa8] sm:$0xff]
    %v5401 = vld [vmem:[#allocation3 + $0xb0] sm:$0xff]
    %v5402 = vld [vmem:[#allocation3 + $0xb8] sm:$0xff]
    %v5403 = vld [vmem:[#allocation3 + $0xc0] sm:$0xff]
    %v5404 = vld [vmem:[#allocation3 + $0xc8] sm:$0xff]
    %v5405 = vld [vmem:[#allocation3 + $0xd0] sm:$0xff]
    %v5406 = vld [vmem:[#allocation3 + $0xd8] sm:$0xff]
    %v5407 = vld [vmem:[#allocation3 + $0xe0] sm:$0xff]
    %v5408 = vld [vmem:[#allocation3 + $0xe8] sm:$0xff]
    %v5409 = vld [vmem:[#allocation3 + $0xf0] sm:$0xff]
    %v5410 = vld [vmem:[#allocation3 + $0xf8] sm:$0xff]
    %v5411 = vld [vmem:[#allocation3 + $0x100] sm:$0xff]
    %v5412 = vld [vmem:[#allocation3 + $0x108] sm:$0xff]
    %v5413 = vld [vmem:[#allocation3 + $0x110] sm:$0xff]
    %v5414 = vld [vmem:[#allocation3 + $0x118] sm:$0xff]
    %v5415 = vld [vmem:[#allocation3 + $0x120] sm:$0xff]
    %v5416 = vld [vmem:[#allocation3 + $0x128] sm:$0xff]
    %v5417 = vld [vmem:[#allocation3 + $0x130] sm:$0xff]
    %v5418 = vld [vmem:[#allocation3 + $0x138] sm:$0xff]
    %v5419 = vld [vmem:[#allocation3 + $0x140] sm:$0xff]
    %v5420 = vld [vmem:[#allocation3 + $0x148] sm:$0xff]
    %v5421 = vld [vmem:[#allocation3 + $0x150] sm:$0xff]
    %v5422 = vld [vmem:[#allocation3 + $0x158] sm:$0xff]
    %v5423 = vld [vmem:[#allocation3 + $0x160] sm:$0xff]
    %v5424 = vld [vmem:[#allocation3 + $0x168] sm:$0xff]
    %v5425 = vld [vmem:[#allocation3 + $0x170] sm:$0xff]
    %v5426 = vld [vmem:[#allocation3 + $0x178] sm:$0xff]
    %v5428 = vsel %vm27, %v5381, 0
    %v5431 = vsel %vm27, %v5384, 0
    %v5434 = vsel %vm27, %v5387, 0
    %v5437 = vsel %vm27, %v5390, 0
    %v5440 = vsel %vm27, %v5393, 0
    %v5443 = vsel %vm27, %v5396, 0
    %v5446 = vsel %vm27, %v5399, 0
    %v5449 = vsel %vm27, %v5402, 0
    %v5452 = vsel %vm27, %v5405, 0
    %v5455 = vsel %vm27, %v5408, 0
    %v5458 = vsel %vm27, %v5411, 0
    %v5461 = vsel %vm27, %v5414, 0
    %v5464 = vsel %vm27, %v5417, 0
    %v5467 = vsel %vm27, %v5420, 0
    %v5470 = vsel %vm27, %v5423, 0
    %v5473 = vsel %vm27, %v5426, 0
    %5475 = vmatprep.subr.mxu0 0.0
    %5476 = vmatpush1.msra.mxu0 %v4678
    %5477 = vmatprep.subr.mxu0 0.0
    %5478 = vmatpush1.msra.mxu0 %v4677
    %5479 = vmatprep.subr.mxu0 0.0
    %5480 = vmatpush1.msra.mxu0 %v4676
    %5481 = vmatprep.subr.mxu0 0.0
    %5482 = vmatpush1.msra.mxu0 %v4675
    %5483 = vmatprep.subr.mxu0 0.0
    %5484 = vmatpush1.msra.mxu0 %v4674
    %5485 = vmatprep.subr.mxu0 0.0
    %5486 = vmatpush1.msra.mxu0 %v4673
    %5487 = vmatprep.subr.mxu0 0.0
    %5488 = vmatpush1.msra.mxu0 %v4672
    %5489 = vmatprep.subr.mxu0 0.0
    %5490 = vmatpush1.msra.mxu0 %v4671
    %5491 = vmatprep.subr.mxu0 0.0
    %5492 = vmatpush1.msra.mxu0 %v4670
    %5493 = vmatprep.subr.mxu0 0.0
    %5494 = vmatpush1.msra.mxu0 %v4669
    %5495 = vmatprep.subr.mxu0 0.0
    %5496 = vmatpush1.msra.mxu0 %v4668
    %5497 = vmatprep.subr.mxu0 0.0
    %5498 = vmatpush1.msra.mxu0 %v4667
    %5499 = vmatprep.subr.mxu0 0.0
    %5500 = vmatpush1.msra.mxu0 %v4666
    %5501 = vmatprep.subr.mxu0 0.0
    %5502 = vmatpush1.msra.mxu0 %v4665
    %5503 = vmatprep.subr.mxu0 0.0
    %5504 = vmatpush1.msra.mxu0 %v4664
    %5505 = vmatprep.subr.mxu0 0.0
    %5506 = vmatpush1.msra.mxu0 %v4663
    %5507 = vmatprep.subr.mxu0 0.0
    %5508 = vmatpush2.msra.mxu0 %v4694
    %5509 = vmatprep.subr.mxu0 0.0
    %5510 = vmatpush2.msra.mxu0 %v4693
    %5511 = vmatprep.subr.mxu0 0.0
    %5512 = vmatpush2.msra.mxu0 %v4692
    %5513 = vmatprep.subr.mxu0 0.0
    %5514 = vmatpush2.msra.mxu0 %v4691
    %5515 = vmatprep.subr.mxu0 0.0
    %5516 = vmatpush2.msra.mxu0 %v4690
    %5517 = vmatprep.subr.mxu0 0.0
    %5518 = vmatpush2.msra.mxu0 %v4689
    %5519 = vmatprep.subr.mxu0 0.0
    %5520 = vmatpush2.msra.mxu0 %v4688
    %5521 = vmatprep.subr.mxu0 0.0
    %5522 = vmatpush2.msra.mxu0 %v4687
    %5523 = vmatprep.subr.mxu0 0.0
    %5524 = vmatpush2.msra.mxu0 %v4686
    %5525 = vmatprep.subr.mxu0 0.0
    %5526 = vmatpush2.msra.mxu0 %v4685
    %5527 = vmatprep.subr.mxu0 0.0
    %5528 = vmatpush2.msra.mxu0 %v4684
    %5529 = vmatprep.subr.mxu0 0.0
    %5530 = vmatpush2.msra.mxu0 %v4683
    %5531 = vmatprep.subr.mxu0 0.0
    %5532 = vmatpush2.msra.mxu0 %v4682
    %5533 = vmatprep.subr.mxu0 0.0
    %5534 = vmatpush2.msra.mxu0 %v4681
    %5535 = vmatprep.subr.mxu0 0.0
    %5536 = vmatpush2.msra.mxu0 %v4680
    %5537 = vmatprep.subr.mxu0 0.0
    %5538 = vmatpush2.msra.mxu0 %v4679
    %5539 = vmatprep.mubr.f32.mxu0 %v5380
    %5540 = vmatmul.mubr.f32.gmra.mxu0 %v5379
    %v5541 = vpop.f32.mrf.mxu0
    %v5542 = vadd.f32 %v3495, %v5541
    %v5543 = vpop.f32.mrf.mxu0
    %5544 = vmatprep.mubr.f32.mxu0 %v5383
    %5545 = vmatmul.mubr.f32.gmra.mxu0 %v5382
    %v5546 = vpop.f32.mrf.mxu0
    %v5547 = vadd.f32 %v3496, %v5546
    %v5548 = vpop.f32.mrf.mxu0
    %5549 = vmatprep.mubr.f32.mxu0 %v5386
    %5550 = vmatmul.mubr.f32.gmra.mxu0 %v5385
    %v5551 = vpop.f32.mrf.mxu0
    %v5552 = vadd.f32 %v3497, %v5551
    %v5553 = vpop.f32.mrf.mxu0
    %5554 = vmatprep.mubr.f32.mxu0 %v5389
    %5555 = vmatmul.mubr.f32.gmra.mxu0 %v5388
    %v5556 = vpop.f32.mrf.mxu0
    %v5557 = vadd.f32 %v3498, %v5556
    %v5558 = vpop.f32.mrf.mxu0
    %5559 = vmatprep.mubr.f32.mxu0 %v5392
    %5560 = vmatmul.mubr.f32.gmra.mxu0 %v5391
    %v5561 = vpop.f32.mrf.mxu0
    %v5562 = vadd.f32 %v3499, %v5561
    %v5563 = vpop.f32.mrf.mxu0
    %5564 = vmatprep.mubr.f32.mxu0 %v5395
    %5565 = vmatmul.mubr.f32.gmra.mxu0 %v5394
    %v5566 = vpop.f32.mrf.mxu0
    %v5567 = vadd.f32 %v3500, %v5566
    %v5568 = vpop.f32.mrf.mxu0
    %5569 = vmatprep.mubr.f32.mxu0 %v5398
    %5570 = vmatmul.mubr.f32.gmra.mxu0 %v5397
    %v5571 = vpop.f32.mrf.mxu0
    %v5572 = vadd.f32 %v3501, %v5571
    %v5573 = vpop.f32.mrf.mxu0
    %5574 = vmatprep.mubr.f32.mxu0 %v5401
    %5575 = vmatmul.mubr.f32.gmra.mxu0 %v5400
    %v5576 = vpop.f32.mrf.mxu0
    %v5577 = vadd.f32 %v3502, %v5576
    %v5578 = vpop.f32.mrf.mxu0
    %5579 = vmatprep.mubr.f32.mxu0 %v5404
    %5580 = vmatmul.mubr.f32.gmra.mxu0 %v5403
    %v5581 = vpop.f32.mrf.mxu0
    %v5582 = vadd.f32 %v3503, %v5581
    %v5583 = vpop.f32.mrf.mxu0
    %5584 = vmatprep.mubr.f32.mxu0 %v5407
    %5585 = vmatmul.mubr.f32.gmra.mxu0 %v5406
    %v5586 = vpop.f32.mrf.mxu0
    %v5587 = vadd.f32 %v3504, %v5586
    %v5588 = vpop.f32.mrf.mxu0
    %5589 = vmatprep.mubr.f32.mxu0 %v5410
    %5590 = vmatmul.mubr.f32.gmra.mxu0 %v5409
    %v5591 = vpop.f32.mrf.mxu0
    %v5592 = vadd.f32 %v3505, %v5591
    %v5593 = vpop.f32.mrf.mxu0
    %5594 = vmatprep.mubr.f32.mxu0 %v5413
    %5595 = vmatmul.mubr.f32.gmra.mxu0 %v5412
    %v5596 = vpop.f32.mrf.mxu0
    %v5597 = vadd.f32 %v3506, %v5596
    %v5598 = vpop.f32.mrf.mxu0
    %5599 = vmatprep.mubr.f32.mxu0 %v5416
    %5600 = vmatmul.mubr.f32.gmra.mxu0 %v5415
    %v5601 = vpop.f32.mrf.mxu0
    %v5602 = vadd.f32 %v3507, %v5601
    %v5603 = vpop.f32.mrf.mxu0
    %5604 = vmatprep.mubr.f32.mxu0 %v5419
    %5605 = vmatmul.mubr.f32.gmra.mxu0 %v5418
    %v5606 = vpop.f32.mrf.mxu0
    %v5607 = vadd.f32 %v3508, %v5606
    %v5608 = vpop.f32.mrf.mxu0
    %5609 = vmatprep.mubr.f32.mxu0 %v5422
    %5610 = vmatmul.mubr.f32.gmra.mxu0 %v5421
    %v5611 = vpop.f32.mrf.mxu0
    %v5612 = vadd.f32 %v3509, %v5611
    %v5613 = vpop.f32.mrf.mxu0
    %5614 = vmatprep.mubr.f32.mxu0 %v5425
    %5615 = vmatmul.mubr.f32.gmra.mxu0 %v5424
    %v5616 = vpop.f32.mrf.mxu0
    %v5617 = vadd.f32 %v3510, %v5616
    %v5618 = vpop.f32.mrf.mxu0
    %5619 = vdwg.mxu0
    %5620 = vmatprep.subr.mxu0 0.0
    %5621 = vmatpush1.msra.mxu0 0.0
    %5622 = vmatprep.subr.mxu0 0.0
    %5623 = vmatpush1.msra.mxu0 0.0
    %5624 = vmatprep.subr.mxu0 0.0
    %5625 = vmatpush1.msra.mxu0 0.0
    %5626 = vmatprep.subr.mxu0 0.0
    %5627 = vmatpush1.msra.mxu0 0.0
    %5628 = vmatprep.subr.mxu0 0.0
    %5629 = vmatpush1.msra.mxu0 0.0
    %5630 = vmatprep.subr.mxu0 0.0
    %5631 = vmatpush1.msra.mxu0 0.0
    %5632 = vmatprep.subr.mxu0 0.0
    %5633 = vmatpush1.msra.mxu0 0.0
    %5634 = vmatprep.subr.mxu0 0.0
    %5635 = vmatpush1.msra.mxu0 0.0
    %5636 = vmatprep.subr.mxu0 0.0
    %5637 = vmatpush1.msra.mxu0 0.0
    %5638 = vmatprep.subr.mxu0 0.0
    %5639 = vmatpush1.msra.mxu0 0.0
    %5640 = vmatprep.subr.mxu0 0.0
    %5641 = vmatpush1.msra.mxu0 0.0
    %5642 = vmatprep.subr.mxu0 0.0
    %5643 = vmatpush1.msra.mxu0 0.0
    %5644 = vmatprep.subr.mxu0 0.0
    %5645 = vmatpush1.msra.mxu0 %v4698
    %5646 = vmatprep.subr.mxu0 0.0
    %5647 = vmatpush1.msra.mxu0 %v4697
    %5648 = vmatprep.subr.mxu0 0.0
    %5649 = vmatpush1.msra.mxu0 %v4696
    %5650 = vmatprep.subr.mxu0 0.0
    %5651 = vmatpush1.msra.mxu0 %v4695
    %5652 = vmatprep.subr.mxu0 0.0
    %5653 = vmatpush2.msra.mxu0 0.0
    %5654 = vmatprep.subr.mxu0 0.0
    %5655 = vmatpush2.msra.mxu0 0.0
    %5656 = vmatprep.subr.mxu0 0.0
    %5657 = vmatpush2.msra.mxu0 0.0
    %5658 = vmatprep.subr.mxu0 0.0
    %5659 = vmatpush2.msra.mxu0 0.0
    %5660 = vmatprep.subr.mxu0 0.0
    %5661 = vmatpush2.msra.mxu0 0.0
    %5662 = vmatprep.subr.mxu0 0.0
    %5663 = vmatpush2.msra.mxu0 0.0
    %5664 = vmatprep.subr.mxu0 0.0
    %5665 = vmatpush2.msra.mxu0 0.0
    %5666 = vmatprep.subr.mxu0 0.0
    %5667 = vmatpush2.msra.mxu0 0.0
    %5668 = vmatprep.subr.mxu0 0.0
    %5669 = vmatpush2.msra.mxu0 0.0
    %5670 = vmatprep.subr.mxu0 0.0
    %5671 = vmatpush2.msra.mxu0 0.0
    %5672 = vmatprep.subr.mxu0 0.0
    %5673 = vmatpush2.msra.mxu0 0.0
    %5674 = vmatprep.subr.mxu0 0.0
    %5675 = vmatpush2.msra.mxu0 0.0
    %5676 = vmatprep.subr.mxu0 0.0
    %5677 = vmatpush2.msra.mxu0 0.0
    %5678 = vmatprep.subr.mxu0 0.0
    %5679 = vmatpush2.msra.mxu0 0.0
    %5680 = vmatprep.subr.mxu0 0.0
    %5681 = vmatpush2.msra.mxu0 0.0
    %5682 = vmatprep.subr.mxu0 0.0
    %5683 = vmatpush2.msra.mxu0 0.0
    %5684 = vmatprep.mubr.f32.mxu0 0.0
    %5685 = vmatmul.mubr.f32.gmra.mxu0 %v5428
    %v5686 = vpop.f32.mrf.mxu0
    %v5687 = vadd.f32 %v5542, %v5686
    %v5688 = vpop.f32.mrf.mxu0
    %5689 = vmatprep.mubr.f32.mxu0 0.0
    %5690 = vmatmul.mubr.f32.gmra.mxu0 %v5431
    %v5691 = vpop.f32.mrf.mxu0
    %v5692 = vadd.f32 %v5547, %v5691
    %v5693 = vpop.f32.mrf.mxu0
    %5694 = vmatprep.mubr.f32.mxu0 0.0
    %5695 = vmatmul.mubr.f32.gmra.mxu0 %v5434
    %v5696 = vpop.f32.mrf.mxu0
    %v5697 = vadd.f32 %v5552, %v5696
    %v5698 = vpop.f32.mrf.mxu0
    %5699 = vmatprep.mubr.f32.mxu0 0.0
    %5700 = vmatmul.mubr.f32.gmra.mxu0 %v5437
    %v5701 = vpop.f32.mrf.mxu0
    %v5702 = vadd.f32 %v5557, %v5701
    %v5703 = vpop.f32.mrf.mxu0
    %5704 = vmatprep.mubr.f32.mxu0 0.0
    %5705 = vmatmul.mubr.f32.gmra.mxu0 %v5440
    %v5706 = vpop.f32.mrf.mxu0
    %v5707 = vadd.f32 %v5562, %v5706
    %v5708 = vpop.f32.mrf.mxu0
    %5709 = vmatprep.mubr.f32.mxu0 0.0
    %5710 = vmatmul.mubr.f32.gmra.mxu0 %v5443
    %v5711 = vpop.f32.mrf.mxu0
    %v5712 = vadd.f32 %v5567, %v5711
    %v5713 = vpop.f32.mrf.mxu0
    %5714 = vmatprep.mubr.f32.mxu0 0.0
    %5715 = vmatmul.mubr.f32.gmra.mxu0 %v5446
    %v5716 = vpop.f32.mrf.mxu0
    %v5717 = vadd.f32 %v5572, %v5716
    %v5718 = vpop.f32.mrf.mxu0
    %5719 = vmatprep.mubr.f32.mxu0 0.0
    %5720 = vmatmul.mubr.f32.gmra.mxu0 %v5449
    %v5721 = vpop.f32.mrf.mxu0
    %v5722 = vadd.f32 %v5577, %v5721
    %v5723 = vpop.f32.mrf.mxu0
    %5724 = vmatprep.mubr.f32.mxu0 0.0
    %5725 = vmatmul.mubr.f32.gmra.mxu0 %v5452
    %v5726 = vpop.f32.mrf.mxu0
    %v5727 = vadd.f32 %v5582, %v5726
    %v5728 = vpop.f32.mrf.mxu0
    %5729 = vmatprep.mubr.f32.mxu0 0.0
    %5730 = vmatmul.mubr.f32.gmra.mxu0 %v5455
    %v5731 = vpop.f32.mrf.mxu0
    %v5732 = vadd.f32 %v5587, %v5731
    %v5733 = vpop.f32.mrf.mxu0
    %5734 = vmatprep.mubr.f32.mxu0 0.0
    %5735 = vmatmul.mubr.f32.gmra.mxu0 %v5458
    %v5736 = vpop.f32.mrf.mxu0
    %v5737 = vadd.f32 %v5592, %v5736
    %v5738 = vpop.f32.mrf.mxu0
    %5739 = vmatprep.mubr.f32.mxu0 0.0
    %5740 = vmatmul.mubr.f32.gmra.mxu0 %v5461
    %v5741 = vpop.f32.mrf.mxu0
    %v5742 = vadd.f32 %v5597, %v5741
    %v5743 = vpop.f32.mrf.mxu0
    %5744 = vmatprep.mubr.f32.mxu0 0.0
    %5745 = vmatmul.mubr.f32.gmra.mxu0 %v5464
    %v5746 = vpop.f32.mrf.mxu0
    %v5747 = vadd.f32 %v5602, %v5746
    %v5748 = vpop.f32.mrf.mxu0
    %5749 = vmatprep.mubr.f32.mxu0 0.0
    %5750 = vmatmul.mubr.f32.gmra.mxu0 %v5467
    %v5751 = vpop.f32.mrf.mxu0
    %v5752 = vadd.f32 %v5607, %v5751
    %v5753 = vpop.f32.mrf.mxu0
    %5754 = vmatprep.mubr.f32.mxu0 0.0
    %5755 = vmatmul.mubr.f32.gmra.mxu0 %v5470
    %v5756 = vpop.f32.mrf.mxu0
    %v5757 = vadd.f32 %v5612, %v5756
    %v5758 = vpop.f32.mrf.mxu0
    %5759 = vmatprep.mubr.f32.mxu0 0.0
    %5760 = vmatmul.mubr.f32.gmra.mxu0 %v5473
    %v5761 = vpop.f32.mrf.mxu0
    %v5762 = vadd.f32 %v5617, %v5761
    %v5763 = vpop.f32.mrf.mxu0
    %5764 = vdwg.mxu0
    %vm5765 = vcmp.gt.f32.partialorder %v5687, 0.0
    %vm5766 = vcmp.gt.f32.partialorder %v5692, 0.0
    %vm5767 = vcmp.gt.f32.partialorder %v5697, 0.0
    %vm5768 = vcmp.gt.f32.partialorder %v5702, 0.0
    %vm5769 = vcmp.gt.f32.partialorder %v5707, 0.0
    %vm5770 = vcmp.gt.f32.partialorder %v5712, 0.0
    %vm5771 = vcmp.gt.f32.partialorder %v5717, 0.0
    %vm5772 = vcmp.gt.f32.partialorder %v5722, 0.0
    %vm5773 = vcmp.gt.f32.partialorder %v5727, 0.0
    %vm5774 = vcmp.gt.f32.partialorder %v5732, 0.0
    %vm5775 = vcmp.gt.f32.partialorder %v5737, 0.0
    %vm5776 = vcmp.gt.f32.partialorder %v5742, 0.0
    %vm5777 = vcmp.gt.f32.partialorder %v5747, 0.0
    %vm5778 = vcmp.gt.f32.partialorder %v5752, 0.0
    %vm5779 = vcmp.gt.f32.partialorder %v5757, 0.0
    %vm5780 = vcmp.gt.f32.partialorder %v5762, 0.0
    %v5781 = vmul.f32 %v5687, 0.01
    %v5782 = vmul.f32 %v5692, 0.01
    %v5783 = vmul.f32 %v5697, 0.01
    %v5784 = vmul.f32 %v5702, 0.01
    %v5785 = vmul.f32 %v5707, 0.01
    %v5786 = vmul.f32 %v5712, 0.01
    %v5787 = vmul.f32 %v5717, 0.01
    %v5788 = vmul.f32 %v5722, 0.01
    %v5789 = vmul.f32 %v5727, 0.01
    %v5790 = vmul.f32 %v5732, 0.01
    %v5791 = vmul.f32 %v5737, 0.01
    %v5792 = vmul.f32 %v5742, 0.01
    %v5793 = vmul.f32 %v5747, 0.01
    %v5794 = vmul.f32 %v5752, 0.01
    %v5795 = vmul.f32 %v5757, 0.01
    %v5796 = vmul.f32 %v5762, 0.01
    %v5797 = vsel %vm5765, %v5687, %v5781
    %v5798 = vsel %vm5766, %v5692, %v5782
    %v5799 = vsel %vm5767, %v5697, %v5783
    %v5800 = vsel %vm5768, %v5702, %v5784
    %v5801 = vsel %vm5769, %v5707, %v5785
    %v5802 = vsel %vm5770, %v5712, %v5786
    %v5803 = vsel %vm5771, %v5717, %v5787
    %v5804 = vsel %vm5772, %v5722, %v5788
    %v5805 = vsel %vm5773, %v5727, %v5789
    %v5806 = vsel %vm5774, %v5732, %v5790
    %v5807 = vsel %vm5775, %v5737, %v5791
    %v5808 = vsel %vm5776, %v5742, %v5792
    %v5809 = vsel %vm5777, %v5747, %v5793
    %v5810 = vsel %vm5778, %v5752, %v5794
    %v5811 = vsel %vm5779, %v5757, %v5795
    %v5812 = vsel %vm5780, %v5762, %v5796
    %v5813 = vld [vmem:[%s2] sm:$0xff]
    %v5814 = vld [vmem:[%s2 + $0x8] sm:$0xff]
    %v5815 = vld [vmem:[%s2 + $0x10] sm:$0xff]
    %v5816 = vld [vmem:[%s2 + $0x18] sm:$0xff]
    %v5818 = vsel %vm27, %v5797, 0
    %v5821 = vsel %vm27, %v5798, 0
    %v5824 = vsel %vm27, %v5799, 0
    %v5827 = vsel %vm27, %v5800, 0
    %v5830 = vsel %vm27, %v5801, 0
    %v5833 = vsel %vm27, %v5802, 0
    %v5836 = vsel %vm27, %v5803, 0
    %v5839 = vsel %vm27, %v5804, 0
    %v5842 = vsel %vm27, %v5805, 0
    %v5845 = vsel %vm27, %v5806, 0
    %v5848 = vsel %vm27, %v5807, 0
    %v5851 = vsel %vm27, %v5808, 0
    %v5854 = vsel %vm27, %v5809, 0
    %v5857 = vsel %vm27, %v5810, 0
    %v5860 = vsel %vm27, %v5811, 0
    %v5863 = vsel %vm27, %v5812, 0
    %5865 = vmatprep.subr.mxu0 0.0
    %5866 = vmatpush1.msra.mxu0 0.0
    %5867 = vmatprep.subr.mxu0 0.0
    %5868 = vmatpush1.msra.mxu0 0.0
    %5869 = vmatprep.subr.mxu0 0.0
    %5870 = vmatpush1.msra.mxu0 0.0
    %5871 = vmatprep.subr.mxu0 0.0
    %5872 = vmatpush1.msra.mxu0 0.0
    %5873 = vmatprep.subr.mxu0 0.0
    %5874 = vmatpush1.msra.mxu0 0.0
    %5875 = vmatprep.subr.mxu0 0.0
    %5876 = vmatpush1.msra.mxu0 0.0
    %5877 = vmatprep.subr.mxu0 0.0
    %5878 = vmatpush1.msra.mxu0 0.0
    %5879 = vmatprep.subr.mxu0 0.0
    %5880 = vmatpush1.msra.mxu0 0.0
    %5881 = vmatprep.subr.mxu0 0.0
    %5882 = vmatpush1.msra.mxu0 0.0
    %5883 = vmatprep.subr.mxu0 0.0
    %5884 = vmatpush1.msra.mxu0 0.0
    %5885 = vmatprep.subr.mxu0 0.0
    %5886 = vmatpush1.msra.mxu0 0.0
    %5887 = vmatprep.subr.mxu0 0.0
    %5888 = vmatpush1.msra.mxu0 0.0
    %5889 = vmatprep.subr.mxu0 0.0
    %5890 = vmatpush1.msra.mxu0 %v5816
    %5891 = vmatprep.subr.mxu0 0.0
    %5892 = vmatpush1.msra.mxu0 %v5815
    %5893 = vmatprep.subr.mxu0 0.0
    %5894 = vmatpush1.msra.mxu0 %v5814
    %5895 = vmatprep.subr.mxu0 0.0
    %5896 = vmatpush1.msra.mxu0 %v5813
    %5897 = vmatprep.subr.mxu0 0.0
    %5898 = vmatpush2.msra.mxu0 0.0
    %5899 = vmatprep.subr.mxu0 0.0
    %5900 = vmatpush2.msra.mxu0 0.0
    %5901 = vmatprep.subr.mxu0 0.0
    %5902 = vmatpush2.msra.mxu0 0.0
    %5903 = vmatprep.subr.mxu0 0.0
    %5904 = vmatpush2.msra.mxu0 0.0
    %5905 = vmatprep.subr.mxu0 0.0
    %5906 = vmatpush2.msra.mxu0 0.0
    %5907 = vmatprep.subr.mxu0 0.0
    %5908 = vmatpush2.msra.mxu0 0.0
    %5909 = vmatprep.subr.mxu0 0.0
    %5910 = vmatpush2.msra.mxu0 0.0
    %5911 = vmatprep.subr.mxu0 0.0
    %5912 = vmatpush2.msra.mxu0 0.0
    %5913 = vmatprep.subr.mxu0 0.0
    %5914 = vmatpush2.msra.mxu0 0.0
    %5915 = vmatprep.subr.mxu0 0.0
    %5916 = vmatpush2.msra.mxu0 0.0
    %5917 = vmatprep.subr.mxu0 0.0
    %5918 = vmatpush2.msra.mxu0 0.0
    %5919 = vmatprep.subr.mxu0 0.0
    %5920 = vmatpush2.msra.mxu0 0.0
    %5921 = vmatprep.subr.mxu0 0.0
    %5922 = vmatpush2.msra.mxu0 0.0
    %5923 = vmatprep.subr.mxu0 0.0
    %5924 = vmatpush2.msra.mxu0 0.0
    %5925 = vmatprep.subr.mxu0 0.0
    %5926 = vmatpush2.msra.mxu0 0.0
    %5927 = vmatprep.subr.mxu0 0.0
    %5928 = vmatpush2.msra.mxu0 0.0
    %5929 = vmatprep.mubr.f32.mxu0 0.0
    %5930 = vmatmul.mubr.f32.gmra.mxu0 %v5818
    %v5931 = vpop.f32.mrf.mxu0
    %v5932 = vadd.f32 0.0, %v5931
    %v5933 = vpop.f32.mrf.mxu0
    %5934 = vmatprep.mubr.f32.mxu0 0.0
    %5935 = vmatmul.mubr.f32.gmra.mxu0 %v5821
    %v5936 = vpop.f32.mrf.mxu0
    %v5937 = vadd.f32 0.0, %v5936
    %v5938 = vpop.f32.mrf.mxu0
    %5939 = vmatprep.mubr.f32.mxu0 0.0
    %5940 = vmatmul.mubr.f32.gmra.mxu0 %v5824
    %v5941 = vpop.f32.mrf.mxu0
    %v5942 = vadd.f32 0.0, %v5941
    %v5943 = vpop.f32.mrf.mxu0
    %5944 = vmatprep.mubr.f32.mxu0 0.0
    %5945 = vmatmul.mubr.f32.gmra.mxu0 %v5827
    %v5946 = vpop.f32.mrf.mxu0
    %v5947 = vadd.f32 0.0, %v5946
    %v5948 = vpop.f32.mrf.mxu0
    %5949 = vmatprep.mubr.f32.mxu0 0.0
    %5950 = vmatmul.mubr.f32.gmra.mxu0 %v5830
    %v5951 = vpop.f32.mrf.mxu0
    %v5952 = vadd.f32 0.0, %v5951
    %v5953 = vpop.f32.mrf.mxu0
    %5954 = vmatprep.mubr.f32.mxu0 0.0
    %5955 = vmatmul.mubr.f32.gmra.mxu0 %v5833
    %v5956 = vpop.f32.mrf.mxu0
    %v5957 = vadd.f32 0.0, %v5956
    %v5958 = vpop.f32.mrf.mxu0
    %5959 = vmatprep.mubr.f32.mxu0 0.0
    %5960 = vmatmul.mubr.f32.gmra.mxu0 %v5836
    %v5961 = vpop.f32.mrf.mxu0
    %v5962 = vadd.f32 0.0, %v5961
    %v5963 = vpop.f32.mrf.mxu0
    %5964 = vmatprep.mubr.f32.mxu0 0.0
    %5965 = vmatmul.mubr.f32.gmra.mxu0 %v5839
    %v5966 = vpop.f32.mrf.mxu0
    %v5967 = vadd.f32 0.0, %v5966
    %v5968 = vpop.f32.mrf.mxu0
    %5969 = vmatprep.mubr.f32.mxu0 0.0
    %5970 = vmatmul.mubr.f32.gmra.mxu0 %v5842
    %v5971 = vpop.f32.mrf.mxu0
    %v5972 = vadd.f32 0.0, %v5971
    %v5973 = vpop.f32.mrf.mxu0
    %5974 = vmatprep.mubr.f32.mxu0 0.0
    %5975 = vmatmul.mubr.f32.gmra.mxu0 %v5845
    %v5976 = vpop.f32.mrf.mxu0
    %v5977 = vadd.f32 0.0, %v5976
    %v5978 = vpop.f32.mrf.mxu0
    %5979 = vmatprep.mubr.f32.mxu0 0.0
    %5980 = vmatmul.mubr.f32.gmra.mxu0 %v5848
    %v5981 = vpop.f32.mrf.mxu0
    %v5982 = vadd.f32 0.0, %v5981
    %v5983 = vpop.f32.mrf.mxu0
    %5984 = vmatprep.mubr.f32.mxu0 0.0
    %5985 = vmatmul.mubr.f32.gmra.mxu0 %v5851
    %v5986 = vpop.f32.mrf.mxu0
    %v5987 = vadd.f32 0.0, %v5986
    %v5988 = vpop.f32.mrf.mxu0
    %5989 = vmatprep.mubr.f32.mxu0 0.0
    %5990 = vmatmul.mubr.f32.gmra.mxu0 %v5854
    %v5991 = vpop.f32.mrf.mxu0
    %v5992 = vadd.f32 0.0, %v5991
    %v5993 = vpop.f32.mrf.mxu0
    %5994 = vmatprep.mubr.f32.mxu0 0.0
    %5995 = vmatmul.mubr.f32.gmra.mxu0 %v5857
    %v5996 = vpop.f32.mrf.mxu0
    %v5997 = vadd.f32 0.0, %v5996
    %v5998 = vpop.f32.mrf.mxu0
    %5999 = vmatprep.mubr.f32.mxu0 0.0
    %6000 = vmatmul.mubr.f32.gmra.mxu0 %v5860
    %v6001 = vpop.f32.mrf.mxu0
    %v6002 = vadd.f32 0.0, %v6001
    %v6003 = vpop.f32.mrf.mxu0
    %6004 = vmatprep.mubr.f32.mxu0 0.0
    %6005 = vmatmul.mubr.f32.gmra.mxu0 %v5863
    %v6006 = vpop.f32.mrf.mxu0
    %v6007 = vadd.f32 0.0, %v6006
    %v6008 = vpop.f32.mrf.mxu0
    %6009 = vdwg.mxu0
    %v6010 = vmax.f32 %v5932, 0.0
    %v6011 = vmax.f32 %v5937, 0.0
    %v6012 = vmax.f32 %v5942, 0.0
    %v6013 = vmax.f32 %v5947, 0.0
    %v6014 = vmax.f32 %v5952, 0.0
    %v6015 = vmax.f32 %v5957, 0.0
    %v6016 = vmax.f32 %v5962, 0.0
    %v6017 = vmax.f32 %v5967, 0.0
    %v6018 = vmax.f32 %v5972, 0.0
    %v6019 = vmax.f32 %v5977, 0.0
    %v6020 = vmax.f32 %v5982, 0.0
    %v6021 = vmax.f32 %v5987, 0.0
    %v6022 = vmax.f32 %v5992, 0.0
    %v6023 = vmax.f32 %v5997, 0.0
    %v6024 = vmax.f32 %v6002, 0.0
    %v6025 = vmax.f32 %v6007, 0.0
    %v6026 = vld [vmem:[%s3] sm:$0xff]
    %v6027 = vld [vmem:[%s3 + $0x8] sm:$0xff]
    %v6028 = vld [vmem:[%s3 + $0x10] sm:$0xff]
    %v6029 = vld [vmem:[%s3 + $0x18] sm:$0xff]
    %v6030 = vld [vmem:[%s3 + $0x20] sm:$0xff]
    %v6031 = vld [vmem:[%s3 + $0x28] sm:$0xff]
    %v6032 = vld [vmem:[%s3 + $0x30] sm:$0xff]
    %v6033 = vld [vmem:[%s3 + $0x38] sm:$0xff]
    %v6034 = vld [vmem:[%s3 + $0x40] sm:$0xff]
    %v6035 = vld [vmem:[%s3 + $0x48] sm:$0xff]
    %v6036 = vld [vmem:[%s3 + $0x50] sm:$0xff]
    %v6037 = vld [vmem:[%s3 + $0x58] sm:$0xff]
    %v6038 = vld [vmem:[%s3 + $0x60] sm:$0xff]
    %v6039 = vld [vmem:[%s3 + $0x68] sm:$0xff]
    %v6040 = vld [vmem:[%s3 + $0x70] sm:$0xff]
    %v6041 = vld [vmem:[%s3 + $0x78] sm:$0xff]
    %v6042 = vld [vmem:[%s3 + $0x80] sm:$0xff]
    %v6043 = vld [vmem:[%s3 + $0x88] sm:$0xff]
    %v6044 = vld [vmem:[%s3 + $0x90] sm:$0xff]
    %v6045 = vld [vmem:[%s3 + $0x98] sm:$0xff]
    %v6046 = vld [vmem:[%s3 + $0xa0] sm:$0xff]
    %v6047 = vld [vmem:[%s3 + $0xa8] sm:$0xff]
    %v6048 = vld [vmem:[%s3 + $0xb0] sm:$0xff]
    %v6049 = vld [vmem:[%s3 + $0xb8] sm:$0xff]
    %v6050 = vld [vmem:[%s3 + $0xc0] sm:$0xff]
    %v6051 = vld [vmem:[%s3 + $0xc8] sm:$0xff]
    %v6052 = vld [vmem:[%s3 + $0xd0] sm:$0xff]
    %v6053 = vld [vmem:[%s3 + $0xd8] sm:$0xff]
    %v6054 = vld [vmem:[%s3 + $0xe0] sm:$0xff]
    %v6055 = vld [vmem:[%s3 + $0xe8] sm:$0xff]
    %v6056 = vld [vmem:[%s3 + $0xf0] sm:$0xff]
    %v6057 = vld [vmem:[%s3 + $0xf8] sm:$0xff]
    %v6058 = vld [vmem:[%s3 + $0x100] sm:$0xff]
    %v6059 = vld [vmem:[%s3 + $0x108] sm:$0xff]
    %v6060 = vld [vmem:[%s3 + $0x110] sm:$0xff]
    %v6061 = vld [vmem:[%s3 + $0x118] sm:$0xff]
    %v6062 = vld [vmem:[%s3 + $0x120] sm:$0xff]
    %v6063 = vld [vmem:[%s3 + $0x128] sm:$0xff]
    %v6064 = vld [vmem:[%s3 + $0x130] sm:$0xff]
    %v6065 = vld [vmem:[%s3 + $0x138] sm:$0xff]
    %v6066 = vld [vmem:[%s3 + $0x140] sm:$0xff]
    %v6067 = vld [vmem:[%s3 + $0x148] sm:$0xff]
    %v6068 = vld [vmem:[%s3 + $0x150] sm:$0xff]
    %v6069 = vld [vmem:[%s3 + $0x158] sm:$0xff]
    %v6070 = vld [vmem:[%s3 + $0x160] sm:$0xff]
    %v6071 = vld [vmem:[%s3 + $0x168] sm:$0xff]
    %v6072 = vld [vmem:[%s3 + $0x170] sm:$0xff]
    %v6073 = vld [vmem:[%s3 + $0x178] sm:$0xff]
    %v6074 = vld [vmem:[%s3 + $0x180] sm:$0xff]
    %v6075 = vld [vmem:[%s3 + $0x188] sm:$0xff]
    %v6076 = vld [vmem:[%s3 + $0x190] sm:$0xff]
    %v6077 = vld [vmem:[%s3 + $0x198] sm:$0xff]
    %v6078 = vld [vmem:[%s3 + $0x1a0] sm:$0xff]
    %v6079 = vld [vmem:[%s3 + $0x1a8] sm:$0xff]
    %v6080 = vld [vmem:[%s3 + $0x1b0] sm:$0xff]
    %v6081 = vld [vmem:[%s3 + $0x1b8] sm:$0xff]
    %v6082 = vld [vmem:[%s3 + $0x1c0] sm:$0xff]
    %v6083 = vld [vmem:[%s3 + $0x1c8] sm:$0xff]
    %v6084 = vld [vmem:[%s3 + $0x1d0] sm:$0xff]
    %v6085 = vld [vmem:[%s3 + $0x1d8] sm:$0xff]
    %v6086 = vld [vmem:[%s3 + $0x1e0] sm:$0xff]
    %v6087 = vld [vmem:[%s3 + $0x1e8] sm:$0xff]
    %v6088 = vld [vmem:[%s3 + $0x1f0] sm:$0xff]
    %v6089 = vld [vmem:[%s3 + $0x1f8] sm:$0xff]
    %6091 = vset.pattern.permute.xlu0 0
    %6092 = vperm.xlu0 %6091, %v6010
    %v6093 = vpop.permute.xlu0 %6092
    %6096 = vset.pattern.permute.xlu0 0
    %6097 = vperm.xlu0 %6096, %v6011
    %v6098 = vpop.permute.xlu0 %6097
    %6101 = vset.pattern.permute.xlu0 0
    %6102 = vperm.xlu0 %6101, %v6012
    %v6103 = vpop.permute.xlu0 %6102
    %6106 = vset.pattern.permute.xlu0 0
    %6107 = vperm.xlu0 %6106, %v6013
    %v6108 = vpop.permute.xlu0 %6107
    %6111 = vset.pattern.permute.xlu0 0
    %6112 = vperm.xlu0 %6111, %v6014
    %v6113 = vpop.permute.xlu0 %6112
    %6116 = vset.pattern.permute.xlu0 0
    %6117 = vperm.xlu0 %6116, %v6015
    %v6118 = vpop.permute.xlu0 %6117
    %6121 = vset.pattern.permute.xlu0 0
    %6122 = vperm.xlu0 %6121, %v6016
    %v6123 = vpop.permute.xlu0 %6122
    %6126 = vset.pattern.permute.xlu0 0
    %6127 = vperm.xlu0 %6126, %v6017
    %v6128 = vpop.permute.xlu0 %6127
    %6131 = vset.pattern.permute.xlu0 0
    %6132 = vperm.xlu0 %6131, %v6018
    %v6133 = vpop.permute.xlu0 %6132
    %6136 = vset.pattern.permute.xlu0 0
    %6137 = vperm.xlu0 %6136, %v6019
    %v6138 = vpop.permute.xlu0 %6137
    %6141 = vset.pattern.permute.xlu0 0
    %6142 = vperm.xlu0 %6141, %v6020
    %v6143 = vpop.permute.xlu0 %6142
    %6146 = vset.pattern.permute.xlu0 0
    %6147 = vperm.xlu0 %6146, %v6021
    %v6148 = vpop.permute.xlu0 %6147
    %6151 = vset.pattern.permute.xlu0 0
    %6152 = vperm.xlu0 %6151, %v6022
    %v6153 = vpop.permute.xlu0 %6152
    %6156 = vset.pattern.permute.xlu0 0
    %6157 = vperm.xlu0 %6156, %v6023
    %v6158 = vpop.permute.xlu0 %6157
    %6161 = vset.pattern.permute.xlu0 0
    %6162 = vperm.xlu0 %6161, %v6024
    %v6163 = vpop.permute.xlu0 %6162
    %6166 = vset.pattern.permute.xlu0 0
    %6167 = vperm.xlu0 %6166, %v6025
    %v6168 = vpop.permute.xlu0 %6167
    %v6170 = vmul.f32 %v6093, %v6026
    %v6171 = vmul.f32 %v6093, %v6027
    %v6172 = vmul.f32 %v6093, %v6028
    %v6173 = vmul.f32 %v6093, %v6029
    %v6174 = vmul.f32 %v6098, %v6030
    %v6175 = vmul.f32 %v6098, %v6031
    %v6176 = vmul.f32 %v6098, %v6032
    %v6177 = vmul.f32 %v6098, %v6033
    %v6178 = vmul.f32 %v6103, %v6034
    %v6179 = vmul.f32 %v6103, %v6035
    %v6180 = vmul.f32 %v6103, %v6036
    %v6181 = vmul.f32 %v6103, %v6037
    %v6182 = vmul.f32 %v6108, %v6038
    %v6183 = vmul.f32 %v6108, %v6039
    %v6184 = vmul.f32 %v6108, %v6040
    %v6185 = vmul.f32 %v6108, %v6041
    %v6186 = vmul.f32 %v6113, %v6042
    %v6187 = vmul.f32 %v6113, %v6043
    %v6188 = vmul.f32 %v6113, %v6044
    %v6189 = vmul.f32 %v6113, %v6045
    %v6190 = vmul.f32 %v6118, %v6046
    %v6191 = vmul.f32 %v6118, %v6047
    %v6192 = vmul.f32 %v6118, %v6048
    %v6193 = vmul.f32 %v6118, %v6049
    %v6194 = vmul.f32 %v6123, %v6050
    %v6195 = vmul.f32 %v6123, %v6051
    %v6196 = vmul.f32 %v6123, %v6052
    %v6197 = vmul.f32 %v6123, %v6053
    %v6198 = vmul.f32 %v6128, %v6054
    %v6199 = vmul.f32 %v6128, %v6055
    %v6200 = vmul.f32 %v6128, %v6056
    %v6201 = vmul.f32 %v6128, %v6057
    %v6202 = vmul.f32 %v6133, %v6058
    %v6203 = vmul.f32 %v6133, %v6059
    %v6204 = vmul.f32 %v6133, %v6060
    %v6205 = vmul.f32 %v6133, %v6061
    %v6206 = vmul.f32 %v6138, %v6062
    %v6207 = vmul.f32 %v6138, %v6063
    %v6208 = vmul.f32 %v6138, %v6064
    %v6209 = vmul.f32 %v6138, %v6065
    %v6210 = vmul.f32 %v6143, %v6066
    %v6211 = vmul.f32 %v6143, %v6067
    %v6212 = vmul.f32 %v6143, %v6068
    %v6213 = vmul.f32 %v6143, %v6069
    %v6214 = vmul.f32 %v6148, %v6070
    %v6215 = vmul.f32 %v6148, %v6071
    %v6216 = vmul.f32 %v6148, %v6072
    %v6217 = vmul.f32 %v6148, %v6073
    %v6218 = vmul.f32 %v6153, %v6074
    %v6219 = vmul.f32 %v6153, %v6075
    %v6220 = vmul.f32 %v6153, %v6076
    %v6221 = vmul.f32 %v6153, %v6077
    %v6222 = vmul.f32 %v6158, %v6078
    %v6223 = vmul.f32 %v6158, %v6079
    %v6224 = vmul.f32 %v6158, %v6080
    %v6225 = vmul.f32 %v6158, %v6081
    %v6226 = vmul.f32 %v6163, %v6082
    %v6227 = vmul.f32 %v6163, %v6083
    %v6228 = vmul.f32 %v6163, %v6084
    %v6229 = vmul.f32 %v6163, %v6085
    %v6230 = vmul.f32 %v6168, %v6086
    %v6231 = vmul.f32 %v6168, %v6087
    %v6232 = vmul.f32 %v6168, %v6088
    %v6233 = vmul.f32 %v6168, %v6089
    %v6234 = vld [vmem:[%s4] sm:$0xff]
    %v6235 = vld [vmem:[%s4 + $0x8] sm:$0xff]
    %v6236 = vld [vmem:[%s4 + $0x10] sm:$0xff]
    %v6237 = vld [vmem:[%s4 + $0x18] sm:$0xff]
    %v6238 = vld [vmem:[%s4 + $0x20] sm:$0xff]
    %v6239 = vld [vmem:[%s4 + $0x28] sm:$0xff]
    %v6240 = vld [vmem:[%s4 + $0x30] sm:$0xff]
    %v6241 = vld [vmem:[%s4 + $0x38] sm:$0xff]
    %v6242 = vld [vmem:[%s4 + $0x40] sm:$0xff]
    %v6243 = vld [vmem:[%s4 + $0x48] sm:$0xff]
    %v6244 = vld [vmem:[%s4 + $0x50] sm:$0xff]
    %v6245 = vld [vmem:[%s4 + $0x58] sm:$0xff]
    %v6246 = vld [vmem:[%s4 + $0x60] sm:$0xff]
    %v6247 = vld [vmem:[%s4 + $0x68] sm:$0xff]
    %v6248 = vld [vmem:[%s4 + $0x70] sm:$0xff]
    %v6249 = vld [vmem:[%s4 + $0x78] sm:$0xff]
    %v6250 = vld [vmem:[%s4 + $0x80] sm:$0xff]
    %v6251 = vld [vmem:[%s4 + $0x88] sm:$0xff]
    %v6252 = vld [vmem:[%s4 + $0x90] sm:$0xff]
    %v6253 = vld [vmem:[%s4 + $0x98] sm:$0xff]
    %v6254 = vld [vmem:[%s4 + $0xa0] sm:$0xff]
    %v6255 = vld [vmem:[%s4 + $0xa8] sm:$0xff]
    %v6256 = vld [vmem:[%s4 + $0xb0] sm:$0xff]
    %v6257 = vld [vmem:[%s4 + $0xb8] sm:$0xff]
    %v6258 = vld [vmem:[%s4 + $0xc0] sm:$0xff]
    %v6259 = vld [vmem:[%s4 + $0xc8] sm:$0xff]
    %v6260 = vld [vmem:[%s4 + $0xd0] sm:$0xff]
    %v6261 = vld [vmem:[%s4 + $0xd8] sm:$0xff]
    %v6262 = vld [vmem:[%s4 + $0xe0] sm:$0xff]
    %v6263 = vld [vmem:[%s4 + $0xe8] sm:$0xff]
    %v6264 = vld [vmem:[%s4 + $0xf0] sm:$0xff]
    %v6265 = vld [vmem:[%s4 + $0xf8] sm:$0xff]
    %v6266 = vld [vmem:[%s4 + $0x100] sm:$0xff]
    %v6267 = vld [vmem:[%s4 + $0x108] sm:$0xff]
    %v6268 = vld [vmem:[%s4 + $0x110] sm:$0xff]
    %v6269 = vld [vmem:[%s4 + $0x118] sm:$0xff]
    %v6270 = vld [vmem:[%s4 + $0x120] sm:$0xff]
    %v6271 = vld [vmem:[%s4 + $0x128] sm:$0xff]
    %v6272 = vld [vmem:[%s4 + $0x130] sm:$0xff]
    %v6273 = vld [vmem:[%s4 + $0x138] sm:$0xff]
    %v6274 = vld [vmem:[%s4 + $0x140] sm:$0xff]
    %v6275 = vld [vmem:[%s4 + $0x148] sm:$0xff]
    %v6276 = vld [vmem:[%s4 + $0x150] sm:$0xff]
    %v6277 = vld [vmem:[%s4 + $0x158] sm:$0xff]
    %v6278 = vld [vmem:[%s4 + $0x160] sm:$0xff]
    %v6279 = vld [vmem:[%s4 + $0x168] sm:$0xff]
    %v6280 = vld [vmem:[%s4 + $0x170] sm:$0xff]
    %v6281 = vld [vmem:[%s4 + $0x178] sm:$0xff]
    %v6282 = vld [vmem:[%s4 + $0x180] sm:$0xff]
    %v6283 = vld [vmem:[%s4 + $0x188] sm:$0xff]
    %v6284 = vld [vmem:[%s4 + $0x190] sm:$0xff]
    %v6285 = vld [vmem:[%s4 + $0x198] sm:$0xff]
    %v6286 = vld [vmem:[%s4 + $0x1a0] sm:$0xff]
    %v6287 = vld [vmem:[%s4 + $0x1a8] sm:$0xff]
    %v6288 = vld [vmem:[%s4 + $0x1b0] sm:$0xff]
    %v6289 = vld [vmem:[%s4 + $0x1b8] sm:$0xff]
    %v6290 = vld [vmem:[%s4 + $0x1c0] sm:$0xff]
    %v6291 = vld [vmem:[%s4 + $0x1c8] sm:$0xff]
    %v6292 = vld [vmem:[%s4 + $0x1d0] sm:$0xff]
    %v6293 = vld [vmem:[%s4 + $0x1d8] sm:$0xff]
    %v6294 = vld [vmem:[%s4 + $0x1e0] sm:$0xff]
    %v6295 = vld [vmem:[%s4 + $0x1e8] sm:$0xff]
    %v6296 = vld [vmem:[%s4 + $0x1f0] sm:$0xff]
    %v6297 = vld [vmem:[%s4 + $0x1f8] sm:$0xff]
    %6298 = vset.pattern.permute.xlu0 1
    %6299 = vperm.xlu0 %6298, %v6010
    %v6300 = vpop.permute.xlu0 %6299
    %6302 = vset.pattern.permute.xlu0 1
    %6303 = vperm.xlu0 %6302, %v6011
    %v6304 = vpop.permute.xlu0 %6303
    %6306 = vset.pattern.permute.xlu0 1
    %6307 = vperm.xlu0 %6306, %v6012
    %v6308 = vpop.permute.xlu0 %6307
    %6310 = vset.pattern.permute.xlu0 1
    %6311 = vperm.xlu0 %6310, %v6013
    %v6312 = vpop.permute.xlu0 %6311
    %6314 = vset.pattern.permute.xlu0 1
    %6315 = vperm.xlu0 %6314, %v6014
    %v6316 = vpop.permute.xlu0 %6315
    %6318 = vset.pattern.permute.xlu0 1
    %6319 = vperm.xlu0 %6318, %v6015
    %v6320 = vpop.permute.xlu0 %6319
    %6322 = vset.pattern.permute.xlu0 1
    %6323 = vperm.xlu0 %6322, %v6016
    %v6324 = vpop.permute.xlu0 %6323
    %6326 = vset.pattern.permute.xlu0 1
    %6327 = vperm.xlu0 %6326, %v6017
    %v6328 = vpop.permute.xlu0 %6327
    %6330 = vset.pattern.permute.xlu0 1
    %6331 = vperm.xlu0 %6330, %v6018
    %v6332 = vpop.permute.xlu0 %6331
    %6334 = vset.pattern.permute.xlu0 1
    %6335 = vperm.xlu0 %6334, %v6019
    %v6336 = vpop.permute.xlu0 %6335
    %6338 = vset.pattern.permute.xlu0 1
    %6339 = vperm.xlu0 %6338, %v6020
    %v6340 = vpop.permute.xlu0 %6339
    %6342 = vset.pattern.permute.xlu0 1
    %6343 = vperm.xlu0 %6342, %v6021
    %v6344 = vpop.permute.xlu0 %6343
    %6346 = vset.pattern.permute.xlu0 1
    %6347 = vperm.xlu0 %6346, %v6022
    %v6348 = vpop.permute.xlu0 %6347
    %6350 = vset.pattern.permute.xlu0 1
    %6351 = vperm.xlu0 %6350, %v6023
    %v6352 = vpop.permute.xlu0 %6351
    %6354 = vset.pattern.permute.xlu0 1
    %6355 = vperm.xlu0 %6354, %v6024
    %v6356 = vpop.permute.xlu0 %6355
    %6358 = vset.pattern.permute.xlu0 1
    %6359 = vperm.xlu0 %6358, %v6025
    %v6360 = vpop.permute.xlu0 %6359
    %v6362 = vmul.f32 %v6300, %v6234
    %v6363 = vmul.f32 %v6300, %v6235
    %v6364 = vmul.f32 %v6300, %v6236
    %v6365 = vmul.f32 %v6300, %v6237
    %v6366 = vmul.f32 %v6304, %v6238
    %v6367 = vmul.f32 %v6304, %v6239
    %v6368 = vmul.f32 %v6304, %v6240
    %v6369 = vmul.f32 %v6304, %v6241
    %v6370 = vmul.f32 %v6308, %v6242
    %v6371 = vmul.f32 %v6308, %v6243
    %v6372 = vmul.f32 %v6308, %v6244
    %v6373 = vmul.f32 %v6308, %v6245
    %v6374 = vmul.f32 %v6312, %v6246
    %v6375 = vmul.f32 %v6312, %v6247
    %v6376 = vmul.f32 %v6312, %v6248
    %v6377 = vmul.f32 %v6312, %v6249
    %v6378 = vmul.f32 %v6316, %v6250
    %v6379 = vmul.f32 %v6316, %v6251
    %v6380 = vmul.f32 %v6316, %v6252
    %v6381 = vmul.f32 %v6316, %v6253
    %v6382 = vmul.f32 %v6320, %v6254
    %v6383 = vmul.f32 %v6320, %v6255
    %v6384 = vmul.f32 %v6320, %v6256
    %v6385 = vmul.f32 %v6320, %v6257
    %v6386 = vmul.f32 %v6324, %v6258
    %v6387 = vmul.f32 %v6324, %v6259
    %v6388 = vmul.f32 %v6324, %v6260
    %v6389 = vmul.f32 %v6324, %v6261
    %v6390 = vmul.f32 %v6328, %v6262
    %v6391 = vmul.f32 %v6328, %v6263
    %v6392 = vmul.f32 %v6328, %v6264
    %v6393 = vmul.f32 %v6328, %v6265
    %v6394 = vmul.f32 %v6332, %v6266
    %v6395 = vmul.f32 %v6332, %v6267
    %v6396 = vmul.f32 %v6332, %v6268
    %v6397 = vmul.f32 %v6332, %v6269
    %v6398 = vmul.f32 %v6336, %v6270
    %v6399 = vmul.f32 %v6336, %v6271
    %v6400 = vmul.f32 %v6336, %v6272
    %v6401 = vmul.f32 %v6336, %v6273
    %v6402 = vmul.f32 %v6340, %v6274
    %v6403 = vmul.f32 %v6340, %v6275
    %v6404 = vmul.f32 %v6340, %v6276
    %v6405 = vmul.f32 %v6340, %v6277
    %v6406 = vmul.f32 %v6344, %v6278
    %v6407 = vmul.f32 %v6344, %v6279
    %v6408 = vmul.f32 %v6344, %v6280
    %v6409 = vmul.f32 %v6344, %v6281
    %v6410 = vmul.f32 %v6348, %v6282
    %v6411 = vmul.f32 %v6348, %v6283
    %v6412 = vmul.f32 %v6348, %v6284
    %v6413 = vmul.f32 %v6348, %v6285
    %v6414 = vmul.f32 %v6352, %v6286
    %v6415 = vmul.f32 %v6352, %v6287
    %v6416 = vmul.f32 %v6352, %v6288
    %v6417 = vmul.f32 %v6352, %v6289
    %v6418 = vmul.f32 %v6356, %v6290
    %v6419 = vmul.f32 %v6356, %v6291
    %v6420 = vmul.f32 %v6356, %v6292
    %v6421 = vmul.f32 %v6356, %v6293
    %v6422 = vmul.f32 %v6360, %v6294
    %v6423 = vmul.f32 %v6360, %v6295
    %v6424 = vmul.f32 %v6360, %v6296
    %v6425 = vmul.f32 %v6360, %v6297
    %v6426 = vadd.f32 %v6170, %v6362
    %v6427 = vadd.f32 %v6171, %v6363
    %v6428 = vadd.f32 %v6172, %v6364
    %v6429 = vadd.f32 %v6173, %v6365
    %v6430 = vadd.f32 %v6174, %v6366
    %v6431 = vadd.f32 %v6175, %v6367
    %v6432 = vadd.f32 %v6176, %v6368
    %v6433 = vadd.f32 %v6177, %v6369
    %v6434 = vadd.f32 %v6178, %v6370
    %v6435 = vadd.f32 %v6179, %v6371
    %v6436 = vadd.f32 %v6180, %v6372
    %v6437 = vadd.f32 %v6181, %v6373
    %v6438 = vadd.f32 %v6182, %v6374
    %v6439 = vadd.f32 %v6183, %v6375
    %v6440 = vadd.f32 %v6184, %v6376
    %v6441 = vadd.f32 %v6185, %v6377
    %v6442 = vadd.f32 %v6186, %v6378
    %v6443 = vadd.f32 %v6187, %v6379
    %v6444 = vadd.f32 %v6188, %v6380
    %v6445 = vadd.f32 %v6189, %v6381
    %v6446 = vadd.f32 %v6190, %v6382
    %v6447 = vadd.f32 %v6191, %v6383
    %v6448 = vadd.f32 %v6192, %v6384
    %v6449 = vadd.f32 %v6193, %v6385
    %v6450 = vadd.f32 %v6194, %v6386
    %v6451 = vadd.f32 %v6195, %v6387
    %v6452 = vadd.f32 %v6196, %v6388
    %v6453 = vadd.f32 %v6197, %v6389
    %v6454 = vadd.f32 %v6198, %v6390
    %v6455 = vadd.f32 %v6199, %v6391
    %v6456 = vadd.f32 %v6200, %v6392
    %v6457 = vadd.f32 %v6201, %v6393
    %v6458 = vadd.f32 %v6202, %v6394
    %v6459 = vadd.f32 %v6203, %v6395
    %v6460 = vadd.f32 %v6204, %v6396
    %v6461 = vadd.f32 %v6205, %v6397
    %v6462 = vadd.f32 %v6206, %v6398
    %v6463 = vadd.f32 %v6207, %v6399
    %v6464 = vadd.f32 %v6208, %v6400
    %v6465 = vadd.f32 %v6209, %v6401
    %v6466 = vadd.f32 %v6210, %v6402
    %v6467 = vadd.f32 %v6211, %v6403
    %v6468 = vadd.f32 %v6212, %v6404
    %v6469 = vadd.f32 %v6213, %v6405
    %v6470 = vadd.f32 %v6214, %v6406
    %v6471 = vadd.f32 %v6215, %v6407
    %v6472 = vadd.f32 %v6216, %v6408
    %v6473 = vadd.f32 %v6217, %v6409
    %v6474 = vadd.f32 %v6218, %v6410
    %v6475 = vadd.f32 %v6219, %v6411
    %v6476 = vadd.f32 %v6220, %v6412
    %v6477 = vadd.f32 %v6221, %v6413
    %v6478 = vadd.f32 %v6222, %v6414
    %v6479 = vadd.f32 %v6223, %v6415
    %v6480 = vadd.f32 %v6224, %v6416
    %v6481 = vadd.f32 %v6225, %v6417
    %v6482 = vadd.f32 %v6226, %v6418
    %v6483 = vadd.f32 %v6227, %v6419
    %v6484 = vadd.f32 %v6228, %v6420
    %v6485 = vadd.f32 %v6229, %v6421
    %v6486 = vadd.f32 %v6230, %v6422
    %v6487 = vadd.f32 %v6231, %v6423
    %v6488 = vadd.f32 %v6232, %v6424
    %v6489 = vadd.f32 %v6233, %v6425
    %v6490 = vld [vmem:[%s5] sm:$0x3]
    %v6491 = vld [vmem:[%s6] sm:$0xf]
    %v6493 = vlaneseq
    %v6494 = vshrl.u32 %v6493, 7
    %v6495 = vsub.s32 0, %v6494
    %v6496 = vrot.slane %v6491, %v6495
    %v6497 = vlaneseq
    %v6498 = vshrl.u32 %v6497, 7
    %v6499 = vsub.s32 1, %v6498
    %v6500 = vrot.slane %v6491, %v6499
    %v6501 = vlaneseq
    %v6502 = vshrl.u32 %v6501, 7
    %v6503 = vsub.s32 2, %v6502
    %v6504 = vrot.slane %v6491, %v6503
    %v6505 = vlaneseq
    %v6506 = vshrl.u32 %v6505, 7
    %v6507 = vsub.s32 3, %v6506
    %v6508 = vrot.slane %v6491, %v6507
    %6513 = vmatprep.subr.mxu0 %v6487
    %6514 = vmatpush1.msra.mxu0 %v6486
    %6515 = vmatprep.subr.mxu0 %v6483
    %6516 = vmatpush1.msra.mxu0 %v6482
    %6517 = vmatprep.subr.mxu0 %v6479
    %6518 = vmatpush1.msra.mxu0 %v6478
    %6519 = vmatprep.subr.mxu0 %v6475
    %6520 = vmatpush1.msra.mxu0 %v6474
    %6521 = vmatprep.subr.mxu0 %v6471
    %6522 = vmatpush1.msra.mxu0 %v6470
    %6523 = vmatprep.subr.mxu0 %v6467
    %6524 = vmatpush1.msra.mxu0 %v6466
    %6525 = vmatprep.subr.mxu0 %v6463
    %6526 = vmatpush1.msra.mxu0 %v6462
    %6527 = vmatprep.subr.mxu0 %v6459
    %6528 = vmatpush1.msra.mxu0 %v6458
    %6529 = vmatprep.subr.mxu0 %v6455
    %6530 = vmatpush1.msra.mxu0 %v6454
    %6531 = vmatprep.subr.mxu0 %v6451
    %6532 = vmatpush1.msra.mxu0 %v6450
    %6533 = vmatprep.subr.mxu0 %v6447
    %6534 = vmatpush1.msra.mxu0 %v6446
    %6535 = vmatprep.subr.mxu0 %v6443
    %6536 = vmatpush1.msra.mxu0 %v6442
    %6537 = vmatprep.subr.mxu0 %v6439
    %6538 = vmatpush1.msra.mxu0 %v6438
    %6539 = vmatprep.subr.mxu0 %v6435
    %6540 = vmatpush1.msra.mxu0 %v6434
    %6541 = vmatprep.subr.mxu0 %v6431
    %6542 = vmatpush1.msra.mxu0 %v6430
    %6543 = vmatprep.subr.mxu0 %v6427
    %6544 = vmatpush1.msra.mxu0 %v6426
    %6545 = vmatprep.subr.mxu0 0.0
    %6546 = vmatpush2.msra.mxu0 0.0
    %6547 = vmatprep.subr.mxu0 0.0
    %6548 = vmatpush2.msra.mxu0 0.0
    %6549 = vmatprep.subr.mxu0 0.0
    %6550 = vmatpush2.msra.mxu0 0.0
    %6551 = vmatprep.subr.mxu0 0.0
    %6552 = vmatpush2.msra.mxu0 0.0
    %6553 = vmatprep.subr.mxu0 0.0
    %6554 = vmatpush2.msra.mxu0 0.0
    %6555 = vmatprep.subr.mxu0 0.0
    %6556 = vmatpush2.msra.mxu0 0.0
    %6557 = vmatprep.subr.mxu0 0.0
    %6558 = vmatpush2.msra.mxu0 0.0
    %6559 = vmatprep.subr.mxu0 0.0
    %6560 = vmatpush2.msra.mxu0 0.0
    %6561 = vmatprep.subr.mxu0 0.0
    %6562 = vmatpush2.msra.mxu0 0.0
    %6563 = vmatprep.subr.mxu0 0.0
    %6564 = vmatpush2.msra.mxu0 0.0
    %6565 = vmatprep.subr.mxu0 0.0
    %6566 = vmatpush2.msra.mxu0 0.0
    %6567 = vmatprep.subr.mxu0 0.0
    %6568 = vmatpush2.msra.mxu0 0.0
    %6569 = vmatprep.subr.mxu0 0.0
    %6570 = vmatpush2.msra.mxu0 0.0
    %6571 = vmatprep.subr.mxu0 0.0
    %6572 = vmatpush2.msra.mxu0 0.0
    %6573 = vmatprep.subr.mxu0 0.0
    %6574 = vmatpush2.msra.mxu0 0.0
    %6575 = vmatprep.subr.mxu0 0.0
    %6576 = vmatpush2.msra.mxu0 0.0
    %6577 = vmatprep.mubr.f32.mxu0 0.0
    %6578 = vmatmul.mubr.f32.gmra.mxu0 %v6490
    %v6579 = vpop.f32.mrf.mxu0
    %v6580 = vadd.f32 %v6496, %v6579
    %v6581 = vpop.f32.mrf.mxu0
    %v6582 = vadd.f32 %v6500, %v6581
    %6583 = vdwg.mxu0
    %6584 = vmatprep.subr.mxu0 %v6489
    %6585 = vmatpush1.msra.mxu0 %v6488
    %6586 = vmatprep.subr.mxu0 %v6485
    %6587 = vmatpush1.msra.mxu0 %v6484
    %6588 = vmatprep.subr.mxu0 %v6481
    %6589 = vmatpush1.msra.mxu0 %v6480
    %6590 = vmatprep.subr.mxu0 %v6477
    %6591 = vmatpush1.msra.mxu0 %v6476
    %6592 = vmatprep.subr.mxu0 %v6473
    %6593 = vmatpush1.msra.mxu0 %v6472
    %6594 = vmatprep.subr.mxu0 %v6469
    %6595 = vmatpush1.msra.mxu0 %v6468
    %6596 = vmatprep.subr.mxu0 %v6465
    %6597 = vmatpush1.msra.mxu0 %v6464
    %6598 = vmatprep.subr.mxu0 %v6461
    %6599 = vmatpush1.msra.mxu0 %v6460
    %6600 = vmatprep.subr.mxu0 %v6457
    %6601 = vmatpush1.msra.mxu0 %v6456
    %6602 = vmatprep.subr.mxu0 %v6453
    %6603 = vmatpush1.msra.mxu0 %v6452
    %6604 = vmatprep.subr.mxu0 %v6449
    %6605 = vmatpush1.msra.mxu0 %v6448
    %6606 = vmatprep.subr.mxu0 %v6445
    %6607 = vmatpush1.msra.mxu0 %v6444
    %6608 = vmatprep.subr.mxu0 %v6441
    %6609 = vmatpush1.msra.mxu0 %v6440
    %6610 = vmatprep.subr.mxu0 %v6437
    %6611 = vmatpush1.msra.mxu0 %v6436
    %6612 = vmatprep.subr.mxu0 %v6433
    %6613 = vmatpush1.msra.mxu0 %v6432
    %6614 = vmatprep.subr.mxu0 %v6429
    %6615 = vmatpush1.msra.mxu0 %v6428
    %6616 = vmatprep.subr.mxu0 0.0
    %6617 = vmatpush2.msra.mxu0 0.0
    %6618 = vmatprep.subr.mxu0 0.0
    %6619 = vmatpush2.msra.mxu0 0.0
    %6620 = vmatprep.subr.mxu0 0.0
    %6621 = vmatpush2.msra.mxu0 0.0
    %6622 = vmatprep.subr.mxu0 0.0
    %6623 = vmatpush2.msra.mxu0 0.0
    %6624 = vmatprep.subr.mxu0 0.0
    %6625 = vmatpush2.msra.mxu0 0.0
    %6626 = vmatprep.subr.mxu0 0.0
    %6627 = vmatpush2.msra.mxu0 0.0
    %6628 = vmatprep.subr.mxu0 0.0
    %6629 = vmatpush2.msra.mxu0 0.0
    %6630 = vmatprep.subr.mxu0 0.0
    %6631 = vmatpush2.msra.mxu0 0.0
    %6632 = vmatprep.subr.mxu0 0.0
    %6633 = vmatpush2.msra.mxu0 0.0
    %6634 = vmatprep.subr.mxu0 0.0
    %6635 = vmatpush2.msra.mxu0 0.0
    %6636 = vmatprep.subr.mxu0 0.0
    %6637 = vmatpush2.msra.mxu0 0.0
    %6638 = vmatprep.subr.mxu0 0.0
    %6639 = vmatpush2.msra.mxu0 0.0
    %6640 = vmatprep.subr.mxu0 0.0
    %6641 = vmatpush2.msra.mxu0 0.0
    %6642 = vmatprep.subr.mxu0 0.0
    %6643 = vmatpush2.msra.mxu0 0.0
    %6644 = vmatprep.subr.mxu0 0.0
    %6645 = vmatpush2.msra.mxu0 0.0
    %6646 = vmatprep.subr.mxu0 0.0
    %6647 = vmatpush2.msra.mxu0 0.0
    %6648 = vmatprep.mubr.f32.mxu0 0.0
    %6649 = vmatmul.mubr.f32.gmra.mxu0 %v6490
    %v6650 = vpop.f32.mrf.mxu0
    %v6651 = vadd.f32 %v6504, %v6650
    %v6652 = vpop.f32.mrf.mxu0
    %v6653 = vadd.f32 %v6508, %v6652
    %6654 = vdwg.mxu0
    %v6659 = vcombine.low %v6580, %v6582
    %v6660 = vcombine.low %v6651, %v6653
    %v6662 = vunpack.c.l.s4 1983009808
    %v6663 = vunpack.c.0.s8 %v6662
    %v6664 = vlaneseq
    %v6665 = vshrl.u32 %v6664, 7
    %v6666 = vsub.s32 %v6663, %v6665
    %v6667 = vrot.slane %v6659, %v6666
    %v6669 = vunpack.c.l.s4 1983009808
    %v6670 = vunpack.c.0.s8 %v6669
    %v6671 = vlaneseq
    %v6672 = vshrl.u32 %v6671, 7
    %v6673 = vsub.s32 %v6670, %v6672
    %v6674 = vrot.slane %v6660, %v6673
    %v6675 = vcombine.low %v6667, %v6674
    %6677 = vst [vmem:[#allocation4] sm:$0xff] %v6675
    // Predicated region
    $region30: #{icm_forward.1} parent=1 // pred_check
      _
    $region31: #{icm_forward.1} parent=1 // pred_check_branch
      %6679 = sbr.rel (0) target = $region33
    $region32: #{icm_forward.1} parent=1 // pred_region
      %s6681 = ssub.s32 128, 128
      %6682 = vsyncadd [#allocation5], %s6681
      %s6684 = sshll.u32 [#allocation4], 4
      %s6685 = int_to_ptr.vmem [resolvable:$true] %s6684
      %6687 = dma.vmem_to_hbm [thread:$0]  %s6685, 128, %s7, [#allocation5]
    $region33: #{icm_forward.1} parent=1 // pred_fallthru
      _
    // Predicated region
    $region34: #{icm_forward.1} parent=1 // pred_check
      _
    $region35: #{icm_forward.1} parent=1 // pred_check_branch
      %6689 = sbr.rel (0) target = $region37
    $region36: #{icm_forward.1} parent=1 // pred_region
      %6690 = dma.done [#allocation5], 128
    $region37: #{icm_forward.1} parent=1 // pred_fallthru
      _
    %6691 = vsyncpa [#allocation5], 1

</llo_original>
